<compile_context>
chip_gen: v7x
topology: tpu7x:2x2x1
jax: 0.10.0
libtpu: 0.0.40
codegen_flags: <defaults>
</compile_context>

<pallas_src>
import functools

import jax
import jax.numpy as jnp
from jax.experimental import pallas as pl
from jax.experimental.pallas import tpu as pltpu

BN_SCALE = float(1.0 / (1.0 + 1e-5) ** 0.5)  # eval-mode BatchNorm2d scale at init


# ---------------------------------------------------------------- block specs
def _batched_spec(shape):
    zeros = (0,) * (len(shape) - 1)
    return pl.BlockSpec((1,) + tuple(shape[1:]), lambda b, _z=zeros: (b,) + _z)


def _shared_spec(shape):
    zeros = (0,) * len(shape)
    return pl.BlockSpec(tuple(shape), lambda b, _z=zeros: _z)


# ---------------------------------------- math shared by the kernel and the reference
def _mm(a, b):
    return jnp.dot(a, b, preferred_element_type=jnp.float32)


def _rownorm(x, eps):
    # InstanceNorm2d (affine=False): per-channel normalization over the N points (lanes).
    mean = jnp.mean(x, axis=-1, keepdims=True)
    var = jnp.mean(jnp.square(x - mean), axis=-1, keepdims=True)
    return (x - mean) * jax.lax.rsqrt(var + eps)


def _knn_onehot(idxT):
    # [N, K*N] gather matrix: onehot[m, k*N + n] = (idx[n, k] == m).
    # Built with a single VPU compare against a 2-D iota; reused by both LC layers.
    K, N = idxT.shape
    idx_row = jnp.concatenate([idxT[k:k + 1, :] for k in range(K)], axis=1)       # [1, K*N]
    row_iota = jax.lax.broadcasted_iota(jnp.int32, (N, K * N), 0)
    return (idx_row == row_iota).astype(jnp.float32)


def _lc(x, onehot, wds, bds, w1, b1, w2, b2, wo, bo):
    # LCLayer: ds conv -> KNN diff feats -> conv1/BN/ReLU/conv2 -> max over K -> conv_out.
    N = x.shape[1]
    K = onehot.shape[1] // N
    fds = _mm(wds, x) + bds                               # ds_net                  [D, N]
    g = _mm(w1, fds)                                      # conv1 hoisted through the diff:
    gb = g + b1                                           #  W1(f - f_nn)+b1 == (W1 f + b1) - (W1 f)_nn
    gnn = _mm(g, onehot)                                  # all-K neighbor gather   [D, K*N]
    h = jnp.maximum(jnp.tile(gb, (1, K)) - gnn, 0.0)      # ReLU(BN(conv1(diff))); BN folded into w2
    m = _mm(w2, h) + b2                                   # conv2                   [D, K*N]
    acc = m[:, 0:N]
    for k in range(1, K):                                 # max over K neighbors
        acc = jnp.maximum(acc, m[:, k * N:(k + 1) * N])
    return _mm(wo, acc) + bo                              # conv_out                [C, N]


def _pointcn(x, w1, b1, w2, b2):
    # IN(1e-3) -> BN(folded) -> ReLU -> Conv -> IN(1e-3) -> BN(folded) -> ReLU -> Conv
    h = jnp.maximum(_rownorm(x, 1e-3), 0.0)
    h = _mm(w1, h) + b1
    h = jnp.maximum(_rownorm(h, 1e-3), 0.0)
    return _mm(w2, h) + b2


def _cr(x, evT, ev_lp, w1, b1, w2, b2):
    # spectral_smooth: project onto eigenbasis, low-pass by 1/(1+eta*lambda), project back.
    proj = jax.lax.dot_general(x, evT, (((1,), (1,)), ((), ())),
                               preferred_element_type=jnp.float32)                # [C, Me]
    smooth = _mm(proj, ev_lp)                                                     # [C, N]
    d = smooth - x
    h = jnp.maximum(_rownorm(d, 1e-5), 0.0)
    h = _mm(w1, h) + b1
    h = jnp.maximum(_rownorm(h, 1e-5), 0.0)
    return _mm(w2, h) + b2


def _cluster(x, wd, bd, w1, b1, w2t, b2, w3, b3, wu, bu):
    # DiffPool: embed + softmax over points (torch dim=2)
    h = jnp.maximum(_rownorm(x, 1e-3), 0.0)
    embed = _mm(wd, h) + bd                                                       # [M, N]
    embed = embed - jnp.max(embed, axis=-1, keepdims=True)
    e = jnp.exp(embed)
    S = e / jnp.sum(e, axis=-1, keepdims=True)
    down = jax.lax.dot_general(x, S, (((1,), (1,)), ((), ())),
                               preferred_element_type=jnp.float32)                # [C, M]
    # OAFilter kept in [C, M] form (trans(1,2) pair eliminated; w2t stores W2^T, BN folded)
    g = jnp.maximum(_rownorm(down, 1e-3), 0.0)
    g = _mm(w1, g) + b1                                                           # conv1  [C, M]
    t = g + _mm(jnp.maximum(g, 0.0), w2t) + b2                                    # + conv2 (cluster mix)
    u = jnp.maximum(_rownorm(t, 1e-3), 0.0)
    u = _mm(w3, u) + b3                                                           # conv3
    oaf = u + down                                                                # OAFilter residual
    # DiffUnpool: embed on x_up, softmax over clusters (torch dim=1)
    h2 = jnp.maximum(_rownorm(x, 1e-3), 0.0)
    embed2 = _mm(wu, h2) + bu                                                     # [M, N]
    embed2 = embed2 - jnp.max(embed2, axis=0, keepdims=True)
    e2 = jnp.exp(embed2)
    S2 = e2 / jnp.sum(e2, axis=0, keepdims=True)
    return _mm(oaf, S2)                                                           # [C, N]


def _block_compute(x, idxT, evT, lam_col, w, *, eta):
    """Whole LMCBlock on one [C, N] slab (pure jnp: used in-kernel and by the vmapped reference)."""
    (l0_wds, l0_bds, l0_w1, l0_b1, l0_w2, l0_b2, l0_wo, l0_bo,
     c0_w1, c0_b1, c0_w2, c0_b2,
     r0_w1, r0_b1, r0_w2, r0_b2,
     g_wd, g_bd, g_w1, g_b1, g_w2t, g_b2, g_w3, g_b3, g_wu, g_bu,
     l1_wds, l1_bds, l1_w1, l1_b1, l1_w2, l1_b2, l1_wo, l1_bo,
     c1_w1, c1_b1, c1_w2, c1_b2,
     r1_w1, r1_b1, r1_w2, r1_b2) = w

    onehot = _knn_onehot(idxT)                        # built once, reused by lc0 and lc1
    ev_lp = evT * (1.0 / (1.0 + eta * lam_col))       # low-pass eigenbasis, reused by cr0 and cr1

    x = x + _lc(x, onehot, l0_wds, l0_bds, l0_w1, l0_b1, l0_w2, l0_b2, l0_wo, l0_bo)
    x = x + _pointcn(x, c0_w1, c0_b1, c0_w2, c0_b2)   # PointCN's internal shortcut
    x = x + _cr(x, evT, ev_lp, r0_w1, r0_b1, r0_w2, r0_b2)
    x = x + _cluster(x, g_wd, g_bd, g_w1, g_b1, g_w2t, g_b2, g_w3, g_b3, g_wu, g_bu)
    x = x + _lc(x, onehot, l1_wds, l1_bds, l1_w1, l1_b1, l1_w2, l1_b2, l1_wo, l1_bo)
    x = x + _pointcn(x, c1_w1, c1_b1, c1_w2, c1_b2)
    x = x + _cr(x, evT, ev_lp, r1_w1, r1_b1, r1_w2, r1_b2)
    return x


# ---------------------------------------------------------------- fused LMCBlock kernel
def lmc_block_kernel(x_ref, idx_ref, evT_ref, lam_ref, *args, eta):
    *w_refs, o_ref = args
    w = [r[...] for r in w_refs]
    o_ref[0] = _block_compute(x_ref[0], idx_ref[0], evT_ref[0], lam_ref[0], w, eta=eta)


def _flat_weights(params):
    weights = []
    for name in ("lc0", "cn0", "cr0", "cluster", "lc1", "cn1", "cr1"):
        weights.extend(params[name])
    return weights


def lmc_block_forward(feats_nchw, idxs, eig_vec, eig_val, params, *, eta):
    # NCHW [B, C, N, 1] already has N last -> just squeeze; no activation transpose.
    x = feats_nchw[..., 0]                            # [B, C, N]
    idxT = jnp.transpose(idxs, (0, 2, 1))             # [B, K, N] int32
    evT = jnp.transpose(eig_vec, (0, 2, 1))           # [B, Me, N]
    lam = eig_val[:, :, None]                         # [B, Me, 1]
    weights = _flat_weights(params)

    B, C, N = x.shape
    in_specs = ([_batched_spec(x.shape), _batched_spec(idxT.shape),
                 _batched_spec(evT.shape), _batched_spec(lam.shape)]
                + [_shared_spec(wt.shape) for wt in weights])

    out = pl.pallas_call(
        functools.partial(lmc_block_kernel, eta=eta),
        out_shape=jax.ShapeDtypeStruct((B, C, N), jnp.float32),
        grid=(B,),
        in_specs=in_specs,
        out_specs=_batched_spec((B, C, N)),
        compiler_params=pltpu.CompilerParams(dimension_semantics=("parallel",)),
    )(x, idxT, evT, lam, *weights)

    return out[..., None]                             # back to [B, C, N, 1]


def lmc_block_reference(feats_nchw, idxs, eig_vec, eig_val, params, *, eta):
    # Pure-JAX reference: same math, vmapped over the batch (no Pallas).
    x = feats_nchw[..., 0]
    idxT = jnp.transpose(idxs, (0, 2, 1))
    evT = jnp.transpose(eig_vec, (0, 2, 1))
    lam = eig_val[:, :, None]
    weights = _flat_weights(params)
    fn = lambda xb, ib, eb, lb: _block_compute(xb, ib, eb, lb, weights, eta=eta)
    return jax.vmap(fn)(x, idxT, evT, lam)[..., None]


# ---------------------------------------------------------------- parameters
def init_params(key, C, D, M):
    """1x1-conv weights in native torch [C_out, C_in] layout; biases as [C_out, 1] columns.
    The eval-mode BatchNorm scale is pre-folded (host-side) into every conv that
    follows a BN+ReLU (relu(s*x) = s*relu(x) for s > 0)."""
    ks = iter(jax.random.split(key, 64))

    def dense(shape, scale=1.0):
        return (0.1 * scale) * jax.random.normal(next(ks), shape, dtype=jnp.float32)

    s = BN_SCALE

    def lc():
        return (dense((D, C)), dense((D, 1)),         # ds_net           (no preceding BN)
                dense((D, D)), dense((D, 1)),         # mlp conv1        (no preceding BN)
                dense((D, D), s), dense((D, 1)),      # mlp conv2        (after BN+ReLU -> folded)
                dense((C, D)), dense((C, 1)))         # conv_out         (no preceding BN)

    def cn():
        return (dense((C, C), s), dense((C, 1)),      # conv1 after IN+BN+ReLU -> folded
                dense((C, C), s), dense((C, 1)))      # conv2 after IN+BN+ReLU -> folded

    def cluster():
        return (dense((M, C), s), dense((M, 1)),      # DiffPool conv
                dense((C, C), s), dense((C, 1)),      # OAFilter conv1
                dense((M, M), s), dense((1, M)),      # OAFilter conv2 (stored as W2^T), row bias
                dense((C, C), s), dense((C, 1)),      # OAFilter conv3
                dense((M, C), s), dense((M, 1)))      # DiffUnpool conv

    return dict(lc0=lc(), cn0=cn(), cr0=cn(), cluster=cluster(),
                lc1=lc(), cn1=cn(), cr1=cn())


# ---------------------------------------------------------------- main
if __name__ == "__main__":
    B, C, N = 2, 32, 128       # batch, in_dim, num points
    D = 16                     # knn_dim  (in_dim > knn_dim -> downsample path)
    K = 6                      # neighbors
    M = 8                      # cluster_num
    Me = 16                    # number of Laplacian eigenvectors
    ETA = 0.8

    key = jax.random.PRNGKey(0)
    k_f, k_i, k_v, k_l, k_p = jax.random.split(key, 5)

    feats = jax.random.normal(k_f, (B, C, N, 1), dtype=jnp.float32)
    idxs = jax.random.randint(k_i, (B, N, K), 0, N, dtype=jnp.int32)
    eig_vec = jax.random.normal(k_v, (B, N, Me), dtype=jnp.float32) / (N ** 0.5)
    eig_val = jax.random.uniform(k_l, (B, Me), dtype=jnp.float32) * 2.0

    params = init_params(k_p, C, D, M)

    out = lmc_block_forward(feats, idxs, eig_vec, eig_val, params, eta=ETA)
    out = jax.block_until_ready(out)

    assert out.shape == (B, C, N, 1), out.shape
    assert bool(jnp.all(jnp.isfinite(out)))

    # Numerical check against the pure-JAX reference of the same math.
    with jax.default_matmul_precision("float32"):
        ref = lmc_block_reference(feats, idxs, eig_vec, eig_val, params, eta=ETA)
    ref = jax.block_until_ready(ref)
    err = float(jnp.max(jnp.abs(out - ref)))
    scale = float(jnp.max(jnp.abs(ref)))
    assert err <= 1e-2 * (1.0 + scale), (err, scale)

    print("KERNEL_OK")
</pallas_src>

<mosaic_0001>
module attributes {stable_mosaic.version = 11 : i64} {
  func.func @lmc_block_kernel(%arg0: i32, %arg1: memref<1x32x128xf32, #tpu.memory_space<vmem>>, %arg2: memref<1x6x128xi32, #tpu.memory_space<vmem>>, %arg3: memref<1x16x128xf32, #tpu.memory_space<vmem>>, %arg4: memref<1x16x1xf32, #tpu.memory_space<vmem>>, %arg5: memref<16x32xf32, #tpu.memory_space<vmem>>, %arg6: memref<16x1xf32, #tpu.memory_space<vmem>>, %arg7: memref<16x16xf32, #tpu.memory_space<vmem>>, %arg8: memref<16x1xf32, #tpu.memory_space<vmem>>, %arg9: memref<16x16xf32, #tpu.memory_space<vmem>>, %arg10: memref<16x1xf32, #tpu.memory_space<vmem>>, %arg11: memref<32x16xf32, #tpu.memory_space<vmem>>, %arg12: memref<32x1xf32, #tpu.memory_space<vmem>>, %arg13: memref<32x32xf32, #tpu.memory_space<vmem>>, %arg14: memref<32x1xf32, #tpu.memory_space<vmem>>, %arg15: memref<32x32xf32, #tpu.memory_space<vmem>>, %arg16: memref<32x1xf32, #tpu.memory_space<vmem>>, %arg17: memref<32x32xf32, #tpu.memory_space<vmem>>, %arg18: memref<32x1xf32, #tpu.memory_space<vmem>>, %arg19: memref<32x32xf32, #tpu.memory_space<vmem>>, %arg20: memref<32x1xf32, #tpu.memory_space<vmem>>, %arg21: memref<8x32xf32, #tpu.memory_space<vmem>>, %arg22: memref<8x1xf32, #tpu.memory_space<vmem>>, %arg23: memref<32x32xf32, #tpu.memory_space<vmem>>, %arg24: memref<32x1xf32, #tpu.memory_space<vmem>>, %arg25: memref<8x8xf32, #tpu.memory_space<vmem>>, %arg26: memref<1x8xf32, #tpu.memory_space<vmem>>, %arg27: memref<32x32xf32, #tpu.memory_space<vmem>>, %arg28: memref<32x1xf32, #tpu.memory_space<vmem>>, %arg29: memref<8x32xf32, #tpu.memory_space<vmem>>, %arg30: memref<8x1xf32, #tpu.memory_space<vmem>>, %arg31: memref<16x32xf32, #tpu.memory_space<vmem>>, %arg32: memref<16x1xf32, #tpu.memory_space<vmem>>, %arg33: memref<16x16xf32, #tpu.memory_space<vmem>>, %arg34: memref<16x1xf32, #tpu.memory_space<vmem>>, %arg35: memref<16x16xf32, #tpu.memory_space<vmem>>, %arg36: memref<16x1xf32, #tpu.memory_space<vmem>>, %arg37: memref<32x16xf32, #tpu.memory_space<vmem>>, %arg38: memref<32x1xf32, #tpu.memory_space<vmem>>, %arg39: memref<32x32xf32, #tpu.memory_space<vmem>>, %arg40: memref<32x1xf32, #tpu.memory_space<vmem>>, %arg41: memref<32x32xf32, #tpu.memory_space<vmem>>, %arg42: memref<32x1xf32, #tpu.memory_space<vmem>>, %arg43: memref<32x32xf32, #tpu.memory_space<vmem>>, %arg44: memref<32x1xf32, #tpu.memory_space<vmem>>, %arg45: memref<32x32xf32, #tpu.memory_space<vmem>>, %arg46: memref<32x1xf32, #tpu.memory_space<vmem>>, %arg47: memref<1x32x128xf32, #tpu.memory_space<vmem>>) attributes {dimension_semantics = [#tpu.dimension_semantics<parallel>], iteration_bounds = array<i64: 2>, scalar_prefetch = 0 : i64, scratch_operands = 0 : i64, tpu.core_type = #tpu.core_type<tc>, window_params = [{transform_indices = @transform_0, window_bounds = array<i64: 1, 32, 128>}, {transform_indices = @transform_1, window_bounds = array<i64: 1, 6, 128>}, {transform_indices = @transform_2, window_bounds = array<i64: 1, 16, 128>}, {transform_indices = @transform_3, window_bounds = array<i64: 1, 16, 1>}, {pipeline_mode = #tpu.pipeline_mode<synchronous>, transform_indices = @transform_4, window_bounds = array<i64: 16, 32>}, {pipeline_mode = #tpu.pipeline_mode<synchronous>, transform_indices = @transform_5, window_bounds = array<i64: 16, 1>}, {pipeline_mode = #tpu.pipeline_mode<synchronous>, transform_indices = @transform_6, window_bounds = array<i64: 16, 16>}, {pipeline_mode = #tpu.pipeline_mode<synchronous>, transform_indices = @transform_7, window_bounds = array<i64: 16, 1>}, {pipeline_mode = #tpu.pipeline_mode<synchronous>, transform_indices = @transform_8, window_bounds = array<i64: 16, 16>}, {pipeline_mode = #tpu.pipeline_mode<synchronous>, transform_indices = @transform_9, window_bounds = array<i64: 16, 1>}, {pipeline_mode = #tpu.pipeline_mode<synchronous>, transform_indices = @transform_10, window_bounds = array<i64: 32, 16>}, {pipeline_mode = #tpu.pipeline_mode<synchronous>, transform_indices = @transform_11, window_bounds = array<i64: 32, 1>}, {pipeline_mode = #tpu.pipeline_mode<synchronous>, transform_indices = @transform_12, window_bounds = array<i64: 32, 32>}, {pipeline_mode = #tpu.pipeline_mode<synchronous>, transform_indices = @transform_13, window_bounds = array<i64: 32, 1>}, {pipeline_mode = #tpu.pipeline_mode<synchronous>, transform_indices = @transform_14, window_bounds = array<i64: 32, 32>}, {pipeline_mode = #tpu.pipeline_mode<synchronous>, transform_indices = @transform_15, window_bounds = array<i64: 32, 1>}, {pipeline_mode = #tpu.pipeline_mode<synchronous>, transform_indices = @transform_16, window_bounds = array<i64: 32, 32>}, {pipeline_mode = #tpu.pipeline_mode<synchronous>, transform_indices = @transform_17, window_bounds = array<i64: 32, 1>}, {pipeline_mode = #tpu.pipeline_mode<synchronous>, transform_indices = @transform_18, window_bounds = array<i64: 32, 32>}, {pipeline_mode = #tpu.pipeline_mode<synchronous>, transform_indices = @transform_19, window_bounds = array<i64: 32, 1>}, {pipeline_mode = #tpu.pipeline_mode<synchronous>, transform_indices = @transform_20, window_bounds = array<i64: 8, 32>}, {pipeline_mode = #tpu.pipeline_mode<synchronous>, transform_indices = @transform_21, window_bounds = array<i64: 8, 1>}, {pipeline_mode = #tpu.pipeline_mode<synchronous>, transform_indices = @transform_22, window_bounds = array<i64: 32, 32>}, {pipeline_mode = #tpu.pipeline_mode<synchronous>, transform_indices = @transform_23, window_bounds = array<i64: 32, 1>}, {pipeline_mode = #tpu.pipeline_mode<synchronous>, transform_indices = @transform_24, window_bounds = array<i64: 8, 8>}, {pipeline_mode = #tpu.pipeline_mode<synchronous>, transform_indices = @transform_25, window_bounds = array<i64: 1, 8>}, {pipeline_mode = #tpu.pipeline_mode<synchronous>, transform_indices = @transform_26, window_bounds = array<i64: 32, 32>}, {pipeline_mode = #tpu.pipeline_mode<synchronous>, transform_indices = @transform_27, window_bounds = array<i64: 32, 1>}, {pipeline_mode = #tpu.pipeline_mode<synchronous>, transform_indices = @transform_28, window_bounds = array<i64: 8, 32>}, {pipeline_mode = #tpu.pipeline_mode<synchronous>, transform_indices = @transform_29, window_bounds = array<i64: 8, 1>}, {pipeline_mode = #tpu.pipeline_mode<synchronous>, transform_indices = @transform_30, window_bounds = array<i64: 16, 32>}, {pipeline_mode = #tpu.pipeline_mode<synchronous>, transform_indices = @transform_31, window_bounds = array<i64: 16, 1>}, {pipeline_mode = #tpu.pipeline_mode<synchronous>, transform_indices = @transform_32, window_bounds = array<i64: 16, 16>}, {pipeline_mode = #tpu.pipeline_mode<synchronous>, transform_indices = @transform_33, window_bounds = array<i64: 16, 1>}, {pipeline_mode = #tpu.pipeline_mode<synchronous>, transform_indices = @transform_34, window_bounds = array<i64: 16, 16>}, {pipeline_mode = #tpu.pipeline_mode<synchronous>, transform_indices = @transform_35, window_bounds = array<i64: 16, 1>}, {pipeline_mode = #tpu.pipeline_mode<synchronous>, transform_indices = @transform_36, window_bounds = array<i64: 32, 16>}, {pipeline_mode = #tpu.pipeline_mode<synchronous>, transform_indices = @transform_37, window_bounds = array<i64: 32, 1>}, {pipeline_mode = #tpu.pipeline_mode<synchronous>, transform_indices = @transform_38, window_bounds = array<i64: 32, 32>}, {pipeline_mode = #tpu.pipeline_mode<synchronous>, transform_indices = @transform_39, window_bounds = array<i64: 32, 1>}, {pipeline_mode = #tpu.pipeline_mode<synchronous>, transform_indices = @transform_40, window_bounds = array<i64: 32, 32>}, {pipeline_mode = #tpu.pipeline_mode<synchronous>, transform_indices = @transform_41, window_bounds = array<i64: 32, 1>}, {pipeline_mode = #tpu.pipeline_mode<synchronous>, transform_indices = @transform_42, window_bounds = array<i64: 32, 32>}, {pipeline_mode = #tpu.pipeline_mode<synchronous>, transform_indices = @transform_43, window_bounds = array<i64: 32, 1>}, {pipeline_mode = #tpu.pipeline_mode<synchronous>, transform_indices = @transform_44, window_bounds = array<i64: 32, 32>}, {pipeline_mode = #tpu.pipeline_mode<synchronous>, transform_indices = @transform_45, window_bounds = array<i64: 32, 1>}, {transform_indices = @transform_46, window_bounds = array<i64: 1, 32, 128>}]} {
    %c0 = arith.constant 0 : index
    %c0_0 = arith.constant 0 : index
    %0 = vector.load %arg5[%c0, %c0_0] : memref<16x32xf32, #tpu.memory_space<vmem>>, vector<16x32xf32>
    %c0_1 = arith.constant 0 : index
    %c0_2 = arith.constant 0 : index
    %1 = vector.load %arg6[%c0_1, %c0_2] : memref<16x1xf32, #tpu.memory_space<vmem>>, vector<16x1xf32>
    %c0_3 = arith.constant 0 : index
    %c0_4 = arith.constant 0 : index
    %2 = vector.load %arg7[%c0_3, %c0_4] : memref<16x16xf32, #tpu.memory_space<vmem>>, vector<16x16xf32>
    %c0_5 = arith.constant 0 : index
    %c0_6 = arith.constant 0 : index
    %3 = vector.load %arg8[%c0_5, %c0_6] : memref<16x1xf32, #tpu.memory_space<vmem>>, vector<16x1xf32>
    %c0_7 = arith.constant 0 : index
    %c0_8 = arith.constant 0 : index
    %4 = vector.load %arg9[%c0_7, %c0_8] : memref<16x16xf32, #tpu.memory_space<vmem>>, vector<16x16xf32>
    %c0_9 = arith.constant 0 : index
    %c0_10 = arith.constant 0 : index
    %5 = vector.load %arg10[%c0_9, %c0_10] : memref<16x1xf32, #tpu.memory_space<vmem>>, vector<16x1xf32>
    %c0_11 = arith.constant 0 : index
    %c0_12 = arith.constant 0 : index
    %6 = vector.load %arg11[%c0_11, %c0_12] : memref<32x16xf32, #tpu.memory_space<vmem>>, vector<32x16xf32>
    %c0_13 = arith.constant 0 : index
    %c0_14 = arith.constant 0 : index
    %7 = vector.load %arg12[%c0_13, %c0_14] : memref<32x1xf32, #tpu.memory_space<vmem>>, vector<32x1xf32>
    %c0_15 = arith.constant 0 : index
    %c0_16 = arith.constant 0 : index
    %8 = vector.load %arg13[%c0_15, %c0_16] : memref<32x32xf32, #tpu.memory_space<vmem>>, vector<32x32xf32>
    %c0_17 = arith.constant 0 : index
    %c0_18 = arith.constant 0 : index
    %9 = vector.load %arg14[%c0_17, %c0_18] : memref<32x1xf32, #tpu.memory_space<vmem>>, vector<32x1xf32>
    %c0_19 = arith.constant 0 : index
    %c0_20 = arith.constant 0 : index
    %10 = vector.load %arg15[%c0_19, %c0_20] : memref<32x32xf32, #tpu.memory_space<vmem>>, vector<32x32xf32>
    %c0_21 = arith.constant 0 : index
    %c0_22 = arith.constant 0 : index
    %11 = vector.load %arg16[%c0_21, %c0_22] : memref<32x1xf32, #tpu.memory_space<vmem>>, vector<32x1xf32>
    %c0_23 = arith.constant 0 : index
    %c0_24 = arith.constant 0 : index
    %12 = vector.load %arg17[%c0_23, %c0_24] : memref<32x32xf32, #tpu.memory_space<vmem>>, vector<32x32xf32>
    %c0_25 = arith.constant 0 : index
    %c0_26 = arith.constant 0 : index
    %13 = vector.load %arg18[%c0_25, %c0_26] : memref<32x1xf32, #tpu.memory_space<vmem>>, vector<32x1xf32>
    %c0_27 = arith.constant 0 : index
    %c0_28 = arith.constant 0 : index
    %14 = vector.load %arg19[%c0_27, %c0_28] : memref<32x32xf32, #tpu.memory_space<vmem>>, vector<32x32xf32>
    %c0_29 = arith.constant 0 : index
    %c0_30 = arith.constant 0 : index
    %15 = vector.load %arg20[%c0_29, %c0_30] : memref<32x1xf32, #tpu.memory_space<vmem>>, vector<32x1xf32>
    %c0_31 = arith.constant 0 : index
    %c0_32 = arith.constant 0 : index
    %16 = vector.load %arg21[%c0_31, %c0_32] : memref<8x32xf32, #tpu.memory_space<vmem>>, vector<8x32xf32>
    %c0_33 = arith.constant 0 : index
    %c0_34 = arith.constant 0 : index
    %17 = vector.load %arg22[%c0_33, %c0_34] : memref<8x1xf32, #tpu.memory_space<vmem>>, vector<8x1xf32>
    %c0_35 = arith.constant 0 : index
    %c0_36 = arith.constant 0 : index
    %18 = vector.load %arg23[%c0_35, %c0_36] : memref<32x32xf32, #tpu.memory_space<vmem>>, vector<32x32xf32>
    %c0_37 = arith.constant 0 : index
    %c0_38 = arith.constant 0 : index
    %19 = vector.load %arg24[%c0_37, %c0_38] : memref<32x1xf32, #tpu.memory_space<vmem>>, vector<32x1xf32>
    %c0_39 = arith.constant 0 : index
    %c0_40 = arith.constant 0 : index
    %20 = vector.load %arg25[%c0_39, %c0_40] : memref<8x8xf32, #tpu.memory_space<vmem>>, vector<8x8xf32>
    %c0_41 = arith.constant 0 : index
    %c0_42 = arith.constant 0 : index
    %21 = vector.load %arg26[%c0_41, %c0_42] : memref<1x8xf32, #tpu.memory_space<vmem>>, vector<1x8xf32>
    %c0_43 = arith.constant 0 : index
    %c0_44 = arith.constant 0 : index
    %22 = vector.load %arg27[%c0_43, %c0_44] : memref<32x32xf32, #tpu.memory_space<vmem>>, vector<32x32xf32>
    %c0_45 = arith.constant 0 : index
    %c0_46 = arith.constant 0 : index
    %23 = vector.load %arg28[%c0_45, %c0_46] : memref<32x1xf32, #tpu.memory_space<vmem>>, vector<32x1xf32>
    %c0_47 = arith.constant 0 : index
    %c0_48 = arith.constant 0 : index
    %24 = vector.load %arg29[%c0_47, %c0_48] : memref<8x32xf32, #tpu.memory_space<vmem>>, vector<8x32xf32>
    %c0_49 = arith.constant 0 : index
    %c0_50 = arith.constant 0 : index
    %25 = vector.load %arg30[%c0_49, %c0_50] : memref<8x1xf32, #tpu.memory_space<vmem>>, vector<8x1xf32>
    %c0_51 = arith.constant 0 : index
    %c0_52 = arith.constant 0 : index
    %26 = vector.load %arg31[%c0_51, %c0_52] : memref<16x32xf32, #tpu.memory_space<vmem>>, vector<16x32xf32>
    %c0_53 = arith.constant 0 : index
    %c0_54 = arith.constant 0 : index
    %27 = vector.load %arg32[%c0_53, %c0_54] : memref<16x1xf32, #tpu.memory_space<vmem>>, vector<16x1xf32>
    %c0_55 = arith.constant 0 : index
    %c0_56 = arith.constant 0 : index
    %28 = vector.load %arg33[%c0_55, %c0_56] : memref<16x16xf32, #tpu.memory_space<vmem>>, vector<16x16xf32>
    %c0_57 = arith.constant 0 : index
    %c0_58 = arith.constant 0 : index
    %29 = vector.load %arg34[%c0_57, %c0_58] : memref<16x1xf32, #tpu.memory_space<vmem>>, vector<16x1xf32>
    %c0_59 = arith.constant 0 : index
    %c0_60 = arith.constant 0 : index
    %30 = vector.load %arg35[%c0_59, %c0_60] : memref<16x16xf32, #tpu.memory_space<vmem>>, vector<16x16xf32>
    %c0_61 = arith.constant 0 : index
    %c0_62 = arith.constant 0 : index
    %31 = vector.load %arg36[%c0_61, %c0_62] : memref<16x1xf32, #tpu.memory_space<vmem>>, vector<16x1xf32>
    %c0_63 = arith.constant 0 : index
    %c0_64 = arith.constant 0 : index
    %32 = vector.load %arg37[%c0_63, %c0_64] : memref<32x16xf32, #tpu.memory_space<vmem>>, vector<32x16xf32>
    %c0_65 = arith.constant 0 : index
    %c0_66 = arith.constant 0 : index
    %33 = vector.load %arg38[%c0_65, %c0_66] : memref<32x1xf32, #tpu.memory_space<vmem>>, vector<32x1xf32>
    %c0_67 = arith.constant 0 : index
    %c0_68 = arith.constant 0 : index
    %34 = vector.load %arg39[%c0_67, %c0_68] : memref<32x32xf32, #tpu.memory_space<vmem>>, vector<32x32xf32>
    %c0_69 = arith.constant 0 : index
    %c0_70 = arith.constant 0 : index
    %35 = vector.load %arg40[%c0_69, %c0_70] : memref<32x1xf32, #tpu.memory_space<vmem>>, vector<32x1xf32>
    %c0_71 = arith.constant 0 : index
    %c0_72 = arith.constant 0 : index
    %36 = vector.load %arg41[%c0_71, %c0_72] : memref<32x32xf32, #tpu.memory_space<vmem>>, vector<32x32xf32>
    %c0_73 = arith.constant 0 : index
    %c0_74 = arith.constant 0 : index
    %37 = vector.load %arg42[%c0_73, %c0_74] : memref<32x1xf32, #tpu.memory_space<vmem>>, vector<32x1xf32>
    %c0_75 = arith.constant 0 : index
    %c0_76 = arith.constant 0 : index
    %38 = vector.load %arg43[%c0_75, %c0_76] : memref<32x32xf32, #tpu.memory_space<vmem>>, vector<32x32xf32>
    %c0_77 = arith.constant 0 : index
    %c0_78 = arith.constant 0 : index
    %39 = vector.load %arg44[%c0_77, %c0_78] : memref<32x1xf32, #tpu.memory_space<vmem>>, vector<32x1xf32>
    %c0_79 = arith.constant 0 : index
    %c0_80 = arith.constant 0 : index
    %40 = vector.load %arg45[%c0_79, %c0_80] : memref<32x32xf32, #tpu.memory_space<vmem>>, vector<32x32xf32>
    %c0_81 = arith.constant 0 : index
    %c0_82 = arith.constant 0 : index
    %41 = vector.load %arg46[%c0_81, %c0_82] : memref<32x1xf32, #tpu.memory_space<vmem>>, vector<32x1xf32>
    %c0_83 = arith.constant 0 : index
    %c0_84 = arith.constant 0 : index
    %c0_85 = arith.constant 0 : index
    %42 = vector.load %arg1[%c0_83, %c0_84, %c0_85] : memref<1x32x128xf32, #tpu.memory_space<vmem>>, vector<1x32x128xf32>
    %43 = vector.shape_cast %42 : vector<1x32x128xf32> to vector<32x128xf32>
    %c0_86 = arith.constant 0 : index
    %c0_87 = arith.constant 0 : index
    %c0_88 = arith.constant 0 : index
    %44 = vector.load %arg2[%c0_86, %c0_87, %c0_88] : memref<1x6x128xi32, #tpu.memory_space<vmem>>, vector<1x6x128xi32>
    %45 = vector.shape_cast %44 : vector<1x6x128xi32> to vector<6x128xi32>
    %c0_89 = arith.constant 0 : index
    %c0_90 = arith.constant 0 : index
    %c0_91 = arith.constant 0 : index
    %46 = vector.load %arg3[%c0_89, %c0_90, %c0_91] : memref<1x16x128xf32, #tpu.memory_space<vmem>>, vector<1x16x128xf32>
    %47 = vector.shape_cast %46 : vector<1x16x128xf32> to vector<16x128xf32>
    %c0_92 = arith.constant 0 : index
    %c0_93 = arith.constant 0 : index
    %c0_94 = arith.constant 0 : index
    %48 = vector.load %arg4[%c0_92, %c0_93, %c0_94] : memref<1x16x1xf32, #tpu.memory_space<vmem>>, vector<1x16x1xf32>
    %49 = vector.shape_cast %48 : vector<1x16x1xf32> to vector<16x1xf32>
    %50 = vector.extract_strided_slice %45 {offsets = [0, 0], sizes = [1, 128], strides = [1, 1]} : vector<6x128xi32> to vector<1x128xi32>
    %51 = vector.extract_strided_slice %45 {offsets = [1, 0], sizes = [1, 128], strides = [1, 1]} : vector<6x128xi32> to vector<1x128xi32>
    %52 = vector.extract_strided_slice %45 {offsets = [2, 0], sizes = [1, 128], strides = [1, 1]} : vector<6x128xi32> to vector<1x128xi32>
    %53 = vector.extract_strided_slice %45 {offsets = [3, 0], sizes = [1, 128], strides = [1, 1]} : vector<6x128xi32> to vector<1x128xi32>
    %54 = vector.extract_strided_slice %45 {offsets = [4, 0], sizes = [1, 128], strides = [1, 1]} : vector<6x128xi32> to vector<1x128xi32>
    %55 = vector.extract_strided_slice %45 {offsets = [5, 0], sizes = [1, 128], strides = [1, 1]} : vector<6x128xi32> to vector<1x128xi32>
    %56 = tpu.concatenate %50, %51, %52, %53, %54, %55 in 1 : vector<1x128xi32>, vector<1x128xi32>, vector<1x128xi32>, vector<1x128xi32>, vector<1x128xi32>, vector<1x128xi32> -> vector<1x768xi32>
    %57 = tpu.iota {dimensions = array<i32: 0>} : vector<128x768xi32>
    %58 = vector.broadcast %56 : vector<1x768xi32> to vector<128x768xi32>
    %59 = arith.cmpi eq, %58, %57 : vector<128x768xi32>
    %60 = arith.extui %59 : vector<128x768xi1> to vector<128x768xi32>
    %61 = arith.sitofp %60 : vector<128x768xi32> to vector<128x768xf32>
    %cst = arith.constant 8.000000e-01 : f32
    %62 = vector.broadcast %cst : f32 to vector<16x1xf32>
    %63 = arith.mulf %62, %49 : vector<16x1xf32>
    %cst_95 = arith.constant 1.000000e+00 : f32
    %64 = vector.broadcast %cst_95 : f32 to vector<16x1xf32>
    %65 = arith.addf %64, %63 : vector<16x1xf32>
    %cst_96 = arith.constant 1.000000e+00 : f32
    %66 = vector.broadcast %cst_96 : f32 to vector<16x1xf32>
    %67 = arith.divf %66, %65 : vector<16x1xf32>
    %68 = vector.broadcast %67 : vector<16x1xf32> to vector<16x128xf32>
    %69 = arith.mulf %47, %68 : vector<16x128xf32>
    %cst_97 = arith.constant dense<0.000000e+00> : vector<16x128xf32>
    %70 = tpu.matmul %0, %43, %cst_97 {dimension_numbers = #tpu.dot_dimension_numbers<[1], [0], [0], [1], [0, 0, 1, 1], [], []>} : vector<16x32xf32>, vector<32x128xf32>, vector<16x128xf32> -> vector<16x128xf32>
    %71 = vector.broadcast %1 : vector<16x1xf32> to vector<16x128xf32>
    %72 = arith.addf %70, %71 : vector<16x128xf32>
    %cst_98 = arith.constant dense<0.000000e+00> : vector<16x128xf32>
    %73 = tpu.matmul %2, %72, %cst_98 {dimension_numbers = #tpu.dot_dimension_numbers<[1], [0], [0], [1], [0, 0, 1, 1], [], []>} : vector<16x16xf32>, vector<16x128xf32>, vector<16x128xf32> -> vector<16x128xf32>
    %74 = vector.broadcast %3 : vector<16x1xf32> to vector<16x128xf32>
    %75 = arith.addf %73, %74 : vector<16x128xf32>
    %cst_99 = arith.constant dense<0.000000e+00> : vector<16x768xf32>
    %76 = tpu.matmul %73, %61, %cst_99 {dimension_numbers = #tpu.dot_dimension_numbers<[1], [0], [0], [1], [0, 0, 1, 1], [], []>} : vector<16x128xf32>, vector<128x768xf32>, vector<16x768xf32> -> vector<16x768xf32>
    %77 = tpu.concatenate %75, %75, %75, %75, %75, %75 in 1 : vector<16x128xf32>, vector<16x128xf32>, vector<16x128xf32>, vector<16x128xf32>, vector<16x128xf32>, vector<16x128xf32> -> vector<16x768xf32>
    %78 = arith.subf %77, %76 : vector<16x768xf32>
    %cst_100 = arith.constant 0.000000e+00 : f32
    %79 = vector.broadcast %cst_100 : f32 to vector<16x768xf32>
    %80 = arith.maximumf %78, %79 : vector<16x768xf32>
    %cst_101 = arith.constant dense<0.000000e+00> : vector<16x768xf32>
    %81 = tpu.matmul %4, %80, %cst_101 {dimension_numbers = #tpu.dot_dimension_numbers<[1], [0], [0], [1], [0, 0, 1, 1], [], []>} : vector<16x16xf32>, vector<16x768xf32>, vector<16x768xf32> -> vector<16x768xf32>
    %82 = vector.broadcast %5 : vector<16x1xf32> to vector<16x768xf32>
    %83 = arith.addf %81, %82 : vector<16x768xf32>
    %84 = vector.extract_strided_slice %83 {offsets = [0, 0], sizes = [16, 128], strides = [1, 1]} : vector<16x768xf32> to vector<16x128xf32>
    %85 = vector.extract_strided_slice %83 {offsets = [0, 128], sizes = [16, 128], strides = [1, 1]} : vector<16x768xf32> to vector<16x128xf32>
    %86 = arith.maximumf %84, %85 : vector<16x128xf32>
    %87 = vector.extract_strided_slice %83 {offsets = [0, 256], sizes = [16, 128], strides = [1, 1]} : vector<16x768xf32> to vector<16x128xf32>
    %88 = arith.maximumf %86, %87 : vector<16x128xf32>
    %89 = vector.extract_strided_slice %83 {offsets = [0, 384], sizes = [16, 128], strides = [1, 1]} : vector<16x768xf32> to vector<16x128xf32>
    %90 = arith.maximumf %88, %89 : vector<16x128xf32>
    %91 = vector.extract_strided_slice %83 {offsets = [0, 512], sizes = [16, 128], strides = [1, 1]} : vector<16x768xf32> to vector<16x128xf32>
    %92 = arith.maximumf %90, %91 : vector<16x128xf32>
    %93 = vector.extract_strided_slice %83 {offsets = [0, 640], sizes = [16, 128], strides = [1, 1]} : vector<16x768xf32> to vector<16x128xf32>
    %94 = arith.maximumf %92, %93 : vector<16x128xf32>
    %cst_102 = arith.constant dense<0.000000e+00> : vector<32x128xf32>
    %95 = tpu.matmul %6, %94, %cst_102 {dimension_numbers = #tpu.dot_dimension_numbers<[1], [0], [0], [1], [0, 0, 1, 1], [], []>} : vector<32x16xf32>, vector<16x128xf32>, vector<32x128xf32> -> vector<32x128xf32>
    %96 = vector.broadcast %7 : vector<32x1xf32> to vector<32x128xf32>
    %97 = arith.addf %95, %96 : vector<32x128xf32>
    %98 = arith.addf %43, %97 : vector<32x128xf32>
    %cst_103 = arith.constant dense<0.000000e+00> : vector<32xf32>
    %99 = vector.multi_reduction <add>, %98, %cst_103 [1] : vector<32x128xf32> to vector<32xf32>
    %100 = vector.shape_cast %99 : vector<32xf32> to vector<32x1xf32>
    %cst_104 = arith.constant 1.280000e+02 : f32
    %101 = vector.broadcast %cst_104 : f32 to vector<32x1xf32>
    %102 = arith.divf %100, %101 : vector<32x1xf32>
    %103 = vector.broadcast %102 : vector<32x1xf32> to vector<32x128xf32>
    %104 = arith.subf %98, %103 : vector<32x128xf32>
    %105 = arith.mulf %104, %104 : vector<32x128xf32>
    %cst_105 = arith.constant dense<0.000000e+00> : vector<32xf32>
    %106 = vector.multi_reduction <add>, %105, %cst_105 [1] : vector<32x128xf32> to vector<32xf32>
    %107 = vector.shape_cast %106 : vector<32xf32> to vector<32x1xf32>
    %cst_106 = arith.constant 1.280000e+02 : f32
    %108 = vector.broadcast %cst_106 : f32 to vector<32x1xf32>
    %109 = arith.divf %107, %108 : vector<32x1xf32>
    %110 = vector.broadcast %102 : vector<32x1xf32> to vector<32x128xf32>
    %111 = arith.subf %98, %110 : vector<32x128xf32>
    %cst_107 = arith.constant 1.000000e-03 : f32
    %112 = vector.broadcast %cst_107 : f32 to vector<32x1xf32>
    %113 = arith.addf %109, %112 : vector<32x1xf32>
    %114 = math.rsqrt %113 : vector<32x1xf32>
    %115 = vector.broadcast %114 : vector<32x1xf32> to vector<32x128xf32>
    %116 = arith.mulf %111, %115 : vector<32x128xf32>
    %cst_108 = arith.constant 0.000000e+00 : f32
    %117 = vector.broadcast %cst_108 : f32 to vector<32x128xf32>
    %118 = arith.maximumf %116, %117 : vector<32x128xf32>
    %cst_109 = arith.constant dense<0.000000e+00> : vector<32x128xf32>
    %119 = tpu.matmul %8, %118, %cst_109 {dimension_numbers = #tpu.dot_dimension_numbers<[1], [0], [0], [1], [0, 0, 1, 1], [], []>} : vector<32x32xf32>, vector<32x128xf32>, vector<32x128xf32> -> vector<32x128xf32>
    %120 = vector.broadcast %9 : vector<32x1xf32> to vector<32x128xf32>
    %121 = arith.addf %119, %120 : vector<32x128xf32>
    %cst_110 = arith.constant dense<0.000000e+00> : vector<32xf32>
    %122 = vector.multi_reduction <add>, %121, %cst_110 [1] : vector<32x128xf32> to vector<32xf32>
    %123 = vector.shape_cast %122 : vector<32xf32> to vector<32x1xf32>
    %cst_111 = arith.constant 1.280000e+02 : f32
    %124 = vector.broadcast %cst_111 : f32 to vector<32x1xf32>
    %125 = arith.divf %123, %124 : vector<32x1xf32>
    %126 = vector.broadcast %125 : vector<32x1xf32> to vector<32x128xf32>
    %127 = arith.subf %121, %126 : vector<32x128xf32>
    %128 = arith.mulf %127, %127 : vector<32x128xf32>
    %cst_112 = arith.constant dense<0.000000e+00> : vector<32xf32>
    %129 = vector.multi_reduction <add>, %128, %cst_112 [1] : vector<32x128xf32> to vector<32xf32>
    %130 = vector.shape_cast %129 : vector<32xf32> to vector<32x1xf32>
    %cst_113 = arith.constant 1.280000e+02 : f32
    %131 = vector.broadcast %cst_113 : f32 to vector<32x1xf32>
    %132 = arith.divf %130, %131 : vector<32x1xf32>
    %133 = vector.broadcast %125 : vector<32x1xf32> to vector<32x128xf32>
    %134 = arith.subf %121, %133 : vector<32x128xf32>
    %cst_114 = arith.constant 1.000000e-03 : f32
    %135 = vector.broadcast %cst_114 : f32 to vector<32x1xf32>
    %136 = arith.addf %132, %135 : vector<32x1xf32>
    %137 = math.rsqrt %136 : vector<32x1xf32>
    %138 = vector.broadcast %137 : vector<32x1xf32> to vector<32x128xf32>
    %139 = arith.mulf %134, %138 : vector<32x128xf32>
    %cst_115 = arith.constant 0.000000e+00 : f32
    %140 = vector.broadcast %cst_115 : f32 to vector<32x128xf32>
    %141 = arith.maximumf %139, %140 : vector<32x128xf32>
    %cst_116 = arith.constant dense<0.000000e+00> : vector<32x128xf32>
    %142 = tpu.matmul %10, %141, %cst_116 {dimension_numbers = #tpu.dot_dimension_numbers<[1], [0], [0], [1], [0, 0, 1, 1], [], []>} : vector<32x32xf32>, vector<32x128xf32>, vector<32x128xf32> -> vector<32x128xf32>
    %143 = vector.broadcast %11 : vector<32x1xf32> to vector<32x128xf32>
    %144 = arith.addf %142, %143 : vector<32x128xf32>
    %145 = arith.addf %98, %144 : vector<32x128xf32>
    %cst_117 = arith.constant dense<0.000000e+00> : vector<32x16xf32>
    %146 = tpu.matmul %145, %47, %cst_117 {dimension_numbers = #tpu.dot_dimension_numbers<[1], [1], [0], [0], [0, 0, 1, 0], [], []>} : vector<32x128xf32>, vector<16x128xf32>, vector<32x16xf32> -> vector<32x16xf32>
    %cst_118 = arith.constant dense<0.000000e+00> : vector<32x128xf32>
    %147 = tpu.matmul %146, %69, %cst_118 {dimension_numbers = #tpu.dot_dimension_numbers<[1], [0], [0], [1], [0, 0, 1, 1], [], []>} : vector<32x16xf32>, vector<16x128xf32>, vector<32x128xf32> -> vector<32x128xf32>
    %148 = arith.subf %147, %145 : vector<32x128xf32>
    %cst_119 = arith.constant dense<0.000000e+00> : vector<32xf32>
    %149 = vector.multi_reduction <add>, %148, %cst_119 [1] : vector<32x128xf32> to vector<32xf32>
    %150 = vector.shape_cast %149 : vector<32xf32> to vector<32x1xf32>
    %cst_120 = arith.constant 1.280000e+02 : f32
    %151 = vector.broadcast %cst_120 : f32 to vector<32x1xf32>
    %152 = arith.divf %150, %151 : vector<32x1xf32>
    %153 = vector.broadcast %152 : vector<32x1xf32> to vector<32x128xf32>
    %154 = arith.subf %148, %153 : vector<32x128xf32>
    %155 = arith.mulf %154, %154 : vector<32x128xf32>
    %cst_121 = arith.constant dense<0.000000e+00> : vector<32xf32>
    %156 = vector.multi_reduction <add>, %155, %cst_121 [1] : vector<32x128xf32> to vector<32xf32>
    %157 = vector.shape_cast %156 : vector<32xf32> to vector<32x1xf32>
    %cst_122 = arith.constant 1.280000e+02 : f32
    %158 = vector.broadcast %cst_122 : f32 to vector<32x1xf32>
    %159 = arith.divf %157, %158 : vector<32x1xf32>
    %160 = vector.broadcast %152 : vector<32x1xf32> to vector<32x128xf32>
    %161 = arith.subf %148, %160 : vector<32x128xf32>
    %cst_123 = arith.constant 9.99999974E-6 : f32
    %162 = vector.broadcast %cst_123 : f32 to vector<32x1xf32>
    %163 = arith.addf %159, %162 : vector<32x1xf32>
    %164 = math.rsqrt %163 : vector<32x1xf32>
    %165 = vector.broadcast %164 : vector<32x1xf32> to vector<32x128xf32>
    %166 = arith.mulf %161, %165 : vector<32x128xf32>
    %cst_124 = arith.constant 0.000000e+00 : f32
    %167 = vector.broadcast %cst_124 : f32 to vector<32x128xf32>
    %168 = arith.maximumf %166, %167 : vector<32x128xf32>
    %cst_125 = arith.constant dense<0.000000e+00> : vector<32x128xf32>
    %169 = tpu.matmul %12, %168, %cst_125 {dimension_numbers = #tpu.dot_dimension_numbers<[1], [0], [0], [1], [0, 0, 1, 1], [], []>} : vector<32x32xf32>, vector<32x128xf32>, vector<32x128xf32> -> vector<32x128xf32>
    %170 = vector.broadcast %13 : vector<32x1xf32> to vector<32x128xf32>
    %171 = arith.addf %169, %170 : vector<32x128xf32>
    %cst_126 = arith.constant dense<0.000000e+00> : vector<32xf32>
    %172 = vector.multi_reduction <add>, %171, %cst_126 [1] : vector<32x128xf32> to vector<32xf32>
    %173 = vector.shape_cast %172 : vector<32xf32> to vector<32x1xf32>
    %cst_127 = arith.constant 1.280000e+02 : f32
    %174 = vector.broadcast %cst_127 : f32 to vector<32x1xf32>
    %175 = arith.divf %173, %174 : vector<32x1xf32>
    %176 = vector.broadcast %175 : vector<32x1xf32> to vector<32x128xf32>
    %177 = arith.subf %171, %176 : vector<32x128xf32>
    %178 = arith.mulf %177, %177 : vector<32x128xf32>
    %cst_128 = arith.constant dense<0.000000e+00> : vector<32xf32>
    %179 = vector.multi_reduction <add>, %178, %cst_128 [1] : vector<32x128xf32> to vector<32xf32>
    %180 = vector.shape_cast %179 : vector<32xf32> to vector<32x1xf32>
    %cst_129 = arith.constant 1.280000e+02 : f32
    %181 = vector.broadcast %cst_129 : f32 to vector<32x1xf32>
    %182 = arith.divf %180, %181 : vector<32x1xf32>
    %183 = vector.broadcast %175 : vector<32x1xf32> to vector<32x128xf32>
    %184 = arith.subf %171, %183 : vector<32x128xf32>
    %cst_130 = arith.constant 9.99999974E-6 : f32
    %185 = vector.broadcast %cst_130 : f32 to vector<32x1xf32>
    %186 = arith.addf %182, %185 : vector<32x1xf32>
    %187 = math.rsqrt %186 : vector<32x1xf32>
    %188 = vector.broadcast %187 : vector<32x1xf32> to vector<32x128xf32>
    %189 = arith.mulf %184, %188 : vector<32x128xf32>
    %cst_131 = arith.constant 0.000000e+00 : f32
    %190 = vector.broadcast %cst_131 : f32 to vector<32x128xf32>
    %191 = arith.maximumf %189, %190 : vector<32x128xf32>
    %cst_132 = arith.constant dense<0.000000e+00> : vector<32x128xf32>
    %192 = tpu.matmul %14, %191, %cst_132 {dimension_numbers = #tpu.dot_dimension_numbers<[1], [0], [0], [1], [0, 0, 1, 1], [], []>} : vector<32x32xf32>, vector<32x128xf32>, vector<32x128xf32> -> vector<32x128xf32>
    %193 = vector.broadcast %15 : vector<32x1xf32> to vector<32x128xf32>
    %194 = arith.addf %192, %193 : vector<32x128xf32>
    %195 = arith.addf %145, %194 : vector<32x128xf32>
    %cst_133 = arith.constant dense<0.000000e+00> : vector<32xf32>
    %196 = vector.multi_reduction <add>, %195, %cst_133 [1] : vector<32x128xf32> to vector<32xf32>
    %197 = vector.shape_cast %196 : vector<32xf32> to vector<32x1xf32>
    %cst_134 = arith.constant 1.280000e+02 : f32
    %198 = vector.broadcast %cst_134 : f32 to vector<32x1xf32>
    %199 = arith.divf %197, %198 : vector<32x1xf32>
    %200 = vector.broadcast %199 : vector<32x1xf32> to vector<32x128xf32>
    %201 = arith.subf %195, %200 : vector<32x128xf32>
    %202 = arith.mulf %201, %201 : vector<32x128xf32>
    %cst_135 = arith.constant dense<0.000000e+00> : vector<32xf32>
    %203 = vector.multi_reduction <add>, %202, %cst_135 [1] : vector<32x128xf32> to vector<32xf32>
    %204 = vector.shape_cast %203 : vector<32xf32> to vector<32x1xf32>
    %cst_136 = arith.constant 1.280000e+02 : f32
    %205 = vector.broadcast %cst_136 : f32 to vector<32x1xf32>
    %206 = arith.divf %204, %205 : vector<32x1xf32>
    %207 = vector.broadcast %199 : vector<32x1xf32> to vector<32x128xf32>
    %208 = arith.subf %195, %207 : vector<32x128xf32>
    %cst_137 = arith.constant 1.000000e-03 : f32
    %209 = vector.broadcast %cst_137 : f32 to vector<32x1xf32>
    %210 = arith.addf %206, %209 : vector<32x1xf32>
    %211 = math.rsqrt %210 : vector<32x1xf32>
    %212 = vector.broadcast %211 : vector<32x1xf32> to vector<32x128xf32>
    %213 = arith.mulf %208, %212 : vector<32x128xf32>
    %cst_138 = arith.constant 0.000000e+00 : f32
    %214 = vector.broadcast %cst_138 : f32 to vector<32x128xf32>
    %215 = arith.maximumf %213, %214 : vector<32x128xf32>
    %cst_139 = arith.constant dense<0.000000e+00> : vector<8x128xf32>
    %216 = tpu.matmul %16, %215, %cst_139 {dimension_numbers = #tpu.dot_dimension_numbers<[1], [0], [0], [1], [0, 0, 1, 1], [], []>} : vector<8x32xf32>, vector<32x128xf32>, vector<8x128xf32> -> vector<8x128xf32>
    %217 = vector.broadcast %17 : vector<8x1xf32> to vector<8x128xf32>
    %218 = arith.addf %216, %217 : vector<8x128xf32>
    %cst_140 = arith.constant dense<0xFF800000> : vector<8xf32>
    %219 = vector.multi_reduction <maximumf>, %218, %cst_140 [1] : vector<8x128xf32> to vector<8xf32>
    %220 = vector.shape_cast %219 : vector<8xf32> to vector<8x1xf32>
    %221 = vector.broadcast %220 : vector<8x1xf32> to vector<8x128xf32>
    %222 = arith.subf %218, %221 : vector<8x128xf32>
    %223 = math.exp %222 : vector<8x128xf32>
    %cst_141 = arith.constant dense<0.000000e+00> : vector<8xf32>
    %224 = vector.multi_reduction <add>, %223, %cst_141 [1] : vector<8x128xf32> to vector<8xf32>
    %225 = vector.shape_cast %224 : vector<8xf32> to vector<8x1xf32>
    %226 = vector.broadcast %225 : vector<8x1xf32> to vector<8x128xf32>
    %227 = arith.divf %223, %226 : vector<8x128xf32>
    %cst_142 = arith.constant dense<0.000000e+00> : vector<32x8xf32>
    %228 = tpu.matmul %195, %227, %cst_142 {dimension_numbers = #tpu.dot_dimension_numbers<[1], [1], [0], [0], [0, 0, 1, 0], [], []>} : vector<32x128xf32>, vector<8x128xf32>, vector<32x8xf32> -> vector<32x8xf32>
    %cst_143 = arith.constant dense<0.000000e+00> : vector<32xf32>
    %229 = vector.multi_reduction <add>, %228, %cst_143 [1] : vector<32x8xf32> to vector<32xf32>
    %230 = vector.shape_cast %229 : vector<32xf32> to vector<32x1xf32>
    %cst_144 = arith.constant 8.000000e+00 : f32
    %231 = vector.broadcast %cst_144 : f32 to vector<32x1xf32>
    %232 = arith.divf %230, %231 : vector<32x1xf32>
    %233 = vector.broadcast %232 : vector<32x1xf32> to vector<32x8xf32>
    %234 = arith.subf %228, %233 : vector<32x8xf32>
    %235 = arith.mulf %234, %234 : vector<32x8xf32>
    %cst_145 = arith.constant dense<0.000000e+00> : vector<32xf32>
    %236 = vector.multi_reduction <add>, %235, %cst_145 [1] : vector<32x8xf32> to vector<32xf32>
    %237 = vector.shape_cast %236 : vector<32xf32> to vector<32x1xf32>
    %cst_146 = arith.constant 8.000000e+00 : f32
    %238 = vector.broadcast %cst_146 : f32 to vector<32x1xf32>
    %239 = arith.divf %237, %238 : vector<32x1xf32>
    %240 = vector.broadcast %232 : vector<32x1xf32> to vector<32x8xf32>
    %241 = arith.subf %228, %240 : vector<32x8xf32>
    %cst_147 = arith.constant 1.000000e-03 : f32
    %242 = vector.broadcast %cst_147 : f32 to vector<32x1xf32>
    %243 = arith.addf %239, %242 : vector<32x1xf32>
    %244 = math.rsqrt %243 : vector<32x1xf32>
    %245 = vector.broadcast %244 : vector<32x1xf32> to vector<32x8xf32>
    %246 = arith.mulf %241, %245 : vector<32x8xf32>
    %cst_148 = arith.constant 0.000000e+00 : f32
    %247 = vector.broadcast %cst_148 : f32 to vector<32x8xf32>
    %248 = arith.maximumf %246, %247 : vector<32x8xf32>
    %cst_149 = arith.constant dense<0.000000e+00> : vector<32x8xf32>
    %249 = tpu.matmul %18, %248, %cst_149 {dimension_numbers = #tpu.dot_dimension_numbers<[1], [0], [0], [1], [0, 0, 1, 1], [], []>} : vector<32x32xf32>, vector<32x8xf32>, vector<32x8xf32> -> vector<32x8xf32>
    %250 = vector.broadcast %19 : vector<32x1xf32> to vector<32x8xf32>
    %251 = arith.addf %249, %250 : vector<32x8xf32>
    %cst_150 = arith.constant 0.000000e+00 : f32
    %252 = vector.broadcast %cst_150 : f32 to vector<32x8xf32>
    %253 = arith.maximumf %251, %252 : vector<32x8xf32>
    %cst_151 = arith.constant dense<0.000000e+00> : vector<32x8xf32>
    %254 = tpu.matmul %253, %20, %cst_151 {dimension_numbers = #tpu.dot_dimension_numbers<[1], [0], [0], [1], [0, 0, 1, 1], [], []>} : vector<32x8xf32>, vector<8x8xf32>, vector<32x8xf32> -> vector<32x8xf32>
    %255 = arith.addf %251, %254 : vector<32x8xf32>
    %256 = vector.broadcast %21 : vector<1x8xf32> to vector<32x8xf32>
    %257 = arith.addf %255, %256 : vector<32x8xf32>
    %cst_152 = arith.constant dense<0.000000e+00> : vector<32xf32>
    %258 = vector.multi_reduction <add>, %257, %cst_152 [1] : vector<32x8xf32> to vector<32xf32>
    %259 = vector.shape_cast %258 : vector<32xf32> to vector<32x1xf32>
    %cst_153 = arith.constant 8.000000e+00 : f32
    %260 = vector.broadcast %cst_153 : f32 to vector<32x1xf32>
    %261 = arith.divf %259, %260 : vector<32x1xf32>
    %262 = vector.broadcast %261 : vector<32x1xf32> to vector<32x8xf32>
    %263 = arith.subf %257, %262 : vector<32x8xf32>
    %264 = arith.mulf %263, %263 : vector<32x8xf32>
    %cst_154 = arith.constant dense<0.000000e+00> : vector<32xf32>
    %265 = vector.multi_reduction <add>, %264, %cst_154 [1] : vector<32x8xf32> to vector<32xf32>
    %266 = vector.shape_cast %265 : vector<32xf32> to vector<32x1xf32>
    %cst_155 = arith.constant 8.000000e+00 : f32
    %267 = vector.broadcast %cst_155 : f32 to vector<32x1xf32>
    %268 = arith.divf %266, %267 : vector<32x1xf32>
    %269 = vector.broadcast %261 : vector<32x1xf32> to vector<32x8xf32>
    %270 = arith.subf %257, %269 : vector<32x8xf32>
    %cst_156 = arith.constant 1.000000e-03 : f32
    %271 = vector.broadcast %cst_156 : f32 to vector<32x1xf32>
    %272 = arith.addf %268, %271 : vector<32x1xf32>
    %273 = math.rsqrt %272 : vector<32x1xf32>
    %274 = vector.broadcast %273 : vector<32x1xf32> to vector<32x8xf32>
    %275 = arith.mulf %270, %274 : vector<32x8xf32>
    %cst_157 = arith.constant 0.000000e+00 : f32
    %276 = vector.broadcast %cst_157 : f32 to vector<32x8xf32>
    %277 = arith.maximumf %275, %276 : vector<32x8xf32>
    %cst_158 = arith.constant dense<0.000000e+00> : vector<32x8xf32>
    %278 = tpu.matmul %22, %277, %cst_158 {dimension_numbers = #tpu.dot_dimension_numbers<[1], [0], [0], [1], [0, 0, 1, 1], [], []>} : vector<32x32xf32>, vector<32x8xf32>, vector<32x8xf32> -> vector<32x8xf32>
    %279 = vector.broadcast %23 : vector<32x1xf32> to vector<32x8xf32>
    %280 = arith.addf %278, %279 : vector<32x8xf32>
    %281 = arith.addf %280, %228 : vector<32x8xf32>
    %cst_159 = arith.constant dense<0.000000e+00> : vector<32xf32>
    %282 = vector.multi_reduction <add>, %195, %cst_159 [1] : vector<32x128xf32> to vector<32xf32>
    %283 = vector.shape_cast %282 : vector<32xf32> to vector<32x1xf32>
    %cst_160 = arith.constant 1.280000e+02 : f32
    %284 = vector.broadcast %cst_160 : f32 to vector<32x1xf32>
    %285 = arith.divf %283, %284 : vector<32x1xf32>
    %286 = vector.broadcast %285 : vector<32x1xf32> to vector<32x128xf32>
    %287 = arith.subf %195, %286 : vector<32x128xf32>
    %288 = arith.mulf %287, %287 : vector<32x128xf32>
    %cst_161 = arith.constant dense<0.000000e+00> : vector<32xf32>
    %289 = vector.multi_reduction <add>, %288, %cst_161 [1] : vector<32x128xf32> to vector<32xf32>
    %290 = vector.shape_cast %289 : vector<32xf32> to vector<32x1xf32>
    %cst_162 = arith.constant 1.280000e+02 : f32
    %291 = vector.broadcast %cst_162 : f32 to vector<32x1xf32>
    %292 = arith.divf %290, %291 : vector<32x1xf32>
    %293 = vector.broadcast %285 : vector<32x1xf32> to vector<32x128xf32>
    %294 = arith.subf %195, %293 : vector<32x128xf32>
    %cst_163 = arith.constant 1.000000e-03 : f32
    %295 = vector.broadcast %cst_163 : f32 to vector<32x1xf32>
    %296 = arith.addf %292, %295 : vector<32x1xf32>
    %297 = math.rsqrt %296 : vector<32x1xf32>
    %298 = vector.broadcast %297 : vector<32x1xf32> to vector<32x128xf32>
    %299 = arith.mulf %294, %298 : vector<32x128xf32>
    %cst_164 = arith.constant 0.000000e+00 : f32
    %300 = vector.broadcast %cst_164 : f32 to vector<32x128xf32>
    %301 = arith.maximumf %299, %300 : vector<32x128xf32>
    %cst_165 = arith.constant dense<0.000000e+00> : vector<8x128xf32>
    %302 = tpu.matmul %24, %301, %cst_165 {dimension_numbers = #tpu.dot_dimension_numbers<[1], [0], [0], [1], [0, 0, 1, 1], [], []>} : vector<8x32xf32>, vector<32x128xf32>, vector<8x128xf32> -> vector<8x128xf32>
    %303 = vector.broadcast %25 : vector<8x1xf32> to vector<8x128xf32>
    %304 = arith.addf %302, %303 : vector<8x128xf32>
    %cst_166 = arith.constant dense<0xFF800000> : vector<128xf32>
    %305 = vector.multi_reduction <maximumf>, %304, %cst_166 [0] : vector<8x128xf32> to vector<128xf32>
    %306 = vector.shape_cast %305 : vector<128xf32> to vector<1x128xf32>
    %307 = vector.broadcast %306 : vector<1x128xf32> to vector<8x128xf32>
    %308 = arith.subf %304, %307 : vector<8x128xf32>
    %309 = math.exp %308 : vector<8x128xf32>
    %cst_167 = arith.constant dense<0.000000e+00> : vector<128xf32>
    %310 = vector.multi_reduction <add>, %309, %cst_167 [0] : vector<8x128xf32> to vector<128xf32>
    %311 = vector.shape_cast %310 : vector<128xf32> to vector<1x128xf32>
    %312 = vector.broadcast %311 : vector<1x128xf32> to vector<8x128xf32>
    %313 = arith.divf %309, %312 : vector<8x128xf32>
    %cst_168 = arith.constant dense<0.000000e+00> : vector<32x128xf32>
    %314 = tpu.matmul %281, %313, %cst_168 {dimension_numbers = #tpu.dot_dimension_numbers<[1], [0], [0], [1], [0, 0, 1, 1], [], []>} : vector<32x8xf32>, vector<8x128xf32>, vector<32x128xf32> -> vector<32x128xf32>
    %315 = arith.addf %195, %314 : vector<32x128xf32>
    %cst_169 = arith.constant dense<0.000000e+00> : vector<16x128xf32>
    %316 = tpu.matmul %26, %315, %cst_169 {dimension_numbers = #tpu.dot_dimension_numbers<[1], [0], [0], [1], [0, 0, 1, 1], [], []>} : vector<16x32xf32>, vector<32x128xf32>, vector<16x128xf32> -> vector<16x128xf32>
    %317 = vector.broadcast %27 : vector<16x1xf32> to vector<16x128xf32>
    %318 = arith.addf %316, %317 : vector<16x128xf32>
    %cst_170 = arith.constant dense<0.000000e+00> : vector<16x128xf32>
    %319 = tpu.matmul %28, %318, %cst_170 {dimension_numbers = #tpu.dot_dimension_numbers<[1], [0], [0], [1], [0, 0, 1, 1], [], []>} : vector<16x16xf32>, vector<16x128xf32>, vector<16x128xf32> -> vector<16x128xf32>
    %320 = vector.broadcast %29 : vector<16x1xf32> to vector<16x128xf32>
    %321 = arith.addf %319, %320 : vector<16x128xf32>
    %cst_171 = arith.constant dense<0.000000e+00> : vector<16x768xf32>
    %322 = tpu.matmul %319, %61, %cst_171 {dimension_numbers = #tpu.dot_dimension_numbers<[1], [0], [0], [1], [0, 0, 1, 1], [], []>} : vector<16x128xf32>, vector<128x768xf32>, vector<16x768xf32> -> vector<16x768xf32>
    %323 = tpu.concatenate %321, %321, %321, %321, %321, %321 in 1 : vector<16x128xf32>, vector<16x128xf32>, vector<16x128xf32>, vector<16x128xf32>, vector<16x128xf32>, vector<16x128xf32> -> vector<16x768xf32>
    %324 = arith.subf %323, %322 : vector<16x768xf32>
    %cst_172 = arith.constant 0.000000e+00 : f32
    %325 = vector.broadcast %cst_172 : f32 to vector<16x768xf32>
    %326 = arith.maximumf %324, %325 : vector<16x768xf32>
    %cst_173 = arith.constant dense<0.000000e+00> : vector<16x768xf32>
    %327 = tpu.matmul %30, %326, %cst_173 {dimension_numbers = #tpu.dot_dimension_numbers<[1], [0], [0], [1], [0, 0, 1, 1], [], []>} : vector<16x16xf32>, vector<16x768xf32>, vector<16x768xf32> -> vector<16x768xf32>
    %328 = vector.broadcast %31 : vector<16x1xf32> to vector<16x768xf32>
    %329 = arith.addf %327, %328 : vector<16x768xf32>
    %330 = vector.extract_strided_slice %329 {offsets = [0, 0], sizes = [16, 128], strides = [1, 1]} : vector<16x768xf32> to vector<16x128xf32>
    %331 = vector.extract_strided_slice %329 {offsets = [0, 128], sizes = [16, 128], strides = [1, 1]} : vector<16x768xf32> to vector<16x128xf32>
    %332 = arith.maximumf %330, %331 : vector<16x128xf32>
    %333 = vector.extract_strided_slice %329 {offsets = [0, 256], sizes = [16, 128], strides = [1, 1]} : vector<16x768xf32> to vector<16x128xf32>
    %334 = arith.maximumf %332, %333 : vector<16x128xf32>
    %335 = vector.extract_strided_slice %329 {offsets = [0, 384], sizes = [16, 128], strides = [1, 1]} : vector<16x768xf32> to vector<16x128xf32>
    %336 = arith.maximumf %334, %335 : vector<16x128xf32>
    %337 = vector.extract_strided_slice %329 {offsets = [0, 512], sizes = [16, 128], strides = [1, 1]} : vector<16x768xf32> to vector<16x128xf32>
    %338 = arith.maximumf %336, %337 : vector<16x128xf32>
    %339 = vector.extract_strided_slice %329 {offsets = [0, 640], sizes = [16, 128], strides = [1, 1]} : vector<16x768xf32> to vector<16x128xf32>
    %340 = arith.maximumf %338, %339 : vector<16x128xf32>
    %cst_174 = arith.constant dense<0.000000e+00> : vector<32x128xf32>
    %341 = tpu.matmul %32, %340, %cst_174 {dimension_numbers = #tpu.dot_dimension_numbers<[1], [0], [0], [1], [0, 0, 1, 1], [], []>} : vector<32x16xf32>, vector<16x128xf32>, vector<32x128xf32> -> vector<32x128xf32>
    %342 = vector.broadcast %33 : vector<32x1xf32> to vector<32x128xf32>
    %343 = arith.addf %341, %342 : vector<32x128xf32>
    %344 = arith.addf %315, %343 : vector<32x128xf32>
    %cst_175 = arith.constant dense<0.000000e+00> : vector<32xf32>
    %345 = vector.multi_reduction <add>, %344, %cst_175 [1] : vector<32x128xf32> to vector<32xf32>
    %346 = vector.shape_cast %345 : vector<32xf32> to vector<32x1xf32>
    %cst_176 = arith.constant 1.280000e+02 : f32
    %347 = vector.broadcast %cst_176 : f32 to vector<32x1xf32>
    %348 = arith.divf %346, %347 : vector<32x1xf32>
    %349 = vector.broadcast %348 : vector<32x1xf32> to vector<32x128xf32>
    %350 = arith.subf %344, %349 : vector<32x128xf32>
    %351 = arith.mulf %350, %350 : vector<32x128xf32>
    %cst_177 = arith.constant dense<0.000000e+00> : vector<32xf32>
    %352 = vector.multi_reduction <add>, %351, %cst_177 [1] : vector<32x128xf32> to vector<32xf32>
    %353 = vector.shape_cast %352 : vector<32xf32> to vector<32x1xf32>
    %cst_178 = arith.constant 1.280000e+02 : f32
    %354 = vector.broadcast %cst_178 : f32 to vector<32x1xf32>
    %355 = arith.divf %353, %354 : vector<32x1xf32>
    %356 = vector.broadcast %348 : vector<32x1xf32> to vector<32x128xf32>
    %357 = arith.subf %344, %356 : vector<32x128xf32>
    %cst_179 = arith.constant 1.000000e-03 : f32
    %358 = vector.broadcast %cst_179 : f32 to vector<32x1xf32>
    %359 = arith.addf %355, %358 : vector<32x1xf32>
    %360 = math.rsqrt %359 : vector<32x1xf32>
    %361 = vector.broadcast %360 : vector<32x1xf32> to vector<32x128xf32>
    %362 = arith.mulf %357, %361 : vector<32x128xf32>
    %cst_180 = arith.constant 0.000000e+00 : f32
    %363 = vector.broadcast %cst_180 : f32 to vector<32x128xf32>
    %364 = arith.maximumf %362, %363 : vector<32x128xf32>
    %cst_181 = arith.constant dense<0.000000e+00> : vector<32x128xf32>
    %365 = tpu.matmul %34, %364, %cst_181 {dimension_numbers = #tpu.dot_dimension_numbers<[1], [0], [0], [1], [0, 0, 1, 1], [], []>} : vector<32x32xf32>, vector<32x128xf32>, vector<32x128xf32> -> vector<32x128xf32>
    %366 = vector.broadcast %35 : vector<32x1xf32> to vector<32x128xf32>
    %367 = arith.addf %365, %366 : vector<32x128xf32>
    %cst_182 = arith.constant dense<0.000000e+00> : vector<32xf32>
    %368 = vector.multi_reduction <add>, %367, %cst_182 [1] : vector<32x128xf32> to vector<32xf32>
    %369 = vector.shape_cast %368 : vector<32xf32> to vector<32x1xf32>
    %cst_183 = arith.constant 1.280000e+02 : f32
    %370 = vector.broadcast %cst_183 : f32 to vector<32x1xf32>
    %371 = arith.divf %369, %370 : vector<32x1xf32>
    %372 = vector.broadcast %371 : vector<32x1xf32> to vector<32x128xf32>
    %373 = arith.subf %367, %372 : vector<32x128xf32>
    %374 = arith.mulf %373, %373 : vector<32x128xf32>
    %cst_184 = arith.constant dense<0.000000e+00> : vector<32xf32>
    %375 = vector.multi_reduction <add>, %374, %cst_184 [1] : vector<32x128xf32> to vector<32xf32>
    %376 = vector.shape_cast %375 : vector<32xf32> to vector<32x1xf32>
    %cst_185 = arith.constant 1.280000e+02 : f32
    %377 = vector.broadcast %cst_185 : f32 to vector<32x1xf32>
    %378 = arith.divf %376, %377 : vector<32x1xf32>
    %379 = vector.broadcast %371 : vector<32x1xf32> to vector<32x128xf32>
    %380 = arith.subf %367, %379 : vector<32x128xf32>
    %cst_186 = arith.constant 1.000000e-03 : f32
    %381 = vector.broadcast %cst_186 : f32 to vector<32x1xf32>
    %382 = arith.addf %378, %381 : vector<32x1xf32>
    %383 = math.rsqrt %382 : vector<32x1xf32>
    %384 = vector.broadcast %383 : vector<32x1xf32> to vector<32x128xf32>
    %385 = arith.mulf %380, %384 : vector<32x128xf32>
    %cst_187 = arith.constant 0.000000e+00 : f32
    %386 = vector.broadcast %cst_187 : f32 to vector<32x128xf32>
    %387 = arith.maximumf %385, %386 : vector<32x128xf32>
    %cst_188 = arith.constant dense<0.000000e+00> : vector<32x128xf32>
    %388 = tpu.matmul %36, %387, %cst_188 {dimension_numbers = #tpu.dot_dimension_numbers<[1], [0], [0], [1], [0, 0, 1, 1], [], []>} : vector<32x32xf32>, vector<32x128xf32>, vector<32x128xf32> -> vector<32x128xf32>
    %389 = vector.broadcast %37 : vector<32x1xf32> to vector<32x128xf32>
    %390 = arith.addf %388, %389 : vector<32x128xf32>
    %391 = arith.addf %344, %390 : vector<32x128xf32>
    %cst_189 = arith.constant dense<0.000000e+00> : vector<32x16xf32>
    %392 = tpu.matmul %391, %47, %cst_189 {dimension_numbers = #tpu.dot_dimension_numbers<[1], [1], [0], [0], [0, 0, 1, 0], [], []>} : vector<32x128xf32>, vector<16x128xf32>, vector<32x16xf32> -> vector<32x16xf32>
    %cst_190 = arith.constant dense<0.000000e+00> : vector<32x128xf32>
    %393 = tpu.matmul %392, %69, %cst_190 {dimension_numbers = #tpu.dot_dimension_numbers<[1], [0], [0], [1], [0, 0, 1, 1], [], []>} : vector<32x16xf32>, vector<16x128xf32>, vector<32x128xf32> -> vector<32x128xf32>
    %394 = arith.subf %393, %391 : vector<32x128xf32>
    %cst_191 = arith.constant dense<0.000000e+00> : vector<32xf32>
    %395 = vector.multi_reduction <add>, %394, %cst_191 [1] : vector<32x128xf32> to vector<32xf32>
    %396 = vector.shape_cast %395 : vector<32xf32> to vector<32x1xf32>
    %cst_192 = arith.constant 1.280000e+02 : f32
    %397 = vector.broadcast %cst_192 : f32 to vector<32x1xf32>
    %398 = arith.divf %396, %397 : vector<32x1xf32>
    %399 = vector.broadcast %398 : vector<32x1xf32> to vector<32x128xf32>
    %400 = arith.subf %394, %399 : vector<32x128xf32>
    %401 = arith.mulf %400, %400 : vector<32x128xf32>
    %cst_193 = arith.constant dense<0.000000e+00> : vector<32xf32>
    %402 = vector.multi_reduction <add>, %401, %cst_193 [1] : vector<32x128xf32> to vector<32xf32>
    %403 = vector.shape_cast %402 : vector<32xf32> to vector<32x1xf32>
    %cst_194 = arith.constant 1.280000e+02 : f32
    %404 = vector.broadcast %cst_194 : f32 to vector<32x1xf32>
    %405 = arith.divf %403, %404 : vector<32x1xf32>
    %406 = vector.broadcast %398 : vector<32x1xf32> to vector<32x128xf32>
    %407 = arith.subf %394, %406 : vector<32x128xf32>
    %cst_195 = arith.constant 9.99999974E-6 : f32
    %408 = vector.broadcast %cst_195 : f32 to vector<32x1xf32>
    %409 = arith.addf %405, %408 : vector<32x1xf32>
    %410 = math.rsqrt %409 : vector<32x1xf32>
    %411 = vector.broadcast %410 : vector<32x1xf32> to vector<32x128xf32>
    %412 = arith.mulf %407, %411 : vector<32x128xf32>
    %cst_196 = arith.constant 0.000000e+00 : f32
    %413 = vector.broadcast %cst_196 : f32 to vector<32x128xf32>
    %414 = arith.maximumf %412, %413 : vector<32x128xf32>
    %cst_197 = arith.constant dense<0.000000e+00> : vector<32x128xf32>
    %415 = tpu.matmul %38, %414, %cst_197 {dimension_numbers = #tpu.dot_dimension_numbers<[1], [0], [0], [1], [0, 0, 1, 1], [], []>} : vector<32x32xf32>, vector<32x128xf32>, vector<32x128xf32> -> vector<32x128xf32>
    %416 = vector.broadcast %39 : vector<32x1xf32> to vector<32x128xf32>
    %417 = arith.addf %415, %416 : vector<32x128xf32>
    %cst_198 = arith.constant dense<0.000000e+00> : vector<32xf32>
    %418 = vector.multi_reduction <add>, %417, %cst_198 [1] : vector<32x128xf32> to vector<32xf32>
    %419 = vector.shape_cast %418 : vector<32xf32> to vector<32x1xf32>
    %cst_199 = arith.constant 1.280000e+02 : f32
    %420 = vector.broadcast %cst_199 : f32 to vector<32x1xf32>
    %421 = arith.divf %419, %420 : vector<32x1xf32>
    %422 = vector.broadcast %421 : vector<32x1xf32> to vector<32x128xf32>
    %423 = arith.subf %417, %422 : vector<32x128xf32>
    %424 = arith.mulf %423, %423 : vector<32x128xf32>
    %cst_200 = arith.constant dense<0.000000e+00> : vector<32xf32>
    %425 = vector.multi_reduction <add>, %424, %cst_200 [1] : vector<32x128xf32> to vector<32xf32>
    %426 = vector.shape_cast %425 : vector<32xf32> to vector<32x1xf32>
    %cst_201 = arith.constant 1.280000e+02 : f32
    %427 = vector.broadcast %cst_201 : f32 to vector<32x1xf32>
    %428 = arith.divf %426, %427 : vector<32x1xf32>
    %429 = vector.broadcast %421 : vector<32x1xf32> to vector<32x128xf32>
    %430 = arith.subf %417, %429 : vector<32x128xf32>
    %cst_202 = arith.constant 9.99999974E-6 : f32
    %431 = vector.broadcast %cst_202 : f32 to vector<32x1xf32>
    %432 = arith.addf %428, %431 : vector<32x1xf32>
    %433 = math.rsqrt %432 : vector<32x1xf32>
    %434 = vector.broadcast %433 : vector<32x1xf32> to vector<32x128xf32>
    %435 = arith.mulf %430, %434 : vector<32x128xf32>
    %cst_203 = arith.constant 0.000000e+00 : f32
    %436 = vector.broadcast %cst_203 : f32 to vector<32x128xf32>
    %437 = arith.maximumf %435, %436 : vector<32x128xf32>
    %cst_204 = arith.constant dense<0.000000e+00> : vector<32x128xf32>
    %438 = tpu.matmul %40, %437, %cst_204 {dimension_numbers = #tpu.dot_dimension_numbers<[1], [0], [0], [1], [0, 0, 1, 1], [], []>} : vector<32x32xf32>, vector<32x128xf32>, vector<32x128xf32> -> vector<32x128xf32>
    %439 = vector.broadcast %41 : vector<32x1xf32> to vector<32x128xf32>
    %440 = arith.addf %438, %439 : vector<32x128xf32>
    %441 = arith.addf %391, %440 : vector<32x128xf32>
    %c0_205 = arith.constant 0 : index
    %c0_206 = arith.constant 0 : index
    %c0_207 = arith.constant 0 : index
    %442 = vector.load %arg47[%c0_205, %c0_206, %c0_207] : memref<1x32x128xf32, #tpu.memory_space<vmem>>, vector<1x32x128xf32>
    %443 = vector.shape_cast %442 : vector<1x32x128xf32> to vector<32x128xf32>
    %444 = vector.shape_cast %441 : vector<32x128xf32> to vector<1x32x128xf32>
    tpu.vector_store %arg47[%c0_205, %c0_206, %c0_207], %444 {strides = array<i32>} : memref<1x32x128xf32, #tpu.memory_space<vmem>>, vector<1x32x128xf32>,
    return
  }
  func.func @transform_0(%arg0: i32) -> (i32, i32, i32) {
    %c0_i32 = arith.constant 0 : i32
    %c0_i32_0 = arith.constant 0 : i32
    %c0_i32_1 = arith.constant 0 : i32
    return %arg0, %c0_i32, %c0_i32_0 : i32, i32, i32
  }
  func.func @transform_1(%arg0: i32) -> (i32, i32, i32) {
    %c0_i32 = arith.constant 0 : i32
    %c0_i32_0 = arith.constant 0 : i32
    %c0_i32_1 = arith.constant 0 : i32
    return %arg0, %c0_i32, %c0_i32_0 : i32, i32, i32
  }
  func.func @transform_2(%arg0: i32) -> (i32, i32, i32) {
    %c0_i32 = arith.constant 0 : i32
    %c0_i32_0 = arith.constant 0 : i32
    %c0_i32_1 = arith.constant 0 : i32
    return %arg0, %c0_i32, %c0_i32_0 : i32, i32, i32
  }
  func.func @transform_3(%arg0: i32) -> (i32, i32, i32) {
    %c0_i32 = arith.constant 0 : i32
    %c0_i32_0 = arith.constant 0 : i32
    %c0_i32_1 = arith.constant 0 : i32
    return %arg0, %c0_i32, %c0_i32_0 : i32, i32, i32
  }
  func.func @transform_4(%arg0: i32) -> (i32, i32) {
    %c0_i32 = arith.constant 0 : i32
    %c0_i32_0 = arith.constant 0 : i32
    %c0_i32_1 = arith.constant 0 : i32
    return %c0_i32, %c0_i32_0 : i32, i32
  }
  func.func @transform_5(%arg0: i32) -> (i32, i32) {
    %c0_i32 = arith.constant 0 : i32
    %c0_i32_0 = arith.constant 0 : i32
    %c0_i32_1 = arith.constant 0 : i32
    return %c0_i32, %c0_i32_0 : i32, i32
  }
  func.func @transform_6(%arg0: i32) -> (i32, i32) {
    %c0_i32 = arith.constant 0 : i32
    %c0_i32_0 = arith.constant 0 : i32
    %c0_i32_1 = arith.constant 0 : i32
    return %c0_i32, %c0_i32_0 : i32, i32
  }
  func.func @transform_7(%arg0: i32) -> (i32, i32) {
    %c0_i32 = arith.constant 0 : i32
    %c0_i32_0 = arith.constant 0 : i32
    %c0_i32_1 = arith.constant 0 : i32
    return %c0_i32, %c0_i32_0 : i32, i32
  }
  func.func @transform_8(%arg0: i32) -> (i32, i32) {
    %c0_i32 = arith.constant 0 : i32
    %c0_i32_0 = arith.constant 0 : i32
    %c0_i32_1 = arith.constant 0 : i32
    return %c0_i32, %c0_i32_0 : i32, i32
  }
  func.func @transform_9(%arg0: i32) -> (i32, i32) {
    %c0_i32 = arith.constant 0 : i32
    %c0_i32_0 = arith.constant 0 : i32
    %c0_i32_1 = arith.constant 0 : i32
    return %c0_i32, %c0_i32_0 : i32, i32
  }
  func.func @transform_10(%arg0: i32) -> (i32, i32) {
    %c0_i32 = arith.constant 0 : i32
    %c0_i32_0 = arith.constant 0 : i32
    %c0_i32_1 = arith.constant 0 : i32
    return %c0_i32, %c0_i32_0 : i32, i32
  }
  func.func @transform_11(%arg0: i32) -> (i32, i32) {
    %c0_i32 = arith.constant 0 : i32
    %c0_i32_0 = arith.constant 0 : i32
    %c0_i32_1 = arith.constant 0 : i32
    return %c0_i32, %c0_i32_0 : i32, i32
  }
  func.func @transform_12(%arg0: i32) -> (i32, i32) {
    %c0_i32 = arith.constant 0 : i32
    %c0_i32_0 = arith.constant 0 : i32
    %c0_i32_1 = arith.constant 0 : i32
    return %c0_i32, %c0_i32_0 : i32, i32
  }
  func.func @transform_13(%arg0: i32) -> (i32, i32) {
    %c0_i32 = arith.constant 0 : i32
    %c0_i32_0 = arith.constant 0 : i32
    %c0_i32_1 = arith.constant 0 : i32
    return %c0_i32, %c0_i32_0 : i32, i32
  }
  func.func @transform_14(%arg0: i32) -> (i32, i32) {
    %c0_i32 = arith.constant 0 : i32
    %c0_i32_0 = arith.constant 0 : i32
    %c0_i32_1 = arith.constant 0 : i32
    return %c0_i32, %c0_i32_0 : i32, i32
  }
  func.func @transform_15(%arg0: i32) -> (i32, i32) {
    %c0_i32 = arith.constant 0 : i32
    %c0_i32_0 = arith.constant 0 : i32
    %c0_i32_1 = arith.constant 0 : i32
    return %c0_i32, %c0_i32_0 : i32, i32
  }
  func.func @transform_16(%arg0: i32) -> (i32, i32) {
    %c0_i32 = arith.constant 0 : i32
    %c0_i32_0 = arith.constant 0 : i32
    %c0_i32_1 = arith.constant 0 : i32
    return %c0_i32, %c0_i32_0 : i32, i32
  }
  func.func @transform_17(%arg0: i32) -> (i32, i32) {
    %c0_i32 = arith.constant 0 : i32
    %c0_i32_0 = arith.constant 0 : i32
    %c0_i32_1 = arith.constant 0 : i32
    return %c0_i32, %c0_i32_0 : i32, i32
  }
  func.func @transform_18(%arg0: i32) -> (i32, i32) {
    %c0_i32 = arith.constant 0 : i32
    %c0_i32_0 = arith.constant 0 : i32
    %c0_i32_1 = arith.constant 0 : i32
    return %c0_i32, %c0_i32_0 : i32, i32
  }
  func.func @transform_19(%arg0: i32) -> (i32, i32) {
    %c0_i32 = arith.constant 0 : i32
    %c0_i32_0 = arith.constant 0 : i32
    %c0_i32_1 = arith.constant 0 : i32
    return %c0_i32, %c0_i32_0 : i32, i32
  }
  func.func @transform_20(%arg0: i32) -> (i32, i32) {
    %c0_i32 = arith.constant 0 : i32
    %c0_i32_0 = arith.constant 0 : i32
    %c0_i32_1 = arith.constant 0 : i32
    return %c0_i32, %c0_i32_0 : i32, i32
  }
  func.func @transform_21(%arg0: i32) -> (i32, i32) {
    %c0_i32 = arith.constant 0 : i32
    %c0_i32_0 = arith.constant 0 : i32
    %c0_i32_1 = arith.constant 0 : i32
    return %c0_i32, %c0_i32_0 : i32, i32
  }
  func.func @transform_22(%arg0: i32) -> (i32, i32) {
    %c0_i32 = arith.constant 0 : i32
    %c0_i32_0 = arith.constant 0 : i32
    %c0_i32_1 = arith.constant 0 : i32
    return %c0_i32, %c0_i32_0 : i32, i32
  }
  func.func @transform_23(%arg0: i32) -> (i32, i32) {
    %c0_i32 = arith.constant 0 : i32
    %c0_i32_0 = arith.constant 0 : i32
    %c0_i32_1 = arith.constant 0 : i32
    return %c0_i32, %c0_i32_0 : i32, i32
  }
  func.func @transform_24(%arg0: i32) -> (i32, i32) {
    %c0_i32 = arith.constant 0 : i32
    %c0_i32_0 = arith.constant 0 : i32
    %c0_i32_1 = arith.constant 0 : i32
    return %c0_i32, %c0_i32_0 : i32, i32
  }
  func.func @transform_25(%arg0: i32) -> (i32, i32) {
    %c0_i32 = arith.constant 0 : i32
    %c0_i32_0 = arith.constant 0 : i32
    %c0_i32_1 = arith.constant 0 : i32
    return %c0_i32, %c0_i32_0 : i32, i32
  }
  func.func @transform_26(%arg0: i32) -> (i32, i32) {
    %c0_i32 = arith.constant 0 : i32
    %c0_i32_0 = arith.constant 0 : i32
    %c0_i32_1 = arith.constant 0 : i32
    return %c0_i32, %c0_i32_0 : i32, i32
  }
  func.func @transform_27(%arg0: i32) -> (i32, i32) {
    %c0_i32 = arith.constant 0 : i32
    %c0_i32_0 = arith.constant 0 : i32
    %c0_i32_1 = arith.constant 0 : i32
    return %c0_i32, %c0_i32_0 : i32, i32
  }
  func.func @transform_28(%arg0: i32) -> (i32, i32) {
    %c0_i32 = arith.constant 0 : i32
    %c0_i32_0 = arith.constant 0 : i32
    %c0_i32_1 = arith.constant 0 : i32
    return %c0_i32, %c0_i32_0 : i32, i32
  }
  func.func @transform_29(%arg0: i32) -> (i32, i32) {
    %c0_i32 = arith.constant 0 : i32
    %c0_i32_0 = arith.constant 0 : i32
    %c0_i32_1 = arith.constant 0 : i32
    return %c0_i32, %c0_i32_0 : i32, i32
  }
  func.func @transform_30(%arg0: i32) -> (i32, i32) {
    %c0_i32 = arith.constant 0 : i32
    %c0_i32_0 = arith.constant 0 : i32
    %c0_i32_1 = arith.constant 0 : i32
    return %c0_i32, %c0_i32_0 : i32, i32
  }
  func.func @transform_31(%arg0: i32) -> (i32, i32) {
    %c0_i32 = arith.constant 0 : i32
    %c0_i32_0 = arith.constant 0 : i32
    %c0_i32_1 = arith.constant 0 : i32
    return %c0_i32, %c0_i32_0 : i32, i32
  }
  func.func @transform_32(%arg0: i32) -> (i32, i32) {
    %c0_i32 = arith.constant 0 : i32
    %c0_i32_0 = arith.constant 0 : i32
    %c0_i32_1 = arith.constant 0 : i32
    return %c0_i32, %c0_i32_0 : i32, i32
  }
  func.func @transform_33(%arg0: i32) -> (i32, i32) {
    %c0_i32 = arith.constant 0 : i32
    %c0_i32_0 = arith.constant 0 : i32
    %c0_i32_1 = arith.constant 0 : i32
    return %c0_i32, %c0_i32_0 : i32, i32
  }
  func.func @transform_34(%arg0: i32) -> (i32, i32) {
    %c0_i32 = arith.constant 0 : i32
    %c0_i32_0 = arith.constant 0 : i32
    %c0_i32_1 = arith.constant 0 : i32
    return %c0_i32, %c0_i32_0 : i32, i32
  }
  func.func @transform_35(%arg0: i32) -> (i32, i32) {
    %c0_i32 = arith.constant 0 : i32
    %c0_i32_0 = arith.constant 0 : i32
    %c0_i32_1 = arith.constant 0 : i32
    return %c0_i32, %c0_i32_0 : i32, i32
  }
  func.func @transform_36(%arg0: i32) -> (i32, i32) {
    %c0_i32 = arith.constant 0 : i32
    %c0_i32_0 = arith.constant 0 : i32
    %c0_i32_1 = arith.constant 0 : i32
    return %c0_i32, %c0_i32_0 : i32, i32
  }
  func.func @transform_37(%arg0: i32) -> (i32, i32) {
    %c0_i32 = arith.constant 0 : i32
    %c0_i32_0 = arith.constant 0 : i32
    %c0_i32_1 = arith.constant 0 : i32
    return %c0_i32, %c0_i32_0 : i32, i32
  }
  func.func @transform_38(%arg0: i32) -> (i32, i32) {
    %c0_i32 = arith.constant 0 : i32
    %c0_i32_0 = arith.constant 0 : i32
    %c0_i32_1 = arith.constant 0 : i32
    return %c0_i32, %c0_i32_0 : i32, i32
  }
  func.func @transform_39(%arg0: i32) -> (i32, i32) {
    %c0_i32 = arith.constant 0 : i32
    %c0_i32_0 = arith.constant 0 : i32
    %c0_i32_1 = arith.constant 0 : i32
    return %c0_i32, %c0_i32_0 : i32, i32
  }
  func.func @transform_40(%arg0: i32) -> (i32, i32) {
    %c0_i32 = arith.constant 0 : i32
    %c0_i32_0 = arith.constant 0 : i32
    %c0_i32_1 = arith.constant 0 : i32
    return %c0_i32, %c0_i32_0 : i32, i32
  }
  func.func @transform_41(%arg0: i32) -> (i32, i32) {
    %c0_i32 = arith.constant 0 : i32
    %c0_i32_0 = arith.constant 0 : i32
    %c0_i32_1 = arith.constant 0 : i32
    return %c0_i32, %c0_i32_0 : i32, i32
  }
  func.func @transform_42(%arg0: i32) -> (i32, i32) {
    %c0_i32 = arith.constant 0 : i32
    %c0_i32_0 = arith.constant 0 : i32
    %c0_i32_1 = arith.constant 0 : i32
    return %c0_i32, %c0_i32_0 : i32, i32
  }
  func.func @transform_43(%arg0: i32) -> (i32, i32) {
    %c0_i32 = arith.constant 0 : i32
    %c0_i32_0 = arith.constant 0 : i32
    %c0_i32_1 = arith.constant 0 : i32
    return %c0_i32, %c0_i32_0 : i32, i32
  }
  func.func @transform_44(%arg0: i32) -> (i32, i32) {
    %c0_i32 = arith.constant 0 : i32
    %c0_i32_0 = arith.constant 0 : i32
    %c0_i32_1 = arith.constant 0 : i32
    return %c0_i32, %c0_i32_0 : i32, i32
  }
  func.func @transform_45(%arg0: i32) -> (i32, i32) {
    %c0_i32 = arith.constant 0 : i32
    %c0_i32_0 = arith.constant 0 : i32
    %c0_i32_1 = arith.constant 0 : i32
    return %c0_i32, %c0_i32_0 : i32, i32
  }
  func.func @transform_46(%arg0: i32) -> (i32, i32, i32) {
    %c0_i32 = arith.constant 0 : i32
    %c0_i32_0 = arith.constant 0 : i32
    %c0_i32_1 = arith.constant 0 : i32
    return %arg0, %c0_i32, %c0_i32_0 : i32, i32, i32
  }
}

</mosaic_0001>

<llo_original>
// kernel: tpu_custom_call.1
$region0: #{tpu_custom_call.1}
  #allocation0 [shape = 'u32[]', space=smem, size = 0x4, offset = 0x4, fixed_abs, tag = 'smem constant byte address 0x4 - core index']
  #allocation1 [shape = 'u32[144,128]{1,0:T(1,128)}', space=vmem, size = 0x12000, scoped, tag = 'internal scratch']
  %s0 = inlined_call_operand.smem [shape: u32[47], index: -1, kind: input, shape index: {}]
  %s1 = sld [smem:[%s0]]
  %s2 = scalar_lea.smem %s0, 1
  %s3 = sld [smem:[%s2]]
  %s4 = scalar_lea.smem %s0, 2
  %s5 = sld [smem:[%s4]]
  %s6 = scalar_lea.smem %s0, 3
  %s7 = sld [smem:[%s6]]
  %s8 = scalar_lea.smem %s0, 4
  %s9 = sld [smem:[%s8]]
  %s10 = scalar_lea.smem %s0, 5
  %s11 = sld [smem:[%s10]]
  %s12 = scalar_lea.smem %s0, 6
  %s13 = sld [smem:[%s12]]
  %s14 = scalar_lea.smem %s0, 7
  %s15 = sld [smem:[%s14]]
  %s16 = scalar_lea.smem %s0, 8
  %s17 = sld [smem:[%s16]]
  %s18 = scalar_lea.smem %s0, 9
  %s19 = sld [smem:[%s18]]
  %s20 = scalar_lea.smem %s0, 10
  %s21 = sld [smem:[%s20]]
  %s22 = scalar_lea.smem %s0, 11
  %s23 = sld [smem:[%s22]]
  %s24 = scalar_lea.smem %s0, 12
  %s25 = sld [smem:[%s24]]
  %s26 = scalar_lea.smem %s0, 13
  %s27 = sld [smem:[%s26]]
  %s28 = scalar_lea.smem %s0, 14
  %s29 = sld [smem:[%s28]]
  %s30 = scalar_lea.smem %s0, 15
  %s31 = sld [smem:[%s30]]
  %s32 = scalar_lea.smem %s0, 16
  %s33 = sld [smem:[%s32]]
  %s34 = scalar_lea.smem %s0, 17
  %s35 = sld [smem:[%s34]]
  %s36 = scalar_lea.smem %s0, 18
  %s37 = sld [smem:[%s36]]
  %s38 = scalar_lea.smem %s0, 19
  %s39 = sld [smem:[%s38]]
  %s40 = scalar_lea.smem %s0, 20
  %s41 = sld [smem:[%s40]]
  %s42 = scalar_lea.smem %s0, 21
  %s43 = sld [smem:[%s42]]
  %s44 = scalar_lea.smem %s0, 22
  %s45 = sld [smem:[%s44]]
  %s46 = scalar_lea.smem %s0, 23
  %s47 = sld [smem:[%s46]]
  %s48 = scalar_lea.smem %s0, 24
  %s49 = sld [smem:[%s48]]
  %s50 = scalar_lea.smem %s0, 25
  %s51 = sld [smem:[%s50]]
  %s52 = scalar_lea.smem %s0, 26
  %s53 = sld [smem:[%s52]]
  %s54 = scalar_lea.smem %s0, 27
  %s55 = sld [smem:[%s54]]
  %s56 = scalar_lea.smem %s0, 28
  %s57 = sld [smem:[%s56]]
  %s58 = scalar_lea.smem %s0, 29
  %s59 = sld [smem:[%s58]]
  %s60 = scalar_lea.smem %s0, 30
  %s61 = sld [smem:[%s60]]
  %s62 = scalar_lea.smem %s0, 31
  %s63 = sld [smem:[%s62]]
  %s64 = scalar_lea.smem %s0, 32
  %s65 = sld [smem:[%s64]]
  %s66 = scalar_lea.smem %s0, 33
  %s67 = sld [smem:[%s66]]
  %s68 = scalar_lea.smem %s0, 34
  %s69 = sld [smem:[%s68]]
  %s70 = scalar_lea.smem %s0, 35
  %s71 = sld [smem:[%s70]]
  %s72 = scalar_lea.smem %s0, 36
  %s73 = sld [smem:[%s72]]
  %s74 = scalar_lea.smem %s0, 37
  %s75 = sld [smem:[%s74]]
  %s76 = scalar_lea.smem %s0, 38
  %s77 = sld [smem:[%s76]]
  %s78 = scalar_lea.smem %s0, 39
  %s79 = sld [smem:[%s78]]
  %s80 = scalar_lea.smem %s0, 40
  %s81 = sld [smem:[%s80]]
  %s82 = scalar_lea.smem %s0, 41
  %s83 = sld [smem:[%s82]]
  %s84 = scalar_lea.smem %s0, 42
  %s85 = sld [smem:[%s84]]
  %s86 = scalar_lea.smem %s0, 43
  %s87 = sld [smem:[%s86]]
  %s88 = scalar_lea.smem %s0, 44
  %s89 = sld [smem:[%s88]]
  %s90 = scalar_lea.smem %s0, 45
  %s91 = sld [smem:[%s90]]
  %s92 = scalar_lea.smem %s0, 46
  %s93 = sld [smem:[%s92]]
  %s94 = sld [smem:[#allocation0]]
  $region221: #{tpu_custom_call.1} parent=0
    _
  %s96 = ssub.s32 1, %s94
  %s97 = scalar_select 0, %s96, %s94
  $region1: #{tpu_custom_call.1} parent=0
    #allocation2 [shape = 'u8[512]{0}', space=vmem, size = 0x400, scoped, tag = 'input window, operand 25, single buffered']
    #allocation3 [shape = 's32[2]{0}', space=sflag, size = 0x8, scoped, tag = 'scoped memory for tpu_custom_call.1']
    #allocation4 [shape = 's32[2]{0}', space=sflag, size = 0x8, scoped, tag = 'scoped memory for tpu_custom_call.1']
    #allocation5 [shape = 'u8[32768]{0}', space=vmem, size = 0x8000, scoped, tag = 'output window, operand 0']
    %98 = vsyncpa [#allocation3], 0
    %99 = vsyncpa [#allocation4], 0
    %s100 = scalar_lea.sflag [#allocation4], 1
    %101 = vsyncpa %s100, 0
    loop: start=0, step=1, limit=4
    $region2: #{tpu_custom_call.1} parent=1 // loop_pre_header
      _
    $region3: #{tpu_custom_call.1} parent=1 // loop_header
      %s103 = sphi 0, %s107
      %p104 = scmp.ge.s32.totalorder %s103, 4
      %s113 = sphi 0, %s115
      %s116 = sphi 0, %s113
      %s117 = sphi 0, %s116
      %s133 = sphi 0, %s117
      %s139 = sphi 0, %s141
      %s142 = sphi 0, %s139
      %s143 = sphi 0, %s142
      %s159 = sphi 0, %s143
      %s165 = sphi 0, %s167
      %s168 = sphi 0, %s165
      %s169 = sphi 0, %s168
      %s185 = sphi 0, %s169
      %s191 = sphi 0, %s193
      %s194 = sphi 0, %s191
      %s195 = sphi 0, %s194
      %s211 = sphi 0, %s195
      %s215 = sphi 0, %s215
      %s217 = sphi 0, %s215
      %s218 = sphi 0, %s217
      %s232 = sphi 0, %s218
      %s236 = sphi 0, %s236
      %s238 = sphi 0, %s236
      %s239 = sphi 0, %s238
      %s253 = sphi 0, %s239
      %s257 = sphi 0, %s257
      %s259 = sphi 0, %s257
      %s260 = sphi 0, %s259
      %s274 = sphi 0, %s260
      %s278 = sphi 0, %s278
      %s280 = sphi 0, %s278
      %s281 = sphi 0, %s280
      %s295 = sphi 0, %s281
      %s299 = sphi 0, %s299
      %s301 = sphi 0, %s299
      %s302 = sphi 0, %s301
      %s316 = sphi 0, %s302
      %s320 = sphi 0, %s320
      %s322 = sphi 0, %s320
      %s323 = sphi 0, %s322
      %s337 = sphi 0, %s323
      %s341 = sphi 0, %s341
      %s343 = sphi 0, %s341
      %s344 = sphi 0, %s343
      %s358 = sphi 0, %s344
      %s362 = sphi 0, %s362
      %s364 = sphi 0, %s362
      %s365 = sphi 0, %s364
      %s379 = sphi 0, %s365
      %s383 = sphi 0, %s383
      %s385 = sphi 0, %s383
      %s386 = sphi 0, %s385
      %s400 = sphi 0, %s386
      %s404 = sphi 0, %s404
      %s406 = sphi 0, %s404
      %s407 = sphi 0, %s406
      %s421 = sphi 0, %s407
      %s425 = sphi 0, %s425
      %s427 = sphi 0, %s425
      %s428 = sphi 0, %s427
      %s442 = sphi 0, %s428
      %s446 = sphi 0, %s446
      %s448 = sphi 0, %s446
      %s449 = sphi 0, %s448
      %s463 = sphi 0, %s449
      %s467 = sphi 0, %s467
      %s469 = sphi 0, %s467
      %s470 = sphi 0, %s469
      %s484 = sphi 0, %s470
      %s488 = sphi 0, %s488
      %s490 = sphi 0, %s488
      %s491 = sphi 0, %s490
      %s505 = sphi 0, %s491
      %s509 = sphi 0, %s509
      %s511 = sphi 0, %s509
      %s512 = sphi 0, %s511
      %s526 = sphi 0, %s512
      %s530 = sphi 0, %s530
      %s532 = sphi 0, %s530
      %s533 = sphi 0, %s532
      %s547 = sphi 0, %s533
      %s551 = sphi 0, %s551
      %s553 = sphi 0, %s551
      %s554 = sphi 0, %s553
      %s568 = sphi 0, %s554
      %s572 = sphi 0, %s572
      %s574 = sphi 0, %s572
      %s575 = sphi 0, %s574
      %s589 = sphi 0, %s575
      %s593 = sphi 0, %s593
      %s595 = sphi 0, %s593
      %s596 = sphi 0, %s595
      %s610 = sphi 0, %s596
      %s614 = sphi 0, %s614
      %s616 = sphi 0, %s614
      %s617 = sphi 0, %s616
      %s631 = sphi 0, %s617
      %s635 = sphi 0, %s635
      %s637 = sphi 0, %s635
      %s638 = sphi 0, %s637
      %s652 = sphi 0, %s638
      %s656 = sphi 0, %s656
      %s658 = sphi 0, %s656
      %s659 = sphi 0, %s658
      %s673 = sphi 0, %s659
      %s677 = sphi 0, %s677
      %s679 = sphi 0, %s677
      %s680 = sphi 0, %s679
      %s694 = sphi 0, %s680
      %s698 = sphi 0, %s698
      %s700 = sphi 0, %s698
      %s701 = sphi 0, %s700
      %s715 = sphi 0, %s701
      %s719 = sphi 0, %s719
      %s721 = sphi 0, %s719
      %s722 = sphi 0, %s721
      %s736 = sphi 0, %s722
      %s740 = sphi 0, %s740
      %s742 = sphi 0, %s740
      %s743 = sphi 0, %s742
      %s757 = sphi 0, %s743
      %s761 = sphi 0, %s761
      %s763 = sphi 0, %s761
      %s764 = sphi 0, %s763
      %s778 = sphi 0, %s764
      %s782 = sphi 0, %s782
      %s784 = sphi 0, %s782
      %s785 = sphi 0, %s784
      %s799 = sphi 0, %s785
      %s803 = sphi 0, %s803
      %s805 = sphi 0, %s803
      %s806 = sphi 0, %s805
      %s820 = sphi 0, %s806
      %s824 = sphi 0, %s824
      %s826 = sphi 0, %s824
      %s827 = sphi 0, %s826
      %s841 = sphi 0, %s827
      %s845 = sphi 0, %s845
      %s847 = sphi 0, %s845
      %s848 = sphi 0, %s847
      %s862 = sphi 0, %s848
      %s866 = sphi 0, %s866
      %s868 = sphi 0, %s866
      %s869 = sphi 0, %s868
      %s883 = sphi 0, %s869
      %s887 = sphi 0, %s887
      %s889 = sphi 0, %s887
      %s890 = sphi 0, %s889
      %s904 = sphi 0, %s890
      %s908 = sphi 0, %s908
      %s910 = sphi 0, %s908
      %s911 = sphi 0, %s910
      %s925 = sphi 0, %s911
      %s929 = sphi 0, %s929
      %s931 = sphi 0, %s929
      %s932 = sphi 0, %s931
      %s946 = sphi 0, %s932
      %s950 = sphi 0, %s950
      %s952 = sphi 0, %s950
      %s953 = sphi 0, %s952
      %s967 = sphi 0, %s953
      %s971 = sphi 0, %s971
      %s973 = sphi 0, %s971
      %s974 = sphi 0, %s973
      %s988 = sphi 0, %s974
      %s992 = sphi 0, %s992
      %s994 = sphi 0, %s992
      %s995 = sphi 0, %s994
      %s1009 = sphi 0, %s995
      %s1013 = sphi 0, %s1013
      %s1015 = sphi 0, %s1013
      %s1016 = sphi 0, %s1015
      %s1030 = sphi 0, %s1016
      %s1034 = sphi 0, %s1034
      %s1036 = sphi 0, %s1034
      %s1037 = sphi 0, %s1036
      %s1051 = sphi 0, %s1037
      %s1055 = sphi 0, %s1055
      %s1057 = sphi 0, %s1055
      %s1058 = sphi 0, %s1057
      %s1072 = sphi 0, %s1058
      %s1076 = sphi 0, %s1076
      %s1078 = sphi 0, %s1076
      %s1079 = sphi 0, %s1078
      %s1093 = sphi 0, %s1079
      %s1099 = sphi 0, %s1101
      %s1102 = sphi 0, %s1099
      %s1103 = sphi 0, %s1102
      %s1119 = sphi 0, %s1103
    $region4: #{tpu_custom_call.1} parent=1 // loop_header_branch
      %106 = sbr.rel (%p104) target = $region8
    $region5: #{tpu_custom_call.1} parent=1 // loop_body
      %s108 = ssub.s32 %s103, 1
      %s109 = ssub.s32 %s103, 2
      %s110 = sadd.s32 %s103, 1
      %s111 = ssub.s32 %s103, %s110
      %p112 = scmp.eq.s32.totalorder %s111, 0
      %s114 = sadd.s32 %s113, 1
      %s115 = scalar_select %p112, %s113, %s114
      %p118 = pneg %p112
      %p119 = scmp.eq.s32.totalorder %s103, 1
      %p120 = por %p118, %p119
      %p121 = scmp.ne.s32.totalorder %s113, %s116
      %p122 = scmp.eq.s32.totalorder %s103, 0
      %p123 = por %p121, %p122
      %p124 = scmp.ne.s32.totalorder %s113, %s116
      %p125 = scmp.eq.s32.totalorder %s108, 1
      %p126 = por %p124, %p125
      %p127 = scmp.ne.s32.totalorder %s116, %s117
      %p128 = scmp.eq.s32.totalorder %s108, 0
      %p129 = por %p127, %p128
      %p130 = scmp.ne.s32.totalorder %s116, %s117
      %p131 = scmp.eq.s32.totalorder %s109, 1
      %p132 = por %p130, %p131
      %p134 = scmp.ne.s32.totalorder %s117, %s133
      %p135 = scmp.eq.s32.totalorder %s109, 0
      %p136 = por %p134, %p135
      %s137 = ssub.s32 %s103, %s110
      %p138 = scmp.eq.s32.totalorder %s137, 0
      %s140 = sadd.s32 %s139, 1
      %s141 = scalar_select %p138, %s139, %s140
      %p144 = pneg %p138
      %p145 = scmp.eq.s32.totalorder %s103, 1
      %p146 = por %p144, %p145
      %p147 = scmp.ne.s32.totalorder %s139, %s142
      %p148 = scmp.eq.s32.totalorder %s103, 0
      %p149 = por %p147, %p148
      %p150 = scmp.ne.s32.totalorder %s139, %s142
      %p151 = scmp.eq.s32.totalorder %s108, 1
      %p152 = por %p150, %p151
      %p153 = scmp.ne.s32.totalorder %s142, %s143
      %p154 = scmp.eq.s32.totalorder %s108, 0
      %p155 = por %p153, %p154
      %p156 = scmp.ne.s32.totalorder %s142, %s143
      %p157 = scmp.eq.s32.totalorder %s109, 1
      %p158 = por %p156, %p157
      %p160 = scmp.ne.s32.totalorder %s143, %s159
      %p161 = scmp.eq.s32.totalorder %s109, 0
      %p162 = por %p160, %p161
      %s163 = ssub.s32 %s103, %s110
      %p164 = scmp.eq.s32.totalorder %s163, 0
      %s166 = sadd.s32 %s165, 1
      %s167 = scalar_select %p164, %s165, %s166
      %p170 = pneg %p164
      %p171 = scmp.eq.s32.totalorder %s103, 1
      %p172 = por %p170, %p171
      %p173 = scmp.ne.s32.totalorder %s165, %s168
      %p174 = scmp.eq.s32.totalorder %s103, 0
      %p175 = por %p173, %p174
      %p176 = scmp.ne.s32.totalorder %s165, %s168
      %p177 = scmp.eq.s32.totalorder %s108, 1
      %p178 = por %p176, %p177
      %p179 = scmp.ne.s32.totalorder %s168, %s169
      %p180 = scmp.eq.s32.totalorder %s108, 0
      %p181 = por %p179, %p180
      %p182 = scmp.ne.s32.totalorder %s168, %s169
      %p183 = scmp.eq.s32.totalorder %s109, 1
      %p184 = por %p182, %p183
      %p186 = scmp.ne.s32.totalorder %s169, %s185
      %p187 = scmp.eq.s32.totalorder %s109, 0
      %p188 = por %p186, %p187
      %s189 = ssub.s32 %s103, %s110
      %p190 = scmp.eq.s32.totalorder %s189, 0
      %s192 = sadd.s32 %s191, 1
      %s193 = scalar_select %p190, %s191, %s192
      %p196 = pneg %p190
      %p197 = scmp.eq.s32.totalorder %s103, 1
      %p198 = por %p196, %p197
      %p199 = scmp.ne.s32.totalorder %s191, %s194
      %p200 = scmp.eq.s32.totalorder %s103, 0
      %p201 = por %p199, %p200
      %p202 = scmp.ne.s32.totalorder %s191, %s194
      %p203 = scmp.eq.s32.totalorder %s108, 1
      %p204 = por %p202, %p203
      %p205 = scmp.ne.s32.totalorder %s194, %s195
      %p206 = scmp.eq.s32.totalorder %s108, 0
      %p207 = por %p205, %p206
      %p208 = scmp.ne.s32.totalorder %s194, %s195
      %p209 = scmp.eq.s32.totalorder %s109, 1
      %p210 = por %p208, %p209
      %p212 = scmp.ne.s32.totalorder %s195, %s211
      %p213 = scmp.eq.s32.totalorder %s109, 0
      %p214 = por %p212, %p213
      %s216 = sadd.s32 %s215, 1
      %p219 = scmp.eq.s32.totalorder %s103, 1
      %p220 = scmp.ne.s32.totalorder %s215, %s217
      %p221 = scmp.eq.s32.totalorder %s103, 0
      %p222 = por %p220, %p221
      %p223 = scmp.ne.s32.totalorder %s215, %s217
      %p224 = scmp.eq.s32.totalorder %s108, 1
      %p225 = por %p223, %p224
      %p226 = scmp.ne.s32.totalorder %s217, %s218
      %p227 = scmp.eq.s32.totalorder %s108, 0
      %p228 = por %p226, %p227
      %p229 = scmp.ne.s32.totalorder %s217, %s218
      %p230 = scmp.eq.s32.totalorder %s109, 1
      %p231 = por %p229, %p230
      %p233 = scmp.ne.s32.totalorder %s218, %s232
      %p234 = scmp.eq.s32.totalorder %s109, 0
      %p235 = por %p233, %p234
      %s237 = sadd.s32 %s236, 1
      %p240 = scmp.eq.s32.totalorder %s103, 1
      %p241 = scmp.ne.s32.totalorder %s236, %s238
      %p242 = scmp.eq.s32.totalorder %s103, 0
      %p243 = por %p241, %p242
      %p244 = scmp.ne.s32.totalorder %s236, %s238
      %p245 = scmp.eq.s32.totalorder %s108, 1
      %p246 = por %p244, %p245
      %p247 = scmp.ne.s32.totalorder %s238, %s239
      %p248 = scmp.eq.s32.totalorder %s108, 0
      %p249 = por %p247, %p248
      %p250 = scmp.ne.s32.totalorder %s238, %s239
      %p251 = scmp.eq.s32.totalorder %s109, 1
      %p252 = por %p250, %p251
      %p254 = scmp.ne.s32.totalorder %s239, %s253
      %p255 = scmp.eq.s32.totalorder %s109, 0
      %p256 = por %p254, %p255
      %s258 = sadd.s32 %s257, 1
      %p261 = scmp.eq.s32.totalorder %s103, 1
      %p262 = scmp.ne.s32.totalorder %s257, %s259
      %p263 = scmp.eq.s32.totalorder %s103, 0
      %p264 = por %p262, %p263
      %p265 = scmp.ne.s32.totalorder %s257, %s259
      %p266 = scmp.eq.s32.totalorder %s108, 1
      %p267 = por %p265, %p266
      %p268 = scmp.ne.s32.totalorder %s259, %s260
      %p269 = scmp.eq.s32.totalorder %s108, 0
      %p270 = por %p268, %p269
      %p271 = scmp.ne.s32.totalorder %s259, %s260
      %p272 = scmp.eq.s32.totalorder %s109, 1
      %p273 = por %p271, %p272
      %p275 = scmp.ne.s32.totalorder %s260, %s274
      %p276 = scmp.eq.s32.totalorder %s109, 0
      %p277 = por %p275, %p276
      %s279 = sadd.s32 %s278, 1
      %p282 = scmp.eq.s32.totalorder %s103, 1
      %p283 = scmp.ne.s32.totalorder %s278, %s280
      %p284 = scmp.eq.s32.totalorder %s103, 0
      %p285 = por %p283, %p284
      %p286 = scmp.ne.s32.totalorder %s278, %s280
      %p287 = scmp.eq.s32.totalorder %s108, 1
      %p288 = por %p286, %p287
      %p289 = scmp.ne.s32.totalorder %s280, %s281
      %p290 = scmp.eq.s32.totalorder %s108, 0
      %p291 = por %p289, %p290
      %p292 = scmp.ne.s32.totalorder %s280, %s281
      %p293 = scmp.eq.s32.totalorder %s109, 1
      %p294 = por %p292, %p293
      %p296 = scmp.ne.s32.totalorder %s281, %s295
      %p297 = scmp.eq.s32.totalorder %s109, 0
      %p298 = por %p296, %p297
      %s300 = sadd.s32 %s299, 1
      %p303 = scmp.eq.s32.totalorder %s103, 1
      %p304 = scmp.ne.s32.totalorder %s299, %s301
      %p305 = scmp.eq.s32.totalorder %s103, 0
      %p306 = por %p304, %p305
      %p307 = scmp.ne.s32.totalorder %s299, %s301
      %p308 = scmp.eq.s32.totalorder %s108, 1
      %p309 = por %p307, %p308
      %p310 = scmp.ne.s32.totalorder %s301, %s302
      %p311 = scmp.eq.s32.totalorder %s108, 0
      %p312 = por %p310, %p311
      %p313 = scmp.ne.s32.totalorder %s301, %s302
      %p314 = scmp.eq.s32.totalorder %s109, 1
      %p315 = por %p313, %p314
      %p317 = scmp.ne.s32.totalorder %s302, %s316
      %p318 = scmp.eq.s32.totalorder %s109, 0
      %p319 = por %p317, %p318
      %s321 = sadd.s32 %s320, 1
      %p324 = scmp.eq.s32.totalorder %s103, 1
      %p325 = scmp.ne.s32.totalorder %s320, %s322
      %p326 = scmp.eq.s32.totalorder %s103, 0
      %p327 = por %p325, %p326
      %p328 = scmp.ne.s32.totalorder %s320, %s322
      %p329 = scmp.eq.s32.totalorder %s108, 1
      %p330 = por %p328, %p329
      %p331 = scmp.ne.s32.totalorder %s322, %s323
      %p332 = scmp.eq.s32.totalorder %s108, 0
      %p333 = por %p331, %p332
      %p334 = scmp.ne.s32.totalorder %s322, %s323
      %p335 = scmp.eq.s32.totalorder %s109, 1
      %p336 = por %p334, %p335
      %p338 = scmp.ne.s32.totalorder %s323, %s337
      %p339 = scmp.eq.s32.totalorder %s109, 0
      %p340 = por %p338, %p339
      %s342 = sadd.s32 %s341, 1
      %p345 = scmp.eq.s32.totalorder %s103, 1
      %p346 = scmp.ne.s32.totalorder %s341, %s343
      %p347 = scmp.eq.s32.totalorder %s103, 0
      %p348 = por %p346, %p347
      %p349 = scmp.ne.s32.totalorder %s341, %s343
      %p350 = scmp.eq.s32.totalorder %s108, 1
      %p351 = por %p349, %p350
      %p352 = scmp.ne.s32.totalorder %s343, %s344
      %p353 = scmp.eq.s32.totalorder %s108, 0
      %p354 = por %p352, %p353
      %p355 = scmp.ne.s32.totalorder %s343, %s344
      %p356 = scmp.eq.s32.totalorder %s109, 1
      %p357 = por %p355, %p356
      %p359 = scmp.ne.s32.totalorder %s344, %s358
      %p360 = scmp.eq.s32.totalorder %s109, 0
      %p361 = por %p359, %p360
      %s363 = sadd.s32 %s362, 1
      %p366 = scmp.eq.s32.totalorder %s103, 1
      %p367 = scmp.ne.s32.totalorder %s362, %s364
      %p368 = scmp.eq.s32.totalorder %s103, 0
      %p369 = por %p367, %p368
      %p370 = scmp.ne.s32.totalorder %s362, %s364
      %p371 = scmp.eq.s32.totalorder %s108, 1
      %p372 = por %p370, %p371
      %p373 = scmp.ne.s32.totalorder %s364, %s365
      %p374 = scmp.eq.s32.totalorder %s108, 0
      %p375 = por %p373, %p374
      %p376 = scmp.ne.s32.totalorder %s364, %s365
      %p377 = scmp.eq.s32.totalorder %s109, 1
      %p378 = por %p376, %p377
      %p380 = scmp.ne.s32.totalorder %s365, %s379
      %p381 = scmp.eq.s32.totalorder %s109, 0
      %p382 = por %p380, %p381
      %s384 = sadd.s32 %s383, 1
      %p387 = scmp.eq.s32.totalorder %s103, 1
      %p388 = scmp.ne.s32.totalorder %s383, %s385
      %p389 = scmp.eq.s32.totalorder %s103, 0
      %p390 = por %p388, %p389
      %p391 = scmp.ne.s32.totalorder %s383, %s385
      %p392 = scmp.eq.s32.totalorder %s108, 1
      %p393 = por %p391, %p392
      %p394 = scmp.ne.s32.totalorder %s385, %s386
      %p395 = scmp.eq.s32.totalorder %s108, 0
      %p396 = por %p394, %p395
      %p397 = scmp.ne.s32.totalorder %s385, %s386
      %p398 = scmp.eq.s32.totalorder %s109, 1
      %p399 = por %p397, %p398
      %p401 = scmp.ne.s32.totalorder %s386, %s400
      %p402 = scmp.eq.s32.totalorder %s109, 0
      %p403 = por %p401, %p402
      %s405 = sadd.s32 %s404, 1
      %p408 = scmp.eq.s32.totalorder %s103, 1
      %p409 = scmp.ne.s32.totalorder %s404, %s406
      %p410 = scmp.eq.s32.totalorder %s103, 0
      %p411 = por %p409, %p410
      %p412 = scmp.ne.s32.totalorder %s404, %s406
      %p413 = scmp.eq.s32.totalorder %s108, 1
      %p414 = por %p412, %p413
      %p415 = scmp.ne.s32.totalorder %s406, %s407
      %p416 = scmp.eq.s32.totalorder %s108, 0
      %p417 = por %p415, %p416
      %p418 = scmp.ne.s32.totalorder %s406, %s407
      %p419 = scmp.eq.s32.totalorder %s109, 1
      %p420 = por %p418, %p419
      %p422 = scmp.ne.s32.totalorder %s407, %s421
      %p423 = scmp.eq.s32.totalorder %s109, 0
      %p424 = por %p422, %p423
      %s426 = sadd.s32 %s425, 1
      %p429 = scmp.eq.s32.totalorder %s103, 1
      %p430 = scmp.ne.s32.totalorder %s425, %s427
      %p431 = scmp.eq.s32.totalorder %s103, 0
      %p432 = por %p430, %p431
      %p433 = scmp.ne.s32.totalorder %s425, %s427
      %p434 = scmp.eq.s32.totalorder %s108, 1
      %p435 = por %p433, %p434
      %p436 = scmp.ne.s32.totalorder %s427, %s428
      %p437 = scmp.eq.s32.totalorder %s108, 0
      %p438 = por %p436, %p437
      %p439 = scmp.ne.s32.totalorder %s427, %s428
      %p440 = scmp.eq.s32.totalorder %s109, 1
      %p441 = por %p439, %p440
      %p443 = scmp.ne.s32.totalorder %s428, %s442
      %p444 = scmp.eq.s32.totalorder %s109, 0
      %p445 = por %p443, %p444
      %s447 = sadd.s32 %s446, 1
      %p450 = scmp.eq.s32.totalorder %s103, 1
      %p451 = scmp.ne.s32.totalorder %s446, %s448
      %p452 = scmp.eq.s32.totalorder %s103, 0
      %p453 = por %p451, %p452
      %p454 = scmp.ne.s32.totalorder %s446, %s448
      %p455 = scmp.eq.s32.totalorder %s108, 1
      %p456 = por %p454, %p455
      %p457 = scmp.ne.s32.totalorder %s448, %s449
      %p458 = scmp.eq.s32.totalorder %s108, 0
      %p459 = por %p457, %p458
      %p460 = scmp.ne.s32.totalorder %s448, %s449
      %p461 = scmp.eq.s32.totalorder %s109, 1
      %p462 = por %p460, %p461
      %p464 = scmp.ne.s32.totalorder %s449, %s463
      %p465 = scmp.eq.s32.totalorder %s109, 0
      %p466 = por %p464, %p465
      %s468 = sadd.s32 %s467, 1
      %p471 = scmp.eq.s32.totalorder %s103, 1
      %p472 = scmp.ne.s32.totalorder %s467, %s469
      %p473 = scmp.eq.s32.totalorder %s103, 0
      %p474 = por %p472, %p473
      %p475 = scmp.ne.s32.totalorder %s467, %s469
      %p476 = scmp.eq.s32.totalorder %s108, 1
      %p477 = por %p475, %p476
      %p478 = scmp.ne.s32.totalorder %s469, %s470
      %p479 = scmp.eq.s32.totalorder %s108, 0
      %p480 = por %p478, %p479
      %p481 = scmp.ne.s32.totalorder %s469, %s470
      %p482 = scmp.eq.s32.totalorder %s109, 1
      %p483 = por %p481, %p482
      %p485 = scmp.ne.s32.totalorder %s470, %s484
      %p486 = scmp.eq.s32.totalorder %s109, 0
      %p487 = por %p485, %p486
      %s489 = sadd.s32 %s488, 1
      %p492 = scmp.eq.s32.totalorder %s103, 1
      %p493 = scmp.ne.s32.totalorder %s488, %s490
      %p494 = scmp.eq.s32.totalorder %s103, 0
      %p495 = por %p493, %p494
      %p496 = scmp.ne.s32.totalorder %s488, %s490
      %p497 = scmp.eq.s32.totalorder %s108, 1
      %p498 = por %p496, %p497
      %p499 = scmp.ne.s32.totalorder %s490, %s491
      %p500 = scmp.eq.s32.totalorder %s108, 0
      %p501 = por %p499, %p500
      %p502 = scmp.ne.s32.totalorder %s490, %s491
      %p503 = scmp.eq.s32.totalorder %s109, 1
      %p504 = por %p502, %p503
      %p506 = scmp.ne.s32.totalorder %s491, %s505
      %p507 = scmp.eq.s32.totalorder %s109, 0
      %p508 = por %p506, %p507
      %s510 = sadd.s32 %s509, 1
      %p513 = scmp.eq.s32.totalorder %s103, 1
      %p514 = scmp.ne.s32.totalorder %s509, %s511
      %p515 = scmp.eq.s32.totalorder %s103, 0
      %p516 = por %p514, %p515
      %p517 = scmp.ne.s32.totalorder %s509, %s511
      %p518 = scmp.eq.s32.totalorder %s108, 1
      %p519 = por %p517, %p518
      %p520 = scmp.ne.s32.totalorder %s511, %s512
      %p521 = scmp.eq.s32.totalorder %s108, 0
      %p522 = por %p520, %p521
      %p523 = scmp.ne.s32.totalorder %s511, %s512
      %p524 = scmp.eq.s32.totalorder %s109, 1
      %p525 = por %p523, %p524
      %p527 = scmp.ne.s32.totalorder %s512, %s526
      %p528 = scmp.eq.s32.totalorder %s109, 0
      %p529 = por %p527, %p528
      %s531 = sadd.s32 %s530, 1
      %p534 = scmp.eq.s32.totalorder %s103, 1
      %p535 = scmp.ne.s32.totalorder %s530, %s532
      %p536 = scmp.eq.s32.totalorder %s103, 0
      %p537 = por %p535, %p536
      %p538 = scmp.ne.s32.totalorder %s530, %s532
      %p539 = scmp.eq.s32.totalorder %s108, 1
      %p540 = por %p538, %p539
      %p541 = scmp.ne.s32.totalorder %s532, %s533
      %p542 = scmp.eq.s32.totalorder %s108, 0
      %p543 = por %p541, %p542
      %p544 = scmp.ne.s32.totalorder %s532, %s533
      %p545 = scmp.eq.s32.totalorder %s109, 1
      %p546 = por %p544, %p545
      %p548 = scmp.ne.s32.totalorder %s533, %s547
      %p549 = scmp.eq.s32.totalorder %s109, 0
      %p550 = por %p548, %p549
      %s552 = sadd.s32 %s551, 1
      %p555 = scmp.eq.s32.totalorder %s103, 1
      %p556 = scmp.ne.s32.totalorder %s551, %s553
      %p557 = scmp.eq.s32.totalorder %s103, 0
      %p558 = por %p556, %p557
      %p559 = scmp.ne.s32.totalorder %s551, %s553
      %p560 = scmp.eq.s32.totalorder %s108, 1
      %p561 = por %p559, %p560
      %p562 = scmp.ne.s32.totalorder %s553, %s554
      %p563 = scmp.eq.s32.totalorder %s108, 0
      %p564 = por %p562, %p563
      %p565 = scmp.ne.s32.totalorder %s553, %s554
      %p566 = scmp.eq.s32.totalorder %s109, 1
      %p567 = por %p565, %p566
      %p569 = scmp.ne.s32.totalorder %s554, %s568
      %p570 = scmp.eq.s32.totalorder %s109, 0
      %p571 = por %p569, %p570
      %s573 = sadd.s32 %s572, 1
      %p576 = scmp.eq.s32.totalorder %s103, 1
      %p577 = scmp.ne.s32.totalorder %s572, %s574
      %p578 = scmp.eq.s32.totalorder %s103, 0
      %p579 = por %p577, %p578
      %p580 = scmp.ne.s32.totalorder %s572, %s574
      %p581 = scmp.eq.s32.totalorder %s108, 1
      %p582 = por %p580, %p581
      %p583 = scmp.ne.s32.totalorder %s574, %s575
      %p584 = scmp.eq.s32.totalorder %s108, 0
      %p585 = por %p583, %p584
      %p586 = scmp.ne.s32.totalorder %s574, %s575
      %p587 = scmp.eq.s32.totalorder %s109, 1
      %p588 = por %p586, %p587
      %p590 = scmp.ne.s32.totalorder %s575, %s589
      %p591 = scmp.eq.s32.totalorder %s109, 0
      %p592 = por %p590, %p591
      %s594 = sadd.s32 %s593, 1
      %p597 = scmp.eq.s32.totalorder %s103, 1
      %p598 = scmp.ne.s32.totalorder %s593, %s595
      %p599 = scmp.eq.s32.totalorder %s103, 0
      %p600 = por %p598, %p599
      %p601 = scmp.ne.s32.totalorder %s593, %s595
      %p602 = scmp.eq.s32.totalorder %s108, 1
      %p603 = por %p601, %p602
      %p604 = scmp.ne.s32.totalorder %s595, %s596
      %p605 = scmp.eq.s32.totalorder %s108, 0
      %p606 = por %p604, %p605
      %p607 = scmp.ne.s32.totalorder %s595, %s596
      %p608 = scmp.eq.s32.totalorder %s109, 1
      %p609 = por %p607, %p608
      %p611 = scmp.ne.s32.totalorder %s596, %s610
      %p612 = scmp.eq.s32.totalorder %s109, 0
      %p613 = por %p611, %p612
      %s615 = sadd.s32 %s614, 1
      %p618 = scmp.eq.s32.totalorder %s103, 1
      %p619 = scmp.ne.s32.totalorder %s614, %s616
      %p620 = scmp.eq.s32.totalorder %s103, 0
      %p621 = por %p619, %p620
      %p622 = scmp.ne.s32.totalorder %s614, %s616
      %p623 = scmp.eq.s32.totalorder %s108, 1
      %p624 = por %p622, %p623
      %p625 = scmp.ne.s32.totalorder %s616, %s617
      %p626 = scmp.eq.s32.totalorder %s108, 0
      %p627 = por %p625, %p626
      %p628 = scmp.ne.s32.totalorder %s616, %s617
      %p629 = scmp.eq.s32.totalorder %s109, 1
      %p630 = por %p628, %p629
      %p632 = scmp.ne.s32.totalorder %s617, %s631
      %p633 = scmp.eq.s32.totalorder %s109, 0
      %p634 = por %p632, %p633
      %s636 = sadd.s32 %s635, 1
      %p639 = scmp.eq.s32.totalorder %s103, 1
      %p640 = scmp.ne.s32.totalorder %s635, %s637
      %p641 = scmp.eq.s32.totalorder %s103, 0
      %p642 = por %p640, %p641
      %p643 = scmp.ne.s32.totalorder %s635, %s637
      %p644 = scmp.eq.s32.totalorder %s108, 1
      %p645 = por %p643, %p644
      %p646 = scmp.ne.s32.totalorder %s637, %s638
      %p647 = scmp.eq.s32.totalorder %s108, 0
      %p648 = por %p646, %p647
      %p649 = scmp.ne.s32.totalorder %s637, %s638
      %p650 = scmp.eq.s32.totalorder %s109, 1
      %p651 = por %p649, %p650
      %p653 = scmp.ne.s32.totalorder %s638, %s652
      %p654 = scmp.eq.s32.totalorder %s109, 0
      %p655 = por %p653, %p654
      %s657 = sadd.s32 %s656, 1
      %p660 = scmp.eq.s32.totalorder %s103, 1
      %p661 = scmp.ne.s32.totalorder %s656, %s658
      %p662 = scmp.eq.s32.totalorder %s103, 0
      %p663 = por %p661, %p662
      %p664 = scmp.ne.s32.totalorder %s656, %s658
      %p665 = scmp.eq.s32.totalorder %s108, 1
      %p666 = por %p664, %p665
      %p667 = scmp.ne.s32.totalorder %s658, %s659
      %p668 = scmp.eq.s32.totalorder %s108, 0
      %p669 = por %p667, %p668
      %p670 = scmp.ne.s32.totalorder %s658, %s659
      %p671 = scmp.eq.s32.totalorder %s109, 1
      %p672 = por %p670, %p671
      %p674 = scmp.ne.s32.totalorder %s659, %s673
      %p675 = scmp.eq.s32.totalorder %s109, 0
      %p676 = por %p674, %p675
      %s678 = sadd.s32 %s677, 1
      %p681 = scmp.eq.s32.totalorder %s103, 1
      %p682 = scmp.ne.s32.totalorder %s677, %s679
      %p683 = scmp.eq.s32.totalorder %s103, 0
      %p684 = por %p682, %p683
      %p685 = scmp.ne.s32.totalorder %s677, %s679
      %p686 = scmp.eq.s32.totalorder %s108, 1
      %p687 = por %p685, %p686
      %p688 = scmp.ne.s32.totalorder %s679, %s680
      %p689 = scmp.eq.s32.totalorder %s108, 0
      %p690 = por %p688, %p689
      %p691 = scmp.ne.s32.totalorder %s679, %s680
      %p692 = scmp.eq.s32.totalorder %s109, 1
      %p693 = por %p691, %p692
      %p695 = scmp.ne.s32.totalorder %s680, %s694
      %p696 = scmp.eq.s32.totalorder %s109, 0
      %p697 = por %p695, %p696
      %s699 = sadd.s32 %s698, 1
      %p702 = scmp.eq.s32.totalorder %s103, 1
      %p703 = scmp.ne.s32.totalorder %s698, %s700
      %p704 = scmp.eq.s32.totalorder %s103, 0
      %p705 = por %p703, %p704
      %p706 = scmp.ne.s32.totalorder %s698, %s700
      %p707 = scmp.eq.s32.totalorder %s108, 1
      %p708 = por %p706, %p707
      %p709 = scmp.ne.s32.totalorder %s700, %s701
      %p710 = scmp.eq.s32.totalorder %s108, 0
      %p711 = por %p709, %p710
      %p712 = scmp.ne.s32.totalorder %s700, %s701
      %p713 = scmp.eq.s32.totalorder %s109, 1
      %p714 = por %p712, %p713
      %p716 = scmp.ne.s32.totalorder %s701, %s715
      %p717 = scmp.eq.s32.totalorder %s109, 0
      %p718 = por %p716, %p717
      %s720 = sadd.s32 %s719, 1
      %p723 = scmp.eq.s32.totalorder %s103, 1
      %p724 = scmp.ne.s32.totalorder %s719, %s721
      %p725 = scmp.eq.s32.totalorder %s103, 0
      %p726 = por %p724, %p725
      %p727 = scmp.ne.s32.totalorder %s719, %s721
      %p728 = scmp.eq.s32.totalorder %s108, 1
      %p729 = por %p727, %p728
      %p730 = scmp.ne.s32.totalorder %s721, %s722
      %p731 = scmp.eq.s32.totalorder %s108, 0
      %p732 = por %p730, %p731
      %p733 = scmp.ne.s32.totalorder %s721, %s722
      %p734 = scmp.eq.s32.totalorder %s109, 1
      %p735 = por %p733, %p734
      %p737 = scmp.ne.s32.totalorder %s722, %s736
      %p738 = scmp.eq.s32.totalorder %s109, 0
      %p739 = por %p737, %p738
      %s741 = sadd.s32 %s740, 1
      %p744 = scmp.eq.s32.totalorder %s103, 1
      %p745 = scmp.ne.s32.totalorder %s740, %s742
      %p746 = scmp.eq.s32.totalorder %s103, 0
      %p747 = por %p745, %p746
      %p748 = scmp.ne.s32.totalorder %s740, %s742
      %p749 = scmp.eq.s32.totalorder %s108, 1
      %p750 = por %p748, %p749
      %p751 = scmp.ne.s32.totalorder %s742, %s743
      %p752 = scmp.eq.s32.totalorder %s108, 0
      %p753 = por %p751, %p752
      %p754 = scmp.ne.s32.totalorder %s742, %s743
      %p755 = scmp.eq.s32.totalorder %s109, 1
      %p756 = por %p754, %p755
      %p758 = scmp.ne.s32.totalorder %s743, %s757
      %p759 = scmp.eq.s32.totalorder %s109, 0
      %p760 = por %p758, %p759
      %s762 = sadd.s32 %s761, 1
      %p765 = scmp.eq.s32.totalorder %s103, 1
      %p766 = scmp.ne.s32.totalorder %s761, %s763
      %p767 = scmp.eq.s32.totalorder %s103, 0
      %p768 = por %p766, %p767
      %p769 = scmp.ne.s32.totalorder %s761, %s763
      %p770 = scmp.eq.s32.totalorder %s108, 1
      %p771 = por %p769, %p770
      %p772 = scmp.ne.s32.totalorder %s763, %s764
      %p773 = scmp.eq.s32.totalorder %s108, 0
      %p774 = por %p772, %p773
      %p775 = scmp.ne.s32.totalorder %s763, %s764
      %p776 = scmp.eq.s32.totalorder %s109, 1
      %p777 = por %p775, %p776
      %p779 = scmp.ne.s32.totalorder %s764, %s778
      %p780 = scmp.eq.s32.totalorder %s109, 0
      %p781 = por %p779, %p780
      %s783 = sadd.s32 %s782, 1
      %p786 = scmp.eq.s32.totalorder %s103, 1
      %p787 = scmp.ne.s32.totalorder %s782, %s784
      %p788 = scmp.eq.s32.totalorder %s103, 0
      %p789 = por %p787, %p788
      %p790 = scmp.ne.s32.totalorder %s782, %s784
      %p791 = scmp.eq.s32.totalorder %s108, 1
      %p792 = por %p790, %p791
      %p793 = scmp.ne.s32.totalorder %s784, %s785
      %p794 = scmp.eq.s32.totalorder %s108, 0
      %p795 = por %p793, %p794
      %p796 = scmp.ne.s32.totalorder %s784, %s785
      %p797 = scmp.eq.s32.totalorder %s109, 1
      %p798 = por %p796, %p797
      %p800 = scmp.ne.s32.totalorder %s785, %s799
      %p801 = scmp.eq.s32.totalorder %s109, 0
      %p802 = por %p800, %p801
      %s804 = sadd.s32 %s803, 1
      %p807 = scmp.eq.s32.totalorder %s103, 1
      %p808 = scmp.ne.s32.totalorder %s803, %s805
      %p809 = scmp.eq.s32.totalorder %s103, 0
      %p810 = por %p808, %p809
      %p811 = scmp.ne.s32.totalorder %s803, %s805
      %p812 = scmp.eq.s32.totalorder %s108, 1
      %p813 = por %p811, %p812
      %p814 = scmp.ne.s32.totalorder %s805, %s806
      %p815 = scmp.eq.s32.totalorder %s108, 0
      %p816 = por %p814, %p815
      %p817 = scmp.ne.s32.totalorder %s805, %s806
      %p818 = scmp.eq.s32.totalorder %s109, 1
      %p819 = por %p817, %p818
      %p821 = scmp.ne.s32.totalorder %s806, %s820
      %p822 = scmp.eq.s32.totalorder %s109, 0
      %p823 = por %p821, %p822
      %s825 = sadd.s32 %s824, 1
      %p828 = scmp.eq.s32.totalorder %s103, 1
      %p829 = scmp.ne.s32.totalorder %s824, %s826
      %p830 = scmp.eq.s32.totalorder %s103, 0
      %p831 = por %p829, %p830
      %p832 = scmp.ne.s32.totalorder %s824, %s826
      %p833 = scmp.eq.s32.totalorder %s108, 1
      %p834 = por %p832, %p833
      %p835 = scmp.ne.s32.totalorder %s826, %s827
      %p836 = scmp.eq.s32.totalorder %s108, 0
      %p837 = por %p835, %p836
      %p838 = scmp.ne.s32.totalorder %s826, %s827
      %p839 = scmp.eq.s32.totalorder %s109, 1
      %p840 = por %p838, %p839
      %p842 = scmp.ne.s32.totalorder %s827, %s841
      %p843 = scmp.eq.s32.totalorder %s109, 0
      %p844 = por %p842, %p843
      %s846 = sadd.s32 %s845, 1
      %p849 = scmp.eq.s32.totalorder %s103, 1
      %p850 = scmp.ne.s32.totalorder %s845, %s847
      %p851 = scmp.eq.s32.totalorder %s103, 0
      %p852 = por %p850, %p851
      %p853 = scmp.ne.s32.totalorder %s845, %s847
      %p854 = scmp.eq.s32.totalorder %s108, 1
      %p855 = por %p853, %p854
      %p856 = scmp.ne.s32.totalorder %s847, %s848
      %p857 = scmp.eq.s32.totalorder %s108, 0
      %p858 = por %p856, %p857
      %p859 = scmp.ne.s32.totalorder %s847, %s848
      %p860 = scmp.eq.s32.totalorder %s109, 1
      %p861 = por %p859, %p860
      %p863 = scmp.ne.s32.totalorder %s848, %s862
      %p864 = scmp.eq.s32.totalorder %s109, 0
      %p865 = por %p863, %p864
      %s867 = sadd.s32 %s866, 1
      %p870 = scmp.eq.s32.totalorder %s103, 1
      %p871 = scmp.ne.s32.totalorder %s866, %s868
      %p872 = scmp.eq.s32.totalorder %s103, 0
      %p873 = por %p871, %p872
      %p874 = scmp.ne.s32.totalorder %s866, %s868
      %p875 = scmp.eq.s32.totalorder %s108, 1
      %p876 = por %p874, %p875
      %p877 = scmp.ne.s32.totalorder %s868, %s869
      %p878 = scmp.eq.s32.totalorder %s108, 0
      %p879 = por %p877, %p878
      %p880 = scmp.ne.s32.totalorder %s868, %s869
      %p881 = scmp.eq.s32.totalorder %s109, 1
      %p882 = por %p880, %p881
      %p884 = scmp.ne.s32.totalorder %s869, %s883
      %p885 = scmp.eq.s32.totalorder %s109, 0
      %p886 = por %p884, %p885
      %s888 = sadd.s32 %s887, 1
      %p891 = scmp.eq.s32.totalorder %s103, 1
      %p892 = scmp.ne.s32.totalorder %s887, %s889
      %p893 = scmp.eq.s32.totalorder %s103, 0
      %p894 = por %p892, %p893
      %p895 = scmp.ne.s32.totalorder %s887, %s889
      %p896 = scmp.eq.s32.totalorder %s108, 1
      %p897 = por %p895, %p896
      %p898 = scmp.ne.s32.totalorder %s889, %s890
      %p899 = scmp.eq.s32.totalorder %s108, 0
      %p900 = por %p898, %p899
      %p901 = scmp.ne.s32.totalorder %s889, %s890
      %p902 = scmp.eq.s32.totalorder %s109, 1
      %p903 = por %p901, %p902
      %p905 = scmp.ne.s32.totalorder %s890, %s904
      %p906 = scmp.eq.s32.totalorder %s109, 0
      %p907 = por %p905, %p906
      %s909 = sadd.s32 %s908, 1
      %p912 = scmp.eq.s32.totalorder %s103, 1
      %p913 = scmp.ne.s32.totalorder %s908, %s910
      %p914 = scmp.eq.s32.totalorder %s103, 0
      %p915 = por %p913, %p914
      %p916 = scmp.ne.s32.totalorder %s908, %s910
      %p917 = scmp.eq.s32.totalorder %s108, 1
      %p918 = por %p916, %p917
      %p919 = scmp.ne.s32.totalorder %s910, %s911
      %p920 = scmp.eq.s32.totalorder %s108, 0
      %p921 = por %p919, %p920
      %p922 = scmp.ne.s32.totalorder %s910, %s911
      %p923 = scmp.eq.s32.totalorder %s109, 1
      %p924 = por %p922, %p923
      %p926 = scmp.ne.s32.totalorder %s911, %s925
      %p927 = scmp.eq.s32.totalorder %s109, 0
      %p928 = por %p926, %p927
      %s930 = sadd.s32 %s929, 1
      %p933 = scmp.eq.s32.totalorder %s103, 1
      %p934 = scmp.ne.s32.totalorder %s929, %s931
      %p935 = scmp.eq.s32.totalorder %s103, 0
      %p936 = por %p934, %p935
      %p937 = scmp.ne.s32.totalorder %s929, %s931
      %p938 = scmp.eq.s32.totalorder %s108, 1
      %p939 = por %p937, %p938
      %p940 = scmp.ne.s32.totalorder %s931, %s932
      %p941 = scmp.eq.s32.totalorder %s108, 0
      %p942 = por %p940, %p941
      %p943 = scmp.ne.s32.totalorder %s931, %s932
      %p944 = scmp.eq.s32.totalorder %s109, 1
      %p945 = por %p943, %p944
      %p947 = scmp.ne.s32.totalorder %s932, %s946
      %p948 = scmp.eq.s32.totalorder %s109, 0
      %p949 = por %p947, %p948
      %s951 = sadd.s32 %s950, 1
      %p954 = scmp.eq.s32.totalorder %s103, 1
      %p955 = scmp.ne.s32.totalorder %s950, %s952
      %p956 = scmp.eq.s32.totalorder %s103, 0
      %p957 = por %p955, %p956
      %p958 = scmp.ne.s32.totalorder %s950, %s952
      %p959 = scmp.eq.s32.totalorder %s108, 1
      %p960 = por %p958, %p959
      %p961 = scmp.ne.s32.totalorder %s952, %s953
      %p962 = scmp.eq.s32.totalorder %s108, 0
      %p963 = por %p961, %p962
      %p964 = scmp.ne.s32.totalorder %s952, %s953
      %p965 = scmp.eq.s32.totalorder %s109, 1
      %p966 = por %p964, %p965
      %p968 = scmp.ne.s32.totalorder %s953, %s967
      %p969 = scmp.eq.s32.totalorder %s109, 0
      %p970 = por %p968, %p969
      %s972 = sadd.s32 %s971, 1
      %p975 = scmp.eq.s32.totalorder %s103, 1
      %p976 = scmp.ne.s32.totalorder %s971, %s973
      %p977 = scmp.eq.s32.totalorder %s103, 0
      %p978 = por %p976, %p977
      %p979 = scmp.ne.s32.totalorder %s971, %s973
      %p980 = scmp.eq.s32.totalorder %s108, 1
      %p981 = por %p979, %p980
      %p982 = scmp.ne.s32.totalorder %s973, %s974
      %p983 = scmp.eq.s32.totalorder %s108, 0
      %p984 = por %p982, %p983
      %p985 = scmp.ne.s32.totalorder %s973, %s974
      %p986 = scmp.eq.s32.totalorder %s109, 1
      %p987 = por %p985, %p986
      %p989 = scmp.ne.s32.totalorder %s974, %s988
      %p990 = scmp.eq.s32.totalorder %s109, 0
      %p991 = por %p989, %p990
      %s993 = sadd.s32 %s992, 1
      %p996 = scmp.eq.s32.totalorder %s103, 1
      %p997 = scmp.ne.s32.totalorder %s992, %s994
      %p998 = scmp.eq.s32.totalorder %s103, 0
      %p999 = por %p997, %p998
      %p1000 = scmp.ne.s32.totalorder %s992, %s994
      %p1001 = scmp.eq.s32.totalorder %s108, 1
      %p1002 = por %p1000, %p1001
      %p1003 = scmp.ne.s32.totalorder %s994, %s995
      %p1004 = scmp.eq.s32.totalorder %s108, 0
      %p1005 = por %p1003, %p1004
      %p1006 = scmp.ne.s32.totalorder %s994, %s995
      %p1007 = scmp.eq.s32.totalorder %s109, 1
      %p1008 = por %p1006, %p1007
      %p1010 = scmp.ne.s32.totalorder %s995, %s1009
      %p1011 = scmp.eq.s32.totalorder %s109, 0
      %p1012 = por %p1010, %p1011
      %s1014 = sadd.s32 %s1013, 1
      %p1017 = scmp.eq.s32.totalorder %s103, 1
      %p1018 = scmp.ne.s32.totalorder %s1013, %s1015
      %p1019 = scmp.eq.s32.totalorder %s103, 0
      %p1020 = por %p1018, %p1019
      %p1021 = scmp.ne.s32.totalorder %s1013, %s1015
      %p1022 = scmp.eq.s32.totalorder %s108, 1
      %p1023 = por %p1021, %p1022
      %p1024 = scmp.ne.s32.totalorder %s1015, %s1016
      %p1025 = scmp.eq.s32.totalorder %s108, 0
      %p1026 = por %p1024, %p1025
      %p1027 = scmp.ne.s32.totalorder %s1015, %s1016
      %p1028 = scmp.eq.s32.totalorder %s109, 1
      %p1029 = por %p1027, %p1028
      %p1031 = scmp.ne.s32.totalorder %s1016, %s1030
      %p1032 = scmp.eq.s32.totalorder %s109, 0
      %p1033 = por %p1031, %p1032
      %s1035 = sadd.s32 %s1034, 1
      %p1038 = scmp.eq.s32.totalorder %s103, 1
      %p1039 = scmp.ne.s32.totalorder %s1034, %s1036
      %p1040 = scmp.eq.s32.totalorder %s103, 0
      %p1041 = por %p1039, %p1040
      %p1042 = scmp.ne.s32.totalorder %s1034, %s1036
      %p1043 = scmp.eq.s32.totalorder %s108, 1
      %p1044 = por %p1042, %p1043
      %p1045 = scmp.ne.s32.totalorder %s1036, %s1037
      %p1046 = scmp.eq.s32.totalorder %s108, 0
      %p1047 = por %p1045, %p1046
      %p1048 = scmp.ne.s32.totalorder %s1036, %s1037
      %p1049 = scmp.eq.s32.totalorder %s109, 1
      %p1050 = por %p1048, %p1049
      %p1052 = scmp.ne.s32.totalorder %s1037, %s1051
      %p1053 = scmp.eq.s32.totalorder %s109, 0
      %p1054 = por %p1052, %p1053
      %s1056 = sadd.s32 %s1055, 1
      %p1059 = scmp.eq.s32.totalorder %s103, 1
      %p1060 = scmp.ne.s32.totalorder %s1055, %s1057
      %p1061 = scmp.eq.s32.totalorder %s103, 0
      %p1062 = por %p1060, %p1061
      %p1063 = scmp.ne.s32.totalorder %s1055, %s1057
      %p1064 = scmp.eq.s32.totalorder %s108, 1
      %p1065 = por %p1063, %p1064
      %p1066 = scmp.ne.s32.totalorder %s1057, %s1058
      %p1067 = scmp.eq.s32.totalorder %s108, 0
      %p1068 = por %p1066, %p1067
      %p1069 = scmp.ne.s32.totalorder %s1057, %s1058
      %p1070 = scmp.eq.s32.totalorder %s109, 1
      %p1071 = por %p1069, %p1070
      %p1073 = scmp.ne.s32.totalorder %s1058, %s1072
      %p1074 = scmp.eq.s32.totalorder %s109, 0
      %p1075 = por %p1073, %p1074
      %s1077 = sadd.s32 %s1076, 1
      %p1080 = scmp.eq.s32.totalorder %s103, 1
      %p1081 = scmp.ne.s32.totalorder %s1076, %s1078
      %p1082 = scmp.eq.s32.totalorder %s103, 0
      %p1083 = por %p1081, %p1082
      %p1084 = scmp.ne.s32.totalorder %s1076, %s1078
      %p1085 = scmp.eq.s32.totalorder %s108, 1
      %p1086 = por %p1084, %p1085
      %p1087 = scmp.ne.s32.totalorder %s1078, %s1079
      %p1088 = scmp.eq.s32.totalorder %s108, 0
      %p1089 = por %p1087, %p1088
      %p1090 = scmp.ne.s32.totalorder %s1078, %s1079
      %p1091 = scmp.eq.s32.totalorder %s109, 1
      %p1092 = por %p1090, %p1091
      %p1094 = scmp.ne.s32.totalorder %s1079, %s1093
      %p1095 = scmp.eq.s32.totalorder %s109, 0
      %p1096 = por %p1094, %p1095
      %s1097 = ssub.s32 %s103, %s110
      %p1098 = scmp.eq.s32.totalorder %s1097, 0
      %s1100 = sadd.s32 %s1099, 1
      %s1101 = scalar_select %p1098, %s1099, %s1100
      %p1104 = pneg %p1098
      %p1105 = scmp.eq.s32.totalorder %s103, 1
      %p1106 = por %p1104, %p1105
      %p1107 = scmp.ne.s32.totalorder %s1099, %s1102
      %p1108 = scmp.eq.s32.totalorder %s103, 0
      %p1109 = por %p1107, %p1108
      %p1110 = scmp.ne.s32.totalorder %s1099, %s1102
      %p1111 = scmp.eq.s32.totalorder %s108, 1
      %p1112 = por %p1110, %p1111
      %p1113 = scmp.ne.s32.totalorder %s1102, %s1103
      %p1114 = scmp.eq.s32.totalorder %s108, 0
      %p1115 = por %p1113, %p1114
      %p1116 = scmp.ne.s32.totalorder %s1102, %s1103
      %p1117 = scmp.eq.s32.totalorder %s109, 1
      %p1118 = por %p1116, %p1117
      %p1120 = scmp.ne.s32.totalorder %s1103, %s1119
      %p1121 = scmp.eq.s32.totalorder %s109, 0
      %p1122 = por %p1120, %p1121
      %p1123 = scmp.le.s32.totalorder 1, %s103
      %p1124 = scmp.lt.s32.totalorder %s103, 3
      %p1125 = pnand %p1123, %p1124
      %p1126 = pneg %p1125
      // Predicated region
      $region9: #{tpu_custom_call.1} parent=5 // pred_check
        _
      $region10: #{tpu_custom_call.1} parent=5 // pred_check_branch
        %1128 = sbr.rel (%p1125) target = $region12
      $region11: #{tpu_custom_call.1} parent=5 // pred_region
        %s1129 = ssub.s32 %s103, 1
        // Predicated region
        $region13: #{tpu_custom_call.1} parent=11 // pred_check
          %p1130 = pneg %p228
        $region14: #{tpu_custom_call.1} parent=11 // pred_check_branch
          %1132 = sbr.rel (%p1130) target = $region16
        $region15: #{tpu_custom_call.1} parent=11 // pred_region
          _
        $region16: #{tpu_custom_call.1} parent=11 // pred_fallthru
          _
        // Predicated region
        $region17: #{tpu_custom_call.1} parent=11 // pred_check
          %p1133 = pneg %p249
        $region18: #{tpu_custom_call.1} parent=11 // pred_check_branch
          %1135 = sbr.rel (%p1133) target = $region20
        $region19: #{tpu_custom_call.1} parent=11 // pred_region
          _
        $region20: #{tpu_custom_call.1} parent=11 // pred_fallthru
          _
        // Predicated region
        $region21: #{tpu_custom_call.1} parent=11 // pred_check
          %p1136 = pneg %p270
        $region22: #{tpu_custom_call.1} parent=11 // pred_check_branch
          %1138 = sbr.rel (%p1136) target = $region24
        $region23: #{tpu_custom_call.1} parent=11 // pred_region
          _
        $region24: #{tpu_custom_call.1} parent=11 // pred_fallthru
          _
        // Predicated region
        $region25: #{tpu_custom_call.1} parent=11 // pred_check
          %p1139 = pneg %p291
        $region26: #{tpu_custom_call.1} parent=11 // pred_check_branch
          %1141 = sbr.rel (%p1139) target = $region28
        $region27: #{tpu_custom_call.1} parent=11 // pred_region
          _
        $region28: #{tpu_custom_call.1} parent=11 // pred_fallthru
          _
        // Predicated region
        $region29: #{tpu_custom_call.1} parent=11 // pred_check
          %p1142 = pneg %p312
        $region30: #{tpu_custom_call.1} parent=11 // pred_check_branch
          %1144 = sbr.rel (%p1142) target = $region32
        $region31: #{tpu_custom_call.1} parent=11 // pred_region
          _
        $region32: #{tpu_custom_call.1} parent=11 // pred_fallthru
          _
        // Predicated region
        $region33: #{tpu_custom_call.1} parent=11 // pred_check
          %p1145 = pneg %p333
        $region34: #{tpu_custom_call.1} parent=11 // pred_check_branch
          %1147 = sbr.rel (%p1145) target = $region36
        $region35: #{tpu_custom_call.1} parent=11 // pred_region
          _
        $region36: #{tpu_custom_call.1} parent=11 // pred_fallthru
          _
        // Predicated region
        $region37: #{tpu_custom_call.1} parent=11 // pred_check
          %p1148 = pneg %p354
        $region38: #{tpu_custom_call.1} parent=11 // pred_check_branch
          %1150 = sbr.rel (%p1148) target = $region40
        $region39: #{tpu_custom_call.1} parent=11 // pred_region
          _
        $region40: #{tpu_custom_call.1} parent=11 // pred_fallthru
          _
        // Predicated region
        $region41: #{tpu_custom_call.1} parent=11 // pred_check
          %p1151 = pneg %p375
        $region42: #{tpu_custom_call.1} parent=11 // pred_check_branch
          %1153 = sbr.rel (%p1151) target = $region44
        $region43: #{tpu_custom_call.1} parent=11 // pred_region
          _
        $region44: #{tpu_custom_call.1} parent=11 // pred_fallthru
          _
        // Predicated region
        $region45: #{tpu_custom_call.1} parent=11 // pred_check
          %p1154 = pneg %p396
        $region46: #{tpu_custom_call.1} parent=11 // pred_check_branch
          %1156 = sbr.rel (%p1154) target = $region48
        $region47: #{tpu_custom_call.1} parent=11 // pred_region
          _
        $region48: #{tpu_custom_call.1} parent=11 // pred_fallthru
          _
        // Predicated region
        $region49: #{tpu_custom_call.1} parent=11 // pred_check
          %p1157 = pneg %p417
        $region50: #{tpu_custom_call.1} parent=11 // pred_check_branch
          %1159 = sbr.rel (%p1157) target = $region52
        $region51: #{tpu_custom_call.1} parent=11 // pred_region
          _
        $region52: #{tpu_custom_call.1} parent=11 // pred_fallthru
          _
        // Predicated region
        $region53: #{tpu_custom_call.1} parent=11 // pred_check
          %p1160 = pneg %p438
        $region54: #{tpu_custom_call.1} parent=11 // pred_check_branch
          %1162 = sbr.rel (%p1160) target = $region56
        $region55: #{tpu_custom_call.1} parent=11 // pred_region
          _
        $region56: #{tpu_custom_call.1} parent=11 // pred_fallthru
          _
        // Predicated region
        $region57: #{tpu_custom_call.1} parent=11 // pred_check
          %p1163 = pneg %p459
        $region58: #{tpu_custom_call.1} parent=11 // pred_check_branch
          %1165 = sbr.rel (%p1163) target = $region60
        $region59: #{tpu_custom_call.1} parent=11 // pred_region
          _
        $region60: #{tpu_custom_call.1} parent=11 // pred_fallthru
          _
        // Predicated region
        $region61: #{tpu_custom_call.1} parent=11 // pred_check
          %p1166 = pneg %p480
        $region62: #{tpu_custom_call.1} parent=11 // pred_check_branch
          %1168 = sbr.rel (%p1166) target = $region64
        $region63: #{tpu_custom_call.1} parent=11 // pred_region
          _
        $region64: #{tpu_custom_call.1} parent=11 // pred_fallthru
          _
        // Predicated region
        $region65: #{tpu_custom_call.1} parent=11 // pred_check
          %p1169 = pneg %p501
        $region66: #{tpu_custom_call.1} parent=11 // pred_check_branch
          %1171 = sbr.rel (%p1169) target = $region68
        $region67: #{tpu_custom_call.1} parent=11 // pred_region
          _
        $region68: #{tpu_custom_call.1} parent=11 // pred_fallthru
          _
        // Predicated region
        $region69: #{tpu_custom_call.1} parent=11 // pred_check
          %p1172 = pneg %p522
        $region70: #{tpu_custom_call.1} parent=11 // pred_check_branch
          %1174 = sbr.rel (%p1172) target = $region72
        $region71: #{tpu_custom_call.1} parent=11 // pred_region
          _
        $region72: #{tpu_custom_call.1} parent=11 // pred_fallthru
          _
        // Predicated region
        $region73: #{tpu_custom_call.1} parent=11 // pred_check
          %p1175 = pneg %p543
        $region74: #{tpu_custom_call.1} parent=11 // pred_check_branch
          %1177 = sbr.rel (%p1175) target = $region76
        $region75: #{tpu_custom_call.1} parent=11 // pred_region
          _
        $region76: #{tpu_custom_call.1} parent=11 // pred_fallthru
          _
        // Predicated region
        $region77: #{tpu_custom_call.1} parent=11 // pred_check
          %p1178 = pneg %p564
        $region78: #{tpu_custom_call.1} parent=11 // pred_check_branch
          %1180 = sbr.rel (%p1178) target = $region80
        $region79: #{tpu_custom_call.1} parent=11 // pred_region
          _
        $region80: #{tpu_custom_call.1} parent=11 // pred_fallthru
          _
        // Predicated region
        $region81: #{tpu_custom_call.1} parent=11 // pred_check
          %p1181 = pneg %p585
        $region82: #{tpu_custom_call.1} parent=11 // pred_check_branch
          %1183 = sbr.rel (%p1181) target = $region84
        $region83: #{tpu_custom_call.1} parent=11 // pred_region
          _
        $region84: #{tpu_custom_call.1} parent=11 // pred_fallthru
          _
        // Predicated region
        $region85: #{tpu_custom_call.1} parent=11 // pred_check
          %p1184 = pneg %p606
        $region86: #{tpu_custom_call.1} parent=11 // pred_check_branch
          %1186 = sbr.rel (%p1184) target = $region88
        $region87: #{tpu_custom_call.1} parent=11 // pred_region
          _
        $region88: #{tpu_custom_call.1} parent=11 // pred_fallthru
          _
        // Predicated region
        $region89: #{tpu_custom_call.1} parent=11 // pred_check
          %p1187 = pneg %p627
        $region90: #{tpu_custom_call.1} parent=11 // pred_check_branch
          %1189 = sbr.rel (%p1187) target = $region92
        $region91: #{tpu_custom_call.1} parent=11 // pred_region
          _
        $region92: #{tpu_custom_call.1} parent=11 // pred_fallthru
          _
        // Predicated region
        $region93: #{tpu_custom_call.1} parent=11 // pred_check
          %p1190 = pneg %p648
        $region94: #{tpu_custom_call.1} parent=11 // pred_check_branch
          %1192 = sbr.rel (%p1190) target = $region96
        $region95: #{tpu_custom_call.1} parent=11 // pred_region
          _
        $region96: #{tpu_custom_call.1} parent=11 // pred_fallthru
          _
        // Predicated region
        $region97: #{tpu_custom_call.1} parent=11 // pred_check
          %p1193 = pneg %p669
        $region98: #{tpu_custom_call.1} parent=11 // pred_check_branch
          %1195 = sbr.rel (%p1193) target = $region100
        $region99: #{tpu_custom_call.1} parent=11 // pred_region
          %s1197 = ssub.s32 16, 16
          %1198 = vsyncadd [#allocation3], %s1197
          %s1200 = sshll.u32 [#allocation2], 4
          %s1201 = int_to_ptr.vmem [resolvable:$true] %s1200
          %1203 = dma.hbm_to_vmem [thread:$0]  %s51, 16, %s1201, [#allocation3]
        $region100: #{tpu_custom_call.1} parent=11 // pred_fallthru
          _
        // Predicated region
        $region101: #{tpu_custom_call.1} parent=11 // pred_check
          %p1204 = pneg %p690
        $region102: #{tpu_custom_call.1} parent=11 // pred_check_branch
          %1206 = sbr.rel (%p1204) target = $region104
        $region103: #{tpu_custom_call.1} parent=11 // pred_region
          _
        $region104: #{tpu_custom_call.1} parent=11 // pred_fallthru
          _
        // Predicated region
        $region105: #{tpu_custom_call.1} parent=11 // pred_check
          %p1207 = pneg %p711
        $region106: #{tpu_custom_call.1} parent=11 // pred_check_branch
          %1209 = sbr.rel (%p1207) target = $region108
        $region107: #{tpu_custom_call.1} parent=11 // pred_region
          _
        $region108: #{tpu_custom_call.1} parent=11 // pred_fallthru
          _
        // Predicated region
        $region109: #{tpu_custom_call.1} parent=11 // pred_check
          %p1210 = pneg %p732
        $region110: #{tpu_custom_call.1} parent=11 // pred_check_branch
          %1212 = sbr.rel (%p1210) target = $region112
        $region111: #{tpu_custom_call.1} parent=11 // pred_region
          _
        $region112: #{tpu_custom_call.1} parent=11 // pred_fallthru
          _
        // Predicated region
        $region113: #{tpu_custom_call.1} parent=11 // pred_check
          %p1213 = pneg %p753
        $region114: #{tpu_custom_call.1} parent=11 // pred_check_branch
          %1215 = sbr.rel (%p1213) target = $region116
        $region115: #{tpu_custom_call.1} parent=11 // pred_region
          _
        $region116: #{tpu_custom_call.1} parent=11 // pred_fallthru
          _
        // Predicated region
        $region117: #{tpu_custom_call.1} parent=11 // pred_check
          %p1216 = pneg %p774
        $region118: #{tpu_custom_call.1} parent=11 // pred_check_branch
          %1218 = sbr.rel (%p1216) target = $region120
        $region119: #{tpu_custom_call.1} parent=11 // pred_region
          _
        $region120: #{tpu_custom_call.1} parent=11 // pred_fallthru
          _
        // Predicated region
        $region121: #{tpu_custom_call.1} parent=11 // pred_check
          %p1219 = pneg %p795
        $region122: #{tpu_custom_call.1} parent=11 // pred_check_branch
          %1221 = sbr.rel (%p1219) target = $region124
        $region123: #{tpu_custom_call.1} parent=11 // pred_region
          _
        $region124: #{tpu_custom_call.1} parent=11 // pred_fallthru
          _
        // Predicated region
        $region125: #{tpu_custom_call.1} parent=11 // pred_check
          %p1222 = pneg %p816
        $region126: #{tpu_custom_call.1} parent=11 // pred_check_branch
          %1224 = sbr.rel (%p1222) target = $region128
        $region127: #{tpu_custom_call.1} parent=11 // pred_region
          _
        $region128: #{tpu_custom_call.1} parent=11 // pred_fallthru
          _
        // Predicated region
        $region129: #{tpu_custom_call.1} parent=11 // pred_check
          %p1225 = pneg %p837
        $region130: #{tpu_custom_call.1} parent=11 // pred_check_branch
          %1227 = sbr.rel (%p1225) target = $region132
        $region131: #{tpu_custom_call.1} parent=11 // pred_region
          _
        $region132: #{tpu_custom_call.1} parent=11 // pred_fallthru
          _
        // Predicated region
        $region133: #{tpu_custom_call.1} parent=11 // pred_check
          %p1228 = pneg %p858
        $region134: #{tpu_custom_call.1} parent=11 // pred_check_branch
          %1230 = sbr.rel (%p1228) target = $region136
        $region135: #{tpu_custom_call.1} parent=11 // pred_region
          _
        $region136: #{tpu_custom_call.1} parent=11 // pred_fallthru
          _
        // Predicated region
        $region137: #{tpu_custom_call.1} parent=11 // pred_check
          %p1231 = pneg %p879
        $region138: #{tpu_custom_call.1} parent=11 // pred_check_branch
          %1233 = sbr.rel (%p1231) target = $region140
        $region139: #{tpu_custom_call.1} parent=11 // pred_region
          _
        $region140: #{tpu_custom_call.1} parent=11 // pred_fallthru
          _
        // Predicated region
        $region141: #{tpu_custom_call.1} parent=11 // pred_check
          %p1234 = pneg %p900
        $region142: #{tpu_custom_call.1} parent=11 // pred_check_branch
          %1236 = sbr.rel (%p1234) target = $region144
        $region143: #{tpu_custom_call.1} parent=11 // pred_region
          _
        $region144: #{tpu_custom_call.1} parent=11 // pred_fallthru
          _
        // Predicated region
        $region145: #{tpu_custom_call.1} parent=11 // pred_check
          %p1237 = pneg %p921
        $region146: #{tpu_custom_call.1} parent=11 // pred_check_branch
          %1239 = sbr.rel (%p1237) target = $region148
        $region147: #{tpu_custom_call.1} parent=11 // pred_region
          _
        $region148: #{tpu_custom_call.1} parent=11 // pred_fallthru
          _
        // Predicated region
        $region149: #{tpu_custom_call.1} parent=11 // pred_check
          %p1240 = pneg %p942
        $region150: #{tpu_custom_call.1} parent=11 // pred_check_branch
          %1242 = sbr.rel (%p1240) target = $region152
        $region151: #{tpu_custom_call.1} parent=11 // pred_region
          _
        $region152: #{tpu_custom_call.1} parent=11 // pred_fallthru
          _
        // Predicated region
        $region153: #{tpu_custom_call.1} parent=11 // pred_check
          %p1243 = pneg %p963
        $region154: #{tpu_custom_call.1} parent=11 // pred_check_branch
          %1245 = sbr.rel (%p1243) target = $region156
        $region155: #{tpu_custom_call.1} parent=11 // pred_region
          _
        $region156: #{tpu_custom_call.1} parent=11 // pred_fallthru
          _
        // Predicated region
        $region157: #{tpu_custom_call.1} parent=11 // pred_check
          %p1246 = pneg %p984
        $region158: #{tpu_custom_call.1} parent=11 // pred_check_branch
          %1248 = sbr.rel (%p1246) target = $region160
        $region159: #{tpu_custom_call.1} parent=11 // pred_region
          _
        $region160: #{tpu_custom_call.1} parent=11 // pred_fallthru
          _
        // Predicated region
        $region161: #{tpu_custom_call.1} parent=11 // pred_check
          %p1249 = pneg %p1005
        $region162: #{tpu_custom_call.1} parent=11 // pred_check_branch
          %1251 = sbr.rel (%p1249) target = $region164
        $region163: #{tpu_custom_call.1} parent=11 // pred_region
          _
        $region164: #{tpu_custom_call.1} parent=11 // pred_fallthru
          _
        // Predicated region
        $region165: #{tpu_custom_call.1} parent=11 // pred_check
          %p1252 = pneg %p1026
        $region166: #{tpu_custom_call.1} parent=11 // pred_check_branch
          %1254 = sbr.rel (%p1252) target = $region168
        $region167: #{tpu_custom_call.1} parent=11 // pred_region
          _
        $region168: #{tpu_custom_call.1} parent=11 // pred_fallthru
          _
        // Predicated region
        $region169: #{tpu_custom_call.1} parent=11 // pred_check
          %p1255 = pneg %p1047
        $region170: #{tpu_custom_call.1} parent=11 // pred_check_branch
          %1257 = sbr.rel (%p1255) target = $region172
        $region171: #{tpu_custom_call.1} parent=11 // pred_region
          _
        $region172: #{tpu_custom_call.1} parent=11 // pred_fallthru
          _
        // Predicated region
        $region173: #{tpu_custom_call.1} parent=11 // pred_check
          %p1258 = pneg %p1068
        $region174: #{tpu_custom_call.1} parent=11 // pred_check_branch
          %1260 = sbr.rel (%p1258) target = $region176
        $region175: #{tpu_custom_call.1} parent=11 // pred_region
          _
        $region176: #{tpu_custom_call.1} parent=11 // pred_fallthru
          _
        // Predicated region
        $region177: #{tpu_custom_call.1} parent=11 // pred_check
          %p1261 = pneg %p1089
        $region178: #{tpu_custom_call.1} parent=11 // pred_check_branch
          %1263 = sbr.rel (%p1261) target = $region180
        $region179: #{tpu_custom_call.1} parent=11 // pred_region
          _
        $region180: #{tpu_custom_call.1} parent=11 // pred_fallthru
          _
      $region12: #{tpu_custom_call.1} parent=5 // pred_fallthru
        _
      %p1264 = scmp.lt.s32.totalorder %s103, 2
      // Predicated region
      $region181: #{tpu_custom_call.1} parent=5 // pred_check
        %p1265 = pneg %p1264
      $region182: #{tpu_custom_call.1} parent=5 // pred_check_branch
        %1267 = sbr.rel (%p1265) target = $region184
      $region183: #{tpu_custom_call.1} parent=5 // pred_region
        // Predicated region
        $region185: #{tpu_custom_call.1} parent=183 // pred_check
          %p1268 = pneg %p123
        $region186: #{tpu_custom_call.1} parent=183 // pred_check_branch
          %1270 = sbr.rel (%p1268) target = $region188
        $region187: #{tpu_custom_call.1} parent=183 // pred_region
          %p1271 = scmp.lt.s32.totalorder %s103, 1
          %s1272 = scalar_select %p1271, %s103, 1
          %s1273 = smul.addr %s1272, 4
          %s1274 = smul.addr %s1273, 8
          %s1275 = scalar_lea.vmem %s1, %s1274
        $region188: #{tpu_custom_call.1} parent=183 // pred_fallthru
          _
        // Predicated region
        $region189: #{tpu_custom_call.1} parent=183 // pred_check
          %p1276 = pneg %p149
        $region190: #{tpu_custom_call.1} parent=183 // pred_check_branch
          %1278 = sbr.rel (%p1276) target = $region192
        $region191: #{tpu_custom_call.1} parent=183 // pred_region
          %p1279 = scmp.lt.s32.totalorder %s103, 1
          %s1280 = scalar_select %p1279, %s103, 1
          %s1281 = smul.addr %s1280, 8
          %s1282 = scalar_lea.vmem %s3, %s1281
        $region192: #{tpu_custom_call.1} parent=183 // pred_fallthru
          _
        // Predicated region
        $region193: #{tpu_custom_call.1} parent=183 // pred_check
          %p1283 = pneg %p175
        $region194: #{tpu_custom_call.1} parent=183 // pred_check_branch
          %1285 = sbr.rel (%p1283) target = $region196
        $region195: #{tpu_custom_call.1} parent=183 // pred_region
          %p1286 = scmp.lt.s32.totalorder %s103, 1
          %s1287 = scalar_select %p1286, %s103, 1
          %s1288 = smul.addr %s1287, 2
          %s1289 = smul.addr %s1288, 8
          %s1290 = scalar_lea.vmem %s5, %s1289
        $region196: #{tpu_custom_call.1} parent=183 // pred_fallthru
          _
        // Predicated region
        $region197: #{tpu_custom_call.1} parent=183 // pred_check
          %p1291 = pneg %p201
        $region198: #{tpu_custom_call.1} parent=183 // pred_check_branch
          %1293 = sbr.rel (%p1291) target = $region200
        $region199: #{tpu_custom_call.1} parent=183 // pred_region
          %p1294 = scmp.lt.s32.totalorder %s103, 1
          %s1295 = scalar_select %p1294, %s103, 1
          %s1296 = smul.addr %s1295, 2
          %s1297 = smul.addr %s1296, 8
          %s1298 = scalar_lea.vmem %s7, %s1297
        $region200: #{tpu_custom_call.1} parent=183 // pred_fallthru
          _
      $region184: #{tpu_custom_call.1} parent=5 // pred_fallthru
        _
      %p1299 = scmp.le.s32.totalorder 1, %s103
      %p1300 = scmp.lt.s32.totalorder %s103, 3
      %p1301 = pnand %p1299, %p1300
      %p1302 = pneg %p1301
      // Predicated region
      $region201: #{tpu_custom_call.1} parent=5 // pred_check
        _
      $region202: #{tpu_custom_call.1} parent=5 // pred_check_branch
        %1304 = sbr.rel (%p1301) target = $region204
      $region203: #{tpu_custom_call.1} parent=5 // pred_region
        %s1305 = ssub.s32 %s103, 1
        // Predicated region
        $region205: #{tpu_custom_call.1} parent=203 // pred_check
          %p1306 = pneg %p669
        $region206: #{tpu_custom_call.1} parent=203 // pred_check_branch
          %1308 = sbr.rel (%p1306) target = $region208
        $region207: #{tpu_custom_call.1} parent=203 // pred_region
          %1309 = dma.done [#allocation3], 16
        $region208: #{tpu_custom_call.1} parent=203 // pred_fallthru
          _
        %p1310 = scmp.lt.s32.totalorder %s108, 1
        %s1311 = scalar_select %p1310, %s108, 1
        %s1312 = smul.addr %s1311, 4
        %s1313 = smul.addr %s1312, 8
        %s1314 = scalar_lea.vmem %s1, %s1313
        %p1315 = pneg %p129
        %p1316 = pneg %p126
        %p1317 = scmp.lt.s32.totalorder %s108, 1
        %s1318 = scalar_select %p1317, %s108, 1
        %s1319 = smul.addr %s1318, 8
        %s1320 = scalar_lea.vmem %s3, %s1319
        %p1321 = pneg %p155
        %p1322 = pneg %p152
        %p1323 = scmp.lt.s32.totalorder %s108, 1
        %s1324 = scalar_select %p1323, %s108, 1
        %s1325 = smul.addr %s1324, 2
        %s1326 = smul.addr %s1325, 8
        %s1327 = scalar_lea.vmem %s5, %s1326
        %p1328 = pneg %p181
        %p1329 = pneg %p178
        %p1330 = scmp.lt.s32.totalorder %s108, 1
        %s1331 = scalar_select %p1330, %s108, 1
        %s1332 = smul.addr %s1331, 2
        %s1333 = smul.addr %s1332, 8
        %s1334 = scalar_lea.vmem %s7, %s1333
        %p1335 = pneg %p207
        %p1336 = pneg %p204
        %p1337 = pneg %p228
        %p1338 = pneg %p225
        %p1339 = pneg %p249
        %p1340 = pneg %p246
        %p1341 = pneg %p270
        %p1342 = pneg %p267
        %p1343 = pneg %p291
        %p1344 = pneg %p288
        %p1345 = pneg %p312
        %p1346 = pneg %p309
        %p1347 = pneg %p333
        %p1348 = pneg %p330
        %p1349 = pneg %p354
        %p1350 = pneg %p351
        %p1351 = pneg %p375
        %p1352 = pneg %p372
        %p1353 = pneg %p396
        %p1354 = pneg %p393
        %p1355 = pneg %p417
        %p1356 = pneg %p414
        %p1357 = pneg %p438
        %p1358 = pneg %p435
        %p1359 = pneg %p459
        %p1360 = pneg %p456
        %p1361 = pneg %p480
        %p1362 = pneg %p477
        %p1363 = pneg %p501
        %p1364 = pneg %p498
        %p1365 = pneg %p522
        %p1366 = pneg %p519
        %p1367 = pneg %p543
        %p1368 = pneg %p540
        %p1369 = pneg %p564
        %p1370 = pneg %p561
        %p1371 = pneg %p585
        %p1372 = pneg %p582
        %p1373 = pneg %p606
        %p1374 = pneg %p603
        %p1375 = pneg %p627
        %p1376 = pneg %p624
        %p1377 = pneg %p648
        %p1378 = pneg %p645
        %p1379 = pneg %p669
        %p1380 = pneg %p666
        %p1381 = pneg %p690
        %p1382 = pneg %p687
        %p1383 = pneg %p711
        %p1384 = pneg %p708
        %p1385 = pneg %p732
        %p1386 = pneg %p729
        %p1387 = pneg %p753
        %p1388 = pneg %p750
        %p1389 = pneg %p774
        %p1390 = pneg %p771
        %p1391 = pneg %p795
        %p1392 = pneg %p792
        %p1393 = pneg %p816
        %p1394 = pneg %p813
        %p1395 = pneg %p837
        %p1396 = pneg %p834
        %p1397 = pneg %p858
        %p1398 = pneg %p855
        %p1399 = pneg %p879
        %p1400 = pneg %p876
        %p1401 = pneg %p900
        %p1402 = pneg %p897
        %p1403 = pneg %p921
        %p1404 = pneg %p918
        %p1405 = pneg %p942
        %p1406 = pneg %p939
        %p1407 = pneg %p963
        %p1408 = pneg %p960
        %p1409 = pneg %p984
        %p1410 = pneg %p981
        %p1411 = pneg %p1005
        %p1412 = pneg %p1002
        %p1413 = pneg %p1026
        %p1414 = pneg %p1023
        %p1415 = pneg %p1047
        %p1416 = pneg %p1044
        %p1417 = pneg %p1068
        %p1418 = pneg %p1065
        %p1419 = pneg %p1089
        %p1420 = pneg %p1086
        %p1421 = pneg %p1115
        %p1422 = pneg %p1112
        %s1423 = sand.u32 %s1102, 1
        %s1424 = scalar_lea.sflag [#allocation4], %s1423
        %s1425 = sand.u32 %s1102, 1
        %s1426 = smul.addr %s1425, 32
        %s1427 = scalar_lea.vmem [#allocation5], %s1426
        %p1428 = scmp.lt.s32.totalorder %s108, 1
        %s1429 = scalar_select %p1428, %s108, 1
        %s1430 = smul.addr %s1429, 4
        %s1431 = smul.addr %s1430, 8
        %s1432 = scalar_lea.vmem %s1, %s1431
        %p1433 = scmp.lt.s32.totalorder %s108, 1
        %s1434 = scalar_select %p1433, %s108, 1
        %s1435 = smul.addr %s1434, 8
        %s1436 = scalar_lea.vmem %s3, %s1435
        %p1437 = scmp.lt.s32.totalorder %s108, 1
        %s1438 = scalar_select %p1437, %s108, 1
        %s1439 = smul.addr %s1438, 2
        %s1440 = smul.addr %s1439, 8
        %s1441 = scalar_lea.vmem %s5, %s1440
        %p1442 = scmp.lt.s32.totalorder %s108, 1
        %s1443 = scalar_select %p1442, %s108, 1
        %s1444 = smul.addr %s1443, 2
        %s1445 = smul.addr %s1444, 8
        %s1446 = scalar_lea.vmem %s7, %s1445
        %v1447 = vld [vmem:[%s9] sm:$0xff]
        %v1448 = vld [vmem:[%s9 + $0x8] sm:$0xff]
        %v1449 = vld [vmem:[%s11] sm:$0xff]
        %v1450 = vld [vmem:[%s11 + $0x8] sm:$0xff]
        %v1451 = vld [vmem:[%s13] sm:$0xff]
        %v1452 = vld [vmem:[%s13 + $0x8] sm:$0xff]
        %v1453 = vld [vmem:[%s15] sm:$0xff]
        %v1454 = vld [vmem:[%s15 + $0x8] sm:$0xff]
        %v1455 = vld [vmem:[%s17] sm:$0xff]
        %v1456 = vld [vmem:[%s17 + $0x8] sm:$0xff]
        %v1457 = vld [vmem:[%s19] sm:$0xff]
        %v1458 = vld [vmem:[%s19 + $0x8] sm:$0xff]
        %v1459 = vld [vmem:[%s21] sm:$0xff]
        %v1460 = vld [vmem:[%s21 + $0x8] sm:$0xff]
        %v1461 = vld [vmem:[%s21 + $0x10] sm:$0xff]
        %v1462 = vld [vmem:[%s21 + $0x18] sm:$0xff]
        %v1463 = vld [vmem:[%s23] sm:$0xff]
        %v1464 = vld [vmem:[%s23 + $0x8] sm:$0xff]
        %v1465 = vld [vmem:[%s23 + $0x10] sm:$0xff]
        %v1466 = vld [vmem:[%s23 + $0x18] sm:$0xff]
        %v1467 = vld [vmem:[%s25] sm:$0xff]
        %v1468 = vld [vmem:[%s25 + $0x8] sm:$0xff]
        %v1469 = vld [vmem:[%s25 + $0x10] sm:$0xff]
        %v1470 = vld [vmem:[%s25 + $0x18] sm:$0xff]
        %v1471 = vld [vmem:[%s27] sm:$0xff]
        %v1472 = vld [vmem:[%s27 + $0x8] sm:$0xff]
        %v1473 = vld [vmem:[%s27 + $0x10] sm:$0xff]
        %v1474 = vld [vmem:[%s27 + $0x18] sm:$0xff]
        %v1475 = vld [vmem:[%s29] sm:$0xff]
        %v1476 = vld [vmem:[%s29 + $0x8] sm:$0xff]
        %v1477 = vld [vmem:[%s29 + $0x10] sm:$0xff]
        %v1478 = vld [vmem:[%s29 + $0x18] sm:$0xff]
        %v1479 = vld [vmem:[%s31] sm:$0xff]
        %v1480 = vld [vmem:[%s31 + $0x8] sm:$0xff]
        %v1481 = vld [vmem:[%s31 + $0x10] sm:$0xff]
        %v1482 = vld [vmem:[%s31 + $0x18] sm:$0xff]
        %v1483 = vld [vmem:[%s33] sm:$0xff]
        %v1484 = vld [vmem:[%s33 + $0x8] sm:$0xff]
        %v1485 = vld [vmem:[%s33 + $0x10] sm:$0xff]
        %v1486 = vld [vmem:[%s33 + $0x18] sm:$0xff]
        %v1487 = vld [vmem:[%s35] sm:$0xff]
        %v1488 = vld [vmem:[%s35 + $0x8] sm:$0xff]
        %v1489 = vld [vmem:[%s35 + $0x10] sm:$0xff]
        %v1490 = vld [vmem:[%s35 + $0x18] sm:$0xff]
        %v1491 = vld [vmem:[%s37] sm:$0xff]
        %v1492 = vld [vmem:[%s37 + $0x8] sm:$0xff]
        %v1493 = vld [vmem:[%s37 + $0x10] sm:$0xff]
        %v1494 = vld [vmem:[%s37 + $0x18] sm:$0xff]
        %v1495 = vld [vmem:[%s39] sm:$0xff]
        %v1496 = vld [vmem:[%s39 + $0x8] sm:$0xff]
        %v1497 = vld [vmem:[%s39 + $0x10] sm:$0xff]
        %v1498 = vld [vmem:[%s39 + $0x18] sm:$0xff]
        %v1499 = vld [vmem:[%s41] sm:$0xff]
        %v1500 = vld [vmem:[%s43] sm:$0xff]
        %v1501 = vld [vmem:[%s45] sm:$0xff]
        %v1502 = vld [vmem:[%s45 + $0x8] sm:$0xff]
        %v1503 = vld [vmem:[%s45 + $0x10] sm:$0xff]
        %v1504 = vld [vmem:[%s45 + $0x18] sm:$0xff]
        %v1505 = vld [vmem:[%s47] sm:$0xff]
        %v1506 = vld [vmem:[%s47 + $0x8] sm:$0xff]
        %v1507 = vld [vmem:[%s47 + $0x10] sm:$0xff]
        %v1508 = vld [vmem:[%s47 + $0x18] sm:$0xff]
        %v1509 = vld [vmem:[%s49] sm:$0xff]
        %v1510 = vld [vmem:[#allocation2] sm:$0x1]
        %v1511 = vld [vmem:[%s53] sm:$0xff]
        %v1512 = vld [vmem:[%s53 + $0x8] sm:$0xff]
        %v1513 = vld [vmem:[%s53 + $0x10] sm:$0xff]
        %v1514 = vld [vmem:[%s53 + $0x18] sm:$0xff]
        %v1515 = vld [vmem:[%s55] sm:$0xff]
        %v1516 = vld [vmem:[%s55 + $0x8] sm:$0xff]
        %v1517 = vld [vmem:[%s55 + $0x10] sm:$0xff]
        %v1518 = vld [vmem:[%s55 + $0x18] sm:$0xff]
        %v1519 = vld [vmem:[%s57] sm:$0xff]
        %v1520 = vld [vmem:[%s59] sm:$0xff]
        %v1521 = vld [vmem:[%s61] sm:$0xff]
        %v1522 = vld [vmem:[%s61 + $0x8] sm:$0xff]
        %v1523 = vld [vmem:[%s63] sm:$0xff]
        %v1524 = vld [vmem:[%s63 + $0x8] sm:$0xff]
        %v1525 = vld [vmem:[%s65] sm:$0xff]
        %v1526 = vld [vmem:[%s65 + $0x8] sm:$0xff]
        %v1527 = vld [vmem:[%s67] sm:$0xff]
        %v1528 = vld [vmem:[%s67 + $0x8] sm:$0xff]
        %v1529 = vld [vmem:[%s69] sm:$0xff]
        %v1530 = vld [vmem:[%s69 + $0x8] sm:$0xff]
        %v1531 = vld [vmem:[%s71] sm:$0xff]
        %v1532 = vld [vmem:[%s71 + $0x8] sm:$0xff]
        %v1533 = vld [vmem:[%s73] sm:$0xff]
        %v1534 = vld [vmem:[%s73 + $0x8] sm:$0xff]
        %v1535 = vld [vmem:[%s73 + $0x10] sm:$0xff]
        %v1536 = vld [vmem:[%s73 + $0x18] sm:$0xff]
        %v1537 = vld [vmem:[%s75] sm:$0xff]
        %v1538 = vld [vmem:[%s75 + $0x8] sm:$0xff]
        %v1539 = vld [vmem:[%s75 + $0x10] sm:$0xff]
        %v1540 = vld [vmem:[%s75 + $0x18] sm:$0xff]
        %v1541 = vld [vmem:[%s77] sm:$0xff]
        %v1542 = vld [vmem:[%s77 + $0x8] sm:$0xff]
        %v1543 = vld [vmem:[%s77 + $0x10] sm:$0xff]
        %v1544 = vld [vmem:[%s77 + $0x18] sm:$0xff]
        %v1545 = vld [vmem:[%s79] sm:$0xff]
        %v1546 = vld [vmem:[%s79 + $0x8] sm:$0xff]
        %v1547 = vld [vmem:[%s79 + $0x10] sm:$0xff]
        %v1548 = vld [vmem:[%s79 + $0x18] sm:$0xff]
        %v1549 = vld [vmem:[%s81] sm:$0xff]
        %v1550 = vld [vmem:[%s81 + $0x8] sm:$0xff]
        %v1551 = vld [vmem:[%s81 + $0x10] sm:$0xff]
        %v1552 = vld [vmem:[%s81 + $0x18] sm:$0xff]
        %v1553 = vld [vmem:[%s83] sm:$0xff]
        %v1554 = vld [vmem:[%s83 + $0x8] sm:$0xff]
        %v1555 = vld [vmem:[%s83 + $0x10] sm:$0xff]
        %v1556 = vld [vmem:[%s83 + $0x18] sm:$0xff]
        %v1557 = vld [vmem:[%s85] sm:$0xff]
        %v1558 = vld [vmem:[%s85 + $0x8] sm:$0xff]
        %v1559 = vld [vmem:[%s85 + $0x10] sm:$0xff]
        %v1560 = vld [vmem:[%s85 + $0x18] sm:$0xff]
        %v1561 = vld [vmem:[%s87] sm:$0xff]
        %v1562 = vld [vmem:[%s87 + $0x8] sm:$0xff]
        %v1563 = vld [vmem:[%s87 + $0x10] sm:$0xff]
        %v1564 = vld [vmem:[%s87 + $0x18] sm:$0xff]
        %v1565 = vld [vmem:[%s89] sm:$0xff]
        %v1566 = vld [vmem:[%s89 + $0x8] sm:$0xff]
        %v1567 = vld [vmem:[%s89 + $0x10] sm:$0xff]
        %v1568 = vld [vmem:[%s89 + $0x18] sm:$0xff]
        %v1569 = vld [vmem:[%s91] sm:$0xff]
        %v1570 = vld [vmem:[%s91 + $0x8] sm:$0xff]
        %v1571 = vld [vmem:[%s91 + $0x10] sm:$0xff]
        %v1572 = vld [vmem:[%s91 + $0x18] sm:$0xff]
        %v1573 = vld [vmem:[%s1432] sm:$0xff]
        %v1574 = vld [vmem:[%s1432 + $0x8] sm:$0xff]
        %v1575 = vld [vmem:[%s1432 + $0x10] sm:$0xff]
        %v1576 = vld [vmem:[%s1432 + $0x18] sm:$0xff]
        %v1577 = vld [vmem:[%s1436] sm:$0x3f]
        %v1578 = vld [vmem:[%s1441] sm:$0xff]
        %v1579 = vld [vmem:[%s1441 + $0x8] sm:$0xff]
        %v1580 = vld [vmem:[%s1446] sm:$0xff]
        %v1581 = vld [vmem:[%s1446 + $0x8] sm:$0xff]
        %v1582 = vrot.slane %v1577, 1
        %v1583 = vrot.slane %v1577, 2
        %v1584 = vrot.slane %v1577, 3
        %v1585 = vrot.slane %v1577, 4
        %v1586 = vrot.slane %v1577, 5
        %v1587 = vlaneseq
        %v1588 = vshrl.u32 %v1587, 7
        %v1589 = vadd.s32 %v1588, 8
        %v1590 = vadd.s32 %v1588, 16
        %v1591 = vadd.s32 %v1588, 24
        %v1592 = vadd.s32 %v1588, 32
        %v1593 = vadd.s32 %v1588, 40
        %v1594 = vadd.s32 %v1588, 48
        %v1595 = vadd.s32 %v1588, 56
        %v1596 = vadd.s32 %v1588, 64
        %v1597 = vadd.s32 %v1588, 72
        %v1598 = vadd.s32 %v1588, 80
        %v1599 = vadd.s32 %v1588, 88
        %v1600 = vadd.s32 %v1588, 96
        %v1601 = vadd.s32 %v1588, 104
        %v1602 = vadd.s32 %v1588, 112
        %v1603 = vadd.s32 %v1588, 120
        %v1604 = vlaneseq
        %v1605 = vshrl.u32 %v1604, 7
        %v1606 = vsub.s32 0, %v1605
        %v1607 = vrot.slane %v1577, %v1606
        %v1608 = vlaneseq
        %v1609 = vshrl.u32 %v1608, 7
        %v1610 = vsub.s32 0, %v1609
        %v1611 = vrot.slane %v1582, %v1610
        %v1612 = vlaneseq
        %v1613 = vshrl.u32 %v1612, 7
        %v1614 = vsub.s32 0, %v1613
        %v1615 = vrot.slane %v1583, %v1614
        %v1616 = vlaneseq
        %v1617 = vshrl.u32 %v1616, 7
        %v1618 = vsub.s32 0, %v1617
        %v1619 = vrot.slane %v1584, %v1618
        %v1620 = vlaneseq
        %v1621 = vshrl.u32 %v1620, 7
        %v1622 = vsub.s32 0, %v1621
        %v1623 = vrot.slane %v1585, %v1622
        %v1624 = vlaneseq
        %v1625 = vshrl.u32 %v1624, 7
        %v1626 = vsub.s32 0, %v1625
        %v1627 = vrot.slane %v1586, %v1626
        %vm1628 = vcmp.eq.s32.totalorder %v1607, %v1588
        %vm1629 = vcmp.eq.s32.totalorder %v1611, %v1588
        %vm1630 = vcmp.eq.s32.totalorder %v1615, %v1588
        %vm1631 = vcmp.eq.s32.totalorder %v1619, %v1588
        %vm1632 = vcmp.eq.s32.totalorder %v1623, %v1588
        %vm1633 = vcmp.eq.s32.totalorder %v1627, %v1588
        %vm1634 = vcmp.eq.s32.totalorder %v1607, %v1589
        %vm1635 = vcmp.eq.s32.totalorder %v1611, %v1589
        %vm1636 = vcmp.eq.s32.totalorder %v1615, %v1589
        %vm1637 = vcmp.eq.s32.totalorder %v1619, %v1589
        %vm1638 = vcmp.eq.s32.totalorder %v1623, %v1589
        %vm1639 = vcmp.eq.s32.totalorder %v1627, %v1589
        %vm1640 = vcmp.eq.s32.totalorder %v1607, %v1590
        %vm1641 = vcmp.eq.s32.totalorder %v1611, %v1590
        %vm1642 = vcmp.eq.s32.totalorder %v1615, %v1590
        %vm1643 = vcmp.eq.s32.totalorder %v1619, %v1590
        %vm1644 = vcmp.eq.s32.totalorder %v1623, %v1590
        %vm1645 = vcmp.eq.s32.totalorder %v1627, %v1590
        %vm1646 = vcmp.eq.s32.totalorder %v1607, %v1591
        %vm1647 = vcmp.eq.s32.totalorder %v1611, %v1591
        %vm1648 = vcmp.eq.s32.totalorder %v1615, %v1591
        %vm1649 = vcmp.eq.s32.totalorder %v1619, %v1591
        %vm1650 = vcmp.eq.s32.totalorder %v1623, %v1591
        %vm1651 = vcmp.eq.s32.totalorder %v1627, %v1591
        %vm1652 = vcmp.eq.s32.totalorder %v1607, %v1592
        %vm1653 = vcmp.eq.s32.totalorder %v1611, %v1592
        %vm1654 = vcmp.eq.s32.totalorder %v1615, %v1592
        %vm1655 = vcmp.eq.s32.totalorder %v1619, %v1592
        %vm1656 = vcmp.eq.s32.totalorder %v1623, %v1592
        %vm1657 = vcmp.eq.s32.totalorder %v1627, %v1592
        %vm1658 = vcmp.eq.s32.totalorder %v1607, %v1593
        %vm1659 = vcmp.eq.s32.totalorder %v1611, %v1593
        %vm1660 = vcmp.eq.s32.totalorder %v1615, %v1593
        %vm1661 = vcmp.eq.s32.totalorder %v1619, %v1593
        %vm1662 = vcmp.eq.s32.totalorder %v1623, %v1593
        %vm1663 = vcmp.eq.s32.totalorder %v1627, %v1593
        %vm1664 = vcmp.eq.s32.totalorder %v1607, %v1594
        %vm1665 = vcmp.eq.s32.totalorder %v1611, %v1594
        %vm1666 = vcmp.eq.s32.totalorder %v1615, %v1594
        %vm1667 = vcmp.eq.s32.totalorder %v1619, %v1594
        %vm1668 = vcmp.eq.s32.totalorder %v1623, %v1594
        %vm1669 = vcmp.eq.s32.totalorder %v1627, %v1594
        %vm1670 = vcmp.eq.s32.totalorder %v1607, %v1595
        %vm1671 = vcmp.eq.s32.totalorder %v1611, %v1595
        %vm1672 = vcmp.eq.s32.totalorder %v1615, %v1595
        %vm1673 = vcmp.eq.s32.totalorder %v1619, %v1595
        %vm1674 = vcmp.eq.s32.totalorder %v1623, %v1595
        %vm1675 = vcmp.eq.s32.totalorder %v1627, %v1595
        %vm1676 = vcmp.eq.s32.totalorder %v1607, %v1596
        %vm1677 = vcmp.eq.s32.totalorder %v1611, %v1596
        %vm1678 = vcmp.eq.s32.totalorder %v1615, %v1596
        %vm1679 = vcmp.eq.s32.totalorder %v1619, %v1596
        %vm1680 = vcmp.eq.s32.totalorder %v1623, %v1596
        %vm1681 = vcmp.eq.s32.totalorder %v1627, %v1596
        %vm1682 = vcmp.eq.s32.totalorder %v1607, %v1597
        %vm1683 = vcmp.eq.s32.totalorder %v1611, %v1597
        %vm1684 = vcmp.eq.s32.totalorder %v1615, %v1597
        %vm1685 = vcmp.eq.s32.totalorder %v1619, %v1597
        %vm1686 = vcmp.eq.s32.totalorder %v1623, %v1597
        %vm1687 = vcmp.eq.s32.totalorder %v1627, %v1597
        %vm1688 = vcmp.eq.s32.totalorder %v1607, %v1598
        %vm1689 = vcmp.eq.s32.totalorder %v1611, %v1598
        %vm1690 = vcmp.eq.s32.totalorder %v1615, %v1598
        %vm1691 = vcmp.eq.s32.totalorder %v1619, %v1598
        %vm1692 = vcmp.eq.s32.totalorder %v1623, %v1598
        %vm1693 = vcmp.eq.s32.totalorder %v1627, %v1598
        %vm1694 = vcmp.eq.s32.totalorder %v1607, %v1599
        %vm1695 = vcmp.eq.s32.totalorder %v1611, %v1599
        %vm1696 = vcmp.eq.s32.totalorder %v1615, %v1599
        %vm1697 = vcmp.eq.s32.totalorder %v1619, %v1599
        %vm1698 = vcmp.eq.s32.totalorder %v1623, %v1599
        %vm1699 = vcmp.eq.s32.totalorder %v1627, %v1599
        %vm1700 = vcmp.eq.s32.totalorder %v1607, %v1600
        %vm1701 = vcmp.eq.s32.totalorder %v1611, %v1600
        %vm1702 = vcmp.eq.s32.totalorder %v1615, %v1600
        %vm1703 = vcmp.eq.s32.totalorder %v1619, %v1600
        %vm1704 = vcmp.eq.s32.totalorder %v1623, %v1600
        %vm1705 = vcmp.eq.s32.totalorder %v1627, %v1600
        %vm1706 = vcmp.eq.s32.totalorder %v1607, %v1601
        %vm1707 = vcmp.eq.s32.totalorder %v1611, %v1601
        %vm1708 = vcmp.eq.s32.totalorder %v1615, %v1601
        %vm1709 = vcmp.eq.s32.totalorder %v1619, %v1601
        %vm1710 = vcmp.eq.s32.totalorder %v1623, %v1601
        %vm1711 = vcmp.eq.s32.totalorder %v1627, %v1601
        %vm1712 = vcmp.eq.s32.totalorder %v1607, %v1602
        %vm1713 = vcmp.eq.s32.totalorder %v1611, %v1602
        %vm1714 = vcmp.eq.s32.totalorder %v1615, %v1602
        %vm1715 = vcmp.eq.s32.totalorder %v1619, %v1602
        %vm1716 = vcmp.eq.s32.totalorder %v1623, %v1602
        %vm1717 = vcmp.eq.s32.totalorder %v1627, %v1602
        %vm1718 = vcmp.eq.s32.totalorder %v1607, %v1603
        %vm1719 = vcmp.eq.s32.totalorder %v1611, %v1603
        %vm1720 = vcmp.eq.s32.totalorder %v1615, %v1603
        %vm1721 = vcmp.eq.s32.totalorder %v1619, %v1603
        %vm1722 = vcmp.eq.s32.totalorder %v1623, %v1603
        %vm1723 = vcmp.eq.s32.totalorder %v1627, %v1603
        %v1724 = vsel %vm1628, 1, 0
        %v1725 = vsel %vm1629, 1, 0
        %v1726 = vsel %vm1630, 1, 0
        %v1727 = vsel %vm1631, 1, 0
        %v1728 = vsel %vm1632, 1, 0
        %v1729 = vsel %vm1633, 1, 0
        %v1730 = vsel %vm1634, 1, 0
        %v1731 = vsel %vm1635, 1, 0
        %v1732 = vsel %vm1636, 1, 0
        %v1733 = vsel %vm1637, 1, 0
        %v1734 = vsel %vm1638, 1, 0
        %v1735 = vsel %vm1639, 1, 0
        %v1736 = vsel %vm1640, 1, 0
        %v1737 = vsel %vm1641, 1, 0
        %v1738 = vsel %vm1642, 1, 0
        %v1739 = vsel %vm1643, 1, 0
        %v1740 = vsel %vm1644, 1, 0
        %v1741 = vsel %vm1645, 1, 0
        %v1742 = vsel %vm1646, 1, 0
        %v1743 = vsel %vm1647, 1, 0
        %v1744 = vsel %vm1648, 1, 0
        %v1745 = vsel %vm1649, 1, 0
        %v1746 = vsel %vm1650, 1, 0
        %v1747 = vsel %vm1651, 1, 0
        %v1748 = vsel %vm1652, 1, 0
        %v1749 = vsel %vm1653, 1, 0
        %v1750 = vsel %vm1654, 1, 0
        %v1751 = vsel %vm1655, 1, 0
        %v1752 = vsel %vm1656, 1, 0
        %v1753 = vsel %vm1657, 1, 0
        %v1754 = vsel %vm1658, 1, 0
        %v1755 = vsel %vm1659, 1, 0
        %v1756 = vsel %vm1660, 1, 0
        %v1757 = vsel %vm1661, 1, 0
        %v1758 = vsel %vm1662, 1, 0
        %v1759 = vsel %vm1663, 1, 0
        %v1760 = vsel %vm1664, 1, 0
        %v1761 = vsel %vm1665, 1, 0
        %v1762 = vsel %vm1666, 1, 0
        %v1763 = vsel %vm1667, 1, 0
        %v1764 = vsel %vm1668, 1, 0
        %v1765 = vsel %vm1669, 1, 0
        %v1766 = vsel %vm1670, 1, 0
        %v1767 = vsel %vm1671, 1, 0
        %v1768 = vsel %vm1672, 1, 0
        %v1769 = vsel %vm1673, 1, 0
        %v1770 = vsel %vm1674, 1, 0
        %v1771 = vsel %vm1675, 1, 0
        %v1772 = vsel %vm1676, 1, 0
        %v1773 = vsel %vm1677, 1, 0
        %v1774 = vsel %vm1678, 1, 0
        %v1775 = vsel %vm1679, 1, 0
        %v1776 = vsel %vm1680, 1, 0
        %v1777 = vsel %vm1681, 1, 0
        %v1778 = vsel %vm1682, 1, 0
        %v1779 = vsel %vm1683, 1, 0
        %v1780 = vsel %vm1684, 1, 0
        %v1781 = vsel %vm1685, 1, 0
        %v1782 = vsel %vm1686, 1, 0
        %v1783 = vsel %vm1687, 1, 0
        %v1784 = vsel %vm1688, 1, 0
        %v1785 = vsel %vm1689, 1, 0
        %v1786 = vsel %vm1690, 1, 0
        %v1787 = vsel %vm1691, 1, 0
        %v1788 = vsel %vm1692, 1, 0
        %v1789 = vsel %vm1693, 1, 0
        %v1790 = vsel %vm1694, 1, 0
        %v1791 = vsel %vm1695, 1, 0
        %v1792 = vsel %vm1696, 1, 0
        %v1793 = vsel %vm1697, 1, 0
        %v1794 = vsel %vm1698, 1, 0
        %v1795 = vsel %vm1699, 1, 0
        %v1796 = vsel %vm1700, 1, 0
        %v1797 = vsel %vm1701, 1, 0
        %v1798 = vsel %vm1702, 1, 0
        %v1799 = vsel %vm1703, 1, 0
        %v1800 = vsel %vm1704, 1, 0
        %v1801 = vsel %vm1705, 1, 0
        %v1802 = vsel %vm1706, 1, 0
        %v1803 = vsel %vm1707, 1, 0
        %v1804 = vsel %vm1708, 1, 0
        %v1805 = vsel %vm1709, 1, 0
        %v1806 = vsel %vm1710, 1, 0
        %v1807 = vsel %vm1711, 1, 0
        %v1808 = vsel %vm1712, 1, 0
        %v1809 = vsel %vm1713, 1, 0
        %v1810 = vsel %vm1714, 1, 0
        %v1811 = vsel %vm1715, 1, 0
        %v1812 = vsel %vm1716, 1, 0
        %v1813 = vsel %vm1717, 1, 0
        %v1814 = vsel %vm1718, 1, 0
        %v1815 = vsel %vm1719, 1, 0
        %v1816 = vsel %vm1720, 1, 0
        %v1817 = vsel %vm1721, 1, 0
        %v1818 = vsel %vm1722, 1, 0
        %v1819 = vsel %vm1723, 1, 0
        %v1820 = vcvt.s32.f32 %v1724
        %v1821 = vcvt.s32.f32 %v1725
        %v1822 = vcvt.s32.f32 %v1726
        %v1823 = vcvt.s32.f32 %v1727
        %v1824 = vcvt.s32.f32 %v1728
        %v1825 = vcvt.s32.f32 %v1729
        %v1826 = vcvt.s32.f32 %v1730
        %v1827 = vcvt.s32.f32 %v1731
        %v1828 = vcvt.s32.f32 %v1732
        %v1829 = vcvt.s32.f32 %v1733
        %v1830 = vcvt.s32.f32 %v1734
        %v1831 = vcvt.s32.f32 %v1735
        %v1832 = vcvt.s32.f32 %v1736
        %v1833 = vcvt.s32.f32 %v1737
        %v1834 = vcvt.s32.f32 %v1738
        %v1835 = vcvt.s32.f32 %v1739
        %v1836 = vcvt.s32.f32 %v1740
        %v1837 = vcvt.s32.f32 %v1741
        %v1838 = vcvt.s32.f32 %v1742
        %v1839 = vcvt.s32.f32 %v1743
        %v1840 = vcvt.s32.f32 %v1744
        %v1841 = vcvt.s32.f32 %v1745
        %v1842 = vcvt.s32.f32 %v1746
        %v1843 = vcvt.s32.f32 %v1747
        %v1844 = vcvt.s32.f32 %v1748
        %v1845 = vcvt.s32.f32 %v1749
        %v1846 = vcvt.s32.f32 %v1750
        %v1847 = vcvt.s32.f32 %v1751
        %v1848 = vcvt.s32.f32 %v1752
        %v1849 = vcvt.s32.f32 %v1753
        %v1850 = vcvt.s32.f32 %v1754
        %v1851 = vcvt.s32.f32 %v1755
        %v1852 = vcvt.s32.f32 %v1756
        %v1853 = vcvt.s32.f32 %v1757
        %v1854 = vcvt.s32.f32 %v1758
        %v1855 = vcvt.s32.f32 %v1759
        %v1856 = vcvt.s32.f32 %v1760
        %v1857 = vcvt.s32.f32 %v1761
        %v1858 = vcvt.s32.f32 %v1762
        %v1859 = vcvt.s32.f32 %v1763
        %v1860 = vcvt.s32.f32 %v1764
        %v1861 = vcvt.s32.f32 %v1765
        %v1862 = vcvt.s32.f32 %v1766
        %v1863 = vcvt.s32.f32 %v1767
        %v1864 = vcvt.s32.f32 %v1768
        %v1865 = vcvt.s32.f32 %v1769
        %v1866 = vcvt.s32.f32 %v1770
        %v1867 = vcvt.s32.f32 %v1771
        %v1868 = vcvt.s32.f32 %v1772
        %v1869 = vcvt.s32.f32 %v1773
        %v1870 = vcvt.s32.f32 %v1774
        %v1871 = vcvt.s32.f32 %v1775
        %v1872 = vcvt.s32.f32 %v1776
        %v1873 = vcvt.s32.f32 %v1777
        %v1874 = vcvt.s32.f32 %v1778
        %v1875 = vcvt.s32.f32 %v1779
        %v1876 = vcvt.s32.f32 %v1780
        %v1877 = vcvt.s32.f32 %v1781
        %v1878 = vcvt.s32.f32 %v1782
        %v1879 = vcvt.s32.f32 %v1783
        %v1880 = vcvt.s32.f32 %v1784
        %v1881 = vcvt.s32.f32 %v1785
        %v1882 = vcvt.s32.f32 %v1786
        %v1883 = vcvt.s32.f32 %v1787
        %v1884 = vcvt.s32.f32 %v1788
        %v1885 = vcvt.s32.f32 %v1789
        %v1886 = vcvt.s32.f32 %v1790
        %v1887 = vcvt.s32.f32 %v1791
        %v1888 = vcvt.s32.f32 %v1792
        %v1889 = vcvt.s32.f32 %v1793
        %v1890 = vcvt.s32.f32 %v1794
        %v1891 = vcvt.s32.f32 %v1795
        %v1892 = vcvt.s32.f32 %v1796
        %v1893 = vcvt.s32.f32 %v1797
        %v1894 = vcvt.s32.f32 %v1798
        %v1895 = vcvt.s32.f32 %v1799
        %v1896 = vcvt.s32.f32 %v1800
        %v1897 = vcvt.s32.f32 %v1801
        %v1898 = vcvt.s32.f32 %v1802
        %v1899 = vcvt.s32.f32 %v1803
        %v1900 = vcvt.s32.f32 %v1804
        %v1901 = vcvt.s32.f32 %v1805
        %v1902 = vcvt.s32.f32 %v1806
        %v1903 = vcvt.s32.f32 %v1807
        %v1904 = vcvt.s32.f32 %v1808
        %v1905 = vcvt.s32.f32 %v1809
        %v1906 = vcvt.s32.f32 %v1810
        %v1907 = vcvt.s32.f32 %v1811
        %v1908 = vcvt.s32.f32 %v1812
        %v1909 = vcvt.s32.f32 %v1813
        %v1910 = vcvt.s32.f32 %v1814
        %v1911 = vcvt.s32.f32 %v1815
        %v1912 = vcvt.s32.f32 %v1816
        %v1913 = vcvt.s32.f32 %v1817
        %v1914 = vcvt.s32.f32 %v1818
        %v1915 = vcvt.s32.f32 %v1819
        %v1916 = vmul.f32 %v1580, 0.8
        %v1917 = vmul.f32 %v1581, 0.8
        %v1918 = vadd.f32 %v1916, 1.0
        %v1919 = vadd.f32 %v1917, 1.0
        %v1920 = vrcp.pop %v1918
        %v1921 = vmul.f32 1.0, %v1920
        %v1922 = vrcp.pop %v1919
        %v1923 = vmul.f32 1.0, %v1922
        %1925 = vset.pattern.permute.xlu0 0
        %1926 = vperm.xlu0 %1925, %v1921
        %v1927 = vpop.permute.xlu0 %1926
        %1930 = vset.pattern.permute.xlu0 0
        %1931 = vperm.xlu0 %1930, %v1923
        %v1932 = vpop.permute.xlu0 %1931
        %v1934 = vmul.f32 %v1578, %v1927
        %v1935 = vmul.f32 %v1579, %v1932
        %1937 = vset.pattern.permute.xlu0 0
        %1938 = vperm.xlu0 %1937, %v1449
        %v1939 = vpop.permute.xlu0 %1938
        %1942 = vset.pattern.permute.xlu0 0
        %1943 = vperm.xlu0 %1942, %v1450
        %v1944 = vpop.permute.xlu0 %1943
        %vm1946 = vcmask 261120
        %v1948 = vsel %vm1946, %v1447, 0
        %v1951 = vsel %vm1946, %v1448, 0
        %1953 = vmatprep.subr.mxu0 0.0
        %1954 = vmatpush1.msra.mxu0 %v1573
        %1955 = vmatprep.subr.mxu0 0.0
        %1956 = vmatpush1.msra.mxu0 %v1574
        %1957 = vmatprep.subr.mxu0 0.0
        %1958 = vmatpush1.msra.mxu0 %v1575
        %1959 = vmatprep.subr.mxu0 0.0
        %1960 = vmatpush1.msra.mxu0 %v1576
        %1961 = vmatprep.subr.mxu0 0.0
        %1962 = vmatpush1.msra.mxu0 0.0
        %1963 = vmatprep.subr.mxu0 0.0
        %1964 = vmatpush1.msra.mxu0 0.0
        %1965 = vmatprep.subr.mxu0 0.0
        %1966 = vmatpush1.msra.mxu0 0.0
        %1967 = vmatprep.subr.mxu0 0.0
        %1968 = vmatpush1.msra.mxu0 0.0
        %1969 = vmatprep.subr.mxu0 0.0
        %1970 = vmatpush1.msra.mxu0 0.0
        %1971 = vmatprep.subr.mxu0 0.0
        %1972 = vmatpush1.msra.mxu0 0.0
        %1973 = vmatprep.subr.mxu0 0.0
        %1974 = vmatpush1.msra.mxu0 0.0
        %1975 = vmatprep.subr.mxu0 0.0
        %1976 = vmatpush1.msra.mxu0 0.0
        %1977 = vmatprep.subr.mxu0 0.0
        %1978 = vmatpush1.msra.mxu0 0.0
        %1979 = vmatprep.subr.mxu0 0.0
        %1980 = vmatpush1.msra.mxu0 0.0
        %1981 = vmatprep.subr.mxu0 0.0
        %1982 = vmatpush1.msra.mxu0 0.0
        %1983 = vmatprep.subr.mxu0 0.0
        %1984 = vmatpush1.msra.mxu0 0.0
        %1985 = vmatprep.subr.mxu0 0.0
        %1986 = vmatpush1.msra.mxu0 0.0
        %1987 = vmatprep.subr.mxu0 0.0
        %1988 = vmatpush1.msra.mxu0 0.0
        %1989 = vmatprep.subr.mxu0 0.0
        %1990 = vmatpush1.msra.mxu0 0.0
        %1991 = vmatprep.subr.mxu0 0.0
        %1992 = vmatpush1.msra.mxu0 0.0
        %1993 = vmatprep.subr.mxu0 0.0
        %1994 = vmatpush1.msra.mxu0 0.0
        %1995 = vmatprep.subr.mxu0 0.0
        %1996 = vmatpush1.msra.mxu0 0.0
        %1997 = vmatprep.subr.mxu0 0.0
        %1998 = vmatpush1.msra.mxu0 0.0
        %1999 = vmatprep.subr.mxu0 0.0
        %2000 = vmatpush1.msra.mxu0 0.0
        %2001 = vmatprep.subr.mxu0 0.0
        %2002 = vmatpush1.msra.mxu0 0.0
        %2003 = vmatprep.subr.mxu0 0.0
        %2004 = vmatpush1.msra.mxu0 0.0
        %2005 = vmatprep.subr.mxu0 0.0
        %2006 = vmatpush1.msra.mxu0 0.0
        %2007 = vmatprep.subr.mxu0 0.0
        %2008 = vmatpush1.msra.mxu0 0.0
        %2009 = vmatprep.subr.mxu0 0.0
        %2010 = vmatpush1.msra.mxu0 0.0
        %2011 = vmatprep.subr.mxu0 0.0
        %2012 = vmatpush1.msra.mxu0 0.0
        %2013 = vmatprep.subr.mxu0 0.0
        %2014 = vmatpush1.msra.mxu0 0.0
        %2015 = vmatprep.subr.mxu0 0.0
        %2016 = vmatpush1.msra.mxu0 0.0
        %2017 = vmatprep.mubr.f32.mxu0 0.0
        %2018 = vmatmul.mubr.f32.gmra.mrb[0].mxu0 %v1948
        %v2019 = vpop.f32.mrb[0].mxu0
        %v2020 = vadd.f32 %v1939, %v2019
        %v2021 = vpop.f32.mrb[0].mxu0
        %2022 = vmatprep.mubr.f32.mxu0 0.0
        %2023 = vmatmul.mubr.f32.gmra.mrb[0].mxu0 %v1951
        %v2024 = vpop.f32.mrb[0].mxu0
        %v2025 = vadd.f32 %v1944, %v2024
        %v2026 = vpop.f32.mrb[0].mxu0
        %2027 = vdwg.mxu0
        %vm2028 = vcmask 130048
        %v2030 = vsel %vm2028, %v1451, 0
        %v2033 = vsel %vm2028, %v1452, 0
        %2035 = vmatprep.subr.mxu0 0.0
        %2036 = vmatpush1.msra.mxu0 %v2020
        %2037 = vmatprep.subr.mxu0 0.0
        %2038 = vmatpush1.msra.mxu0 %v2025
        %2039 = vmatprep.subr.mxu0 0.0
        %2040 = vmatpush1.msra.mxu0 0.0
        %2041 = vmatprep.subr.mxu0 0.0
        %2042 = vmatpush1.msra.mxu0 0.0
        %2043 = vmatprep.subr.mxu0 0.0
        %2044 = vmatpush1.msra.mxu0 0.0
        %2045 = vmatprep.subr.mxu0 0.0
        %2046 = vmatpush1.msra.mxu0 0.0
        %2047 = vmatprep.subr.mxu0 0.0
        %2048 = vmatpush1.msra.mxu0 0.0
        %2049 = vmatprep.subr.mxu0 0.0
        %2050 = vmatpush1.msra.mxu0 0.0
        %2051 = vmatprep.subr.mxu0 0.0
        %2052 = vmatpush1.msra.mxu0 0.0
        %2053 = vmatprep.subr.mxu0 0.0
        %2054 = vmatpush1.msra.mxu0 0.0
        %2055 = vmatprep.subr.mxu0 0.0
        %2056 = vmatpush1.msra.mxu0 0.0
        %2057 = vmatprep.subr.mxu0 0.0
        %2058 = vmatpush1.msra.mxu0 0.0
        %2059 = vmatprep.subr.mxu0 0.0
        %2060 = vmatpush1.msra.mxu0 0.0
        %2061 = vmatprep.subr.mxu0 0.0
        %2062 = vmatpush1.msra.mxu0 0.0
        %2063 = vmatprep.subr.mxu0 0.0
        %2064 = vmatpush1.msra.mxu0 0.0
        %2065 = vmatprep.subr.mxu0 0.0
        %2066 = vmatpush1.msra.mxu0 0.0
        %2067 = vmatprep.subr.mxu0 0.0
        %2068 = vmatpush1.msra.mxu0 0.0
        %2069 = vmatprep.subr.mxu0 0.0
        %2070 = vmatpush1.msra.mxu0 0.0
        %2071 = vmatprep.subr.mxu0 0.0
        %2072 = vmatpush1.msra.mxu0 0.0
        %2073 = vmatprep.subr.mxu0 0.0
        %2074 = vmatpush1.msra.mxu0 0.0
        %2075 = vmatprep.subr.mxu0 0.0
        %2076 = vmatpush1.msra.mxu0 0.0
        %2077 = vmatprep.subr.mxu0 0.0
        %2078 = vmatpush1.msra.mxu0 0.0
        %2079 = vmatprep.subr.mxu0 0.0
        %2080 = vmatpush1.msra.mxu0 0.0
        %2081 = vmatprep.subr.mxu0 0.0
        %2082 = vmatpush1.msra.mxu0 0.0
        %2083 = vmatprep.subr.mxu0 0.0
        %2084 = vmatpush1.msra.mxu0 0.0
        %2085 = vmatprep.subr.mxu0 0.0
        %2086 = vmatpush1.msra.mxu0 0.0
        %2087 = vmatprep.subr.mxu0 0.0
        %2088 = vmatpush1.msra.mxu0 0.0
        %2089 = vmatprep.subr.mxu0 0.0
        %2090 = vmatpush1.msra.mxu0 0.0
        %2091 = vmatprep.subr.mxu0 0.0
        %2092 = vmatpush1.msra.mxu0 0.0
        %2093 = vmatprep.subr.mxu0 0.0
        %2094 = vmatpush1.msra.mxu0 0.0
        %2095 = vmatprep.subr.mxu0 0.0
        %2096 = vmatpush1.msra.mxu0 0.0
        %2097 = vmatprep.subr.mxu0 0.0
        %2098 = vmatpush1.msra.mxu0 0.0
        %2099 = vmatprep.mubr.f32.mxu0 0.0
        %2100 = vmatmul.mubr.f32.gmra.mrb[0].mxu0 %v2030
        %v2101 = vpop.f32.mrb[0].mxu0
        %v2102 = vadd.f32 0.0, %v2101
        %v2103 = vpop.f32.mrb[0].mxu0
        %2104 = vmatprep.mubr.f32.mxu0 0.0
        %2105 = vmatmul.mubr.f32.gmra.mrb[0].mxu0 %v2033
        %v2106 = vpop.f32.mrb[0].mxu0
        %v2107 = vadd.f32 0.0, %v2106
        %v2108 = vpop.f32.mrb[0].mxu0
        %2109 = vdwg.mxu0
        %2111 = vset.pattern.permute.xlu0 0
        %2112 = vperm.xlu0 %2111, %v1453
        %v2113 = vpop.permute.xlu0 %2112
        %2116 = vset.pattern.permute.xlu0 0
        %2117 = vperm.xlu0 %2116, %v1454
        %v2118 = vpop.permute.xlu0 %2117
        %v2120 = vadd.f32 %v2102, %v2113
        %v2121 = vadd.f32 %v2107, %v2118
        %2122 = vmatprep.subr.mxu0 %v1821
        %2123 = vmatpush1.msra.mxu0 %v1820
        %2124 = vmatprep.subr.mxu0 %v1827
        %2125 = vmatpush1.msra.mxu0 %v1826
        %2126 = vmatprep.subr.mxu0 %v1833
        %2127 = vmatpush1.msra.mxu0 %v1832
        %2128 = vmatprep.subr.mxu0 %v1839
        %2129 = vmatpush1.msra.mxu0 %v1838
        %2130 = vmatprep.subr.mxu0 %v1845
        %2131 = vmatpush1.msra.mxu0 %v1844
        %2132 = vmatprep.subr.mxu0 %v1851
        %2133 = vmatpush1.msra.mxu0 %v1850
        %2134 = vmatprep.subr.mxu0 %v1857
        %2135 = vmatpush1.msra.mxu0 %v1856
        %2136 = vmatprep.subr.mxu0 %v1863
        %2137 = vmatpush1.msra.mxu0 %v1862
        %2138 = vmatprep.subr.mxu0 %v1869
        %2139 = vmatpush1.msra.mxu0 %v1868
        %2140 = vmatprep.subr.mxu0 %v1875
        %2141 = vmatpush1.msra.mxu0 %v1874
        %2142 = vmatprep.subr.mxu0 %v1881
        %2143 = vmatpush1.msra.mxu0 %v1880
        %2144 = vmatprep.subr.mxu0 %v1887
        %2145 = vmatpush1.msra.mxu0 %v1886
        %2146 = vmatprep.subr.mxu0 %v1893
        %2147 = vmatpush1.msra.mxu0 %v1892
        %2148 = vmatprep.subr.mxu0 %v1899
        %2149 = vmatpush1.msra.mxu0 %v1898
        %2150 = vmatprep.subr.mxu0 %v1905
        %2151 = vmatpush1.msra.mxu0 %v1904
        %2152 = vmatprep.subr.mxu0 %v1911
        %2153 = vmatpush1.msra.mxu0 %v1910
        %2154 = vmatprep.subr.mxu0 0.0
        %2155 = vmatpush1.msra.mxu0 0.0
        %2156 = vmatprep.subr.mxu0 0.0
        %2157 = vmatpush1.msra.mxu0 0.0
        %2158 = vmatprep.subr.mxu0 0.0
        %2159 = vmatpush1.msra.mxu0 0.0
        %2160 = vmatprep.subr.mxu0 0.0
        %2161 = vmatpush1.msra.mxu0 0.0
        %2162 = vmatprep.subr.mxu0 0.0
        %2163 = vmatpush1.msra.mxu0 0.0
        %2164 = vmatprep.subr.mxu0 0.0
        %2165 = vmatpush1.msra.mxu0 0.0
        %2166 = vmatprep.subr.mxu0 0.0
        %2167 = vmatpush1.msra.mxu0 0.0
        %2168 = vmatprep.subr.mxu0 0.0
        %2169 = vmatpush1.msra.mxu0 0.0
        %2170 = vmatprep.subr.mxu0 0.0
        %2171 = vmatpush1.msra.mxu0 0.0
        %2172 = vmatprep.subr.mxu0 0.0
        %2173 = vmatpush1.msra.mxu0 0.0
        %2174 = vmatprep.subr.mxu0 0.0
        %2175 = vmatpush1.msra.mxu0 0.0
        %2176 = vmatprep.subr.mxu0 0.0
        %2177 = vmatpush1.msra.mxu0 0.0
        %2178 = vmatprep.subr.mxu0 0.0
        %2179 = vmatpush1.msra.mxu0 0.0
        %2180 = vmatprep.subr.mxu0 0.0
        %2181 = vmatpush1.msra.mxu0 0.0
        %2182 = vmatprep.subr.mxu0 0.0
        %2183 = vmatpush1.msra.mxu0 0.0
        %2184 = vmatprep.subr.mxu0 0.0
        %2185 = vmatpush1.msra.mxu0 0.0
        %2186 = vmatprep.mubr.f32.mxu0 0.0
        %2187 = vmatmul.mubr.f32.gmra.mrb[0].mxu0 %v2102
        %v2188 = vpop.f32.mrb[0].mxu0
        %v2189 = vadd.f32 0.0, %v2188
        %v2190 = vpop.f32.mrb[0].mxu0
        %v2191 = vadd.f32 0.0, %v2190
        %2192 = vmatprep.mubr.f32.mxu0 0.0
        %2193 = vmatmul.mubr.f32.gmra.mrb[0].mxu0 %v2107
        %v2194 = vpop.f32.mrb[0].mxu0
        %v2195 = vadd.f32 0.0, %v2194
        %v2196 = vpop.f32.mrb[0].mxu0
        %v2197 = vadd.f32 0.0, %v2196
        %2198 = vdwg.mxu0
        %2199 = vmatprep.subr.mxu0 %v1823
        %2200 = vmatpush1.msra.mxu0 %v1822
        %2201 = vmatprep.subr.mxu0 %v1829
        %2202 = vmatpush1.msra.mxu0 %v1828
        %2203 = vmatprep.subr.mxu0 %v1835
        %2204 = vmatpush1.msra.mxu0 %v1834
        %2205 = vmatprep.subr.mxu0 %v1841
        %2206 = vmatpush1.msra.mxu0 %v1840
        %2207 = vmatprep.subr.mxu0 %v1847
        %2208 = vmatpush1.msra.mxu0 %v1846
        %2209 = vmatprep.subr.mxu0 %v1853
        %2210 = vmatpush1.msra.mxu0 %v1852
        %2211 = vmatprep.subr.mxu0 %v1859
        %2212 = vmatpush1.msra.mxu0 %v1858
        %2213 = vmatprep.subr.mxu0 %v1865
        %2214 = vmatpush1.msra.mxu0 %v1864
        %2215 = vmatprep.subr.mxu0 %v1871
        %2216 = vmatpush1.msra.mxu0 %v1870
        %2217 = vmatprep.subr.mxu0 %v1877
        %2218 = vmatpush1.msra.mxu0 %v1876
        %2219 = vmatprep.subr.mxu0 %v1883
        %2220 = vmatpush1.msra.mxu0 %v1882
        %2221 = vmatprep.subr.mxu0 %v1889
        %2222 = vmatpush1.msra.mxu0 %v1888
        %2223 = vmatprep.subr.mxu0 %v1895
        %2224 = vmatpush1.msra.mxu0 %v1894
        %2225 = vmatprep.subr.mxu0 %v1901
        %2226 = vmatpush1.msra.mxu0 %v1900
        %2227 = vmatprep.subr.mxu0 %v1907
        %2228 = vmatpush1.msra.mxu0 %v1906
        %2229 = vmatprep.subr.mxu0 %v1913
        %2230 = vmatpush1.msra.mxu0 %v1912
        %2231 = vmatprep.subr.mxu0 0.0
        %2232 = vmatpush1.msra.mxu0 0.0
        %2233 = vmatprep.subr.mxu0 0.0
        %2234 = vmatpush1.msra.mxu0 0.0
        %2235 = vmatprep.subr.mxu0 0.0
        %2236 = vmatpush1.msra.mxu0 0.0
        %2237 = vmatprep.subr.mxu0 0.0
        %2238 = vmatpush1.msra.mxu0 0.0
        %2239 = vmatprep.subr.mxu0 0.0
        %2240 = vmatpush1.msra.mxu0 0.0
        %2241 = vmatprep.subr.mxu0 0.0
        %2242 = vmatpush1.msra.mxu0 0.0
        %2243 = vmatprep.subr.mxu0 0.0
        %2244 = vmatpush1.msra.mxu0 0.0
        %2245 = vmatprep.subr.mxu0 0.0
        %2246 = vmatpush1.msra.mxu0 0.0
        %2247 = vmatprep.subr.mxu0 0.0
        %2248 = vmatpush1.msra.mxu0 0.0
        %2249 = vmatprep.subr.mxu0 0.0
        %2250 = vmatpush1.msra.mxu0 0.0
        %2251 = vmatprep.subr.mxu0 0.0
        %2252 = vmatpush1.msra.mxu0 0.0
        %2253 = vmatprep.subr.mxu0 0.0
        %2254 = vmatpush1.msra.mxu0 0.0
        %2255 = vmatprep.subr.mxu0 0.0
        %2256 = vmatpush1.msra.mxu0 0.0
        %2257 = vmatprep.subr.mxu0 0.0
        %2258 = vmatpush1.msra.mxu0 0.0
        %2259 = vmatprep.subr.mxu0 0.0
        %2260 = vmatpush1.msra.mxu0 0.0
        %2261 = vmatprep.subr.mxu0 0.0
        %2262 = vmatpush1.msra.mxu0 0.0
        %2263 = vmatprep.mubr.f32.mxu0 0.0
        %2264 = vmatmul.mubr.f32.gmra.mrb[0].mxu0 %v2102
        %v2265 = vpop.f32.mrb[0].mxu0
        %v2266 = vadd.f32 0.0, %v2265
        %v2267 = vpop.f32.mrb[0].mxu0
        %v2268 = vadd.f32 0.0, %v2267
        %2269 = vmatprep.mubr.f32.mxu0 0.0
        %2270 = vmatmul.mubr.f32.gmra.mrb[0].mxu0 %v2107
        %v2271 = vpop.f32.mrb[0].mxu0
        %v2272 = vadd.f32 0.0, %v2271
        %v2273 = vpop.f32.mrb[0].mxu0
        %v2274 = vadd.f32 0.0, %v2273
        %2275 = vdwg.mxu0
        %2276 = vmatprep.subr.mxu0 %v1825
        %2277 = vmatpush1.msra.mxu0 %v1824
        %2278 = vmatprep.subr.mxu0 %v1831
        %2279 = vmatpush1.msra.mxu0 %v1830
        %2280 = vmatprep.subr.mxu0 %v1837
        %2281 = vmatpush1.msra.mxu0 %v1836
        %2282 = vmatprep.subr.mxu0 %v1843
        %2283 = vmatpush1.msra.mxu0 %v1842
        %2284 = vmatprep.subr.mxu0 %v1849
        %2285 = vmatpush1.msra.mxu0 %v1848
        %2286 = vmatprep.subr.mxu0 %v1855
        %2287 = vmatpush1.msra.mxu0 %v1854
        %2288 = vmatprep.subr.mxu0 %v1861
        %2289 = vmatpush1.msra.mxu0 %v1860
        %2290 = vmatprep.subr.mxu0 %v1867
        %2291 = vmatpush1.msra.mxu0 %v1866
        %2292 = vmatprep.subr.mxu0 %v1873
        %2293 = vmatpush1.msra.mxu0 %v1872
        %2294 = vmatprep.subr.mxu0 %v1879
        %2295 = vmatpush1.msra.mxu0 %v1878
        %2296 = vmatprep.subr.mxu0 %v1885
        %2297 = vmatpush1.msra.mxu0 %v1884
        %2298 = vmatprep.subr.mxu0 %v1891
        %2299 = vmatpush1.msra.mxu0 %v1890
        %2300 = vmatprep.subr.mxu0 %v1897
        %2301 = vmatpush1.msra.mxu0 %v1896
        %2302 = vmatprep.subr.mxu0 %v1903
        %2303 = vmatpush1.msra.mxu0 %v1902
        %2304 = vmatprep.subr.mxu0 %v1909
        %2305 = vmatpush1.msra.mxu0 %v1908
        %2306 = vmatprep.subr.mxu0 %v1915
        %2307 = vmatpush1.msra.mxu0 %v1914
        %2308 = vmatprep.subr.mxu0 0.0
        %2309 = vmatpush1.msra.mxu0 0.0
        %2310 = vmatprep.subr.mxu0 0.0
        %2311 = vmatpush1.msra.mxu0 0.0
        %2312 = vmatprep.subr.mxu0 0.0
        %2313 = vmatpush1.msra.mxu0 0.0
        %2314 = vmatprep.subr.mxu0 0.0
        %2315 = vmatpush1.msra.mxu0 0.0
        %2316 = vmatprep.subr.mxu0 0.0
        %2317 = vmatpush1.msra.mxu0 0.0
        %2318 = vmatprep.subr.mxu0 0.0
        %2319 = vmatpush1.msra.mxu0 0.0
        %2320 = vmatprep.subr.mxu0 0.0
        %2321 = vmatpush1.msra.mxu0 0.0
        %2322 = vmatprep.subr.mxu0 0.0
        %2323 = vmatpush1.msra.mxu0 0.0
        %2324 = vmatprep.subr.mxu0 0.0
        %2325 = vmatpush1.msra.mxu0 0.0
        %2326 = vmatprep.subr.mxu0 0.0
        %2327 = vmatpush1.msra.mxu0 0.0
        %2328 = vmatprep.subr.mxu0 0.0
        %2329 = vmatpush1.msra.mxu0 0.0
        %2330 = vmatprep.subr.mxu0 0.0
        %2331 = vmatpush1.msra.mxu0 0.0
        %2332 = vmatprep.subr.mxu0 0.0
        %2333 = vmatpush1.msra.mxu0 0.0
        %2334 = vmatprep.subr.mxu0 0.0
        %2335 = vmatpush1.msra.mxu0 0.0
        %2336 = vmatprep.subr.mxu0 0.0
        %2337 = vmatpush1.msra.mxu0 0.0
        %2338 = vmatprep.subr.mxu0 0.0
        %2339 = vmatpush1.msra.mxu0 0.0
        %2340 = vmatprep.mubr.f32.mxu0 0.0
        %2341 = vmatmul.mubr.f32.gmra.mrb[0].mxu0 %v2102
        %v2342 = vpop.f32.mrb[0].mxu0
        %v2343 = vadd.f32 0.0, %v2342
        %v2344 = vpop.f32.mrb[0].mxu0
        %v2345 = vadd.f32 0.0, %v2344
        %2346 = vmatprep.mubr.f32.mxu0 0.0
        %2347 = vmatmul.mubr.f32.gmra.mrb[0].mxu0 %v2107
        %v2348 = vpop.f32.mrb[0].mxu0
        %v2349 = vadd.f32 0.0, %v2348
        %v2350 = vpop.f32.mrb[0].mxu0
        %v2351 = vadd.f32 0.0, %v2350
        %2352 = vdwg.mxu0
        %v2353 = vsub.f32 %v2120, %v2189
        %v2354 = vsub.f32 %v2120, %v2191
        %v2355 = vsub.f32 %v2120, %v2266
        %v2356 = vsub.f32 %v2120, %v2268
        %v2357 = vsub.f32 %v2120, %v2343
        %v2358 = vsub.f32 %v2120, %v2345
        %v2359 = vsub.f32 %v2121, %v2195
        %v2360 = vsub.f32 %v2121, %v2197
        %v2361 = vsub.f32 %v2121, %v2272
        %v2362 = vsub.f32 %v2121, %v2274
        %v2363 = vsub.f32 %v2121, %v2349
        %v2364 = vsub.f32 %v2121, %v2351
        %v2365 = vmax.f32 %v2353, 0.0
        %v2366 = vmax.f32 %v2354, 0.0
        %v2367 = vmax.f32 %v2355, 0.0
        %v2368 = vmax.f32 %v2356, 0.0
        %v2369 = vmax.f32 %v2357, 0.0
        %v2370 = vmax.f32 %v2358, 0.0
        %v2371 = vmax.f32 %v2359, 0.0
        %v2372 = vmax.f32 %v2360, 0.0
        %v2373 = vmax.f32 %v2361, 0.0
        %v2374 = vmax.f32 %v2362, 0.0
        %v2375 = vmax.f32 %v2363, 0.0
        %v2376 = vmax.f32 %v2364, 0.0
        %2378 = vset.pattern.permute.xlu0 0
        %2379 = vperm.xlu0 %2378, %v1457
        %v2380 = vpop.permute.xlu0 %2379
        %2383 = vset.pattern.permute.xlu0 0
        %2384 = vperm.xlu0 %2383, %v1458
        %v2385 = vpop.permute.xlu0 %2384
        %v2388 = vsel %vm2028, %v1455, 0
        %v2391 = vsel %vm2028, %v1456, 0
        %2393 = vmatprep.subr.mxu0 %v2366
        %2394 = vmatpush1.msra.mxu0 %v2365
        %2395 = vmatprep.subr.mxu0 %v2372
        %2396 = vmatpush1.msra.mxu0 %v2371
        %2397 = vmatprep.subr.mxu0 0.0
        %2398 = vmatpush1.msra.mxu0 0.0
        %2399 = vmatprep.subr.mxu0 0.0
        %2400 = vmatpush1.msra.mxu0 0.0
        %2401 = vmatprep.subr.mxu0 0.0
        %2402 = vmatpush1.msra.mxu0 0.0
        %2403 = vmatprep.subr.mxu0 0.0
        %2404 = vmatpush1.msra.mxu0 0.0
        %2405 = vmatprep.subr.mxu0 0.0
        %2406 = vmatpush1.msra.mxu0 0.0
        %2407 = vmatprep.subr.mxu0 0.0
        %2408 = vmatpush1.msra.mxu0 0.0
        %2409 = vmatprep.subr.mxu0 0.0
        %2410 = vmatpush1.msra.mxu0 0.0
        %2411 = vmatprep.subr.mxu0 0.0
        %2412 = vmatpush1.msra.mxu0 0.0
        %2413 = vmatprep.subr.mxu0 0.0
        %2414 = vmatpush1.msra.mxu0 0.0
        %2415 = vmatprep.subr.mxu0 0.0
        %2416 = vmatpush1.msra.mxu0 0.0
        %2417 = vmatprep.subr.mxu0 0.0
        %2418 = vmatpush1.msra.mxu0 0.0
        %2419 = vmatprep.subr.mxu0 0.0
        %2420 = vmatpush1.msra.mxu0 0.0
        %2421 = vmatprep.subr.mxu0 0.0
        %2422 = vmatpush1.msra.mxu0 0.0
        %2423 = vmatprep.subr.mxu0 0.0
        %2424 = vmatpush1.msra.mxu0 0.0
        %2425 = vmatprep.subr.mxu0 0.0
        %2426 = vmatpush1.msra.mxu0 0.0
        %2427 = vmatprep.subr.mxu0 0.0
        %2428 = vmatpush1.msra.mxu0 0.0
        %2429 = vmatprep.subr.mxu0 0.0
        %2430 = vmatpush1.msra.mxu0 0.0
        %2431 = vmatprep.subr.mxu0 0.0
        %2432 = vmatpush1.msra.mxu0 0.0
        %2433 = vmatprep.subr.mxu0 0.0
        %2434 = vmatpush1.msra.mxu0 0.0
        %2435 = vmatprep.subr.mxu0 0.0
        %2436 = vmatpush1.msra.mxu0 0.0
        %2437 = vmatprep.subr.mxu0 0.0
        %2438 = vmatpush1.msra.mxu0 0.0
        %2439 = vmatprep.subr.mxu0 0.0
        %2440 = vmatpush1.msra.mxu0 0.0
        %2441 = vmatprep.subr.mxu0 0.0
        %2442 = vmatpush1.msra.mxu0 0.0
        %2443 = vmatprep.subr.mxu0 0.0
        %2444 = vmatpush1.msra.mxu0 0.0
        %2445 = vmatprep.subr.mxu0 0.0
        %2446 = vmatpush1.msra.mxu0 0.0
        %2447 = vmatprep.subr.mxu0 0.0
        %2448 = vmatpush1.msra.mxu0 0.0
        %2449 = vmatprep.subr.mxu0 0.0
        %2450 = vmatpush1.msra.mxu0 0.0
        %2451 = vmatprep.subr.mxu0 0.0
        %2452 = vmatpush1.msra.mxu0 0.0
        %2453 = vmatprep.subr.mxu0 0.0
        %2454 = vmatpush1.msra.mxu0 0.0
        %2455 = vmatprep.subr.mxu0 0.0
        %2456 = vmatpush1.msra.mxu0 0.0
        %2457 = vmatprep.mubr.f32.mxu0 0.0
        %2458 = vmatmul.mubr.f32.gmra.mrb[0].mxu0 %v2388
        %v2459 = vpop.f32.mrb[0].mxu0
        %v2460 = vadd.f32 %v2380, %v2459
        %v2461 = vpop.f32.mrb[0].mxu0
        %v2462 = vadd.f32 %v2380, %v2461
        %2463 = vmatprep.mubr.f32.mxu0 0.0
        %2464 = vmatmul.mubr.f32.gmra.mrb[0].mxu0 %v2391
        %v2465 = vpop.f32.mrb[0].mxu0
        %v2466 = vadd.f32 %v2385, %v2465
        %v2467 = vpop.f32.mrb[0].mxu0
        %v2468 = vadd.f32 %v2385, %v2467
        %2469 = vdwg.mxu0
        %2470 = vmatprep.subr.mxu0 %v2368
        %2471 = vmatpush1.msra.mxu0 %v2367
        %2472 = vmatprep.subr.mxu0 %v2374
        %2473 = vmatpush1.msra.mxu0 %v2373
        %2474 = vmatprep.subr.mxu0 0.0
        %2475 = vmatpush1.msra.mxu0 0.0
        %2476 = vmatprep.subr.mxu0 0.0
        %2477 = vmatpush1.msra.mxu0 0.0
        %2478 = vmatprep.subr.mxu0 0.0
        %2479 = vmatpush1.msra.mxu0 0.0
        %2480 = vmatprep.subr.mxu0 0.0
        %2481 = vmatpush1.msra.mxu0 0.0
        %2482 = vmatprep.subr.mxu0 0.0
        %2483 = vmatpush1.msra.mxu0 0.0
        %2484 = vmatprep.subr.mxu0 0.0
        %2485 = vmatpush1.msra.mxu0 0.0
        %2486 = vmatprep.subr.mxu0 0.0
        %2487 = vmatpush1.msra.mxu0 0.0
        %2488 = vmatprep.subr.mxu0 0.0
        %2489 = vmatpush1.msra.mxu0 0.0
        %2490 = vmatprep.subr.mxu0 0.0
        %2491 = vmatpush1.msra.mxu0 0.0
        %2492 = vmatprep.subr.mxu0 0.0
        %2493 = vmatpush1.msra.mxu0 0.0
        %2494 = vmatprep.subr.mxu0 0.0
        %2495 = vmatpush1.msra.mxu0 0.0
        %2496 = vmatprep.subr.mxu0 0.0
        %2497 = vmatpush1.msra.mxu0 0.0
        %2498 = vmatprep.subr.mxu0 0.0
        %2499 = vmatpush1.msra.mxu0 0.0
        %2500 = vmatprep.subr.mxu0 0.0
        %2501 = vmatpush1.msra.mxu0 0.0
        %2502 = vmatprep.subr.mxu0 0.0
        %2503 = vmatpush1.msra.mxu0 0.0
        %2504 = vmatprep.subr.mxu0 0.0
        %2505 = vmatpush1.msra.mxu0 0.0
        %2506 = vmatprep.subr.mxu0 0.0
        %2507 = vmatpush1.msra.mxu0 0.0
        %2508 = vmatprep.subr.mxu0 0.0
        %2509 = vmatpush1.msra.mxu0 0.0
        %2510 = vmatprep.subr.mxu0 0.0
        %2511 = vmatpush1.msra.mxu0 0.0
        %2512 = vmatprep.subr.mxu0 0.0
        %2513 = vmatpush1.msra.mxu0 0.0
        %2514 = vmatprep.subr.mxu0 0.0
        %2515 = vmatpush1.msra.mxu0 0.0
        %2516 = vmatprep.subr.mxu0 0.0
        %2517 = vmatpush1.msra.mxu0 0.0
        %2518 = vmatprep.subr.mxu0 0.0
        %2519 = vmatpush1.msra.mxu0 0.0
        %2520 = vmatprep.subr.mxu0 0.0
        %2521 = vmatpush1.msra.mxu0 0.0
        %2522 = vmatprep.subr.mxu0 0.0
        %2523 = vmatpush1.msra.mxu0 0.0
        %2524 = vmatprep.subr.mxu0 0.0
        %2525 = vmatpush1.msra.mxu0 0.0
        %2526 = vmatprep.subr.mxu0 0.0
        %2527 = vmatpush1.msra.mxu0 0.0
        %2528 = vmatprep.subr.mxu0 0.0
        %2529 = vmatpush1.msra.mxu0 0.0
        %2530 = vmatprep.subr.mxu0 0.0
        %2531 = vmatpush1.msra.mxu0 0.0
        %2532 = vmatprep.subr.mxu0 0.0
        %2533 = vmatpush1.msra.mxu0 0.0
        %2534 = vmatprep.mubr.f32.mxu0 0.0
        %2535 = vmatmul.mubr.f32.gmra.mrb[0].mxu0 %v2388
        %v2536 = vpop.f32.mrb[0].mxu0
        %v2537 = vadd.f32 %v2380, %v2536
        %v2538 = vpop.f32.mrb[0].mxu0
        %v2539 = vadd.f32 %v2380, %v2538
        %2540 = vmatprep.mubr.f32.mxu0 0.0
        %2541 = vmatmul.mubr.f32.gmra.mrb[0].mxu0 %v2391
        %v2542 = vpop.f32.mrb[0].mxu0
        %v2543 = vadd.f32 %v2385, %v2542
        %v2544 = vpop.f32.mrb[0].mxu0
        %v2545 = vadd.f32 %v2385, %v2544
        %2546 = vdwg.mxu0
        %2547 = vmatprep.subr.mxu0 %v2370
        %2548 = vmatpush1.msra.mxu0 %v2369
        %2549 = vmatprep.subr.mxu0 %v2376
        %2550 = vmatpush1.msra.mxu0 %v2375
        %2551 = vmatprep.subr.mxu0 0.0
        %2552 = vmatpush1.msra.mxu0 0.0
        %2553 = vmatprep.subr.mxu0 0.0
        %2554 = vmatpush1.msra.mxu0 0.0
        %2555 = vmatprep.subr.mxu0 0.0
        %2556 = vmatpush1.msra.mxu0 0.0
        %2557 = vmatprep.subr.mxu0 0.0
        %2558 = vmatpush1.msra.mxu0 0.0
        %2559 = vmatprep.subr.mxu0 0.0
        %2560 = vmatpush1.msra.mxu0 0.0
        %2561 = vmatprep.subr.mxu0 0.0
        %2562 = vmatpush1.msra.mxu0 0.0
        %2563 = vmatprep.subr.mxu0 0.0
        %2564 = vmatpush1.msra.mxu0 0.0
        %2565 = vmatprep.subr.mxu0 0.0
        %2566 = vmatpush1.msra.mxu0 0.0
        %2567 = vmatprep.subr.mxu0 0.0
        %2568 = vmatpush1.msra.mxu0 0.0
        %2569 = vmatprep.subr.mxu0 0.0
        %2570 = vmatpush1.msra.mxu0 0.0
        %2571 = vmatprep.subr.mxu0 0.0
        %2572 = vmatpush1.msra.mxu0 0.0
        %2573 = vmatprep.subr.mxu0 0.0
        %2574 = vmatpush1.msra.mxu0 0.0
        %2575 = vmatprep.subr.mxu0 0.0
        %2576 = vmatpush1.msra.mxu0 0.0
        %2577 = vmatprep.subr.mxu0 0.0
        %2578 = vmatpush1.msra.mxu0 0.0
        %2579 = vmatprep.subr.mxu0 0.0
        %2580 = vmatpush1.msra.mxu0 0.0
        %2581 = vmatprep.subr.mxu0 0.0
        %2582 = vmatpush1.msra.mxu0 0.0
        %2583 = vmatprep.subr.mxu0 0.0
        %2584 = vmatpush1.msra.mxu0 0.0
        %2585 = vmatprep.subr.mxu0 0.0
        %2586 = vmatpush1.msra.mxu0 0.0
        %2587 = vmatprep.subr.mxu0 0.0
        %2588 = vmatpush1.msra.mxu0 0.0
        %2589 = vmatprep.subr.mxu0 0.0
        %2590 = vmatpush1.msra.mxu0 0.0
        %2591 = vmatprep.subr.mxu0 0.0
        %2592 = vmatpush1.msra.mxu0 0.0
        %2593 = vmatprep.subr.mxu0 0.0
        %2594 = vmatpush1.msra.mxu0 0.0
        %2595 = vmatprep.subr.mxu0 0.0
        %2596 = vmatpush1.msra.mxu0 0.0
        %2597 = vmatprep.subr.mxu0 0.0
        %2598 = vmatpush1.msra.mxu0 0.0
        %2599 = vmatprep.subr.mxu0 0.0
        %2600 = vmatpush1.msra.mxu0 0.0
        %2601 = vmatprep.subr.mxu0 0.0
        %2602 = vmatpush1.msra.mxu0 0.0
        %2603 = vmatprep.subr.mxu0 0.0
        %2604 = vmatpush1.msra.mxu0 0.0
        %2605 = vmatprep.subr.mxu0 0.0
        %2606 = vmatpush1.msra.mxu0 0.0
        %2607 = vmatprep.subr.mxu0 0.0
        %2608 = vmatpush1.msra.mxu0 0.0
        %2609 = vmatprep.subr.mxu0 0.0
        %2610 = vmatpush1.msra.mxu0 0.0
        %2611 = vmatprep.mubr.f32.mxu0 0.0
        %2612 = vmatmul.mubr.f32.gmra.mrb[0].mxu0 %v2388
        %v2613 = vpop.f32.mrb[0].mxu0
        %v2614 = vadd.f32 %v2380, %v2613
        %v2615 = vpop.f32.mrb[0].mxu0
        %v2616 = vadd.f32 %v2380, %v2615
        %2617 = vmatprep.mubr.f32.mxu0 0.0
        %2618 = vmatmul.mubr.f32.gmra.mrb[0].mxu0 %v2391
        %v2619 = vpop.f32.mrb[0].mxu0
        %v2620 = vadd.f32 %v2385, %v2619
        %v2621 = vpop.f32.mrb[0].mxu0
        %v2622 = vadd.f32 %v2385, %v2621
        %2623 = vdwg.mxu0
        %v2624 = vmax.f32 %v2460, %v2462
        %v2625 = vmax.f32 %v2466, %v2468
        %v2626 = vmax.f32 %v2624, %v2537
        %v2627 = vmax.f32 %v2625, %v2543
        %v2628 = vmax.f32 %v2626, %v2539
        %v2629 = vmax.f32 %v2627, %v2545
        %v2630 = vmax.f32 %v2628, %v2614
        %v2631 = vmax.f32 %v2629, %v2620
        %v2632 = vmax.f32 %v2630, %v2616
        %v2633 = vmax.f32 %v2631, %v2622
        %2635 = vset.pattern.permute.xlu0 0
        %2636 = vperm.xlu0 %2635, %v1463
        %v2637 = vpop.permute.xlu0 %2636
        %2640 = vset.pattern.permute.xlu0 0
        %2641 = vperm.xlu0 %2640, %v1464
        %v2642 = vpop.permute.xlu0 %2641
        %2645 = vset.pattern.permute.xlu0 0
        %2646 = vperm.xlu0 %2645, %v1465
        %v2647 = vpop.permute.xlu0 %2646
        %2650 = vset.pattern.permute.xlu0 0
        %2651 = vperm.xlu0 %2650, %v1466
        %v2652 = vpop.permute.xlu0 %2651
        %v2655 = vsel %vm2028, %v1459, 0
        %v2658 = vsel %vm2028, %v1460, 0
        %v2661 = vsel %vm2028, %v1461, 0
        %v2664 = vsel %vm2028, %v1462, 0
        %2666 = vmatprep.subr.mxu0 0.0
        %2667 = vmatpush1.msra.mxu0 %v2632
        %2668 = vmatprep.subr.mxu0 0.0
        %2669 = vmatpush1.msra.mxu0 %v2633
        %2670 = vmatprep.subr.mxu0 0.0
        %2671 = vmatpush1.msra.mxu0 0.0
        %2672 = vmatprep.subr.mxu0 0.0
        %2673 = vmatpush1.msra.mxu0 0.0
        %2674 = vmatprep.subr.mxu0 0.0
        %2675 = vmatpush1.msra.mxu0 0.0
        %2676 = vmatprep.subr.mxu0 0.0
        %2677 = vmatpush1.msra.mxu0 0.0
        %2678 = vmatprep.subr.mxu0 0.0
        %2679 = vmatpush1.msra.mxu0 0.0
        %2680 = vmatprep.subr.mxu0 0.0
        %2681 = vmatpush1.msra.mxu0 0.0
        %2682 = vmatprep.subr.mxu0 0.0
        %2683 = vmatpush1.msra.mxu0 0.0
        %2684 = vmatprep.subr.mxu0 0.0
        %2685 = vmatpush1.msra.mxu0 0.0
        %2686 = vmatprep.subr.mxu0 0.0
        %2687 = vmatpush1.msra.mxu0 0.0
        %2688 = vmatprep.subr.mxu0 0.0
        %2689 = vmatpush1.msra.mxu0 0.0
        %2690 = vmatprep.subr.mxu0 0.0
        %2691 = vmatpush1.msra.mxu0 0.0
        %2692 = vmatprep.subr.mxu0 0.0
        %2693 = vmatpush1.msra.mxu0 0.0
        %2694 = vmatprep.subr.mxu0 0.0
        %2695 = vmatpush1.msra.mxu0 0.0
        %2696 = vmatprep.subr.mxu0 0.0
        %2697 = vmatpush1.msra.mxu0 0.0
        %2698 = vmatprep.subr.mxu0 0.0
        %2699 = vmatpush1.msra.mxu0 0.0
        %2700 = vmatprep.subr.mxu0 0.0
        %2701 = vmatpush1.msra.mxu0 0.0
        %2702 = vmatprep.subr.mxu0 0.0
        %2703 = vmatpush1.msra.mxu0 0.0
        %2704 = vmatprep.subr.mxu0 0.0
        %2705 = vmatpush1.msra.mxu0 0.0
        %2706 = vmatprep.subr.mxu0 0.0
        %2707 = vmatpush1.msra.mxu0 0.0
        %2708 = vmatprep.subr.mxu0 0.0
        %2709 = vmatpush1.msra.mxu0 0.0
        %2710 = vmatprep.subr.mxu0 0.0
        %2711 = vmatpush1.msra.mxu0 0.0
        %2712 = vmatprep.subr.mxu0 0.0
        %2713 = vmatpush1.msra.mxu0 0.0
        %2714 = vmatprep.subr.mxu0 0.0
        %2715 = vmatpush1.msra.mxu0 0.0
        %2716 = vmatprep.subr.mxu0 0.0
        %2717 = vmatpush1.msra.mxu0 0.0
        %2718 = vmatprep.subr.mxu0 0.0
        %2719 = vmatpush1.msra.mxu0 0.0
        %2720 = vmatprep.subr.mxu0 0.0
        %2721 = vmatpush1.msra.mxu0 0.0
        %2722 = vmatprep.subr.mxu0 0.0
        %2723 = vmatpush1.msra.mxu0 0.0
        %2724 = vmatprep.subr.mxu0 0.0
        %2725 = vmatpush1.msra.mxu0 0.0
        %2726 = vmatprep.subr.mxu0 0.0
        %2727 = vmatpush1.msra.mxu0 0.0
        %2728 = vmatprep.subr.mxu0 0.0
        %2729 = vmatpush1.msra.mxu0 0.0
        %2730 = vmatprep.mubr.f32.mxu0 0.0
        %2731 = vmatmul.mubr.f32.gmra.mrb[0].mxu0 %v2655
        %v2732 = vpop.f32.mrb[0].mxu0
        %v2733 = vadd.f32 %v2637, %v2732
        %v2734 = vpop.f32.mrb[0].mxu0
        %2735 = vmatprep.mubr.f32.mxu0 0.0
        %2736 = vmatmul.mubr.f32.gmra.mrb[0].mxu0 %v2658
        %v2737 = vpop.f32.mrb[0].mxu0
        %v2738 = vadd.f32 %v2642, %v2737
        %v2739 = vpop.f32.mrb[0].mxu0
        %2740 = vmatprep.mubr.f32.mxu0 0.0
        %2741 = vmatmul.mubr.f32.gmra.mrb[0].mxu0 %v2661
        %v2742 = vpop.f32.mrb[0].mxu0
        %v2743 = vadd.f32 %v2647, %v2742
        %v2744 = vpop.f32.mrb[0].mxu0
        %2745 = vmatprep.mubr.f32.mxu0 0.0
        %2746 = vmatmul.mubr.f32.gmra.mrb[0].mxu0 %v2664
        %v2747 = vpop.f32.mrb[0].mxu0
        %v2748 = vadd.f32 %v2652, %v2747
        %v2749 = vpop.f32.mrb[0].mxu0
        %2750 = vdwg.mxu0
        %v2751 = vadd.f32 %v1573, %v2733
        %v2752 = vadd.f32 %v1574, %v2738
        %v2753 = vadd.f32 %v1575, %v2743
        %v2754 = vadd.f32 %v1576, %v2748
        %2755 = vadd.xlane.f32.xlu0 %v2751
        %v2756 = vpop.xlane.xlu0 %2755
        %2757 = vadd.xlane.f32.xlu0 %v2752
        %v2758 = vpop.xlane.xlu0 %2757
        %2759 = vadd.xlane.f32.xlu0 %v2753
        %v2760 = vpop.xlane.xlu0 %2759
        %2761 = vadd.xlane.f32.xlu0 %v2754
        %v2762 = vpop.xlane.xlu0 %2761
        %v2763 = vrcp.pop 128.0
        %v2764 = vmul.f32 %v2756, %v2763
        %v2765 = vmul.f32 %v2758, %v2763
        %v2766 = vmul.f32 %v2760, %v2763
        %v2767 = vmul.f32 %v2762, %v2763
        %v2768 = vsub.f32 %v2751, %v2764
        %v2769 = vsub.f32 %v2752, %v2765
        %v2770 = vsub.f32 %v2753, %v2766
        %v2771 = vsub.f32 %v2754, %v2767
        %v2772 = vmul.f32 %v2768, %v2768
        %v2773 = vmul.f32 %v2769, %v2769
        %v2774 = vmul.f32 %v2770, %v2770
        %v2775 = vmul.f32 %v2771, %v2771
        %2776 = vadd.xlane.f32.xlu0 %v2772
        %v2777 = vpop.xlane.xlu0 %2776
        %2778 = vadd.xlane.f32.xlu0 %v2773
        %v2779 = vpop.xlane.xlu0 %2778
        %2780 = vadd.xlane.f32.xlu0 %v2774
        %v2781 = vpop.xlane.xlu0 %2780
        %2782 = vadd.xlane.f32.xlu0 %v2775
        %v2783 = vpop.xlane.xlu0 %2782
        %v2784 = vmul.f32 %v2777, %v2763
        %v2785 = vmul.f32 %v2779, %v2763
        %v2786 = vmul.f32 %v2781, %v2763
        %v2787 = vmul.f32 %v2783, %v2763
        %v2788 = vadd.f32 %v2784, 0.001
        %v2789 = vadd.f32 %v2785, 0.001
        %v2790 = vadd.f32 %v2786, 0.001
        %v2791 = vadd.f32 %v2787, 0.001
        %v2792 = vrsqrt.pop %v2788
        %v2793 = vrsqrt.pop %v2789
        %v2794 = vrsqrt.pop %v2790
        %v2795 = vrsqrt.pop %v2791
        %v2796 = vmul.f32 %v2768, %v2792
        %v2797 = vmul.f32 %v2769, %v2793
        %v2798 = vmul.f32 %v2770, %v2794
        %v2799 = vmul.f32 %v2771, %v2795
        %v2800 = vmax.f32 %v2796, 0.0
        %v2801 = vmax.f32 %v2797, 0.0
        %v2802 = vmax.f32 %v2798, 0.0
        %v2803 = vmax.f32 %v2799, 0.0
        %2805 = vset.pattern.permute.xlu0 0
        %2806 = vperm.xlu0 %2805, %v1471
        %v2807 = vpop.permute.xlu0 %2806
        %2810 = vset.pattern.permute.xlu0 0
        %2811 = vperm.xlu0 %2810, %v1472
        %v2812 = vpop.permute.xlu0 %2811
        %2815 = vset.pattern.permute.xlu0 0
        %2816 = vperm.xlu0 %2815, %v1473
        %v2817 = vpop.permute.xlu0 %2816
        %2820 = vset.pattern.permute.xlu0 0
        %2821 = vperm.xlu0 %2820, %v1474
        %v2822 = vpop.permute.xlu0 %2821
        %v2825 = vsel %vm1946, %v1467, 0
        %v2828 = vsel %vm1946, %v1468, 0
        %v2831 = vsel %vm1946, %v1469, 0
        %v2834 = vsel %vm1946, %v1470, 0
        %2836 = vmatprep.subr.mxu0 0.0
        %2837 = vmatpush1.msra.mxu0 %v2800
        %2838 = vmatprep.subr.mxu0 0.0
        %2839 = vmatpush1.msra.mxu0 %v2801
        %2840 = vmatprep.subr.mxu0 0.0
        %2841 = vmatpush1.msra.mxu0 %v2802
        %2842 = vmatprep.subr.mxu0 0.0
        %2843 = vmatpush1.msra.mxu0 %v2803
        %2844 = vmatprep.subr.mxu0 0.0
        %2845 = vmatpush1.msra.mxu0 0.0
        %2846 = vmatprep.subr.mxu0 0.0
        %2847 = vmatpush1.msra.mxu0 0.0
        %2848 = vmatprep.subr.mxu0 0.0
        %2849 = vmatpush1.msra.mxu0 0.0
        %2850 = vmatprep.subr.mxu0 0.0
        %2851 = vmatpush1.msra.mxu0 0.0
        %2852 = vmatprep.subr.mxu0 0.0
        %2853 = vmatpush1.msra.mxu0 0.0
        %2854 = vmatprep.subr.mxu0 0.0
        %2855 = vmatpush1.msra.mxu0 0.0
        %2856 = vmatprep.subr.mxu0 0.0
        %2857 = vmatpush1.msra.mxu0 0.0
        %2858 = vmatprep.subr.mxu0 0.0
        %2859 = vmatpush1.msra.mxu0 0.0
        %2860 = vmatprep.subr.mxu0 0.0
        %2861 = vmatpush1.msra.mxu0 0.0
        %2862 = vmatprep.subr.mxu0 0.0
        %2863 = vmatpush1.msra.mxu0 0.0
        %2864 = vmatprep.subr.mxu0 0.0
        %2865 = vmatpush1.msra.mxu0 0.0
        %2866 = vmatprep.subr.mxu0 0.0
        %2867 = vmatpush1.msra.mxu0 0.0
        %2868 = vmatprep.subr.mxu0 0.0
        %2869 = vmatpush1.msra.mxu0 0.0
        %2870 = vmatprep.subr.mxu0 0.0
        %2871 = vmatpush1.msra.mxu0 0.0
        %2872 = vmatprep.subr.mxu0 0.0
        %2873 = vmatpush1.msra.mxu0 0.0
        %2874 = vmatprep.subr.mxu0 0.0
        %2875 = vmatpush1.msra.mxu0 0.0
        %2876 = vmatprep.subr.mxu0 0.0
        %2877 = vmatpush1.msra.mxu0 0.0
        %2878 = vmatprep.subr.mxu0 0.0
        %2879 = vmatpush1.msra.mxu0 0.0
        %2880 = vmatprep.subr.mxu0 0.0
        %2881 = vmatpush1.msra.mxu0 0.0
        %2882 = vmatprep.subr.mxu0 0.0
        %2883 = vmatpush1.msra.mxu0 0.0
        %2884 = vmatprep.subr.mxu0 0.0
        %2885 = vmatpush1.msra.mxu0 0.0
        %2886 = vmatprep.subr.mxu0 0.0
        %2887 = vmatpush1.msra.mxu0 0.0
        %2888 = vmatprep.subr.mxu0 0.0
        %2889 = vmatpush1.msra.mxu0 0.0
        %2890 = vmatprep.subr.mxu0 0.0
        %2891 = vmatpush1.msra.mxu0 0.0
        %2892 = vmatprep.subr.mxu0 0.0
        %2893 = vmatpush1.msra.mxu0 0.0
        %2894 = vmatprep.subr.mxu0 0.0
        %2895 = vmatpush1.msra.mxu0 0.0
        %2896 = vmatprep.subr.mxu0 0.0
        %2897 = vmatpush1.msra.mxu0 0.0
        %2898 = vmatprep.subr.mxu0 0.0
        %2899 = vmatpush1.msra.mxu0 0.0
        %2900 = vmatprep.mubr.f32.mxu0 0.0
        %2901 = vmatmul.mubr.f32.gmra.mrb[0].mxu0 %v2825
        %v2902 = vpop.f32.mrb[0].mxu0
        %v2903 = vadd.f32 %v2807, %v2902
        %v2904 = vpop.f32.mrb[0].mxu0
        %2905 = vmatprep.mubr.f32.mxu0 0.0
        %2906 = vmatmul.mubr.f32.gmra.mrb[0].mxu0 %v2828
        %v2907 = vpop.f32.mrb[0].mxu0
        %v2908 = vadd.f32 %v2812, %v2907
        %v2909 = vpop.f32.mrb[0].mxu0
        %2910 = vmatprep.mubr.f32.mxu0 0.0
        %2911 = vmatmul.mubr.f32.gmra.mrb[0].mxu0 %v2831
        %v2912 = vpop.f32.mrb[0].mxu0
        %v2913 = vadd.f32 %v2817, %v2912
        %v2914 = vpop.f32.mrb[0].mxu0
        %2915 = vmatprep.mubr.f32.mxu0 0.0
        %2916 = vmatmul.mubr.f32.gmra.mrb[0].mxu0 %v2834
        %v2917 = vpop.f32.mrb[0].mxu0
        %v2918 = vadd.f32 %v2822, %v2917
        %v2919 = vpop.f32.mrb[0].mxu0
        %2920 = vdwg.mxu0
        %2921 = vadd.xlane.f32.xlu0 %v2903
        %v2922 = vpop.xlane.xlu0 %2921
        %2923 = vadd.xlane.f32.xlu0 %v2908
        %v2924 = vpop.xlane.xlu0 %2923
        %2925 = vadd.xlane.f32.xlu0 %v2913
        %v2926 = vpop.xlane.xlu0 %2925
        %2927 = vadd.xlane.f32.xlu0 %v2918
        %v2928 = vpop.xlane.xlu0 %2927
        %v2929 = vmul.f32 %v2922, %v2763
        %v2930 = vmul.f32 %v2924, %v2763
        %v2931 = vmul.f32 %v2926, %v2763
        %v2932 = vmul.f32 %v2928, %v2763
        %v2933 = vsub.f32 %v2903, %v2929
        %v2934 = vsub.f32 %v2908, %v2930
        %v2935 = vsub.f32 %v2913, %v2931
        %v2936 = vsub.f32 %v2918, %v2932
        %v2937 = vmul.f32 %v2933, %v2933
        %v2938 = vmul.f32 %v2934, %v2934
        %v2939 = vmul.f32 %v2935, %v2935
        %v2940 = vmul.f32 %v2936, %v2936
        %2941 = vadd.xlane.f32.xlu0 %v2937
        %v2942 = vpop.xlane.xlu0 %2941
        %2943 = vadd.xlane.f32.xlu0 %v2938
        %v2944 = vpop.xlane.xlu0 %2943
        %2945 = vadd.xlane.f32.xlu0 %v2939
        %v2946 = vpop.xlane.xlu0 %2945
        %2947 = vadd.xlane.f32.xlu0 %v2940
        %v2948 = vpop.xlane.xlu0 %2947
        %v2949 = vmul.f32 %v2942, %v2763
        %v2950 = vmul.f32 %v2944, %v2763
        %v2951 = vmul.f32 %v2946, %v2763
        %v2952 = vmul.f32 %v2948, %v2763
        %v2953 = vadd.f32 %v2949, 0.001
        %v2954 = vadd.f32 %v2950, 0.001
        %v2955 = vadd.f32 %v2951, 0.001
        %v2956 = vadd.f32 %v2952, 0.001
        %v2957 = vrsqrt.pop %v2953
        %v2958 = vrsqrt.pop %v2954
        %v2959 = vrsqrt.pop %v2955
        %v2960 = vrsqrt.pop %v2956
        %v2961 = vmul.f32 %v2933, %v2957
        %v2962 = vmul.f32 %v2934, %v2958
        %v2963 = vmul.f32 %v2935, %v2959
        %v2964 = vmul.f32 %v2936, %v2960
        %v2965 = vmax.f32 %v2961, 0.0
        %v2966 = vmax.f32 %v2962, 0.0
        %v2967 = vmax.f32 %v2963, 0.0
        %v2968 = vmax.f32 %v2964, 0.0
        %2970 = vset.pattern.permute.xlu0 0
        %2971 = vperm.xlu0 %2970, %v1479
        %v2972 = vpop.permute.xlu0 %2971
        %2975 = vset.pattern.permute.xlu0 0
        %2976 = vperm.xlu0 %2975, %v1480
        %v2977 = vpop.permute.xlu0 %2976
        %2980 = vset.pattern.permute.xlu0 0
        %2981 = vperm.xlu0 %2980, %v1481
        %v2982 = vpop.permute.xlu0 %2981
        %2985 = vset.pattern.permute.xlu0 0
        %2986 = vperm.xlu0 %2985, %v1482
        %v2987 = vpop.permute.xlu0 %2986
        %v2990 = vsel %vm1946, %v1475, 0
        %v2993 = vsel %vm1946, %v1476, 0
        %v2996 = vsel %vm1946, %v1477, 0
        %v2999 = vsel %vm1946, %v1478, 0
        %3001 = vmatprep.subr.mxu0 0.0
        %3002 = vmatpush1.msra.mxu0 %v2965
        %3003 = vmatprep.subr.mxu0 0.0
        %3004 = vmatpush1.msra.mxu0 %v2966
        %3005 = vmatprep.subr.mxu0 0.0
        %3006 = vmatpush1.msra.mxu0 %v2967
        %3007 = vmatprep.subr.mxu0 0.0
        %3008 = vmatpush1.msra.mxu0 %v2968
        %3009 = vmatprep.subr.mxu0 0.0
        %3010 = vmatpush1.msra.mxu0 0.0
        %3011 = vmatprep.subr.mxu0 0.0
        %3012 = vmatpush1.msra.mxu0 0.0
        %3013 = vmatprep.subr.mxu0 0.0
        %3014 = vmatpush1.msra.mxu0 0.0
        %3015 = vmatprep.subr.mxu0 0.0
        %3016 = vmatpush1.msra.mxu0 0.0
        %3017 = vmatprep.subr.mxu0 0.0
        %3018 = vmatpush1.msra.mxu0 0.0
        %3019 = vmatprep.subr.mxu0 0.0
        %3020 = vmatpush1.msra.mxu0 0.0
        %3021 = vmatprep.subr.mxu0 0.0
        %3022 = vmatpush1.msra.mxu0 0.0
        %3023 = vmatprep.subr.mxu0 0.0
        %3024 = vmatpush1.msra.mxu0 0.0
        %3025 = vmatprep.subr.mxu0 0.0
        %3026 = vmatpush1.msra.mxu0 0.0
        %3027 = vmatprep.subr.mxu0 0.0
        %3028 = vmatpush1.msra.mxu0 0.0
        %3029 = vmatprep.subr.mxu0 0.0
        %3030 = vmatpush1.msra.mxu0 0.0
        %3031 = vmatprep.subr.mxu0 0.0
        %3032 = vmatpush1.msra.mxu0 0.0
        %3033 = vmatprep.subr.mxu0 0.0
        %3034 = vmatpush1.msra.mxu0 0.0
        %3035 = vmatprep.subr.mxu0 0.0
        %3036 = vmatpush1.msra.mxu0 0.0
        %3037 = vmatprep.subr.mxu0 0.0
        %3038 = vmatpush1.msra.mxu0 0.0
        %3039 = vmatprep.subr.mxu0 0.0
        %3040 = vmatpush1.msra.mxu0 0.0
        %3041 = vmatprep.subr.mxu0 0.0
        %3042 = vmatpush1.msra.mxu0 0.0
        %3043 = vmatprep.subr.mxu0 0.0
        %3044 = vmatpush1.msra.mxu0 0.0
        %3045 = vmatprep.subr.mxu0 0.0
        %3046 = vmatpush1.msra.mxu0 0.0
        %3047 = vmatprep.subr.mxu0 0.0
        %3048 = vmatpush1.msra.mxu0 0.0
        %3049 = vmatprep.subr.mxu0 0.0
        %3050 = vmatpush1.msra.mxu0 0.0
        %3051 = vmatprep.subr.mxu0 0.0
        %3052 = vmatpush1.msra.mxu0 0.0
        %3053 = vmatprep.subr.mxu0 0.0
        %3054 = vmatpush1.msra.mxu0 0.0
        %3055 = vmatprep.subr.mxu0 0.0
        %3056 = vmatpush1.msra.mxu0 0.0
        %3057 = vmatprep.subr.mxu0 0.0
        %3058 = vmatpush1.msra.mxu0 0.0
        %3059 = vmatprep.subr.mxu0 0.0
        %3060 = vmatpush1.msra.mxu0 0.0
        %3061 = vmatprep.subr.mxu0 0.0
        %3062 = vmatpush1.msra.mxu0 0.0
        %3063 = vmatprep.subr.mxu0 0.0
        %3064 = vmatpush1.msra.mxu0 0.0
        %3065 = vmatprep.mubr.f32.mxu0 0.0
        %3066 = vmatmul.mubr.f32.gmra.mrb[0].mxu0 %v2990
        %v3067 = vpop.f32.mrb[0].mxu0
        %v3068 = vadd.f32 %v2972, %v3067
        %v3069 = vpop.f32.mrb[0].mxu0
        %3070 = vmatprep.mubr.f32.mxu0 0.0
        %3071 = vmatmul.mubr.f32.gmra.mrb[0].mxu0 %v2993
        %v3072 = vpop.f32.mrb[0].mxu0
        %v3073 = vadd.f32 %v2977, %v3072
        %v3074 = vpop.f32.mrb[0].mxu0
        %3075 = vmatprep.mubr.f32.mxu0 0.0
        %3076 = vmatmul.mubr.f32.gmra.mrb[0].mxu0 %v2996
        %v3077 = vpop.f32.mrb[0].mxu0
        %v3078 = vadd.f32 %v2982, %v3077
        %v3079 = vpop.f32.mrb[0].mxu0
        %3080 = vmatprep.mubr.f32.mxu0 0.0
        %3081 = vmatmul.mubr.f32.gmra.mrb[0].mxu0 %v2999
        %v3082 = vpop.f32.mrb[0].mxu0
        %v3083 = vadd.f32 %v2987, %v3082
        %v3084 = vpop.f32.mrb[0].mxu0
        %3085 = vdwg.mxu0
        %v3086 = vadd.f32 %v2751, %v3068
        %v3087 = vadd.f32 %v2752, %v3073
        %v3088 = vadd.f32 %v2753, %v3078
        %v3089 = vadd.f32 %v2754, %v3083
        %3090 = vmatprep.subr.mxu0 0.0
        %3091 = vmatpush1.xpose.msra.mxu0 %v1578
        %3092 = vmatprep.subr.mxu0 0.0
        %3093 = vmatpush1.xpose.msra.mxu0 %v1579
        %3094 = vmatprep.subr.mxu0 0.0
        %3095 = vmatpush1.xpose.msra.mxu0 0.0
        %3096 = vmatprep.subr.mxu0 0.0
        %3097 = vmatpush1.xpose.msra.mxu0 0.0
        %3098 = vmatprep.subr.mxu0 0.0
        %3099 = vmatpush1.xpose.msra.mxu0 0.0
        %3100 = vmatprep.subr.mxu0 0.0
        %3101 = vmatpush1.xpose.msra.mxu0 0.0
        %3102 = vmatprep.subr.mxu0 0.0
        %3103 = vmatpush1.xpose.msra.mxu0 0.0
        %3104 = vmatprep.subr.mxu0 0.0
        %3105 = vmatpush1.xpose.msra.mxu0 0.0
        %3106 = vmatprep.subr.mxu0 0.0
        %3107 = vmatpush1.xpose.msra.mxu0 0.0
        %3108 = vmatprep.subr.mxu0 0.0
        %3109 = vmatpush1.xpose.msra.mxu0 0.0
        %3110 = vmatprep.subr.mxu0 0.0
        %3111 = vmatpush1.xpose.msra.mxu0 0.0
        %3112 = vmatprep.subr.mxu0 0.0
        %3113 = vmatpush1.xpose.msra.mxu0 0.0
        %3114 = vmatprep.subr.mxu0 0.0
        %3115 = vmatpush1.xpose.msra.mxu0 0.0
        %3116 = vmatprep.subr.mxu0 0.0
        %3117 = vmatpush1.xpose.msra.mxu0 0.0
        %3118 = vmatprep.subr.mxu0 0.0
        %3119 = vmatpush1.xpose.msra.mxu0 0.0
        %3120 = vmatprep.subr.mxu0 0.0
        %3121 = vmatpush1.xpose.msra.mxu0 0.0
        %3122 = vmatprep.subr.mxu0 0.0
        %3123 = vmatpush1.xpose.msra.mxu0 0.0
        %3124 = vmatprep.subr.mxu0 0.0
        %3125 = vmatpush1.xpose.msra.mxu0 0.0
        %3126 = vmatprep.subr.mxu0 0.0
        %3127 = vmatpush1.xpose.msra.mxu0 0.0
        %3128 = vmatprep.subr.mxu0 0.0
        %3129 = vmatpush1.xpose.msra.mxu0 0.0
        %3130 = vmatprep.subr.mxu0 0.0
        %3131 = vmatpush1.xpose.msra.mxu0 0.0
        %3132 = vmatprep.subr.mxu0 0.0
        %3133 = vmatpush1.xpose.msra.mxu0 0.0
        %3134 = vmatprep.subr.mxu0 0.0
        %3135 = vmatpush1.xpose.msra.mxu0 0.0
        %3136 = vmatprep.subr.mxu0 0.0
        %3137 = vmatpush1.xpose.msra.mxu0 0.0
        %3138 = vmatprep.subr.mxu0 0.0
        %3139 = vmatpush1.xpose.msra.mxu0 0.0
        %3140 = vmatprep.subr.mxu0 0.0
        %3141 = vmatpush1.xpose.msra.mxu0 0.0
        %3142 = vmatprep.subr.mxu0 0.0
        %3143 = vmatpush1.xpose.msra.mxu0 0.0
        %3144 = vmatprep.subr.mxu0 0.0
        %3145 = vmatpush1.xpose.msra.mxu0 0.0
        %3146 = vmatprep.subr.mxu0 0.0
        %3147 = vmatpush1.xpose.msra.mxu0 0.0
        %3148 = vmatprep.subr.mxu0 0.0
        %3149 = vmatpush1.xpose.msra.mxu0 0.0
        %3150 = vmatprep.subr.mxu0 0.0
        %3151 = vmatpush1.xpose.msra.mxu0 0.0
        %3152 = vmatprep.subr.mxu0 0.0
        %3153 = vmatpush1.xpose.msra.mxu0 0.0
        %3154 = vmatprep.mubr.f32.mxu0 0.0
        %3155 = vmatmul.mubr.f32.gmra.mrb[0].mxu0 %v3086
        %v3156 = vpop.f32.mrb[0].mxu0
        %v3157 = vadd.f32 0.0, %v3156
        %v3158 = vpop.f32.mrb[0].mxu0
        %3159 = vmatprep.mubr.f32.mxu0 0.0
        %3160 = vmatmul.mubr.f32.gmra.mrb[0].mxu0 %v3087
        %v3161 = vpop.f32.mrb[0].mxu0
        %v3162 = vadd.f32 0.0, %v3161
        %v3163 = vpop.f32.mrb[0].mxu0
        %3164 = vmatprep.mubr.f32.mxu0 0.0
        %3165 = vmatmul.mubr.f32.gmra.mrb[0].mxu0 %v3088
        %v3166 = vpop.f32.mrb[0].mxu0
        %v3167 = vadd.f32 0.0, %v3166
        %v3168 = vpop.f32.mrb[0].mxu0
        %3169 = vmatprep.mubr.f32.mxu0 0.0
        %3170 = vmatmul.mubr.f32.gmra.mrb[0].mxu0 %v3089
        %v3171 = vpop.f32.mrb[0].mxu0
        %v3172 = vadd.f32 0.0, %v3171
        %v3173 = vpop.f32.mrb[0].mxu0
        %3174 = vdwg.mxu0
        %v3176 = vsel %vm2028, %v3157, 0
        %v3179 = vsel %vm2028, %v3162, 0
        %v3182 = vsel %vm2028, %v3167, 0
        %v3185 = vsel %vm2028, %v3172, 0
        %3187 = vmatprep.subr.mxu0 0.0
        %3188 = vmatpush1.msra.mxu0 %v1934
        %3189 = vmatprep.subr.mxu0 0.0
        %3190 = vmatpush1.msra.mxu0 %v1935
        %3191 = vmatprep.subr.mxu0 0.0
        %3192 = vmatpush1.msra.mxu0 0.0
        %3193 = vmatprep.subr.mxu0 0.0
        %3194 = vmatpush1.msra.mxu0 0.0
        %3195 = vmatprep.subr.mxu0 0.0
        %3196 = vmatpush1.msra.mxu0 0.0
        %3197 = vmatprep.subr.mxu0 0.0
        %3198 = vmatpush1.msra.mxu0 0.0
        %3199 = vmatprep.subr.mxu0 0.0
        %3200 = vmatpush1.msra.mxu0 0.0
        %3201 = vmatprep.subr.mxu0 0.0
        %3202 = vmatpush1.msra.mxu0 0.0
        %3203 = vmatprep.subr.mxu0 0.0
        %3204 = vmatpush1.msra.mxu0 0.0
        %3205 = vmatprep.subr.mxu0 0.0
        %3206 = vmatpush1.msra.mxu0 0.0
        %3207 = vmatprep.subr.mxu0 0.0
        %3208 = vmatpush1.msra.mxu0 0.0
        %3209 = vmatprep.subr.mxu0 0.0
        %3210 = vmatpush1.msra.mxu0 0.0
        %3211 = vmatprep.subr.mxu0 0.0
        %3212 = vmatpush1.msra.mxu0 0.0
        %3213 = vmatprep.subr.mxu0 0.0
        %3214 = vmatpush1.msra.mxu0 0.0
        %3215 = vmatprep.subr.mxu0 0.0
        %3216 = vmatpush1.msra.mxu0 0.0
        %3217 = vmatprep.subr.mxu0 0.0
        %3218 = vmatpush1.msra.mxu0 0.0
        %3219 = vmatprep.subr.mxu0 0.0
        %3220 = vmatpush1.msra.mxu0 0.0
        %3221 = vmatprep.subr.mxu0 0.0
        %3222 = vmatpush1.msra.mxu0 0.0
        %3223 = vmatprep.subr.mxu0 0.0
        %3224 = vmatpush1.msra.mxu0 0.0
        %3225 = vmatprep.subr.mxu0 0.0
        %3226 = vmatpush1.msra.mxu0 0.0
        %3227 = vmatprep.subr.mxu0 0.0
        %3228 = vmatpush1.msra.mxu0 0.0
        %3229 = vmatprep.subr.mxu0 0.0
        %3230 = vmatpush1.msra.mxu0 0.0
        %3231 = vmatprep.subr.mxu0 0.0
        %3232 = vmatpush1.msra.mxu0 0.0
        %3233 = vmatprep.subr.mxu0 0.0
        %3234 = vmatpush1.msra.mxu0 0.0
        %3235 = vmatprep.subr.mxu0 0.0
        %3236 = vmatpush1.msra.mxu0 0.0
        %3237 = vmatprep.subr.mxu0 0.0
        %3238 = vmatpush1.msra.mxu0 0.0
        %3239 = vmatprep.subr.mxu0 0.0
        %3240 = vmatpush1.msra.mxu0 0.0
        %3241 = vmatprep.subr.mxu0 0.0
        %3242 = vmatpush1.msra.mxu0 0.0
        %3243 = vmatprep.subr.mxu0 0.0
        %3244 = vmatpush1.msra.mxu0 0.0
        %3245 = vmatprep.subr.mxu0 0.0
        %3246 = vmatpush1.msra.mxu0 0.0
        %3247 = vmatprep.subr.mxu0 0.0
        %3248 = vmatpush1.msra.mxu0 0.0
        %3249 = vmatprep.subr.mxu0 0.0
        %3250 = vmatpush1.msra.mxu0 0.0
        %3251 = vmatprep.mubr.f32.mxu0 0.0
        %3252 = vmatmul.mubr.f32.gmra.mrb[0].mxu0 %v3176
        %v3253 = vpop.f32.mrb[0].mxu0
        %v3254 = vadd.f32 0.0, %v3253
        %v3255 = vpop.f32.mrb[0].mxu0
        %3256 = vmatprep.mubr.f32.mxu0 0.0
        %3257 = vmatmul.mubr.f32.gmra.mrb[0].mxu0 %v3179
        %v3258 = vpop.f32.mrb[0].mxu0
        %v3259 = vadd.f32 0.0, %v3258
        %v3260 = vpop.f32.mrb[0].mxu0
        %3261 = vmatprep.mubr.f32.mxu0 0.0
        %3262 = vmatmul.mubr.f32.gmra.mrb[0].mxu0 %v3182
        %v3263 = vpop.f32.mrb[0].mxu0
        %v3264 = vadd.f32 0.0, %v3263
        %v3265 = vpop.f32.mrb[0].mxu0
        %3266 = vmatprep.mubr.f32.mxu0 0.0
        %3267 = vmatmul.mubr.f32.gmra.mrb[0].mxu0 %v3185
        %v3268 = vpop.f32.mrb[0].mxu0
        %v3269 = vadd.f32 0.0, %v3268
        %v3270 = vpop.f32.mrb[0].mxu0
        %3271 = vdwg.mxu0
        %v3272 = vsub.f32 %v3254, %v3086
        %v3273 = vsub.f32 %v3259, %v3087
        %v3274 = vsub.f32 %v3264, %v3088
        %v3275 = vsub.f32 %v3269, %v3089
        %3276 = vadd.xlane.f32.xlu0 %v3272
        %v3277 = vpop.xlane.xlu0 %3276
        %3278 = vadd.xlane.f32.xlu0 %v3273
        %v3279 = vpop.xlane.xlu0 %3278
        %3280 = vadd.xlane.f32.xlu0 %v3274
        %v3281 = vpop.xlane.xlu0 %3280
        %3282 = vadd.xlane.f32.xlu0 %v3275
        %v3283 = vpop.xlane.xlu0 %3282
        %v3284 = vmul.f32 %v3277, %v2763
        %v3285 = vmul.f32 %v3279, %v2763
        %v3286 = vmul.f32 %v3281, %v2763
        %v3287 = vmul.f32 %v3283, %v2763
        %v3288 = vsub.f32 %v3272, %v3284
        %v3289 = vsub.f32 %v3273, %v3285
        %v3290 = vsub.f32 %v3274, %v3286
        %v3291 = vsub.f32 %v3275, %v3287
        %v3292 = vmul.f32 %v3288, %v3288
        %v3293 = vmul.f32 %v3289, %v3289
        %v3294 = vmul.f32 %v3290, %v3290
        %v3295 = vmul.f32 %v3291, %v3291
        %3296 = vadd.xlane.f32.xlu0 %v3292
        %v3297 = vpop.xlane.xlu0 %3296
        %3298 = vadd.xlane.f32.xlu0 %v3293
        %v3299 = vpop.xlane.xlu0 %3298
        %3300 = vadd.xlane.f32.xlu0 %v3294
        %v3301 = vpop.xlane.xlu0 %3300
        %3302 = vadd.xlane.f32.xlu0 %v3295
        %v3303 = vpop.xlane.xlu0 %3302
        %v3304 = vmul.f32 %v3297, %v2763
        %v3305 = vmul.f32 %v3299, %v2763
        %v3306 = vmul.f32 %v3301, %v2763
        %v3307 = vmul.f32 %v3303, %v2763
        %v3308 = vadd.f32 %v3304, 1e-05
        %v3309 = vadd.f32 %v3305, 1e-05
        %v3310 = vadd.f32 %v3306, 1e-05
        %v3311 = vadd.f32 %v3307, 1e-05
        %v3312 = vrsqrt.pop %v3308
        %v3313 = vrsqrt.pop %v3309
        %v3314 = vrsqrt.pop %v3310
        %v3315 = vrsqrt.pop %v3311
        %v3316 = vmul.f32 %v3288, %v3312
        %v3317 = vmul.f32 %v3289, %v3313
        %v3318 = vmul.f32 %v3290, %v3314
        %v3319 = vmul.f32 %v3291, %v3315
        %v3320 = vmax.f32 %v3316, 0.0
        %v3321 = vmax.f32 %v3317, 0.0
        %v3322 = vmax.f32 %v3318, 0.0
        %v3323 = vmax.f32 %v3319, 0.0
        %3325 = vset.pattern.permute.xlu0 0
        %3326 = vperm.xlu0 %3325, %v1487
        %v3327 = vpop.permute.xlu0 %3326
        %3330 = vset.pattern.permute.xlu0 0
        %3331 = vperm.xlu0 %3330, %v1488
        %v3332 = vpop.permute.xlu0 %3331
        %3335 = vset.pattern.permute.xlu0 0
        %3336 = vperm.xlu0 %3335, %v1489
        %v3337 = vpop.permute.xlu0 %3336
        %3340 = vset.pattern.permute.xlu0 0
        %3341 = vperm.xlu0 %3340, %v1490
        %v3342 = vpop.permute.xlu0 %3341
        %v3345 = vsel %vm1946, %v1483, 0
        %v3348 = vsel %vm1946, %v1484, 0
        %v3351 = vsel %vm1946, %v1485, 0
        %v3354 = vsel %vm1946, %v1486, 0
        %3356 = vmatprep.subr.mxu0 0.0
        %3357 = vmatpush1.msra.mxu0 %v3320
        %3358 = vmatprep.subr.mxu0 0.0
        %3359 = vmatpush1.msra.mxu0 %v3321
        %3360 = vmatprep.subr.mxu0 0.0
        %3361 = vmatpush1.msra.mxu0 %v3322
        %3362 = vmatprep.subr.mxu0 0.0
        %3363 = vmatpush1.msra.mxu0 %v3323
        %3364 = vmatprep.subr.mxu0 0.0
        %3365 = vmatpush1.msra.mxu0 0.0
        %3366 = vmatprep.subr.mxu0 0.0
        %3367 = vmatpush1.msra.mxu0 0.0
        %3368 = vmatprep.subr.mxu0 0.0
        %3369 = vmatpush1.msra.mxu0 0.0
        %3370 = vmatprep.subr.mxu0 0.0
        %3371 = vmatpush1.msra.mxu0 0.0
        %3372 = vmatprep.subr.mxu0 0.0
        %3373 = vmatpush1.msra.mxu0 0.0
        %3374 = vmatprep.subr.mxu0 0.0
        %3375 = vmatpush1.msra.mxu0 0.0
        %3376 = vmatprep.subr.mxu0 0.0
        %3377 = vmatpush1.msra.mxu0 0.0
        %3378 = vmatprep.subr.mxu0 0.0
        %3379 = vmatpush1.msra.mxu0 0.0
        %3380 = vmatprep.subr.mxu0 0.0
        %3381 = vmatpush1.msra.mxu0 0.0
        %3382 = vmatprep.subr.mxu0 0.0
        %3383 = vmatpush1.msra.mxu0 0.0
        %3384 = vmatprep.subr.mxu0 0.0
        %3385 = vmatpush1.msra.mxu0 0.0
        %3386 = vmatprep.subr.mxu0 0.0
        %3387 = vmatpush1.msra.mxu0 0.0
        %3388 = vmatprep.subr.mxu0 0.0
        %3389 = vmatpush1.msra.mxu0 0.0
        %3390 = vmatprep.subr.mxu0 0.0
        %3391 = vmatpush1.msra.mxu0 0.0
        %3392 = vmatprep.subr.mxu0 0.0
        %3393 = vmatpush1.msra.mxu0 0.0
        %3394 = vmatprep.subr.mxu0 0.0
        %3395 = vmatpush1.msra.mxu0 0.0
        %3396 = vmatprep.subr.mxu0 0.0
        %3397 = vmatpush1.msra.mxu0 0.0
        %3398 = vmatprep.subr.mxu0 0.0
        %3399 = vmatpush1.msra.mxu0 0.0
        %3400 = vmatprep.subr.mxu0 0.0
        %3401 = vmatpush1.msra.mxu0 0.0
        %3402 = vmatprep.subr.mxu0 0.0
        %3403 = vmatpush1.msra.mxu0 0.0
        %3404 = vmatprep.subr.mxu0 0.0
        %3405 = vmatpush1.msra.mxu0 0.0
        %3406 = vmatprep.subr.mxu0 0.0
        %3407 = vmatpush1.msra.mxu0 0.0
        %3408 = vmatprep.subr.mxu0 0.0
        %3409 = vmatpush1.msra.mxu0 0.0
        %3410 = vmatprep.subr.mxu0 0.0
        %3411 = vmatpush1.msra.mxu0 0.0
        %3412 = vmatprep.subr.mxu0 0.0
        %3413 = vmatpush1.msra.mxu0 0.0
        %3414 = vmatprep.subr.mxu0 0.0
        %3415 = vmatpush1.msra.mxu0 0.0
        %3416 = vmatprep.subr.mxu0 0.0
        %3417 = vmatpush1.msra.mxu0 0.0
        %3418 = vmatprep.subr.mxu0 0.0
        %3419 = vmatpush1.msra.mxu0 0.0
        %3420 = vmatprep.mubr.f32.mxu0 0.0
        %3421 = vmatmul.mubr.f32.gmra.mrb[0].mxu0 %v3345
        %v3422 = vpop.f32.mrb[0].mxu0
        %v3423 = vadd.f32 %v3327, %v3422
        %v3424 = vpop.f32.mrb[0].mxu0
        %3425 = vmatprep.mubr.f32.mxu0 0.0
        %3426 = vmatmul.mubr.f32.gmra.mrb[0].mxu0 %v3348
        %v3427 = vpop.f32.mrb[0].mxu0
        %v3428 = vadd.f32 %v3332, %v3427
        %v3429 = vpop.f32.mrb[0].mxu0
        %3430 = vmatprep.mubr.f32.mxu0 0.0
        %3431 = vmatmul.mubr.f32.gmra.mrb[0].mxu0 %v3351
        %v3432 = vpop.f32.mrb[0].mxu0
        %v3433 = vadd.f32 %v3337, %v3432
        %v3434 = vpop.f32.mrb[0].mxu0
        %3435 = vmatprep.mubr.f32.mxu0 0.0
        %3436 = vmatmul.mubr.f32.gmra.mrb[0].mxu0 %v3354
        %v3437 = vpop.f32.mrb[0].mxu0
        %v3438 = vadd.f32 %v3342, %v3437
        %v3439 = vpop.f32.mrb[0].mxu0
        %3440 = vdwg.mxu0
        %3441 = vadd.xlane.f32.xlu0 %v3423
        %v3442 = vpop.xlane.xlu0 %3441
        %3443 = vadd.xlane.f32.xlu0 %v3428
        %v3444 = vpop.xlane.xlu0 %3443
        %3445 = vadd.xlane.f32.xlu0 %v3433
        %v3446 = vpop.xlane.xlu0 %3445
        %3447 = vadd.xlane.f32.xlu0 %v3438
        %v3448 = vpop.xlane.xlu0 %3447
        %v3449 = vmul.f32 %v3442, %v2763
        %v3450 = vmul.f32 %v3444, %v2763
        %v3451 = vmul.f32 %v3446, %v2763
        %v3452 = vmul.f32 %v3448, %v2763
        %v3453 = vsub.f32 %v3423, %v3449
        %v3454 = vsub.f32 %v3428, %v3450
        %v3455 = vsub.f32 %v3433, %v3451
        %v3456 = vsub.f32 %v3438, %v3452
        %v3457 = vmul.f32 %v3453, %v3453
        %v3458 = vmul.f32 %v3454, %v3454
        %v3459 = vmul.f32 %v3455, %v3455
        %v3460 = vmul.f32 %v3456, %v3456
        %3461 = vadd.xlane.f32.xlu0 %v3457
        %v3462 = vpop.xlane.xlu0 %3461
        %3463 = vadd.xlane.f32.xlu0 %v3458
        %v3464 = vpop.xlane.xlu0 %3463
        %3465 = vadd.xlane.f32.xlu0 %v3459
        %v3466 = vpop.xlane.xlu0 %3465
        %3467 = vadd.xlane.f32.xlu0 %v3460
        %v3468 = vpop.xlane.xlu0 %3467
        %v3469 = vmul.f32 %v3462, %v2763
        %v3470 = vmul.f32 %v3464, %v2763
        %v3471 = vmul.f32 %v3466, %v2763
        %v3472 = vmul.f32 %v3468, %v2763
        %v3473 = vadd.f32 %v3469, 1e-05
        %v3474 = vadd.f32 %v3470, 1e-05
        %v3475 = vadd.f32 %v3471, 1e-05
        %v3476 = vadd.f32 %v3472, 1e-05
        %v3477 = vrsqrt.pop %v3473
        %v3478 = vrsqrt.pop %v3474
        %v3479 = vrsqrt.pop %v3475
        %v3480 = vrsqrt.pop %v3476
        %v3481 = vmul.f32 %v3453, %v3477
        %v3482 = vmul.f32 %v3454, %v3478
        %v3483 = vmul.f32 %v3455, %v3479
        %v3484 = vmul.f32 %v3456, %v3480
        %v3485 = vmax.f32 %v3481, 0.0
        %v3486 = vmax.f32 %v3482, 0.0
        %v3487 = vmax.f32 %v3483, 0.0
        %v3488 = vmax.f32 %v3484, 0.0
        %3490 = vset.pattern.permute.xlu0 0
        %3491 = vperm.xlu0 %3490, %v1495
        %v3492 = vpop.permute.xlu0 %3491
        %3495 = vset.pattern.permute.xlu0 0
        %3496 = vperm.xlu0 %3495, %v1496
        %v3497 = vpop.permute.xlu0 %3496
        %3500 = vset.pattern.permute.xlu0 0
        %3501 = vperm.xlu0 %3500, %v1497
        %v3502 = vpop.permute.xlu0 %3501
        %3505 = vset.pattern.permute.xlu0 0
        %3506 = vperm.xlu0 %3505, %v1498
        %v3507 = vpop.permute.xlu0 %3506
        %v3510 = vsel %vm1946, %v1491, 0
        %v3513 = vsel %vm1946, %v1492, 0
        %v3516 = vsel %vm1946, %v1493, 0
        %v3519 = vsel %vm1946, %v1494, 0
        %3521 = vmatprep.subr.mxu0 0.0
        %3522 = vmatpush1.msra.mxu0 %v3485
        %3523 = vmatprep.subr.mxu0 0.0
        %3524 = vmatpush1.msra.mxu0 %v3486
        %3525 = vmatprep.subr.mxu0 0.0
        %3526 = vmatpush1.msra.mxu0 %v3487
        %3527 = vmatprep.subr.mxu0 0.0
        %3528 = vmatpush1.msra.mxu0 %v3488
        %3529 = vmatprep.subr.mxu0 0.0
        %3530 = vmatpush1.msra.mxu0 0.0
        %3531 = vmatprep.subr.mxu0 0.0
        %3532 = vmatpush1.msra.mxu0 0.0
        %3533 = vmatprep.subr.mxu0 0.0
        %3534 = vmatpush1.msra.mxu0 0.0
        %3535 = vmatprep.subr.mxu0 0.0
        %3536 = vmatpush1.msra.mxu0 0.0
        %3537 = vmatprep.subr.mxu0 0.0
        %3538 = vmatpush1.msra.mxu0 0.0
        %3539 = vmatprep.subr.mxu0 0.0
        %3540 = vmatpush1.msra.mxu0 0.0
        %3541 = vmatprep.subr.mxu0 0.0
        %3542 = vmatpush1.msra.mxu0 0.0
        %3543 = vmatprep.subr.mxu0 0.0
        %3544 = vmatpush1.msra.mxu0 0.0
        %3545 = vmatprep.subr.mxu0 0.0
        %3546 = vmatpush1.msra.mxu0 0.0
        %3547 = vmatprep.subr.mxu0 0.0
        %3548 = vmatpush1.msra.mxu0 0.0
        %3549 = vmatprep.subr.mxu0 0.0
        %3550 = vmatpush1.msra.mxu0 0.0
        %3551 = vmatprep.subr.mxu0 0.0
        %3552 = vmatpush1.msra.mxu0 0.0
        %3553 = vmatprep.subr.mxu0 0.0
        %3554 = vmatpush1.msra.mxu0 0.0
        %3555 = vmatprep.subr.mxu0 0.0
        %3556 = vmatpush1.msra.mxu0 0.0
        %3557 = vmatprep.subr.mxu0 0.0
        %3558 = vmatpush1.msra.mxu0 0.0
        %3559 = vmatprep.subr.mxu0 0.0
        %3560 = vmatpush1.msra.mxu0 0.0
        %3561 = vmatprep.subr.mxu0 0.0
        %3562 = vmatpush1.msra.mxu0 0.0
        %3563 = vmatprep.subr.mxu0 0.0
        %3564 = vmatpush1.msra.mxu0 0.0
        %3565 = vmatprep.subr.mxu0 0.0
        %3566 = vmatpush1.msra.mxu0 0.0
        %3567 = vmatprep.subr.mxu0 0.0
        %3568 = vmatpush1.msra.mxu0 0.0
        %3569 = vmatprep.subr.mxu0 0.0
        %3570 = vmatpush1.msra.mxu0 0.0
        %3571 = vmatprep.subr.mxu0 0.0
        %3572 = vmatpush1.msra.mxu0 0.0
        %3573 = vmatprep.subr.mxu0 0.0
        %3574 = vmatpush1.msra.mxu0 0.0
        %3575 = vmatprep.subr.mxu0 0.0
        %3576 = vmatpush1.msra.mxu0 0.0
        %3577 = vmatprep.subr.mxu0 0.0
        %3578 = vmatpush1.msra.mxu0 0.0
        %3579 = vmatprep.subr.mxu0 0.0
        %3580 = vmatpush1.msra.mxu0 0.0
        %3581 = vmatprep.subr.mxu0 0.0
        %3582 = vmatpush1.msra.mxu0 0.0
        %3583 = vmatprep.subr.mxu0 0.0
        %3584 = vmatpush1.msra.mxu0 0.0
        %3585 = vmatprep.mubr.f32.mxu0 0.0
        %3586 = vmatmul.mubr.f32.gmra.mrb[0].mxu0 %v3510
        %v3587 = vpop.f32.mrb[0].mxu0
        %v3588 = vadd.f32 %v3492, %v3587
        %v3589 = vpop.f32.mrb[0].mxu0
        %3590 = vmatprep.mubr.f32.mxu0 0.0
        %3591 = vmatmul.mubr.f32.gmra.mrb[0].mxu0 %v3513
        %v3592 = vpop.f32.mrb[0].mxu0
        %v3593 = vadd.f32 %v3497, %v3592
        %v3594 = vpop.f32.mrb[0].mxu0
        %3595 = vmatprep.mubr.f32.mxu0 0.0
        %3596 = vmatmul.mubr.f32.gmra.mrb[0].mxu0 %v3516
        %v3597 = vpop.f32.mrb[0].mxu0
        %v3598 = vadd.f32 %v3502, %v3597
        %v3599 = vpop.f32.mrb[0].mxu0
        %3600 = vmatprep.mubr.f32.mxu0 0.0
        %3601 = vmatmul.mubr.f32.gmra.mrb[0].mxu0 %v3519
        %v3602 = vpop.f32.mrb[0].mxu0
        %v3603 = vadd.f32 %v3507, %v3602
        %v3604 = vpop.f32.mrb[0].mxu0
        %3605 = vdwg.mxu0
        %v3606 = vadd.f32 %v3086, %v3588
        %v3607 = vadd.f32 %v3087, %v3593
        %v3608 = vadd.f32 %v3088, %v3598
        %v3609 = vadd.f32 %v3089, %v3603
        %3610 = vadd.xlane.f32.xlu0 %v3606
        %v3611 = vpop.xlane.xlu0 %3610
        %3612 = vadd.xlane.f32.xlu0 %v3607
        %v3613 = vpop.xlane.xlu0 %3612
        %3614 = vadd.xlane.f32.xlu0 %v3608
        %v3615 = vpop.xlane.xlu0 %3614
        %3616 = vadd.xlane.f32.xlu0 %v3609
        %v3617 = vpop.xlane.xlu0 %3616
        %v3618 = vmul.f32 %v3611, %v2763
        %v3619 = vmul.f32 %v3613, %v2763
        %v3620 = vmul.f32 %v3615, %v2763
        %v3621 = vmul.f32 %v3617, %v2763
        %v3622 = vsub.f32 %v3606, %v3618
        %v3623 = vsub.f32 %v3607, %v3619
        %v3624 = vsub.f32 %v3608, %v3620
        %v3625 = vsub.f32 %v3609, %v3621
        %v3626 = vmul.f32 %v3622, %v3622
        %v3627 = vmul.f32 %v3623, %v3623
        %v3628 = vmul.f32 %v3624, %v3624
        %v3629 = vmul.f32 %v3625, %v3625
        %3630 = vadd.xlane.f32.xlu0 %v3626
        %v3631 = vpop.xlane.xlu0 %3630
        %3632 = vadd.xlane.f32.xlu0 %v3627
        %v3633 = vpop.xlane.xlu0 %3632
        %3634 = vadd.xlane.f32.xlu0 %v3628
        %v3635 = vpop.xlane.xlu0 %3634
        %3636 = vadd.xlane.f32.xlu0 %v3629
        %v3637 = vpop.xlane.xlu0 %3636
        %v3638 = vmul.f32 %v3631, %v2763
        %v3639 = vmul.f32 %v3633, %v2763
        %v3640 = vmul.f32 %v3635, %v2763
        %v3641 = vmul.f32 %v3637, %v2763
        %v3642 = vadd.f32 %v3638, 0.001
        %v3643 = vadd.f32 %v3639, 0.001
        %v3644 = vadd.f32 %v3640, 0.001
        %v3645 = vadd.f32 %v3641, 0.001
        %v3646 = vrsqrt.pop %v3642
        %v3647 = vrsqrt.pop %v3643
        %v3648 = vrsqrt.pop %v3644
        %v3649 = vrsqrt.pop %v3645
        %v3650 = vmul.f32 %v3622, %v3646
        %v3651 = vmul.f32 %v3623, %v3647
        %v3652 = vmul.f32 %v3624, %v3648
        %v3653 = vmul.f32 %v3625, %v3649
        %v3654 = vmax.f32 %v3650, 0.0
        %v3655 = vmax.f32 %v3651, 0.0
        %v3656 = vmax.f32 %v3652, 0.0
        %v3657 = vmax.f32 %v3653, 0.0
        %3659 = vset.pattern.permute.xlu0 0
        %3660 = vperm.xlu0 %3659, %v1500
        %v3661 = vpop.permute.xlu0 %3660
        %v3664 = vsel %vm1946, %v1499, 0
        %3666 = vmatprep.subr.mxu0 0.0
        %3667 = vmatpush1.msra.mxu0 %v3654
        %3668 = vmatprep.subr.mxu0 0.0
        %3669 = vmatpush1.msra.mxu0 %v3655
        %3670 = vmatprep.subr.mxu0 0.0
        %3671 = vmatpush1.msra.mxu0 %v3656
        %3672 = vmatprep.subr.mxu0 0.0
        %3673 = vmatpush1.msra.mxu0 %v3657
        %3674 = vmatprep.subr.mxu0 0.0
        %3675 = vmatpush1.msra.mxu0 0.0
        %3676 = vmatprep.subr.mxu0 0.0
        %3677 = vmatpush1.msra.mxu0 0.0
        %3678 = vmatprep.subr.mxu0 0.0
        %3679 = vmatpush1.msra.mxu0 0.0
        %3680 = vmatprep.subr.mxu0 0.0
        %3681 = vmatpush1.msra.mxu0 0.0
        %3682 = vmatprep.subr.mxu0 0.0
        %3683 = vmatpush1.msra.mxu0 0.0
        %3684 = vmatprep.subr.mxu0 0.0
        %3685 = vmatpush1.msra.mxu0 0.0
        %3686 = vmatprep.subr.mxu0 0.0
        %3687 = vmatpush1.msra.mxu0 0.0
        %3688 = vmatprep.subr.mxu0 0.0
        %3689 = vmatpush1.msra.mxu0 0.0
        %3690 = vmatprep.subr.mxu0 0.0
        %3691 = vmatpush1.msra.mxu0 0.0
        %3692 = vmatprep.subr.mxu0 0.0
        %3693 = vmatpush1.msra.mxu0 0.0
        %3694 = vmatprep.subr.mxu0 0.0
        %3695 = vmatpush1.msra.mxu0 0.0
        %3696 = vmatprep.subr.mxu0 0.0
        %3697 = vmatpush1.msra.mxu0 0.0
        %3698 = vmatprep.subr.mxu0 0.0
        %3699 = vmatpush1.msra.mxu0 0.0
        %3700 = vmatprep.subr.mxu0 0.0
        %3701 = vmatpush1.msra.mxu0 0.0
        %3702 = vmatprep.subr.mxu0 0.0
        %3703 = vmatpush1.msra.mxu0 0.0
        %3704 = vmatprep.subr.mxu0 0.0
        %3705 = vmatpush1.msra.mxu0 0.0
        %3706 = vmatprep.subr.mxu0 0.0
        %3707 = vmatpush1.msra.mxu0 0.0
        %3708 = vmatprep.subr.mxu0 0.0
        %3709 = vmatpush1.msra.mxu0 0.0
        %3710 = vmatprep.subr.mxu0 0.0
        %3711 = vmatpush1.msra.mxu0 0.0
        %3712 = vmatprep.subr.mxu0 0.0
        %3713 = vmatpush1.msra.mxu0 0.0
        %3714 = vmatprep.subr.mxu0 0.0
        %3715 = vmatpush1.msra.mxu0 0.0
        %3716 = vmatprep.subr.mxu0 0.0
        %3717 = vmatpush1.msra.mxu0 0.0
        %3718 = vmatprep.subr.mxu0 0.0
        %3719 = vmatpush1.msra.mxu0 0.0
        %3720 = vmatprep.subr.mxu0 0.0
        %3721 = vmatpush1.msra.mxu0 0.0
        %3722 = vmatprep.subr.mxu0 0.0
        %3723 = vmatpush1.msra.mxu0 0.0
        %3724 = vmatprep.subr.mxu0 0.0
        %3725 = vmatpush1.msra.mxu0 0.0
        %3726 = vmatprep.subr.mxu0 0.0
        %3727 = vmatpush1.msra.mxu0 0.0
        %3728 = vmatprep.subr.mxu0 0.0
        %3729 = vmatpush1.msra.mxu0 0.0
        %3730 = vmatprep.mubr.f32.mxu0 0.0
        %3731 = vmatmul.mubr.f32.gmra.mrb[0].mxu0 %v3664
        %v3732 = vpop.f32.mrb[0].mxu0
        %v3733 = vadd.f32 %v3661, %v3732
        %v3734 = vpop.f32.mrb[0].mxu0
        %3735 = vdwg.mxu0
        %3736 = vmax.xlane.f32.xlu0 %v3733
        %v3737 = vpop.xlane.xlu0 %3736
        %v3738 = vsub.f32 %v3733, %v3737
        %v3739 = vmul.f32 %v3738, 1.442695
        %v3740 = vpow.pop %v3739
        %3741 = vadd.xlane.f32.xlu0 %v3740
        %v3742 = vpop.xlane.xlu0 %3741
        %v3743 = vrcp.pop %v3742
        %v3744 = vmul.f32 %v3740, %v3743
        %3745 = vmatprep.subr.mxu0 0.0
        %3746 = vmatpush1.xpose.msra.mxu0 %v3744
        %3747 = vmatprep.subr.mxu0 0.0
        %3748 = vmatpush1.xpose.msra.mxu0 0.0
        %3749 = vmatprep.subr.mxu0 0.0
        %3750 = vmatpush1.xpose.msra.mxu0 0.0
        %3751 = vmatprep.subr.mxu0 0.0
        %3752 = vmatpush1.xpose.msra.mxu0 0.0
        %3753 = vmatprep.subr.mxu0 0.0
        %3754 = vmatpush1.xpose.msra.mxu0 0.0
        %3755 = vmatprep.subr.mxu0 0.0
        %3756 = vmatpush1.xpose.msra.mxu0 0.0
        %3757 = vmatprep.subr.mxu0 0.0
        %3758 = vmatpush1.xpose.msra.mxu0 0.0
        %3759 = vmatprep.subr.mxu0 0.0
        %3760 = vmatpush1.xpose.msra.mxu0 0.0
        %3761 = vmatprep.subr.mxu0 0.0
        %3762 = vmatpush1.xpose.msra.mxu0 0.0
        %3763 = vmatprep.subr.mxu0 0.0
        %3764 = vmatpush1.xpose.msra.mxu0 0.0
        %3765 = vmatprep.subr.mxu0 0.0
        %3766 = vmatpush1.xpose.msra.mxu0 0.0
        %3767 = vmatprep.subr.mxu0 0.0
        %3768 = vmatpush1.xpose.msra.mxu0 0.0
        %3769 = vmatprep.subr.mxu0 0.0
        %3770 = vmatpush1.xpose.msra.mxu0 0.0
        %3771 = vmatprep.subr.mxu0 0.0
        %3772 = vmatpush1.xpose.msra.mxu0 0.0
        %3773 = vmatprep.subr.mxu0 0.0
        %3774 = vmatpush1.xpose.msra.mxu0 0.0
        %3775 = vmatprep.subr.mxu0 0.0
        %3776 = vmatpush1.xpose.msra.mxu0 0.0
        %3777 = vmatprep.subr.mxu0 0.0
        %3778 = vmatpush1.xpose.msra.mxu0 0.0
        %3779 = vmatprep.subr.mxu0 0.0
        %3780 = vmatpush1.xpose.msra.mxu0 0.0
        %3781 = vmatprep.subr.mxu0 0.0
        %3782 = vmatpush1.xpose.msra.mxu0 0.0
        %3783 = vmatprep.subr.mxu0 0.0
        %3784 = vmatpush1.xpose.msra.mxu0 0.0
        %3785 = vmatprep.subr.mxu0 0.0
        %3786 = vmatpush1.xpose.msra.mxu0 0.0
        %3787 = vmatprep.subr.mxu0 0.0
        %3788 = vmatpush1.xpose.msra.mxu0 0.0
        %3789 = vmatprep.subr.mxu0 0.0
        %3790 = vmatpush1.xpose.msra.mxu0 0.0
        %3791 = vmatprep.subr.mxu0 0.0
        %3792 = vmatpush1.xpose.msra.mxu0 0.0
        %3793 = vmatprep.subr.mxu0 0.0
        %3794 = vmatpush1.xpose.msra.mxu0 0.0
        %3795 = vmatprep.subr.mxu0 0.0
        %3796 = vmatpush1.xpose.msra.mxu0 0.0
        %3797 = vmatprep.subr.mxu0 0.0
        %3798 = vmatpush1.xpose.msra.mxu0 0.0
        %3799 = vmatprep.subr.mxu0 0.0
        %3800 = vmatpush1.xpose.msra.mxu0 0.0
        %3801 = vmatprep.subr.mxu0 0.0
        %3802 = vmatpush1.xpose.msra.mxu0 0.0
        %3803 = vmatprep.subr.mxu0 0.0
        %3804 = vmatpush1.xpose.msra.mxu0 0.0
        %3805 = vmatprep.subr.mxu0 0.0
        %3806 = vmatpush1.xpose.msra.mxu0 0.0
        %3807 = vmatprep.subr.mxu0 0.0
        %3808 = vmatpush1.xpose.msra.mxu0 0.0
        %3809 = vmatprep.mubr.f32.mxu0 0.0
        %3810 = vmatmul.mubr.f32.gmra.mrb[0].mxu0 %v3606
        %v3811 = vpop.f32.mrb[0].mxu0
        %v3812 = vadd.f32 0.0, %v3811
        %v3813 = vpop.f32.mrb[0].mxu0
        %3814 = vmatprep.mubr.f32.mxu0 0.0
        %3815 = vmatmul.mubr.f32.gmra.mrb[0].mxu0 %v3607
        %v3816 = vpop.f32.mrb[0].mxu0
        %v3817 = vadd.f32 0.0, %v3816
        %v3818 = vpop.f32.mrb[0].mxu0
        %3819 = vmatprep.mubr.f32.mxu0 0.0
        %3820 = vmatmul.mubr.f32.gmra.mrb[0].mxu0 %v3608
        %v3821 = vpop.f32.mrb[0].mxu0
        %v3822 = vadd.f32 0.0, %v3821
        %v3823 = vpop.f32.mrb[0].mxu0
        %3824 = vmatprep.mubr.f32.mxu0 0.0
        %3825 = vmatmul.mubr.f32.gmra.mrb[0].mxu0 %v3609
        %v3826 = vpop.f32.mrb[0].mxu0
        %v3827 = vadd.f32 0.0, %v3826
        %v3828 = vpop.f32.mrb[0].mxu0
        %3829 = vdwg.mxu0
        %vm3830 = vcmask 64512
        %v3831 = vsel %vm3830, %v3812, 0.0
        %3832 = vadd.xlane.f32.xlu0 %v3831
        %v3833 = vpop.xlane.xlu0 %3832
        %v3834 = vsel %vm3830, %v3817, 0.0
        %3835 = vadd.xlane.f32.xlu0 %v3834
        %v3836 = vpop.xlane.xlu0 %3835
        %v3837 = vsel %vm3830, %v3822, 0.0
        %3838 = vadd.xlane.f32.xlu0 %v3837
        %v3839 = vpop.xlane.xlu0 %3838
        %v3840 = vsel %vm3830, %v3827, 0.0
        %3841 = vadd.xlane.f32.xlu0 %v3840
        %v3842 = vpop.xlane.xlu0 %3841
        %v3843 = vrcp.pop 8.0
        %v3844 = vmul.f32 %v3833, %v3843
        %v3845 = vmul.f32 %v3836, %v3843
        %v3846 = vmul.f32 %v3839, %v3843
        %v3847 = vmul.f32 %v3842, %v3843
        %v3848 = vsub.f32 %v3812, %v3844
        %v3849 = vsub.f32 %v3817, %v3845
        %v3850 = vsub.f32 %v3822, %v3846
        %v3851 = vsub.f32 %v3827, %v3847
        %v3852 = vmul.f32 %v3848, %v3848
        %v3853 = vmul.f32 %v3849, %v3849
        %v3854 = vmul.f32 %v3850, %v3850
        %v3855 = vmul.f32 %v3851, %v3851
        %v3856 = vsel %vm3830, %v3852, 0.0
        %3857 = vadd.xlane.f32.xlu0 %v3856
        %v3858 = vpop.xlane.xlu0 %3857
        %v3859 = vsel %vm3830, %v3853, 0.0
        %3860 = vadd.xlane.f32.xlu0 %v3859
        %v3861 = vpop.xlane.xlu0 %3860
        %v3862 = vsel %vm3830, %v3854, 0.0
        %3863 = vadd.xlane.f32.xlu0 %v3862
        %v3864 = vpop.xlane.xlu0 %3863
        %v3865 = vsel %vm3830, %v3855, 0.0
        %3866 = vadd.xlane.f32.xlu0 %v3865
        %v3867 = vpop.xlane.xlu0 %3866
        %v3868 = vmul.f32 %v3858, %v3843
        %v3869 = vmul.f32 %v3861, %v3843
        %v3870 = vmul.f32 %v3864, %v3843
        %v3871 = vmul.f32 %v3867, %v3843
        %v3872 = vadd.f32 %v3868, 0.001
        %v3873 = vadd.f32 %v3869, 0.001
        %v3874 = vadd.f32 %v3870, 0.001
        %v3875 = vadd.f32 %v3871, 0.001
        %v3876 = vrsqrt.pop %v3872
        %v3877 = vrsqrt.pop %v3873
        %v3878 = vrsqrt.pop %v3874
        %v3879 = vrsqrt.pop %v3875
        %v3880 = vmul.f32 %v3848, %v3876
        %v3881 = vmul.f32 %v3849, %v3877
        %v3882 = vmul.f32 %v3850, %v3878
        %v3883 = vmul.f32 %v3851, %v3879
        %v3884 = vmax.f32 %v3880, 0.0
        %v3885 = vmax.f32 %v3881, 0.0
        %v3886 = vmax.f32 %v3882, 0.0
        %v3887 = vmax.f32 %v3883, 0.0
        %3889 = vset.pattern.permute.xlu0 0
        %3890 = vperm.xlu0 %3889, %v1505
        %v3891 = vpop.permute.xlu0 %3890
        %3894 = vset.pattern.permute.xlu0 0
        %3895 = vperm.xlu0 %3894, %v1506
        %v3896 = vpop.permute.xlu0 %3895
        %3899 = vset.pattern.permute.xlu0 0
        %3900 = vperm.xlu0 %3899, %v1507
        %v3901 = vpop.permute.xlu0 %3900
        %3904 = vset.pattern.permute.xlu0 0
        %3905 = vperm.xlu0 %3904, %v1508
        %v3906 = vpop.permute.xlu0 %3905
        %v3909 = vsel %vm1946, %v1501, 0
        %v3912 = vsel %vm1946, %v1502, 0
        %v3915 = vsel %vm1946, %v1503, 0
        %v3918 = vsel %vm1946, %v1504, 0
        %3920 = vmatprep.subr.mxu0 0.0
        %3921 = vmatpush1.msra.mxu0 %v3884
        %3922 = vmatprep.subr.mxu0 0.0
        %3923 = vmatpush1.msra.mxu0 %v3885
        %3924 = vmatprep.subr.mxu0 0.0
        %3925 = vmatpush1.msra.mxu0 %v3886
        %3926 = vmatprep.subr.mxu0 0.0
        %3927 = vmatpush1.msra.mxu0 %v3887
        %3928 = vmatprep.subr.mxu0 0.0
        %3929 = vmatpush1.msra.mxu0 0.0
        %3930 = vmatprep.subr.mxu0 0.0
        %3931 = vmatpush1.msra.mxu0 0.0
        %3932 = vmatprep.subr.mxu0 0.0
        %3933 = vmatpush1.msra.mxu0 0.0
        %3934 = vmatprep.subr.mxu0 0.0
        %3935 = vmatpush1.msra.mxu0 0.0
        %3936 = vmatprep.subr.mxu0 0.0
        %3937 = vmatpush1.msra.mxu0 0.0
        %3938 = vmatprep.subr.mxu0 0.0
        %3939 = vmatpush1.msra.mxu0 0.0
        %3940 = vmatprep.subr.mxu0 0.0
        %3941 = vmatpush1.msra.mxu0 0.0
        %3942 = vmatprep.subr.mxu0 0.0
        %3943 = vmatpush1.msra.mxu0 0.0
        %3944 = vmatprep.subr.mxu0 0.0
        %3945 = vmatpush1.msra.mxu0 0.0
        %3946 = vmatprep.subr.mxu0 0.0
        %3947 = vmatpush1.msra.mxu0 0.0
        %3948 = vmatprep.subr.mxu0 0.0
        %3949 = vmatpush1.msra.mxu0 0.0
        %3950 = vmatprep.subr.mxu0 0.0
        %3951 = vmatpush1.msra.mxu0 0.0
        %3952 = vmatprep.subr.mxu0 0.0
        %3953 = vmatpush1.msra.mxu0 0.0
        %3954 = vmatprep.subr.mxu0 0.0
        %3955 = vmatpush1.msra.mxu0 0.0
        %3956 = vmatprep.subr.mxu0 0.0
        %3957 = vmatpush1.msra.mxu0 0.0
        %3958 = vmatprep.subr.mxu0 0.0
        %3959 = vmatpush1.msra.mxu0 0.0
        %3960 = vmatprep.subr.mxu0 0.0
        %3961 = vmatpush1.msra.mxu0 0.0
        %3962 = vmatprep.subr.mxu0 0.0
        %3963 = vmatpush1.msra.mxu0 0.0
        %3964 = vmatprep.subr.mxu0 0.0
        %3965 = vmatpush1.msra.mxu0 0.0
        %3966 = vmatprep.subr.mxu0 0.0
        %3967 = vmatpush1.msra.mxu0 0.0
        %3968 = vmatprep.subr.mxu0 0.0
        %3969 = vmatpush1.msra.mxu0 0.0
        %3970 = vmatprep.subr.mxu0 0.0
        %3971 = vmatpush1.msra.mxu0 0.0
        %3972 = vmatprep.subr.mxu0 0.0
        %3973 = vmatpush1.msra.mxu0 0.0
        %3974 = vmatprep.subr.mxu0 0.0
        %3975 = vmatpush1.msra.mxu0 0.0
        %3976 = vmatprep.subr.mxu0 0.0
        %3977 = vmatpush1.msra.mxu0 0.0
        %3978 = vmatprep.subr.mxu0 0.0
        %3979 = vmatpush1.msra.mxu0 0.0
        %3980 = vmatprep.subr.mxu0 0.0
        %3981 = vmatpush1.msra.mxu0 0.0
        %3982 = vmatprep.subr.mxu0 0.0
        %3983 = vmatpush1.msra.mxu0 0.0
        %3984 = vmatprep.mubr.f32.mxu0 0.0
        %3985 = vmatmul.mubr.f32.gmra.mrb[0].mxu0 %v3909
        %v3986 = vpop.f32.mrb[0].mxu0
        %v3987 = vadd.f32 %v3891, %v3986
        %v3988 = vpop.f32.mrb[0].mxu0
        %3989 = vmatprep.mubr.f32.mxu0 0.0
        %3990 = vmatmul.mubr.f32.gmra.mrb[0].mxu0 %v3912
        %v3991 = vpop.f32.mrb[0].mxu0
        %v3992 = vadd.f32 %v3896, %v3991
        %v3993 = vpop.f32.mrb[0].mxu0
        %3994 = vmatprep.mubr.f32.mxu0 0.0
        %3995 = vmatmul.mubr.f32.gmra.mrb[0].mxu0 %v3915
        %v3996 = vpop.f32.mrb[0].mxu0
        %v3997 = vadd.f32 %v3901, %v3996
        %v3998 = vpop.f32.mrb[0].mxu0
        %3999 = vmatprep.mubr.f32.mxu0 0.0
        %4000 = vmatmul.mubr.f32.gmra.mrb[0].mxu0 %v3918
        %v4001 = vpop.f32.mrb[0].mxu0
        %v4002 = vadd.f32 %v3906, %v4001
        %v4003 = vpop.f32.mrb[0].mxu0
        %4004 = vdwg.mxu0
        %v4005 = vmax.f32 %v3987, 0.0
        %v4006 = vmax.f32 %v3992, 0.0
        %v4007 = vmax.f32 %v3997, 0.0
        %v4008 = vmax.f32 %v4002, 0.0
        %v4010 = vsel %vm3830, %v4005, 0
        %v4013 = vsel %vm3830, %v4006, 0
        %v4016 = vsel %vm3830, %v4007, 0
        %v4019 = vsel %vm3830, %v4008, 0
        %4021 = vmatprep.subr.mxu0 0.0
        %4022 = vmatpush1.msra.mxu0 %v1509
        %4023 = vmatprep.subr.mxu0 0.0
        %4024 = vmatpush1.msra.mxu0 0.0
        %4025 = vmatprep.subr.mxu0 0.0
        %4026 = vmatpush1.msra.mxu0 0.0
        %4027 = vmatprep.subr.mxu0 0.0
        %4028 = vmatpush1.msra.mxu0 0.0
        %4029 = vmatprep.subr.mxu0 0.0
        %4030 = vmatpush1.msra.mxu0 0.0
        %4031 = vmatprep.subr.mxu0 0.0
        %4032 = vmatpush1.msra.mxu0 0.0
        %4033 = vmatprep.subr.mxu0 0.0
        %4034 = vmatpush1.msra.mxu0 0.0
        %4035 = vmatprep.subr.mxu0 0.0
        %4036 = vmatpush1.msra.mxu0 0.0
        %4037 = vmatprep.subr.mxu0 0.0
        %4038 = vmatpush1.msra.mxu0 0.0
        %4039 = vmatprep.subr.mxu0 0.0
        %4040 = vmatpush1.msra.mxu0 0.0
        %4041 = vmatprep.subr.mxu0 0.0
        %4042 = vmatpush1.msra.mxu0 0.0
        %4043 = vmatprep.subr.mxu0 0.0
        %4044 = vmatpush1.msra.mxu0 0.0
        %4045 = vmatprep.subr.mxu0 0.0
        %4046 = vmatpush1.msra.mxu0 0.0
        %4047 = vmatprep.subr.mxu0 0.0
        %4048 = vmatpush1.msra.mxu0 0.0
        %4049 = vmatprep.subr.mxu0 0.0
        %4050 = vmatpush1.msra.mxu0 0.0
        %4051 = vmatprep.subr.mxu0 0.0
        %4052 = vmatpush1.msra.mxu0 0.0
        %4053 = vmatprep.subr.mxu0 0.0
        %4054 = vmatpush1.msra.mxu0 0.0
        %4055 = vmatprep.subr.mxu0 0.0
        %4056 = vmatpush1.msra.mxu0 0.0
        %4057 = vmatprep.subr.mxu0 0.0
        %4058 = vmatpush1.msra.mxu0 0.0
        %4059 = vmatprep.subr.mxu0 0.0
        %4060 = vmatpush1.msra.mxu0 0.0
        %4061 = vmatprep.subr.mxu0 0.0
        %4062 = vmatpush1.msra.mxu0 0.0
        %4063 = vmatprep.subr.mxu0 0.0
        %4064 = vmatpush1.msra.mxu0 0.0
        %4065 = vmatprep.subr.mxu0 0.0
        %4066 = vmatpush1.msra.mxu0 0.0
        %4067 = vmatprep.subr.mxu0 0.0
        %4068 = vmatpush1.msra.mxu0 0.0
        %4069 = vmatprep.subr.mxu0 0.0
        %4070 = vmatpush1.msra.mxu0 0.0
        %4071 = vmatprep.subr.mxu0 0.0
        %4072 = vmatpush1.msra.mxu0 0.0
        %4073 = vmatprep.subr.mxu0 0.0
        %4074 = vmatpush1.msra.mxu0 0.0
        %4075 = vmatprep.subr.mxu0 0.0
        %4076 = vmatpush1.msra.mxu0 0.0
        %4077 = vmatprep.subr.mxu0 0.0
        %4078 = vmatpush1.msra.mxu0 0.0
        %4079 = vmatprep.subr.mxu0 0.0
        %4080 = vmatpush1.msra.mxu0 0.0
        %4081 = vmatprep.subr.mxu0 0.0
        %4082 = vmatpush1.msra.mxu0 0.0
        %4083 = vmatprep.subr.mxu0 0.0
        %4084 = vmatpush1.msra.mxu0 0.0
        %4085 = vmatprep.mubr.f32.mxu0 0.0
        %4086 = vmatmul.mubr.f32.gmra.mrb[0].mxu0 %v4010
        %v4087 = vpop.f32.mrb[0].mxu0
        %v4088 = vadd.f32 0.0, %v4087
        %v4089 = vpop.f32.mrb[0].mxu0
        %4090 = vmatprep.mubr.f32.mxu0 0.0
        %4091 = vmatmul.mubr.f32.gmra.mrb[0].mxu0 %v4013
        %v4092 = vpop.f32.mrb[0].mxu0
        %v4093 = vadd.f32 0.0, %v4092
        %v4094 = vpop.f32.mrb[0].mxu0
        %4095 = vmatprep.mubr.f32.mxu0 0.0
        %4096 = vmatmul.mubr.f32.gmra.mrb[0].mxu0 %v4016
        %v4097 = vpop.f32.mrb[0].mxu0
        %v4098 = vadd.f32 0.0, %v4097
        %v4099 = vpop.f32.mrb[0].mxu0
        %4100 = vmatprep.mubr.f32.mxu0 0.0
        %4101 = vmatmul.mubr.f32.gmra.mrb[0].mxu0 %v4019
        %v4102 = vpop.f32.mrb[0].mxu0
        %v4103 = vadd.f32 0.0, %v4102
        %v4104 = vpop.f32.mrb[0].mxu0
        %4105 = vdwg.mxu0
        %v4106 = vadd.f32 %v3987, %v4088
        %v4107 = vadd.f32 %v3992, %v4093
        %v4108 = vadd.f32 %v3997, %v4098
        %v4109 = vadd.f32 %v4002, %v4103
        %v4111 = vlaneseq
        %v4112 = vshrl.u32 %v4111, 7
        %v4113 = vsub.s32 0, %v4112
        %v4114 = vrot.slane %v1510, %v4113
        %v4116 = vadd.f32 %v4106, %v4114
        %v4117 = vadd.f32 %v4107, %v4114
        %v4118 = vadd.f32 %v4108, %v4114
        %v4119 = vadd.f32 %v4109, %v4114
        %v4120 = vsel %vm3830, %v4116, 0.0
        %4121 = vadd.xlane.f32.xlu0 %v4120
        %v4122 = vpop.xlane.xlu0 %4121
        %v4123 = vsel %vm3830, %v4117, 0.0
        %4124 = vadd.xlane.f32.xlu0 %v4123
        %v4125 = vpop.xlane.xlu0 %4124
        %v4126 = vsel %vm3830, %v4118, 0.0
        %4127 = vadd.xlane.f32.xlu0 %v4126
        %v4128 = vpop.xlane.xlu0 %4127
        %v4129 = vsel %vm3830, %v4119, 0.0
        %4130 = vadd.xlane.f32.xlu0 %v4129
        %v4131 = vpop.xlane.xlu0 %4130
        %v4132 = vmul.f32 %v4122, %v3843
        %v4133 = vmul.f32 %v4125, %v3843
        %v4134 = vmul.f32 %v4128, %v3843
        %v4135 = vmul.f32 %v4131, %v3843
        %v4136 = vsub.f32 %v4116, %v4132
        %v4137 = vsub.f32 %v4117, %v4133
        %v4138 = vsub.f32 %v4118, %v4134
        %v4139 = vsub.f32 %v4119, %v4135
        %v4140 = vmul.f32 %v4136, %v4136
        %v4141 = vmul.f32 %v4137, %v4137
        %v4142 = vmul.f32 %v4138, %v4138
        %v4143 = vmul.f32 %v4139, %v4139
        %v4144 = vsel %vm3830, %v4140, 0.0
        %4145 = vadd.xlane.f32.xlu0 %v4144
        %v4146 = vpop.xlane.xlu0 %4145
        %v4147 = vsel %vm3830, %v4141, 0.0
        %4148 = vadd.xlane.f32.xlu0 %v4147
        %v4149 = vpop.xlane.xlu0 %4148
        %v4150 = vsel %vm3830, %v4142, 0.0
        %4151 = vadd.xlane.f32.xlu0 %v4150
        %v4152 = vpop.xlane.xlu0 %4151
        %v4153 = vsel %vm3830, %v4143, 0.0
        %4154 = vadd.xlane.f32.xlu0 %v4153
        %v4155 = vpop.xlane.xlu0 %4154
        %v4156 = vmul.f32 %v4146, %v3843
        %v4157 = vmul.f32 %v4149, %v3843
        %v4158 = vmul.f32 %v4152, %v3843
        %v4159 = vmul.f32 %v4155, %v3843
        %v4160 = vadd.f32 %v4156, 0.001
        %v4161 = vadd.f32 %v4157, 0.001
        %v4162 = vadd.f32 %v4158, 0.001
        %v4163 = vadd.f32 %v4159, 0.001
        %v4164 = vrsqrt.pop %v4160
        %v4165 = vrsqrt.pop %v4161
        %v4166 = vrsqrt.pop %v4162
        %v4167 = vrsqrt.pop %v4163
        %v4168 = vmul.f32 %v4136, %v4164
        %v4169 = vmul.f32 %v4137, %v4165
        %v4170 = vmul.f32 %v4138, %v4166
        %v4171 = vmul.f32 %v4139, %v4167
        %v4172 = vmax.f32 %v4168, 0.0
        %v4173 = vmax.f32 %v4169, 0.0
        %v4174 = vmax.f32 %v4170, 0.0
        %v4175 = vmax.f32 %v4171, 0.0
        %4177 = vset.pattern.permute.xlu0 0
        %4178 = vperm.xlu0 %4177, %v1515
        %v4179 = vpop.permute.xlu0 %4178
        %4182 = vset.pattern.permute.xlu0 0
        %4183 = vperm.xlu0 %4182, %v1516
        %v4184 = vpop.permute.xlu0 %4183
        %4187 = vset.pattern.permute.xlu0 0
        %4188 = vperm.xlu0 %4187, %v1517
        %v4189 = vpop.permute.xlu0 %4188
        %4192 = vset.pattern.permute.xlu0 0
        %4193 = vperm.xlu0 %4192, %v1518
        %v4194 = vpop.permute.xlu0 %4193
        %v4197 = vsel %vm1946, %v1511, 0
        %v4200 = vsel %vm1946, %v1512, 0
        %v4203 = vsel %vm1946, %v1513, 0
        %v4206 = vsel %vm1946, %v1514, 0
        %4208 = vmatprep.subr.mxu0 0.0
        %4209 = vmatpush1.msra.mxu0 %v4172
        %4210 = vmatprep.subr.mxu0 0.0
        %4211 = vmatpush1.msra.mxu0 %v4173
        %4212 = vmatprep.subr.mxu0 0.0
        %4213 = vmatpush1.msra.mxu0 %v4174
        %4214 = vmatprep.subr.mxu0 0.0
        %4215 = vmatpush1.msra.mxu0 %v4175
        %4216 = vmatprep.subr.mxu0 0.0
        %4217 = vmatpush1.msra.mxu0 0.0
        %4218 = vmatprep.subr.mxu0 0.0
        %4219 = vmatpush1.msra.mxu0 0.0
        %4220 = vmatprep.subr.mxu0 0.0
        %4221 = vmatpush1.msra.mxu0 0.0
        %4222 = vmatprep.subr.mxu0 0.0
        %4223 = vmatpush1.msra.mxu0 0.0
        %4224 = vmatprep.subr.mxu0 0.0
        %4225 = vmatpush1.msra.mxu0 0.0
        %4226 = vmatprep.subr.mxu0 0.0
        %4227 = vmatpush1.msra.mxu0 0.0
        %4228 = vmatprep.subr.mxu0 0.0
        %4229 = vmatpush1.msra.mxu0 0.0
        %4230 = vmatprep.subr.mxu0 0.0
        %4231 = vmatpush1.msra.mxu0 0.0
        %4232 = vmatprep.subr.mxu0 0.0
        %4233 = vmatpush1.msra.mxu0 0.0
        %4234 = vmatprep.subr.mxu0 0.0
        %4235 = vmatpush1.msra.mxu0 0.0
        %4236 = vmatprep.subr.mxu0 0.0
        %4237 = vmatpush1.msra.mxu0 0.0
        %4238 = vmatprep.subr.mxu0 0.0
        %4239 = vmatpush1.msra.mxu0 0.0
        %4240 = vmatprep.subr.mxu0 0.0
        %4241 = vmatpush1.msra.mxu0 0.0
        %4242 = vmatprep.subr.mxu0 0.0
        %4243 = vmatpush1.msra.mxu0 0.0
        %4244 = vmatprep.subr.mxu0 0.0
        %4245 = vmatpush1.msra.mxu0 0.0
        %4246 = vmatprep.subr.mxu0 0.0
        %4247 = vmatpush1.msra.mxu0 0.0
        %4248 = vmatprep.subr.mxu0 0.0
        %4249 = vmatpush1.msra.mxu0 0.0
        %4250 = vmatprep.subr.mxu0 0.0
        %4251 = vmatpush1.msra.mxu0 0.0
        %4252 = vmatprep.subr.mxu0 0.0
        %4253 = vmatpush1.msra.mxu0 0.0
        %4254 = vmatprep.subr.mxu0 0.0
        %4255 = vmatpush1.msra.mxu0 0.0
        %4256 = vmatprep.subr.mxu0 0.0
        %4257 = vmatpush1.msra.mxu0 0.0
        %4258 = vmatprep.subr.mxu0 0.0
        %4259 = vmatpush1.msra.mxu0 0.0
        %4260 = vmatprep.subr.mxu0 0.0
        %4261 = vmatpush1.msra.mxu0 0.0
        %4262 = vmatprep.subr.mxu0 0.0
        %4263 = vmatpush1.msra.mxu0 0.0
        %4264 = vmatprep.subr.mxu0 0.0
        %4265 = vmatpush1.msra.mxu0 0.0
        %4266 = vmatprep.subr.mxu0 0.0
        %4267 = vmatpush1.msra.mxu0 0.0
        %4268 = vmatprep.subr.mxu0 0.0
        %4269 = vmatpush1.msra.mxu0 0.0
        %4270 = vmatprep.subr.mxu0 0.0
        %4271 = vmatpush1.msra.mxu0 0.0
        %4272 = vmatprep.mubr.f32.mxu0 0.0
        %4273 = vmatmul.mubr.f32.gmra.mrb[0].mxu0 %v4197
        %v4274 = vpop.f32.mrb[0].mxu0
        %v4275 = vadd.f32 %v4179, %v4274
        %v4276 = vpop.f32.mrb[0].mxu0
        %4277 = vmatprep.mubr.f32.mxu0 0.0
        %4278 = vmatmul.mubr.f32.gmra.mrb[0].mxu0 %v4200
        %v4279 = vpop.f32.mrb[0].mxu0
        %v4280 = vadd.f32 %v4184, %v4279
        %v4281 = vpop.f32.mrb[0].mxu0
        %4282 = vmatprep.mubr.f32.mxu0 0.0
        %4283 = vmatmul.mubr.f32.gmra.mrb[0].mxu0 %v4203
        %v4284 = vpop.f32.mrb[0].mxu0
        %v4285 = vadd.f32 %v4189, %v4284
        %v4286 = vpop.f32.mrb[0].mxu0
        %4287 = vmatprep.mubr.f32.mxu0 0.0
        %4288 = vmatmul.mubr.f32.gmra.mrb[0].mxu0 %v4206
        %v4289 = vpop.f32.mrb[0].mxu0
        %v4290 = vadd.f32 %v4194, %v4289
        %v4291 = vpop.f32.mrb[0].mxu0
        %4292 = vdwg.mxu0
        %v4293 = vadd.f32 %v4275, %v3812
        %v4294 = vadd.f32 %v4280, %v3817
        %v4295 = vadd.f32 %v4285, %v3822
        %v4296 = vadd.f32 %v4290, %v3827
        %4298 = vset.pattern.permute.xlu0 0
        %4299 = vperm.xlu0 %4298, %v1520
        %v4300 = vpop.permute.xlu0 %4299
        %v4303 = vsel %vm1946, %v1519, 0
        %4305 = vmatprep.subr.mxu0 0.0
        %4306 = vmatpush1.msra.mxu0 %v3654
        %4307 = vmatprep.subr.mxu0 0.0
        %4308 = vmatpush1.msra.mxu0 %v3655
        %4309 = vmatprep.subr.mxu0 0.0
        %4310 = vmatpush1.msra.mxu0 %v3656
        %4311 = vmatprep.subr.mxu0 0.0
        %4312 = vmatpush1.msra.mxu0 %v3657
        %4313 = vmatprep.subr.mxu0 0.0
        %4314 = vmatpush1.msra.mxu0 0.0
        %4315 = vmatprep.subr.mxu0 0.0
        %4316 = vmatpush1.msra.mxu0 0.0
        %4317 = vmatprep.subr.mxu0 0.0
        %4318 = vmatpush1.msra.mxu0 0.0
        %4319 = vmatprep.subr.mxu0 0.0
        %4320 = vmatpush1.msra.mxu0 0.0
        %4321 = vmatprep.subr.mxu0 0.0
        %4322 = vmatpush1.msra.mxu0 0.0
        %4323 = vmatprep.subr.mxu0 0.0
        %4324 = vmatpush1.msra.mxu0 0.0
        %4325 = vmatprep.subr.mxu0 0.0
        %4326 = vmatpush1.msra.mxu0 0.0
        %4327 = vmatprep.subr.mxu0 0.0
        %4328 = vmatpush1.msra.mxu0 0.0
        %4329 = vmatprep.subr.mxu0 0.0
        %4330 = vmatpush1.msra.mxu0 0.0
        %4331 = vmatprep.subr.mxu0 0.0
        %4332 = vmatpush1.msra.mxu0 0.0
        %4333 = vmatprep.subr.mxu0 0.0
        %4334 = vmatpush1.msra.mxu0 0.0
        %4335 = vmatprep.subr.mxu0 0.0
        %4336 = vmatpush1.msra.mxu0 0.0
        %4337 = vmatprep.subr.mxu0 0.0
        %4338 = vmatpush1.msra.mxu0 0.0
        %4339 = vmatprep.subr.mxu0 0.0
        %4340 = vmatpush1.msra.mxu0 0.0
        %4341 = vmatprep.subr.mxu0 0.0
        %4342 = vmatpush1.msra.mxu0 0.0
        %4343 = vmatprep.subr.mxu0 0.0
        %4344 = vmatpush1.msra.mxu0 0.0
        %4345 = vmatprep.subr.mxu0 0.0
        %4346 = vmatpush1.msra.mxu0 0.0
        %4347 = vmatprep.subr.mxu0 0.0
        %4348 = vmatpush1.msra.mxu0 0.0
        %4349 = vmatprep.subr.mxu0 0.0
        %4350 = vmatpush1.msra.mxu0 0.0
        %4351 = vmatprep.subr.mxu0 0.0
        %4352 = vmatpush1.msra.mxu0 0.0
        %4353 = vmatprep.subr.mxu0 0.0
        %4354 = vmatpush1.msra.mxu0 0.0
        %4355 = vmatprep.subr.mxu0 0.0
        %4356 = vmatpush1.msra.mxu0 0.0
        %4357 = vmatprep.subr.mxu0 0.0
        %4358 = vmatpush1.msra.mxu0 0.0
        %4359 = vmatprep.subr.mxu0 0.0
        %4360 = vmatpush1.msra.mxu0 0.0
        %4361 = vmatprep.subr.mxu0 0.0
        %4362 = vmatpush1.msra.mxu0 0.0
        %4363 = vmatprep.subr.mxu0 0.0
        %4364 = vmatpush1.msra.mxu0 0.0
        %4365 = vmatprep.subr.mxu0 0.0
        %4366 = vmatpush1.msra.mxu0 0.0
        %4367 = vmatprep.subr.mxu0 0.0
        %4368 = vmatpush1.msra.mxu0 0.0
        %4369 = vmatprep.mubr.f32.mxu0 0.0
        %4370 = vmatmul.mubr.f32.gmra.mrb[0].mxu0 %v4303
        %v4371 = vpop.f32.mrb[0].mxu0
        %v4372 = vadd.f32 %v4300, %v4371
        %v4373 = vpop.f32.mrb[0].mxu0
        %4374 = vdwg.mxu0
        %v4375 = vrot.slane %v4372, 4
        %v4376 = vmax.f32 %v4372, %v4375
        %v4377 = vrot.slane %v4376, 2
        %v4378 = vmax.f32 %v4376, %v4377
        %v4379 = vrot.slane %v4378, 1
        %v4380 = vmax.f32 %v4378, %v4379
        %v4381 = vsub.f32 %v4372, %v4380
        %v4382 = vmul.f32 %v4381, 1.442695
        %v4383 = vpow.pop %v4382
        %v4384 = vrot.slane %v4383, 4
        %v4385 = vadd.f32 %v4383, %v4384
        %v4386 = vrot.slane %v4385, 2
        %v4387 = vadd.f32 %v4385, %v4386
        %v4388 = vrot.slane %v4387, 1
        %v4389 = vadd.f32 %v4387, %v4388
        %v4390 = vrcp.pop %v4389
        %v4391 = vmul.f32 %v4383, %v4390
        %v4393 = vsel %vm3830, %v4293, 0
        %v4396 = vsel %vm3830, %v4294, 0
        %v4399 = vsel %vm3830, %v4295, 0
        %v4402 = vsel %vm3830, %v4296, 0
        %4404 = vmatprep.subr.mxu0 0.0
        %4405 = vmatpush1.msra.mxu0 %v4391
        %4406 = vmatprep.subr.mxu0 0.0
        %4407 = vmatpush1.msra.mxu0 0.0
        %4408 = vmatprep.subr.mxu0 0.0
        %4409 = vmatpush1.msra.mxu0 0.0
        %4410 = vmatprep.subr.mxu0 0.0
        %4411 = vmatpush1.msra.mxu0 0.0
        %4412 = vmatprep.subr.mxu0 0.0
        %4413 = vmatpush1.msra.mxu0 0.0
        %4414 = vmatprep.subr.mxu0 0.0
        %4415 = vmatpush1.msra.mxu0 0.0
        %4416 = vmatprep.subr.mxu0 0.0
        %4417 = vmatpush1.msra.mxu0 0.0
        %4418 = vmatprep.subr.mxu0 0.0
        %4419 = vmatpush1.msra.mxu0 0.0
        %4420 = vmatprep.subr.mxu0 0.0
        %4421 = vmatpush1.msra.mxu0 0.0
        %4422 = vmatprep.subr.mxu0 0.0
        %4423 = vmatpush1.msra.mxu0 0.0
        %4424 = vmatprep.subr.mxu0 0.0
        %4425 = vmatpush1.msra.mxu0 0.0
        %4426 = vmatprep.subr.mxu0 0.0
        %4427 = vmatpush1.msra.mxu0 0.0
        %4428 = vmatprep.subr.mxu0 0.0
        %4429 = vmatpush1.msra.mxu0 0.0
        %4430 = vmatprep.subr.mxu0 0.0
        %4431 = vmatpush1.msra.mxu0 0.0
        %4432 = vmatprep.subr.mxu0 0.0
        %4433 = vmatpush1.msra.mxu0 0.0
        %4434 = vmatprep.subr.mxu0 0.0
        %4435 = vmatpush1.msra.mxu0 0.0
        %4436 = vmatprep.subr.mxu0 0.0
        %4437 = vmatpush1.msra.mxu0 0.0
        %4438 = vmatprep.subr.mxu0 0.0
        %4439 = vmatpush1.msra.mxu0 0.0
        %4440 = vmatprep.subr.mxu0 0.0
        %4441 = vmatpush1.msra.mxu0 0.0
        %4442 = vmatprep.subr.mxu0 0.0
        %4443 = vmatpush1.msra.mxu0 0.0
        %4444 = vmatprep.subr.mxu0 0.0
        %4445 = vmatpush1.msra.mxu0 0.0
        %4446 = vmatprep.subr.mxu0 0.0
        %4447 = vmatpush1.msra.mxu0 0.0
        %4448 = vmatprep.subr.mxu0 0.0
        %4449 = vmatpush1.msra.mxu0 0.0
        %4450 = vmatprep.subr.mxu0 0.0
        %4451 = vmatpush1.msra.mxu0 0.0
        %4452 = vmatprep.subr.mxu0 0.0
        %4453 = vmatpush1.msra.mxu0 0.0
        %4454 = vmatprep.subr.mxu0 0.0
        %4455 = vmatpush1.msra.mxu0 0.0
        %4456 = vmatprep.subr.mxu0 0.0
        %4457 = vmatpush1.msra.mxu0 0.0
        %4458 = vmatprep.subr.mxu0 0.0
        %4459 = vmatpush1.msra.mxu0 0.0
        %4460 = vmatprep.subr.mxu0 0.0
        %4461 = vmatpush1.msra.mxu0 0.0
        %4462 = vmatprep.subr.mxu0 0.0
        %4463 = vmatpush1.msra.mxu0 0.0
        %4464 = vmatprep.subr.mxu0 0.0
        %4465 = vmatpush1.msra.mxu0 0.0
        %4466 = vmatprep.subr.mxu0 0.0
        %4467 = vmatpush1.msra.mxu0 0.0
        %4468 = vmatprep.mubr.f32.mxu0 0.0
        %4469 = vmatmul.mubr.f32.gmra.mrb[0].mxu0 %v4393
        %v4470 = vpop.f32.mrb[0].mxu0
        %v4471 = vadd.f32 0.0, %v4470
        %v4472 = vpop.f32.mrb[0].mxu0
        %4473 = vmatprep.mubr.f32.mxu0 0.0
        %4474 = vmatmul.mubr.f32.gmra.mrb[0].mxu0 %v4396
        %v4475 = vpop.f32.mrb[0].mxu0
        %v4476 = vadd.f32 0.0, %v4475
        %v4477 = vpop.f32.mrb[0].mxu0
        %4478 = vmatprep.mubr.f32.mxu0 0.0
        %4479 = vmatmul.mubr.f32.gmra.mrb[0].mxu0 %v4399
        %v4480 = vpop.f32.mrb[0].mxu0
        %v4481 = vadd.f32 0.0, %v4480
        %v4482 = vpop.f32.mrb[0].mxu0
        %4483 = vmatprep.mubr.f32.mxu0 0.0
        %4484 = vmatmul.mubr.f32.gmra.mrb[0].mxu0 %v4402
        %v4485 = vpop.f32.mrb[0].mxu0
        %v4486 = vadd.f32 0.0, %v4485
        %v4487 = vpop.f32.mrb[0].mxu0
        %4488 = vdwg.mxu0
        %v4489 = vadd.f32 %v3606, %v4471
        %v4490 = vadd.f32 %v3607, %v4476
        %v4491 = vadd.f32 %v3608, %v4481
        %v4492 = vadd.f32 %v3609, %v4486
        %4494 = vset.pattern.permute.xlu0 0
        %4495 = vperm.xlu0 %4494, %v1523
        %v4496 = vpop.permute.xlu0 %4495
        %4499 = vset.pattern.permute.xlu0 0
        %4500 = vperm.xlu0 %4499, %v1524
        %v4501 = vpop.permute.xlu0 %4500
        %v4504 = vsel %vm1946, %v1521, 0
        %v4507 = vsel %vm1946, %v1522, 0
        %4509 = vmatprep.subr.mxu0 0.0
        %4510 = vmatpush1.msra.mxu0 %v4489
        %4511 = vmatprep.subr.mxu0 0.0
        %4512 = vmatpush1.msra.mxu0 %v4490
        %4513 = vmatprep.subr.mxu0 0.0
        %4514 = vmatpush1.msra.mxu0 %v4491
        %4515 = vmatprep.subr.mxu0 0.0
        %4516 = vmatpush1.msra.mxu0 %v4492
        %4517 = vmatprep.subr.mxu0 0.0
        %4518 = vmatpush1.msra.mxu0 0.0
        %4519 = vmatprep.subr.mxu0 0.0
        %4520 = vmatpush1.msra.mxu0 0.0
        %4521 = vmatprep.subr.mxu0 0.0
        %4522 = vmatpush1.msra.mxu0 0.0
        %4523 = vmatprep.subr.mxu0 0.0
        %4524 = vmatpush1.msra.mxu0 0.0
        %4525 = vmatprep.subr.mxu0 0.0
        %4526 = vmatpush1.msra.mxu0 0.0
        %4527 = vmatprep.subr.mxu0 0.0
        %4528 = vmatpush1.msra.mxu0 0.0
        %4529 = vmatprep.subr.mxu0 0.0
        %4530 = vmatpush1.msra.mxu0 0.0
        %4531 = vmatprep.subr.mxu0 0.0
        %4532 = vmatpush1.msra.mxu0 0.0
        %4533 = vmatprep.subr.mxu0 0.0
        %4534 = vmatpush1.msra.mxu0 0.0
        %4535 = vmatprep.subr.mxu0 0.0
        %4536 = vmatpush1.msra.mxu0 0.0
        %4537 = vmatprep.subr.mxu0 0.0
        %4538 = vmatpush1.msra.mxu0 0.0
        %4539 = vmatprep.subr.mxu0 0.0
        %4540 = vmatpush1.msra.mxu0 0.0
        %4541 = vmatprep.subr.mxu0 0.0
        %4542 = vmatpush1.msra.mxu0 0.0
        %4543 = vmatprep.subr.mxu0 0.0
        %4544 = vmatpush1.msra.mxu0 0.0
        %4545 = vmatprep.subr.mxu0 0.0
        %4546 = vmatpush1.msra.mxu0 0.0
        %4547 = vmatprep.subr.mxu0 0.0
        %4548 = vmatpush1.msra.mxu0 0.0
        %4549 = vmatprep.subr.mxu0 0.0
        %4550 = vmatpush1.msra.mxu0 0.0
        %4551 = vmatprep.subr.mxu0 0.0
        %4552 = vmatpush1.msra.mxu0 0.0
        %4553 = vmatprep.subr.mxu0 0.0
        %4554 = vmatpush1.msra.mxu0 0.0
        %4555 = vmatprep.subr.mxu0 0.0
        %4556 = vmatpush1.msra.mxu0 0.0
        %4557 = vmatprep.subr.mxu0 0.0
        %4558 = vmatpush1.msra.mxu0 0.0
        %4559 = vmatprep.subr.mxu0 0.0
        %4560 = vmatpush1.msra.mxu0 0.0
        %4561 = vmatprep.subr.mxu0 0.0
        %4562 = vmatpush1.msra.mxu0 0.0
        %4563 = vmatprep.subr.mxu0 0.0
        %4564 = vmatpush1.msra.mxu0 0.0
        %4565 = vmatprep.subr.mxu0 0.0
        %4566 = vmatpush1.msra.mxu0 0.0
        %4567 = vmatprep.subr.mxu0 0.0
        %4568 = vmatpush1.msra.mxu0 0.0
        %4569 = vmatprep.subr.mxu0 0.0
        %4570 = vmatpush1.msra.mxu0 0.0
        %4571 = vmatprep.subr.mxu0 0.0
        %4572 = vmatpush1.msra.mxu0 0.0
        %4573 = vmatprep.mubr.f32.mxu0 0.0
        %4574 = vmatmul.mubr.f32.gmra.mrb[0].mxu0 %v4504
        %v4575 = vpop.f32.mrb[0].mxu0
        %v4576 = vadd.f32 %v4496, %v4575
        %v4577 = vpop.f32.mrb[0].mxu0
        %4578 = vmatprep.mubr.f32.mxu0 0.0
        %4579 = vmatmul.mubr.f32.gmra.mrb[0].mxu0 %v4507
        %v4580 = vpop.f32.mrb[0].mxu0
        %v4581 = vadd.f32 %v4501, %v4580
        %v4582 = vpop.f32.mrb[0].mxu0
        %4583 = vdwg.mxu0
        %v4585 = vsel %vm2028, %v1525, 0
        %v4588 = vsel %vm2028, %v1526, 0
        %4590 = vmatprep.subr.mxu0 0.0
        %4591 = vmatpush1.msra.mxu0 %v4576
        %4592 = vmatprep.subr.mxu0 0.0
        %4593 = vmatpush1.msra.mxu0 %v4581
        %4594 = vmatprep.subr.mxu0 0.0
        %4595 = vmatpush1.msra.mxu0 0.0
        %4596 = vmatprep.subr.mxu0 0.0
        %4597 = vmatpush1.msra.mxu0 0.0
        %4598 = vmatprep.subr.mxu0 0.0
        %4599 = vmatpush1.msra.mxu0 0.0
        %4600 = vmatprep.subr.mxu0 0.0
        %4601 = vmatpush1.msra.mxu0 0.0
        %4602 = vmatprep.subr.mxu0 0.0
        %4603 = vmatpush1.msra.mxu0 0.0
        %4604 = vmatprep.subr.mxu0 0.0
        %4605 = vmatpush1.msra.mxu0 0.0
        %4606 = vmatprep.subr.mxu0 0.0
        %4607 = vmatpush1.msra.mxu0 0.0
        %4608 = vmatprep.subr.mxu0 0.0
        %4609 = vmatpush1.msra.mxu0 0.0
        %4610 = vmatprep.subr.mxu0 0.0
        %4611 = vmatpush1.msra.mxu0 0.0
        %4612 = vmatprep.subr.mxu0 0.0
        %4613 = vmatpush1.msra.mxu0 0.0
        %4614 = vmatprep.subr.mxu0 0.0
        %4615 = vmatpush1.msra.mxu0 0.0
        %4616 = vmatprep.subr.mxu0 0.0
        %4617 = vmatpush1.msra.mxu0 0.0
        %4618 = vmatprep.subr.mxu0 0.0
        %4619 = vmatpush1.msra.mxu0 0.0
        %4620 = vmatprep.subr.mxu0 0.0
        %4621 = vmatpush1.msra.mxu0 0.0
        %4622 = vmatprep.subr.mxu0 0.0
        %4623 = vmatpush1.msra.mxu0 0.0
        %4624 = vmatprep.subr.mxu0 0.0
        %4625 = vmatpush1.msra.mxu0 0.0
        %4626 = vmatprep.subr.mxu0 0.0
        %4627 = vmatpush1.msra.mxu0 0.0
        %4628 = vmatprep.subr.mxu0 0.0
        %4629 = vmatpush1.msra.mxu0 0.0
        %4630 = vmatprep.subr.mxu0 0.0
        %4631 = vmatpush1.msra.mxu0 0.0
        %4632 = vmatprep.subr.mxu0 0.0
        %4633 = vmatpush1.msra.mxu0 0.0
        %4634 = vmatprep.subr.mxu0 0.0
        %4635 = vmatpush1.msra.mxu0 0.0
        %4636 = vmatprep.subr.mxu0 0.0
        %4637 = vmatpush1.msra.mxu0 0.0
        %4638 = vmatprep.subr.mxu0 0.0
        %4639 = vmatpush1.msra.mxu0 0.0
        %4640 = vmatprep.subr.mxu0 0.0
        %4641 = vmatpush1.msra.mxu0 0.0
        %4642 = vmatprep.subr.mxu0 0.0
        %4643 = vmatpush1.msra.mxu0 0.0
        %4644 = vmatprep.subr.mxu0 0.0
        %4645 = vmatpush1.msra.mxu0 0.0
        %4646 = vmatprep.subr.mxu0 0.0
        %4647 = vmatpush1.msra.mxu0 0.0
        %4648 = vmatprep.subr.mxu0 0.0
        %4649 = vmatpush1.msra.mxu0 0.0
        %4650 = vmatprep.subr.mxu0 0.0
        %4651 = vmatpush1.msra.mxu0 0.0
        %4652 = vmatprep.subr.mxu0 0.0
        %4653 = vmatpush1.msra.mxu0 0.0
        %4654 = vmatprep.mubr.f32.mxu0 0.0
        %4655 = vmatmul.mubr.f32.gmra.mrb[0].mxu0 %v4585
        %v4656 = vpop.f32.mrb[0].mxu0
        %v4657 = vadd.f32 0.0, %v4656
        %v4658 = vpop.f32.mrb[0].mxu0
        %4659 = vmatprep.mubr.f32.mxu0 0.0
        %4660 = vmatmul.mubr.f32.gmra.mrb[0].mxu0 %v4588
        %v4661 = vpop.f32.mrb[0].mxu0
        %v4662 = vadd.f32 0.0, %v4661
        %v4663 = vpop.f32.mrb[0].mxu0
        %4664 = vdwg.mxu0
        %4666 = vset.pattern.permute.xlu0 0
        %4667 = vperm.xlu0 %4666, %v1527
        %v4668 = vpop.permute.xlu0 %4667
        %4671 = vset.pattern.permute.xlu0 0
        %4672 = vperm.xlu0 %4671, %v1528
        %v4673 = vpop.permute.xlu0 %4672
        %v4675 = vadd.f32 %v4657, %v4668
        %v4676 = vadd.f32 %v4662, %v4673
        %4677 = vmatprep.subr.mxu0 %v1821
        %4678 = vmatpush1.msra.mxu0 %v1820
        %4679 = vmatprep.subr.mxu0 %v1827
        %4680 = vmatpush1.msra.mxu0 %v1826
        %4681 = vmatprep.subr.mxu0 %v1833
        %4682 = vmatpush1.msra.mxu0 %v1832
        %4683 = vmatprep.subr.mxu0 %v1839
        %4684 = vmatpush1.msra.mxu0 %v1838
        %4685 = vmatprep.subr.mxu0 %v1845
        %4686 = vmatpush1.msra.mxu0 %v1844
        %4687 = vmatprep.subr.mxu0 %v1851
        %4688 = vmatpush1.msra.mxu0 %v1850
        %4689 = vmatprep.subr.mxu0 %v1857
        %4690 = vmatpush1.msra.mxu0 %v1856
        %4691 = vmatprep.subr.mxu0 %v1863
        %4692 = vmatpush1.msra.mxu0 %v1862
        %4693 = vmatprep.subr.mxu0 %v1869
        %4694 = vmatpush1.msra.mxu0 %v1868
        %4695 = vmatprep.subr.mxu0 %v1875
        %4696 = vmatpush1.msra.mxu0 %v1874
        %4697 = vmatprep.subr.mxu0 %v1881
        %4698 = vmatpush1.msra.mxu0 %v1880
        %4699 = vmatprep.subr.mxu0 %v1887
        %4700 = vmatpush1.msra.mxu0 %v1886
        %4701 = vmatprep.subr.mxu0 %v1893
        %4702 = vmatpush1.msra.mxu0 %v1892
        %4703 = vmatprep.subr.mxu0 %v1899
        %4704 = vmatpush1.msra.mxu0 %v1898
        %4705 = vmatprep.subr.mxu0 %v1905
        %4706 = vmatpush1.msra.mxu0 %v1904
        %4707 = vmatprep.subr.mxu0 %v1911
        %4708 = vmatpush1.msra.mxu0 %v1910
        %4709 = vmatprep.subr.mxu0 0.0
        %4710 = vmatpush1.msra.mxu0 0.0
        %4711 = vmatprep.subr.mxu0 0.0
        %4712 = vmatpush1.msra.mxu0 0.0
        %4713 = vmatprep.subr.mxu0 0.0
        %4714 = vmatpush1.msra.mxu0 0.0
        %4715 = vmatprep.subr.mxu0 0.0
        %4716 = vmatpush1.msra.mxu0 0.0
        %4717 = vmatprep.subr.mxu0 0.0
        %4718 = vmatpush1.msra.mxu0 0.0
        %4719 = vmatprep.subr.mxu0 0.0
        %4720 = vmatpush1.msra.mxu0 0.0
        %4721 = vmatprep.subr.mxu0 0.0
        %4722 = vmatpush1.msra.mxu0 0.0
        %4723 = vmatprep.subr.mxu0 0.0
        %4724 = vmatpush1.msra.mxu0 0.0
        %4725 = vmatprep.subr.mxu0 0.0
        %4726 = vmatpush1.msra.mxu0 0.0
        %4727 = vmatprep.subr.mxu0 0.0
        %4728 = vmatpush1.msra.mxu0 0.0
        %4729 = vmatprep.subr.mxu0 0.0
        %4730 = vmatpush1.msra.mxu0 0.0
        %4731 = vmatprep.subr.mxu0 0.0
        %4732 = vmatpush1.msra.mxu0 0.0
        %4733 = vmatprep.subr.mxu0 0.0
        %4734 = vmatpush1.msra.mxu0 0.0
        %4735 = vmatprep.subr.mxu0 0.0
        %4736 = vmatpush1.msra.mxu0 0.0
        %4737 = vmatprep.subr.mxu0 0.0
        %4738 = vmatpush1.msra.mxu0 0.0
        %4739 = vmatprep.subr.mxu0 0.0
        %4740 = vmatpush1.msra.mxu0 0.0
        %4741 = vmatprep.mubr.f32.mxu0 0.0
        %4742 = vmatmul.mubr.f32.gmra.mrb[0].mxu0 %v4657
        %v4743 = vpop.f32.mrb[0].mxu0
        %v4744 = vadd.f32 0.0, %v4743
        %v4745 = vpop.f32.mrb[0].mxu0
        %v4746 = vadd.f32 0.0, %v4745
        %4747 = vmatprep.mubr.f32.mxu0 0.0
        %4748 = vmatmul.mubr.f32.gmra.mrb[0].mxu0 %v4662
        %v4749 = vpop.f32.mrb[0].mxu0
        %v4750 = vadd.f32 0.0, %v4749
        %v4751 = vpop.f32.mrb[0].mxu0
        %v4752 = vadd.f32 0.0, %v4751
        %4753 = vdwg.mxu0
        %4754 = vmatprep.subr.mxu0 %v1823
        %4755 = vmatpush1.msra.mxu0 %v1822
        %4756 = vmatprep.subr.mxu0 %v1829
        %4757 = vmatpush1.msra.mxu0 %v1828
        %4758 = vmatprep.subr.mxu0 %v1835
        %4759 = vmatpush1.msra.mxu0 %v1834
        %4760 = vmatprep.subr.mxu0 %v1841
        %4761 = vmatpush1.msra.mxu0 %v1840
        %4762 = vmatprep.subr.mxu0 %v1847
        %4763 = vmatpush1.msra.mxu0 %v1846
        %4764 = vmatprep.subr.mxu0 %v1853
        %4765 = vmatpush1.msra.mxu0 %v1852
        %4766 = vmatprep.subr.mxu0 %v1859
        %4767 = vmatpush1.msra.mxu0 %v1858
        %4768 = vmatprep.subr.mxu0 %v1865
        %4769 = vmatpush1.msra.mxu0 %v1864
        %4770 = vmatprep.subr.mxu0 %v1871
        %4771 = vmatpush1.msra.mxu0 %v1870
        %4772 = vmatprep.subr.mxu0 %v1877
        %4773 = vmatpush1.msra.mxu0 %v1876
        %4774 = vmatprep.subr.mxu0 %v1883
        %4775 = vmatpush1.msra.mxu0 %v1882
        %4776 = vmatprep.subr.mxu0 %v1889
        %4777 = vmatpush1.msra.mxu0 %v1888
        %4778 = vmatprep.subr.mxu0 %v1895
        %4779 = vmatpush1.msra.mxu0 %v1894
        %4780 = vmatprep.subr.mxu0 %v1901
        %4781 = vmatpush1.msra.mxu0 %v1900
        %4782 = vmatprep.subr.mxu0 %v1907
        %4783 = vmatpush1.msra.mxu0 %v1906
        %4784 = vmatprep.subr.mxu0 %v1913
        %4785 = vmatpush1.msra.mxu0 %v1912
        %4786 = vmatprep.subr.mxu0 0.0
        %4787 = vmatpush1.msra.mxu0 0.0
        %4788 = vmatprep.subr.mxu0 0.0
        %4789 = vmatpush1.msra.mxu0 0.0
        %4790 = vmatprep.subr.mxu0 0.0
        %4791 = vmatpush1.msra.mxu0 0.0
        %4792 = vmatprep.subr.mxu0 0.0
        %4793 = vmatpush1.msra.mxu0 0.0
        %4794 = vmatprep.subr.mxu0 0.0
        %4795 = vmatpush1.msra.mxu0 0.0
        %4796 = vmatprep.subr.mxu0 0.0
        %4797 = vmatpush1.msra.mxu0 0.0
        %4798 = vmatprep.subr.mxu0 0.0
        %4799 = vmatpush1.msra.mxu0 0.0
        %4800 = vmatprep.subr.mxu0 0.0
        %4801 = vmatpush1.msra.mxu0 0.0
        %4802 = vmatprep.subr.mxu0 0.0
        %4803 = vmatpush1.msra.mxu0 0.0
        %4804 = vmatprep.subr.mxu0 0.0
        %4805 = vmatpush1.msra.mxu0 0.0
        %4806 = vmatprep.subr.mxu0 0.0
        %4807 = vmatpush1.msra.mxu0 0.0
        %4808 = vmatprep.subr.mxu0 0.0
        %4809 = vmatpush1.msra.mxu0 0.0
        %4810 = vmatprep.subr.mxu0 0.0
        %4811 = vmatpush1.msra.mxu0 0.0
        %4812 = vmatprep.subr.mxu0 0.0
        %4813 = vmatpush1.msra.mxu0 0.0
        %4814 = vmatprep.subr.mxu0 0.0
        %4815 = vmatpush1.msra.mxu0 0.0
        %4816 = vmatprep.subr.mxu0 0.0
        %4817 = vmatpush1.msra.mxu0 0.0
        %4818 = vmatprep.mubr.f32.mxu0 0.0
        %4819 = vmatmul.mubr.f32.gmra.mrb[0].mxu0 %v4657
        %v4820 = vpop.f32.mrb[0].mxu0
        %v4821 = vadd.f32 0.0, %v4820
        %v4822 = vpop.f32.mrb[0].mxu0
        %v4823 = vadd.f32 0.0, %v4822
        %4824 = vmatprep.mubr.f32.mxu0 0.0
        %4825 = vmatmul.mubr.f32.gmra.mrb[0].mxu0 %v4662
        %v4826 = vpop.f32.mrb[0].mxu0
        %v4827 = vadd.f32 0.0, %v4826
        %v4828 = vpop.f32.mrb[0].mxu0
        %v4829 = vadd.f32 0.0, %v4828
        %4830 = vdwg.mxu0
        %4831 = vmatprep.subr.mxu0 %v1825
        %4832 = vmatpush1.msra.mxu0 %v1824
        %4833 = vmatprep.subr.mxu0 %v1831
        %4834 = vmatpush1.msra.mxu0 %v1830
        %4835 = vmatprep.subr.mxu0 %v1837
        %4836 = vmatpush1.msra.mxu0 %v1836
        %4837 = vmatprep.subr.mxu0 %v1843
        %4838 = vmatpush1.msra.mxu0 %v1842
        %4839 = vmatprep.subr.mxu0 %v1849
        %4840 = vmatpush1.msra.mxu0 %v1848
        %4841 = vmatprep.subr.mxu0 %v1855
        %4842 = vmatpush1.msra.mxu0 %v1854
        %4843 = vmatprep.subr.mxu0 %v1861
        %4844 = vmatpush1.msra.mxu0 %v1860
        %4845 = vmatprep.subr.mxu0 %v1867
        %4846 = vmatpush1.msra.mxu0 %v1866
        %4847 = vmatprep.subr.mxu0 %v1873
        %4848 = vmatpush1.msra.mxu0 %v1872
        %4849 = vmatprep.subr.mxu0 %v1879
        %4850 = vmatpush1.msra.mxu0 %v1878
        %4851 = vmatprep.subr.mxu0 %v1885
        %4852 = vmatpush1.msra.mxu0 %v1884
        %4853 = vmatprep.subr.mxu0 %v1891
        %4854 = vmatpush1.msra.mxu0 %v1890
        %4855 = vmatprep.subr.mxu0 %v1897
        %4856 = vmatpush1.msra.mxu0 %v1896
        %4857 = vmatprep.subr.mxu0 %v1903
        %4858 = vmatpush1.msra.mxu0 %v1902
        %4859 = vmatprep.subr.mxu0 %v1909
        %4860 = vmatpush1.msra.mxu0 %v1908
        %4861 = vmatprep.subr.mxu0 %v1915
        %4862 = vmatpush1.msra.mxu0 %v1914
        %4863 = vmatprep.subr.mxu0 0.0
        %4864 = vmatpush1.msra.mxu0 0.0
        %4865 = vmatprep.subr.mxu0 0.0
        %4866 = vmatpush1.msra.mxu0 0.0
        %4867 = vmatprep.subr.mxu0 0.0
        %4868 = vmatpush1.msra.mxu0 0.0
        %4869 = vmatprep.subr.mxu0 0.0
        %4870 = vmatpush1.msra.mxu0 0.0
        %4871 = vmatprep.subr.mxu0 0.0
        %4872 = vmatpush1.msra.mxu0 0.0
        %4873 = vmatprep.subr.mxu0 0.0
        %4874 = vmatpush1.msra.mxu0 0.0
        %4875 = vmatprep.subr.mxu0 0.0
        %4876 = vmatpush1.msra.mxu0 0.0
        %4877 = vmatprep.subr.mxu0 0.0
        %4878 = vmatpush1.msra.mxu0 0.0
        %4879 = vmatprep.subr.mxu0 0.0
        %4880 = vmatpush1.msra.mxu0 0.0
        %4881 = vmatprep.subr.mxu0 0.0
        %4882 = vmatpush1.msra.mxu0 0.0
        %4883 = vmatprep.subr.mxu0 0.0
        %4884 = vmatpush1.msra.mxu0 0.0
        %4885 = vmatprep.subr.mxu0 0.0
        %4886 = vmatpush1.msra.mxu0 0.0
        %4887 = vmatprep.subr.mxu0 0.0
        %4888 = vmatpush1.msra.mxu0 0.0
        %4889 = vmatprep.subr.mxu0 0.0
        %4890 = vmatpush1.msra.mxu0 0.0
        %4891 = vmatprep.subr.mxu0 0.0
        %4892 = vmatpush1.msra.mxu0 0.0
        %4893 = vmatprep.subr.mxu0 0.0
        %4894 = vmatpush1.msra.mxu0 0.0
        %4895 = vmatprep.mubr.f32.mxu0 0.0
        %4896 = vmatmul.mubr.f32.gmra.mrb[0].mxu0 %v4657
        %v4897 = vpop.f32.mrb[0].mxu0
        %v4898 = vadd.f32 0.0, %v4897
        %v4899 = vpop.f32.mrb[0].mxu0
        %v4900 = vadd.f32 0.0, %v4899
        %4901 = vmatprep.mubr.f32.mxu0 0.0
        %4902 = vmatmul.mubr.f32.gmra.mrb[0].mxu0 %v4662
        %v4903 = vpop.f32.mrb[0].mxu0
        %v4904 = vadd.f32 0.0, %v4903
        %v4905 = vpop.f32.mrb[0].mxu0
        %v4906 = vadd.f32 0.0, %v4905
        %4907 = vdwg.mxu0
        %v4908 = vsub.f32 %v4675, %v4744
        %v4909 = vsub.f32 %v4675, %v4746
        %v4910 = vsub.f32 %v4675, %v4821
        %v4911 = vsub.f32 %v4675, %v4823
        %v4912 = vsub.f32 %v4675, %v4898
        %v4913 = vsub.f32 %v4675, %v4900
        %v4914 = vsub.f32 %v4676, %v4750
        %v4915 = vsub.f32 %v4676, %v4752
        %v4916 = vsub.f32 %v4676, %v4827
        %v4917 = vsub.f32 %v4676, %v4829
        %v4918 = vsub.f32 %v4676, %v4904
        %v4919 = vsub.f32 %v4676, %v4906
        %v4920 = vmax.f32 %v4908, 0.0
        %v4921 = vmax.f32 %v4909, 0.0
        %v4922 = vmax.f32 %v4910, 0.0
        %v4923 = vmax.f32 %v4911, 0.0
        %v4924 = vmax.f32 %v4912, 0.0
        %v4925 = vmax.f32 %v4913, 0.0
        %v4926 = vmax.f32 %v4914, 0.0
        %v4927 = vmax.f32 %v4915, 0.0
        %v4928 = vmax.f32 %v4916, 0.0
        %v4929 = vmax.f32 %v4917, 0.0
        %v4930 = vmax.f32 %v4918, 0.0
        %v4931 = vmax.f32 %v4919, 0.0
        %4933 = vset.pattern.permute.xlu0 0
        %4934 = vperm.xlu0 %4933, %v1531
        %v4935 = vpop.permute.xlu0 %4934
        %4938 = vset.pattern.permute.xlu0 0
        %4939 = vperm.xlu0 %4938, %v1532
        %v4940 = vpop.permute.xlu0 %4939
        %v4943 = vsel %vm2028, %v1529, 0
        %v4946 = vsel %vm2028, %v1530, 0
        %4948 = vmatprep.subr.mxu0 %v4921
        %4949 = vmatpush1.msra.mxu0 %v4920
        %4950 = vmatprep.subr.mxu0 %v4927
        %4951 = vmatpush1.msra.mxu0 %v4926
        %4952 = vmatprep.subr.mxu0 0.0
        %4953 = vmatpush1.msra.mxu0 0.0
        %4954 = vmatprep.subr.mxu0 0.0
        %4955 = vmatpush1.msra.mxu0 0.0
        %4956 = vmatprep.subr.mxu0 0.0
        %4957 = vmatpush1.msra.mxu0 0.0
        %4958 = vmatprep.subr.mxu0 0.0
        %4959 = vmatpush1.msra.mxu0 0.0
        %4960 = vmatprep.subr.mxu0 0.0
        %4961 = vmatpush1.msra.mxu0 0.0
        %4962 = vmatprep.subr.mxu0 0.0
        %4963 = vmatpush1.msra.mxu0 0.0
        %4964 = vmatprep.subr.mxu0 0.0
        %4965 = vmatpush1.msra.mxu0 0.0
        %4966 = vmatprep.subr.mxu0 0.0
        %4967 = vmatpush1.msra.mxu0 0.0
        %4968 = vmatprep.subr.mxu0 0.0
        %4969 = vmatpush1.msra.mxu0 0.0
        %4970 = vmatprep.subr.mxu0 0.0
        %4971 = vmatpush1.msra.mxu0 0.0
        %4972 = vmatprep.subr.mxu0 0.0
        %4973 = vmatpush1.msra.mxu0 0.0
        %4974 = vmatprep.subr.mxu0 0.0
        %4975 = vmatpush1.msra.mxu0 0.0
        %4976 = vmatprep.subr.mxu0 0.0
        %4977 = vmatpush1.msra.mxu0 0.0
        %4978 = vmatprep.subr.mxu0 0.0
        %4979 = vmatpush1.msra.mxu0 0.0
        %4980 = vmatprep.subr.mxu0 0.0
        %4981 = vmatpush1.msra.mxu0 0.0
        %4982 = vmatprep.subr.mxu0 0.0
        %4983 = vmatpush1.msra.mxu0 0.0
        %4984 = vmatprep.subr.mxu0 0.0
        %4985 = vmatpush1.msra.mxu0 0.0
        %4986 = vmatprep.subr.mxu0 0.0
        %4987 = vmatpush1.msra.mxu0 0.0
        %4988 = vmatprep.subr.mxu0 0.0
        %4989 = vmatpush1.msra.mxu0 0.0
        %4990 = vmatprep.subr.mxu0 0.0
        %4991 = vmatpush1.msra.mxu0 0.0
        %4992 = vmatprep.subr.mxu0 0.0
        %4993 = vmatpush1.msra.mxu0 0.0
        %4994 = vmatprep.subr.mxu0 0.0
        %4995 = vmatpush1.msra.mxu0 0.0
        %4996 = vmatprep.subr.mxu0 0.0
        %4997 = vmatpush1.msra.mxu0 0.0
        %4998 = vmatprep.subr.mxu0 0.0
        %4999 = vmatpush1.msra.mxu0 0.0
        %5000 = vmatprep.subr.mxu0 0.0
        %5001 = vmatpush1.msra.mxu0 0.0
        %5002 = vmatprep.subr.mxu0 0.0
        %5003 = vmatpush1.msra.mxu0 0.0
        %5004 = vmatprep.subr.mxu0 0.0
        %5005 = vmatpush1.msra.mxu0 0.0
        %5006 = vmatprep.subr.mxu0 0.0
        %5007 = vmatpush1.msra.mxu0 0.0
        %5008 = vmatprep.subr.mxu0 0.0
        %5009 = vmatpush1.msra.mxu0 0.0
        %5010 = vmatprep.subr.mxu0 0.0
        %5011 = vmatpush1.msra.mxu0 0.0
        %5012 = vmatprep.mubr.f32.mxu0 0.0
        %5013 = vmatmul.mubr.f32.gmra.mrb[0].mxu0 %v4943
        %v5014 = vpop.f32.mrb[0].mxu0
        %v5015 = vadd.f32 %v4935, %v5014
        %v5016 = vpop.f32.mrb[0].mxu0
        %v5017 = vadd.f32 %v4935, %v5016
        %5018 = vmatprep.mubr.f32.mxu0 0.0
        %5019 = vmatmul.mubr.f32.gmra.mrb[0].mxu0 %v4946
        %v5020 = vpop.f32.mrb[0].mxu0
        %v5021 = vadd.f32 %v4940, %v5020
        %v5022 = vpop.f32.mrb[0].mxu0
        %v5023 = vadd.f32 %v4940, %v5022
        %5024 = vdwg.mxu0
        %5025 = vmatprep.subr.mxu0 %v4923
        %5026 = vmatpush1.msra.mxu0 %v4922
        %5027 = vmatprep.subr.mxu0 %v4929
        %5028 = vmatpush1.msra.mxu0 %v4928
        %5029 = vmatprep.subr.mxu0 0.0
        %5030 = vmatpush1.msra.mxu0 0.0
        %5031 = vmatprep.subr.mxu0 0.0
        %5032 = vmatpush1.msra.mxu0 0.0
        %5033 = vmatprep.subr.mxu0 0.0
        %5034 = vmatpush1.msra.mxu0 0.0
        %5035 = vmatprep.subr.mxu0 0.0
        %5036 = vmatpush1.msra.mxu0 0.0
        %5037 = vmatprep.subr.mxu0 0.0
        %5038 = vmatpush1.msra.mxu0 0.0
        %5039 = vmatprep.subr.mxu0 0.0
        %5040 = vmatpush1.msra.mxu0 0.0
        %5041 = vmatprep.subr.mxu0 0.0
        %5042 = vmatpush1.msra.mxu0 0.0
        %5043 = vmatprep.subr.mxu0 0.0
        %5044 = vmatpush1.msra.mxu0 0.0
        %5045 = vmatprep.subr.mxu0 0.0
        %5046 = vmatpush1.msra.mxu0 0.0
        %5047 = vmatprep.subr.mxu0 0.0
        %5048 = vmatpush1.msra.mxu0 0.0
        %5049 = vmatprep.subr.mxu0 0.0
        %5050 = vmatpush1.msra.mxu0 0.0
        %5051 = vmatprep.subr.mxu0 0.0
        %5052 = vmatpush1.msra.mxu0 0.0
        %5053 = vmatprep.subr.mxu0 0.0
        %5054 = vmatpush1.msra.mxu0 0.0
        %5055 = vmatprep.subr.mxu0 0.0
        %5056 = vmatpush1.msra.mxu0 0.0
        %5057 = vmatprep.subr.mxu0 0.0
        %5058 = vmatpush1.msra.mxu0 0.0
        %5059 = vmatprep.subr.mxu0 0.0
        %5060 = vmatpush1.msra.mxu0 0.0
        %5061 = vmatprep.subr.mxu0 0.0
        %5062 = vmatpush1.msra.mxu0 0.0
        %5063 = vmatprep.subr.mxu0 0.0
        %5064 = vmatpush1.msra.mxu0 0.0
        %5065 = vmatprep.subr.mxu0 0.0
        %5066 = vmatpush1.msra.mxu0 0.0
        %5067 = vmatprep.subr.mxu0 0.0
        %5068 = vmatpush1.msra.mxu0 0.0
        %5069 = vmatprep.subr.mxu0 0.0
        %5070 = vmatpush1.msra.mxu0 0.0
        %5071 = vmatprep.subr.mxu0 0.0
        %5072 = vmatpush1.msra.mxu0 0.0
        %5073 = vmatprep.subr.mxu0 0.0
        %5074 = vmatpush1.msra.mxu0 0.0
        %5075 = vmatprep.subr.mxu0 0.0
        %5076 = vmatpush1.msra.mxu0 0.0
        %5077 = vmatprep.subr.mxu0 0.0
        %5078 = vmatpush1.msra.mxu0 0.0
        %5079 = vmatprep.subr.mxu0 0.0
        %5080 = vmatpush1.msra.mxu0 0.0
        %5081 = vmatprep.subr.mxu0 0.0
        %5082 = vmatpush1.msra.mxu0 0.0
        %5083 = vmatprep.subr.mxu0 0.0
        %5084 = vmatpush1.msra.mxu0 0.0
        %5085 = vmatprep.subr.mxu0 0.0
        %5086 = vmatpush1.msra.mxu0 0.0
        %5087 = vmatprep.subr.mxu0 0.0
        %5088 = vmatpush1.msra.mxu0 0.0
        %5089 = vmatprep.mubr.f32.mxu0 0.0
        %5090 = vmatmul.mubr.f32.gmra.mrb[0].mxu0 %v4943
        %v5091 = vpop.f32.mrb[0].mxu0
        %v5092 = vadd.f32 %v4935, %v5091
        %v5093 = vpop.f32.mrb[0].mxu0
        %v5094 = vadd.f32 %v4935, %v5093
        %5095 = vmatprep.mubr.f32.mxu0 0.0
        %5096 = vmatmul.mubr.f32.gmra.mrb[0].mxu0 %v4946
        %v5097 = vpop.f32.mrb[0].mxu0
        %v5098 = vadd.f32 %v4940, %v5097
        %v5099 = vpop.f32.mrb[0].mxu0
        %v5100 = vadd.f32 %v4940, %v5099
        %5101 = vdwg.mxu0
        %5102 = vmatprep.subr.mxu0 %v4925
        %5103 = vmatpush1.msra.mxu0 %v4924
        %5104 = vmatprep.subr.mxu0 %v4931
        %5105 = vmatpush1.msra.mxu0 %v4930
        %5106 = vmatprep.subr.mxu0 0.0
        %5107 = vmatpush1.msra.mxu0 0.0
        %5108 = vmatprep.subr.mxu0 0.0
        %5109 = vmatpush1.msra.mxu0 0.0
        %5110 = vmatprep.subr.mxu0 0.0
        %5111 = vmatpush1.msra.mxu0 0.0
        %5112 = vmatprep.subr.mxu0 0.0
        %5113 = vmatpush1.msra.mxu0 0.0
        %5114 = vmatprep.subr.mxu0 0.0
        %5115 = vmatpush1.msra.mxu0 0.0
        %5116 = vmatprep.subr.mxu0 0.0
        %5117 = vmatpush1.msra.mxu0 0.0
        %5118 = vmatprep.subr.mxu0 0.0
        %5119 = vmatpush1.msra.mxu0 0.0
        %5120 = vmatprep.subr.mxu0 0.0
        %5121 = vmatpush1.msra.mxu0 0.0
        %5122 = vmatprep.subr.mxu0 0.0
        %5123 = vmatpush1.msra.mxu0 0.0
        %5124 = vmatprep.subr.mxu0 0.0
        %5125 = vmatpush1.msra.mxu0 0.0
        %5126 = vmatprep.subr.mxu0 0.0
        %5127 = vmatpush1.msra.mxu0 0.0
        %5128 = vmatprep.subr.mxu0 0.0
        %5129 = vmatpush1.msra.mxu0 0.0
        %5130 = vmatprep.subr.mxu0 0.0
        %5131 = vmatpush1.msra.mxu0 0.0
        %5132 = vmatprep.subr.mxu0 0.0
        %5133 = vmatpush1.msra.mxu0 0.0
        %5134 = vmatprep.subr.mxu0 0.0
        %5135 = vmatpush1.msra.mxu0 0.0
        %5136 = vmatprep.subr.mxu0 0.0
        %5137 = vmatpush1.msra.mxu0 0.0
        %5138 = vmatprep.subr.mxu0 0.0
        %5139 = vmatpush1.msra.mxu0 0.0
        %5140 = vmatprep.subr.mxu0 0.0
        %5141 = vmatpush1.msra.mxu0 0.0
        %5142 = vmatprep.subr.mxu0 0.0
        %5143 = vmatpush1.msra.mxu0 0.0
        %5144 = vmatprep.subr.mxu0 0.0
        %5145 = vmatpush1.msra.mxu0 0.0
        %5146 = vmatprep.subr.mxu0 0.0
        %5147 = vmatpush1.msra.mxu0 0.0
        %5148 = vmatprep.subr.mxu0 0.0
        %5149 = vmatpush1.msra.mxu0 0.0
        %5150 = vmatprep.subr.mxu0 0.0
        %5151 = vmatpush1.msra.mxu0 0.0
        %5152 = vmatprep.subr.mxu0 0.0
        %5153 = vmatpush1.msra.mxu0 0.0
        %5154 = vmatprep.subr.mxu0 0.0
        %5155 = vmatpush1.msra.mxu0 0.0
        %5156 = vmatprep.subr.mxu0 0.0
        %5157 = vmatpush1.msra.mxu0 0.0
        %5158 = vmatprep.subr.mxu0 0.0
        %5159 = vmatpush1.msra.mxu0 0.0
        %5160 = vmatprep.subr.mxu0 0.0
        %5161 = vmatpush1.msra.mxu0 0.0
        %5162 = vmatprep.subr.mxu0 0.0
        %5163 = vmatpush1.msra.mxu0 0.0
        %5164 = vmatprep.subr.mxu0 0.0
        %5165 = vmatpush1.msra.mxu0 0.0
        %5166 = vmatprep.mubr.f32.mxu0 0.0
        %5167 = vmatmul.mubr.f32.gmra.mrb[0].mxu0 %v4943
        %v5168 = vpop.f32.mrb[0].mxu0
        %v5169 = vadd.f32 %v4935, %v5168
        %v5170 = vpop.f32.mrb[0].mxu0
        %v5171 = vadd.f32 %v4935, %v5170
        %5172 = vmatprep.mubr.f32.mxu0 0.0
        %5173 = vmatmul.mubr.f32.gmra.mrb[0].mxu0 %v4946
        %v5174 = vpop.f32.mrb[0].mxu0
        %v5175 = vadd.f32 %v4940, %v5174
        %v5176 = vpop.f32.mrb[0].mxu0
        %v5177 = vadd.f32 %v4940, %v5176
        %5178 = vdwg.mxu0
        %v5179 = vmax.f32 %v5015, %v5017
        %v5180 = vmax.f32 %v5021, %v5023
        %v5181 = vmax.f32 %v5179, %v5092
        %v5182 = vmax.f32 %v5180, %v5098
        %v5183 = vmax.f32 %v5181, %v5094
        %v5184 = vmax.f32 %v5182, %v5100
        %v5185 = vmax.f32 %v5183, %v5169
        %v5186 = vmax.f32 %v5184, %v5175
        %v5187 = vmax.f32 %v5185, %v5171
        %v5188 = vmax.f32 %v5186, %v5177
        %5190 = vset.pattern.permute.xlu0 0
        %5191 = vperm.xlu0 %5190, %v1537
        %v5192 = vpop.permute.xlu0 %5191
        %5195 = vset.pattern.permute.xlu0 0
        %5196 = vperm.xlu0 %5195, %v1538
        %v5197 = vpop.permute.xlu0 %5196
        %5200 = vset.pattern.permute.xlu0 0
        %5201 = vperm.xlu0 %5200, %v1539
        %v5202 = vpop.permute.xlu0 %5201
        %5205 = vset.pattern.permute.xlu0 0
        %5206 = vperm.xlu0 %5205, %v1540
        %v5207 = vpop.permute.xlu0 %5206
        %v5210 = vsel %vm2028, %v1533, 0
        %v5213 = vsel %vm2028, %v1534, 0
        %v5216 = vsel %vm2028, %v1535, 0
        %v5219 = vsel %vm2028, %v1536, 0
        %5221 = vmatprep.subr.mxu0 0.0
        %5222 = vmatpush1.msra.mxu0 %v5187
        %5223 = vmatprep.subr.mxu0 0.0
        %5224 = vmatpush1.msra.mxu0 %v5188
        %5225 = vmatprep.subr.mxu0 0.0
        %5226 = vmatpush1.msra.mxu0 0.0
        %5227 = vmatprep.subr.mxu0 0.0
        %5228 = vmatpush1.msra.mxu0 0.0
        %5229 = vmatprep.subr.mxu0 0.0
        %5230 = vmatpush1.msra.mxu0 0.0
        %5231 = vmatprep.subr.mxu0 0.0
        %5232 = vmatpush1.msra.mxu0 0.0
        %5233 = vmatprep.subr.mxu0 0.0
        %5234 = vmatpush1.msra.mxu0 0.0
        %5235 = vmatprep.subr.mxu0 0.0
        %5236 = vmatpush1.msra.mxu0 0.0
        %5237 = vmatprep.subr.mxu0 0.0
        %5238 = vmatpush1.msra.mxu0 0.0
        %5239 = vmatprep.subr.mxu0 0.0
        %5240 = vmatpush1.msra.mxu0 0.0
        %5241 = vmatprep.subr.mxu0 0.0
        %5242 = vmatpush1.msra.mxu0 0.0
        %5243 = vmatprep.subr.mxu0 0.0
        %5244 = vmatpush1.msra.mxu0 0.0
        %5245 = vmatprep.subr.mxu0 0.0
        %5246 = vmatpush1.msra.mxu0 0.0
        %5247 = vmatprep.subr.mxu0 0.0
        %5248 = vmatpush1.msra.mxu0 0.0
        %5249 = vmatprep.subr.mxu0 0.0
        %5250 = vmatpush1.msra.mxu0 0.0
        %5251 = vmatprep.subr.mxu0 0.0
        %5252 = vmatpush1.msra.mxu0 0.0
        %5253 = vmatprep.subr.mxu0 0.0
        %5254 = vmatpush1.msra.mxu0 0.0
        %5255 = vmatprep.subr.mxu0 0.0
        %5256 = vmatpush1.msra.mxu0 0.0
        %5257 = vmatprep.subr.mxu0 0.0
        %5258 = vmatpush1.msra.mxu0 0.0
        %5259 = vmatprep.subr.mxu0 0.0
        %5260 = vmatpush1.msra.mxu0 0.0
        %5261 = vmatprep.subr.mxu0 0.0
        %5262 = vmatpush1.msra.mxu0 0.0
        %5263 = vmatprep.subr.mxu0 0.0
        %5264 = vmatpush1.msra.mxu0 0.0
        %5265 = vmatprep.subr.mxu0 0.0
        %5266 = vmatpush1.msra.mxu0 0.0
        %5267 = vmatprep.subr.mxu0 0.0
        %5268 = vmatpush1.msra.mxu0 0.0
        %5269 = vmatprep.subr.mxu0 0.0
        %5270 = vmatpush1.msra.mxu0 0.0
        %5271 = vmatprep.subr.mxu0 0.0
        %5272 = vmatpush1.msra.mxu0 0.0
        %5273 = vmatprep.subr.mxu0 0.0
        %5274 = vmatpush1.msra.mxu0 0.0
        %5275 = vmatprep.subr.mxu0 0.0
        %5276 = vmatpush1.msra.mxu0 0.0
        %5277 = vmatprep.subr.mxu0 0.0
        %5278 = vmatpush1.msra.mxu0 0.0
        %5279 = vmatprep.subr.mxu0 0.0
        %5280 = vmatpush1.msra.mxu0 0.0
        %5281 = vmatprep.subr.mxu0 0.0
        %5282 = vmatpush1.msra.mxu0 0.0
        %5283 = vmatprep.subr.mxu0 0.0
        %5284 = vmatpush1.msra.mxu0 0.0
        %5285 = vmatprep.mubr.f32.mxu0 0.0
        %5286 = vmatmul.mubr.f32.gmra.mrb[0].mxu0 %v5210
        %v5287 = vpop.f32.mrb[0].mxu0
        %v5288 = vadd.f32 %v5192, %v5287
        %v5289 = vpop.f32.mrb[0].mxu0
        %5290 = vmatprep.mubr.f32.mxu0 0.0
        %5291 = vmatmul.mubr.f32.gmra.mrb[0].mxu0 %v5213
        %v5292 = vpop.f32.mrb[0].mxu0
        %v5293 = vadd.f32 %v5197, %v5292
        %v5294 = vpop.f32.mrb[0].mxu0
        %5295 = vmatprep.mubr.f32.mxu0 0.0
        %5296 = vmatmul.mubr.f32.gmra.mrb[0].mxu0 %v5216
        %v5297 = vpop.f32.mrb[0].mxu0
        %v5298 = vadd.f32 %v5202, %v5297
        %v5299 = vpop.f32.mrb[0].mxu0
        %5300 = vmatprep.mubr.f32.mxu0 0.0
        %5301 = vmatmul.mubr.f32.gmra.mrb[0].mxu0 %v5219
        %v5302 = vpop.f32.mrb[0].mxu0
        %v5303 = vadd.f32 %v5207, %v5302
        %v5304 = vpop.f32.mrb[0].mxu0
        %5305 = vdwg.mxu0
        %v5306 = vadd.f32 %v4489, %v5288
        %v5307 = vadd.f32 %v4490, %v5293
        %v5308 = vadd.f32 %v4491, %v5298
        %v5309 = vadd.f32 %v4492, %v5303
        %5310 = vadd.xlane.f32.xlu0 %v5306
        %v5311 = vpop.xlane.xlu0 %5310
        %5312 = vadd.xlane.f32.xlu0 %v5307
        %v5313 = vpop.xlane.xlu0 %5312
        %5314 = vadd.xlane.f32.xlu0 %v5308
        %v5315 = vpop.xlane.xlu0 %5314
        %5316 = vadd.xlane.f32.xlu0 %v5309
        %v5317 = vpop.xlane.xlu0 %5316
        %v5318 = vmul.f32 %v5311, %v2763
        %v5319 = vmul.f32 %v5313, %v2763
        %v5320 = vmul.f32 %v5315, %v2763
        %v5321 = vmul.f32 %v5317, %v2763
        %v5322 = vsub.f32 %v5306, %v5318
        %v5323 = vsub.f32 %v5307, %v5319
        %v5324 = vsub.f32 %v5308, %v5320
        %v5325 = vsub.f32 %v5309, %v5321
        %v5326 = vmul.f32 %v5322, %v5322
        %v5327 = vmul.f32 %v5323, %v5323
        %v5328 = vmul.f32 %v5324, %v5324
        %v5329 = vmul.f32 %v5325, %v5325
        %5330 = vadd.xlane.f32.xlu0 %v5326
        %v5331 = vpop.xlane.xlu0 %5330
        %5332 = vadd.xlane.f32.xlu0 %v5327
        %v5333 = vpop.xlane.xlu0 %5332
        %5334 = vadd.xlane.f32.xlu0 %v5328
        %v5335 = vpop.xlane.xlu0 %5334
        %5336 = vadd.xlane.f32.xlu0 %v5329
        %v5337 = vpop.xlane.xlu0 %5336
        %v5338 = vmul.f32 %v5331, %v2763
        %v5339 = vmul.f32 %v5333, %v2763
        %v5340 = vmul.f32 %v5335, %v2763
        %v5341 = vmul.f32 %v5337, %v2763
        %v5342 = vadd.f32 %v5338, 0.001
        %v5343 = vadd.f32 %v5339, 0.001
        %v5344 = vadd.f32 %v5340, 0.001
        %v5345 = vadd.f32 %v5341, 0.001
        %v5346 = vrsqrt.pop %v5342
        %v5347 = vrsqrt.pop %v5343
        %v5348 = vrsqrt.pop %v5344
        %v5349 = vrsqrt.pop %v5345
        %v5350 = vmul.f32 %v5322, %v5346
        %v5351 = vmul.f32 %v5323, %v5347
        %v5352 = vmul.f32 %v5324, %v5348
        %v5353 = vmul.f32 %v5325, %v5349
        %v5354 = vmax.f32 %v5350, 0.0
        %v5355 = vmax.f32 %v5351, 0.0
        %v5356 = vmax.f32 %v5352, 0.0
        %v5357 = vmax.f32 %v5353, 0.0
        %5359 = vset.pattern.permute.xlu0 0
        %5360 = vperm.xlu0 %5359, %v1545
        %v5361 = vpop.permute.xlu0 %5360
        %5364 = vset.pattern.permute.xlu0 0
        %5365 = vperm.xlu0 %5364, %v1546
        %v5366 = vpop.permute.xlu0 %5365
        %5369 = vset.pattern.permute.xlu0 0
        %5370 = vperm.xlu0 %5369, %v1547
        %v5371 = vpop.permute.xlu0 %5370
        %5374 = vset.pattern.permute.xlu0 0
        %5375 = vperm.xlu0 %5374, %v1548
        %v5376 = vpop.permute.xlu0 %5375
        %v5379 = vsel %vm1946, %v1541, 0
        %v5382 = vsel %vm1946, %v1542, 0
        %v5385 = vsel %vm1946, %v1543, 0
        %v5388 = vsel %vm1946, %v1544, 0
        %5390 = vmatprep.subr.mxu0 0.0
        %5391 = vmatpush1.msra.mxu0 %v5354
        %5392 = vmatprep.subr.mxu0 0.0
        %5393 = vmatpush1.msra.mxu0 %v5355
        %5394 = vmatprep.subr.mxu0 0.0
        %5395 = vmatpush1.msra.mxu0 %v5356
        %5396 = vmatprep.subr.mxu0 0.0
        %5397 = vmatpush1.msra.mxu0 %v5357
        %5398 = vmatprep.subr.mxu0 0.0
        %5399 = vmatpush1.msra.mxu0 0.0
        %5400 = vmatprep.subr.mxu0 0.0
        %5401 = vmatpush1.msra.mxu0 0.0
        %5402 = vmatprep.subr.mxu0 0.0
        %5403 = vmatpush1.msra.mxu0 0.0
        %5404 = vmatprep.subr.mxu0 0.0
        %5405 = vmatpush1.msra.mxu0 0.0
        %5406 = vmatprep.subr.mxu0 0.0
        %5407 = vmatpush1.msra.mxu0 0.0
        %5408 = vmatprep.subr.mxu0 0.0
        %5409 = vmatpush1.msra.mxu0 0.0
        %5410 = vmatprep.subr.mxu0 0.0
        %5411 = vmatpush1.msra.mxu0 0.0
        %5412 = vmatprep.subr.mxu0 0.0
        %5413 = vmatpush1.msra.mxu0 0.0
        %5414 = vmatprep.subr.mxu0 0.0
        %5415 = vmatpush1.msra.mxu0 0.0
        %5416 = vmatprep.subr.mxu0 0.0
        %5417 = vmatpush1.msra.mxu0 0.0
        %5418 = vmatprep.subr.mxu0 0.0
        %5419 = vmatpush1.msra.mxu0 0.0
        %5420 = vmatprep.subr.mxu0 0.0
        %5421 = vmatpush1.msra.mxu0 0.0
        %5422 = vmatprep.subr.mxu0 0.0
        %5423 = vmatpush1.msra.mxu0 0.0
        %5424 = vmatprep.subr.mxu0 0.0
        %5425 = vmatpush1.msra.mxu0 0.0
        %5426 = vmatprep.subr.mxu0 0.0
        %5427 = vmatpush1.msra.mxu0 0.0
        %5428 = vmatprep.subr.mxu0 0.0
        %5429 = vmatpush1.msra.mxu0 0.0
        %5430 = vmatprep.subr.mxu0 0.0
        %5431 = vmatpush1.msra.mxu0 0.0
        %5432 = vmatprep.subr.mxu0 0.0
        %5433 = vmatpush1.msra.mxu0 0.0
        %5434 = vmatprep.subr.mxu0 0.0
        %5435 = vmatpush1.msra.mxu0 0.0
        %5436 = vmatprep.subr.mxu0 0.0
        %5437 = vmatpush1.msra.mxu0 0.0
        %5438 = vmatprep.subr.mxu0 0.0
        %5439 = vmatpush1.msra.mxu0 0.0
        %5440 = vmatprep.subr.mxu0 0.0
        %5441 = vmatpush1.msra.mxu0 0.0
        %5442 = vmatprep.subr.mxu0 0.0
        %5443 = vmatpush1.msra.mxu0 0.0
        %5444 = vmatprep.subr.mxu0 0.0
        %5445 = vmatpush1.msra.mxu0 0.0
        %5446 = vmatprep.subr.mxu0 0.0
        %5447 = vmatpush1.msra.mxu0 0.0
        %5448 = vmatprep.subr.mxu0 0.0
        %5449 = vmatpush1.msra.mxu0 0.0
        %5450 = vmatprep.subr.mxu0 0.0
        %5451 = vmatpush1.msra.mxu0 0.0
        %5452 = vmatprep.subr.mxu0 0.0
        %5453 = vmatpush1.msra.mxu0 0.0
        %5454 = vmatprep.mubr.f32.mxu0 0.0
        %5455 = vmatmul.mubr.f32.gmra.mrb[0].mxu0 %v5379
        %v5456 = vpop.f32.mrb[0].mxu0
        %v5457 = vadd.f32 %v5361, %v5456
        %v5458 = vpop.f32.mrb[0].mxu0
        %5459 = vmatprep.mubr.f32.mxu0 0.0
        %5460 = vmatmul.mubr.f32.gmra.mrb[0].mxu0 %v5382
        %v5461 = vpop.f32.mrb[0].mxu0
        %v5462 = vadd.f32 %v5366, %v5461
        %v5463 = vpop.f32.mrb[0].mxu0
        %5464 = vmatprep.mubr.f32.mxu0 0.0
        %5465 = vmatmul.mubr.f32.gmra.mrb[0].mxu0 %v5385
        %v5466 = vpop.f32.mrb[0].mxu0
        %v5467 = vadd.f32 %v5371, %v5466
        %v5468 = vpop.f32.mrb[0].mxu0
        %5469 = vmatprep.mubr.f32.mxu0 0.0
        %5470 = vmatmul.mubr.f32.gmra.mrb[0].mxu0 %v5388
        %v5471 = vpop.f32.mrb[0].mxu0
        %v5472 = vadd.f32 %v5376, %v5471
        %v5473 = vpop.f32.mrb[0].mxu0
        %5474 = vdwg.mxu0
        %5475 = vadd.xlane.f32.xlu0 %v5457
        %v5476 = vpop.xlane.xlu0 %5475
        %5477 = vadd.xlane.f32.xlu0 %v5462
        %v5478 = vpop.xlane.xlu0 %5477
        %5479 = vadd.xlane.f32.xlu0 %v5467
        %v5480 = vpop.xlane.xlu0 %5479
        %5481 = vadd.xlane.f32.xlu0 %v5472
        %v5482 = vpop.xlane.xlu0 %5481
        %v5483 = vmul.f32 %v5476, %v2763
        %v5484 = vmul.f32 %v5478, %v2763
        %v5485 = vmul.f32 %v5480, %v2763
        %v5486 = vmul.f32 %v5482, %v2763
        %v5487 = vsub.f32 %v5457, %v5483
        %v5488 = vsub.f32 %v5462, %v5484
        %v5489 = vsub.f32 %v5467, %v5485
        %v5490 = vsub.f32 %v5472, %v5486
        %v5491 = vmul.f32 %v5487, %v5487
        %v5492 = vmul.f32 %v5488, %v5488
        %v5493 = vmul.f32 %v5489, %v5489
        %v5494 = vmul.f32 %v5490, %v5490
        %5495 = vadd.xlane.f32.xlu0 %v5491
        %v5496 = vpop.xlane.xlu0 %5495
        %5497 = vadd.xlane.f32.xlu0 %v5492
        %v5498 = vpop.xlane.xlu0 %5497
        %5499 = vadd.xlane.f32.xlu0 %v5493
        %v5500 = vpop.xlane.xlu0 %5499
        %5501 = vadd.xlane.f32.xlu0 %v5494
        %v5502 = vpop.xlane.xlu0 %5501
        %v5503 = vmul.f32 %v5496, %v2763
        %v5504 = vmul.f32 %v5498, %v2763
        %v5505 = vmul.f32 %v5500, %v2763
        %v5506 = vmul.f32 %v5502, %v2763
        %v5507 = vadd.f32 %v5503, 0.001
        %v5508 = vadd.f32 %v5504, 0.001
        %v5509 = vadd.f32 %v5505, 0.001
        %v5510 = vadd.f32 %v5506, 0.001
        %v5511 = vrsqrt.pop %v5507
        %v5512 = vrsqrt.pop %v5508
        %v5513 = vrsqrt.pop %v5509
        %v5514 = vrsqrt.pop %v5510
        %v5515 = vmul.f32 %v5487, %v5511
        %v5516 = vmul.f32 %v5488, %v5512
        %v5517 = vmul.f32 %v5489, %v5513
        %v5518 = vmul.f32 %v5490, %v5514
        %v5519 = vmax.f32 %v5515, 0.0
        %v5520 = vmax.f32 %v5516, 0.0
        %v5521 = vmax.f32 %v5517, 0.0
        %v5522 = vmax.f32 %v5518, 0.0
        %5524 = vset.pattern.permute.xlu0 0
        %5525 = vperm.xlu0 %5524, %v1553
        %v5526 = vpop.permute.xlu0 %5525
        %5529 = vset.pattern.permute.xlu0 0
        %5530 = vperm.xlu0 %5529, %v1554
        %v5531 = vpop.permute.xlu0 %5530
        %5534 = vset.pattern.permute.xlu0 0
        %5535 = vperm.xlu0 %5534, %v1555
        %v5536 = vpop.permute.xlu0 %5535
        %5539 = vset.pattern.permute.xlu0 0
        %5540 = vperm.xlu0 %5539, %v1556
        %v5541 = vpop.permute.xlu0 %5540
        %v5544 = vsel %vm1946, %v1549, 0
        %v5547 = vsel %vm1946, %v1550, 0
        %v5550 = vsel %vm1946, %v1551, 0
        %v5553 = vsel %vm1946, %v1552, 0
        %5555 = vmatprep.subr.mxu0 0.0
        %5556 = vmatpush1.msra.mxu0 %v5519
        %5557 = vmatprep.subr.mxu0 0.0
        %5558 = vmatpush1.msra.mxu0 %v5520
        %5559 = vmatprep.subr.mxu0 0.0
        %5560 = vmatpush1.msra.mxu0 %v5521
        %5561 = vmatprep.subr.mxu0 0.0
        %5562 = vmatpush1.msra.mxu0 %v5522
        %5563 = vmatprep.subr.mxu0 0.0
        %5564 = vmatpush1.msra.mxu0 0.0
        %5565 = vmatprep.subr.mxu0 0.0
        %5566 = vmatpush1.msra.mxu0 0.0
        %5567 = vmatprep.subr.mxu0 0.0
        %5568 = vmatpush1.msra.mxu0 0.0
        %5569 = vmatprep.subr.mxu0 0.0
        %5570 = vmatpush1.msra.mxu0 0.0
        %5571 = vmatprep.subr.mxu0 0.0
        %5572 = vmatpush1.msra.mxu0 0.0
        %5573 = vmatprep.subr.mxu0 0.0
        %5574 = vmatpush1.msra.mxu0 0.0
        %5575 = vmatprep.subr.mxu0 0.0
        %5576 = vmatpush1.msra.mxu0 0.0
        %5577 = vmatprep.subr.mxu0 0.0
        %5578 = vmatpush1.msra.mxu0 0.0
        %5579 = vmatprep.subr.mxu0 0.0
        %5580 = vmatpush1.msra.mxu0 0.0
        %5581 = vmatprep.subr.mxu0 0.0
        %5582 = vmatpush1.msra.mxu0 0.0
        %5583 = vmatprep.subr.mxu0 0.0
        %5584 = vmatpush1.msra.mxu0 0.0
        %5585 = vmatprep.subr.mxu0 0.0
        %5586 = vmatpush1.msra.mxu0 0.0
        %5587 = vmatprep.subr.mxu0 0.0
        %5588 = vmatpush1.msra.mxu0 0.0
        %5589 = vmatprep.subr.mxu0 0.0
        %5590 = vmatpush1.msra.mxu0 0.0
        %5591 = vmatprep.subr.mxu0 0.0
        %5592 = vmatpush1.msra.mxu0 0.0
        %5593 = vmatprep.subr.mxu0 0.0
        %5594 = vmatpush1.msra.mxu0 0.0
        %5595 = vmatprep.subr.mxu0 0.0
        %5596 = vmatpush1.msra.mxu0 0.0
        %5597 = vmatprep.subr.mxu0 0.0
        %5598 = vmatpush1.msra.mxu0 0.0
        %5599 = vmatprep.subr.mxu0 0.0
        %5600 = vmatpush1.msra.mxu0 0.0
        %5601 = vmatprep.subr.mxu0 0.0
        %5602 = vmatpush1.msra.mxu0 0.0
        %5603 = vmatprep.subr.mxu0 0.0
        %5604 = vmatpush1.msra.mxu0 0.0
        %5605 = vmatprep.subr.mxu0 0.0
        %5606 = vmatpush1.msra.mxu0 0.0
        %5607 = vmatprep.subr.mxu0 0.0
        %5608 = vmatpush1.msra.mxu0 0.0
        %5609 = vmatprep.subr.mxu0 0.0
        %5610 = vmatpush1.msra.mxu0 0.0
        %5611 = vmatprep.subr.mxu0 0.0
        %5612 = vmatpush1.msra.mxu0 0.0
        %5613 = vmatprep.subr.mxu0 0.0
        %5614 = vmatpush1.msra.mxu0 0.0
        %5615 = vmatprep.subr.mxu0 0.0
        %5616 = vmatpush1.msra.mxu0 0.0
        %5617 = vmatprep.subr.mxu0 0.0
        %5618 = vmatpush1.msra.mxu0 0.0
        %5619 = vmatprep.mubr.f32.mxu0 0.0
        %5620 = vmatmul.mubr.f32.gmra.mrb[0].mxu0 %v5544
        %v5621 = vpop.f32.mrb[0].mxu0
        %v5622 = vadd.f32 %v5526, %v5621
        %v5623 = vpop.f32.mrb[0].mxu0
        %5624 = vmatprep.mubr.f32.mxu0 0.0
        %5625 = vmatmul.mubr.f32.gmra.mrb[0].mxu0 %v5547
        %v5626 = vpop.f32.mrb[0].mxu0
        %v5627 = vadd.f32 %v5531, %v5626
        %v5628 = vpop.f32.mrb[0].mxu0
        %5629 = vmatprep.mubr.f32.mxu0 0.0
        %5630 = vmatmul.mubr.f32.gmra.mrb[0].mxu0 %v5550
        %v5631 = vpop.f32.mrb[0].mxu0
        %v5632 = vadd.f32 %v5536, %v5631
        %v5633 = vpop.f32.mrb[0].mxu0
        %5634 = vmatprep.mubr.f32.mxu0 0.0
        %5635 = vmatmul.mubr.f32.gmra.mrb[0].mxu0 %v5553
        %v5636 = vpop.f32.mrb[0].mxu0
        %v5637 = vadd.f32 %v5541, %v5636
        %v5638 = vpop.f32.mrb[0].mxu0
        %5639 = vdwg.mxu0
        %v5640 = vadd.f32 %v5306, %v5622
        %v5641 = vadd.f32 %v5307, %v5627
        %v5642 = vadd.f32 %v5308, %v5632
        %v5643 = vadd.f32 %v5309, %v5637
        %5644 = vmatprep.subr.mxu0 0.0
        %5645 = vmatpush1.xpose.msra.mxu0 %v1578
        %5646 = vmatprep.subr.mxu0 0.0
        %5647 = vmatpush1.xpose.msra.mxu0 %v1579
        %5648 = vmatprep.subr.mxu0 0.0
        %5649 = vmatpush1.xpose.msra.mxu0 0.0
        %5650 = vmatprep.subr.mxu0 0.0
        %5651 = vmatpush1.xpose.msra.mxu0 0.0
        %5652 = vmatprep.subr.mxu0 0.0
        %5653 = vmatpush1.xpose.msra.mxu0 0.0
        %5654 = vmatprep.subr.mxu0 0.0
        %5655 = vmatpush1.xpose.msra.mxu0 0.0
        %5656 = vmatprep.subr.mxu0 0.0
        %5657 = vmatpush1.xpose.msra.mxu0 0.0
        %5658 = vmatprep.subr.mxu0 0.0
        %5659 = vmatpush1.xpose.msra.mxu0 0.0
        %5660 = vmatprep.subr.mxu0 0.0
        %5661 = vmatpush1.xpose.msra.mxu0 0.0
        %5662 = vmatprep.subr.mxu0 0.0
        %5663 = vmatpush1.xpose.msra.mxu0 0.0
        %5664 = vmatprep.subr.mxu0 0.0
        %5665 = vmatpush1.xpose.msra.mxu0 0.0
        %5666 = vmatprep.subr.mxu0 0.0
        %5667 = vmatpush1.xpose.msra.mxu0 0.0
        %5668 = vmatprep.subr.mxu0 0.0
        %5669 = vmatpush1.xpose.msra.mxu0 0.0
        %5670 = vmatprep.subr.mxu0 0.0
        %5671 = vmatpush1.xpose.msra.mxu0 0.0
        %5672 = vmatprep.subr.mxu0 0.0
        %5673 = vmatpush1.xpose.msra.mxu0 0.0
        %5674 = vmatprep.subr.mxu0 0.0
        %5675 = vmatpush1.xpose.msra.mxu0 0.0
        %5676 = vmatprep.subr.mxu0 0.0
        %5677 = vmatpush1.xpose.msra.mxu0 0.0
        %5678 = vmatprep.subr.mxu0 0.0
        %5679 = vmatpush1.xpose.msra.mxu0 0.0
        %5680 = vmatprep.subr.mxu0 0.0
        %5681 = vmatpush1.xpose.msra.mxu0 0.0
        %5682 = vmatprep.subr.mxu0 0.0
        %5683 = vmatpush1.xpose.msra.mxu0 0.0
        %5684 = vmatprep.subr.mxu0 0.0
        %5685 = vmatpush1.xpose.msra.mxu0 0.0
        %5686 = vmatprep.subr.mxu0 0.0
        %5687 = vmatpush1.xpose.msra.mxu0 0.0
        %5688 = vmatprep.subr.mxu0 0.0
        %5689 = vmatpush1.xpose.msra.mxu0 0.0
        %5690 = vmatprep.subr.mxu0 0.0
        %5691 = vmatpush1.xpose.msra.mxu0 0.0
        %5692 = vmatprep.subr.mxu0 0.0
        %5693 = vmatpush1.xpose.msra.mxu0 0.0
        %5694 = vmatprep.subr.mxu0 0.0
        %5695 = vmatpush1.xpose.msra.mxu0 0.0
        %5696 = vmatprep.subr.mxu0 0.0
        %5697 = vmatpush1.xpose.msra.mxu0 0.0
        %5698 = vmatprep.subr.mxu0 0.0
        %5699 = vmatpush1.xpose.msra.mxu0 0.0
        %5700 = vmatprep.subr.mxu0 0.0
        %5701 = vmatpush1.xpose.msra.mxu0 0.0
        %5702 = vmatprep.subr.mxu0 0.0
        %5703 = vmatpush1.xpose.msra.mxu0 0.0
        %5704 = vmatprep.subr.mxu0 0.0
        %5705 = vmatpush1.xpose.msra.mxu0 0.0
        %5706 = vmatprep.subr.mxu0 0.0
        %5707 = vmatpush1.xpose.msra.mxu0 0.0
        %5708 = vmatprep.mubr.f32.mxu0 0.0
        %5709 = vmatmul.mubr.f32.gmra.mrb[0].mxu0 %v5640
        %v5710 = vpop.f32.mrb[0].mxu0
        %v5711 = vadd.f32 0.0, %v5710
        %v5712 = vpop.f32.mrb[0].mxu0
        %5713 = vmatprep.mubr.f32.mxu0 0.0
        %5714 = vmatmul.mubr.f32.gmra.mrb[0].mxu0 %v5641
        %v5715 = vpop.f32.mrb[0].mxu0
        %v5716 = vadd.f32 0.0, %v5715
        %v5717 = vpop.f32.mrb[0].mxu0
        %5718 = vmatprep.mubr.f32.mxu0 0.0
        %5719 = vmatmul.mubr.f32.gmra.mrb[0].mxu0 %v5642
        %v5720 = vpop.f32.mrb[0].mxu0
        %v5721 = vadd.f32 0.0, %v5720
        %v5722 = vpop.f32.mrb[0].mxu0
        %5723 = vmatprep.mubr.f32.mxu0 0.0
        %5724 = vmatmul.mubr.f32.gmra.mrb[0].mxu0 %v5643
        %v5725 = vpop.f32.mrb[0].mxu0
        %v5726 = vadd.f32 0.0, %v5725
        %v5727 = vpop.f32.mrb[0].mxu0
        %5728 = vdwg.mxu0
        %v5730 = vsel %vm2028, %v5711, 0
        %v5733 = vsel %vm2028, %v5716, 0
        %v5736 = vsel %vm2028, %v5721, 0
        %v5739 = vsel %vm2028, %v5726, 0
        %5741 = vmatprep.subr.mxu0 0.0
        %5742 = vmatpush1.msra.mxu0 %v1934
        %5743 = vmatprep.subr.mxu0 0.0
        %5744 = vmatpush1.msra.mxu0 %v1935
        %5745 = vmatprep.subr.mxu0 0.0
        %5746 = vmatpush1.msra.mxu0 0.0
        %5747 = vmatprep.subr.mxu0 0.0
        %5748 = vmatpush1.msra.mxu0 0.0
        %5749 = vmatprep.subr.mxu0 0.0
        %5750 = vmatpush1.msra.mxu0 0.0
        %5751 = vmatprep.subr.mxu0 0.0
        %5752 = vmatpush1.msra.mxu0 0.0
        %5753 = vmatprep.subr.mxu0 0.0
        %5754 = vmatpush1.msra.mxu0 0.0
        %5755 = vmatprep.subr.mxu0 0.0
        %5756 = vmatpush1.msra.mxu0 0.0
        %5757 = vmatprep.subr.mxu0 0.0
        %5758 = vmatpush1.msra.mxu0 0.0
        %5759 = vmatprep.subr.mxu0 0.0
        %5760 = vmatpush1.msra.mxu0 0.0
        %5761 = vmatprep.subr.mxu0 0.0
        %5762 = vmatpush1.msra.mxu0 0.0
        %5763 = vmatprep.subr.mxu0 0.0
        %5764 = vmatpush1.msra.mxu0 0.0
        %5765 = vmatprep.subr.mxu0 0.0
        %5766 = vmatpush1.msra.mxu0 0.0
        %5767 = vmatprep.subr.mxu0 0.0
        %5768 = vmatpush1.msra.mxu0 0.0
        %5769 = vmatprep.subr.mxu0 0.0
        %5770 = vmatpush1.msra.mxu0 0.0
        %5771 = vmatprep.subr.mxu0 0.0
        %5772 = vmatpush1.msra.mxu0 0.0
        %5773 = vmatprep.subr.mxu0 0.0
        %5774 = vmatpush1.msra.mxu0 0.0
        %5775 = vmatprep.subr.mxu0 0.0
        %5776 = vmatpush1.msra.mxu0 0.0
        %5777 = vmatprep.subr.mxu0 0.0
        %5778 = vmatpush1.msra.mxu0 0.0
        %5779 = vmatprep.subr.mxu0 0.0
        %5780 = vmatpush1.msra.mxu0 0.0
        %5781 = vmatprep.subr.mxu0 0.0
        %5782 = vmatpush1.msra.mxu0 0.0
        %5783 = vmatprep.subr.mxu0 0.0
        %5784 = vmatpush1.msra.mxu0 0.0
        %5785 = vmatprep.subr.mxu0 0.0
        %5786 = vmatpush1.msra.mxu0 0.0
        %5787 = vmatprep.subr.mxu0 0.0
        %5788 = vmatpush1.msra.mxu0 0.0
        %5789 = vmatprep.subr.mxu0 0.0
        %5790 = vmatpush1.msra.mxu0 0.0
        %5791 = vmatprep.subr.mxu0 0.0
        %5792 = vmatpush1.msra.mxu0 0.0
        %5793 = vmatprep.subr.mxu0 0.0
        %5794 = vmatpush1.msra.mxu0 0.0
        %5795 = vmatprep.subr.mxu0 0.0
        %5796 = vmatpush1.msra.mxu0 0.0
        %5797 = vmatprep.subr.mxu0 0.0
        %5798 = vmatpush1.msra.mxu0 0.0
        %5799 = vmatprep.subr.mxu0 0.0
        %5800 = vmatpush1.msra.mxu0 0.0
        %5801 = vmatprep.subr.mxu0 0.0
        %5802 = vmatpush1.msra.mxu0 0.0
        %5803 = vmatprep.subr.mxu0 0.0
        %5804 = vmatpush1.msra.mxu0 0.0
        %5805 = vmatprep.mubr.f32.mxu0 0.0
        %5806 = vmatmul.mubr.f32.gmra.mrb[0].mxu0 %v5730
        %v5807 = vpop.f32.mrb[0].mxu0
        %v5808 = vadd.f32 0.0, %v5807
        %v5809 = vpop.f32.mrb[0].mxu0
        %5810 = vmatprep.mubr.f32.mxu0 0.0
        %5811 = vmatmul.mubr.f32.gmra.mrb[0].mxu0 %v5733
        %v5812 = vpop.f32.mrb[0].mxu0
        %v5813 = vadd.f32 0.0, %v5812
        %v5814 = vpop.f32.mrb[0].mxu0
        %5815 = vmatprep.mubr.f32.mxu0 0.0
        %5816 = vmatmul.mubr.f32.gmra.mrb[0].mxu0 %v5736
        %v5817 = vpop.f32.mrb[0].mxu0
        %v5818 = vadd.f32 0.0, %v5817
        %v5819 = vpop.f32.mrb[0].mxu0
        %5820 = vmatprep.mubr.f32.mxu0 0.0
        %5821 = vmatmul.mubr.f32.gmra.mrb[0].mxu0 %v5739
        %v5822 = vpop.f32.mrb[0].mxu0
        %v5823 = vadd.f32 0.0, %v5822
        %v5824 = vpop.f32.mrb[0].mxu0
        %5825 = vdwg.mxu0
        %v5826 = vsub.f32 %v5808, %v5640
        %v5827 = vsub.f32 %v5813, %v5641
        %v5828 = vsub.f32 %v5818, %v5642
        %v5829 = vsub.f32 %v5823, %v5643
        %5830 = vadd.xlane.f32.xlu0 %v5826
        %v5831 = vpop.xlane.xlu0 %5830
        %5832 = vadd.xlane.f32.xlu0 %v5827
        %v5833 = vpop.xlane.xlu0 %5832
        %5834 = vadd.xlane.f32.xlu0 %v5828
        %v5835 = vpop.xlane.xlu0 %5834
        %5836 = vadd.xlane.f32.xlu0 %v5829
        %v5837 = vpop.xlane.xlu0 %5836
        %v5838 = vmul.f32 %v5831, %v2763
        %v5839 = vmul.f32 %v5833, %v2763
        %v5840 = vmul.f32 %v5835, %v2763
        %v5841 = vmul.f32 %v5837, %v2763
        %v5842 = vsub.f32 %v5826, %v5838
        %v5843 = vsub.f32 %v5827, %v5839
        %v5844 = vsub.f32 %v5828, %v5840
        %v5845 = vsub.f32 %v5829, %v5841
        %v5846 = vmul.f32 %v5842, %v5842
        %v5847 = vmul.f32 %v5843, %v5843
        %v5848 = vmul.f32 %v5844, %v5844
        %v5849 = vmul.f32 %v5845, %v5845
        %5850 = vadd.xlane.f32.xlu0 %v5846
        %v5851 = vpop.xlane.xlu0 %5850
        %5852 = vadd.xlane.f32.xlu0 %v5847
        %v5853 = vpop.xlane.xlu0 %5852
        %5854 = vadd.xlane.f32.xlu0 %v5848
        %v5855 = vpop.xlane.xlu0 %5854
        %5856 = vadd.xlane.f32.xlu0 %v5849
        %v5857 = vpop.xlane.xlu0 %5856
        %v5858 = vmul.f32 %v5851, %v2763
        %v5859 = vmul.f32 %v5853, %v2763
        %v5860 = vmul.f32 %v5855, %v2763
        %v5861 = vmul.f32 %v5857, %v2763
        %v5862 = vadd.f32 %v5858, 1e-05
        %v5863 = vadd.f32 %v5859, 1e-05
        %v5864 = vadd.f32 %v5860, 1e-05
        %v5865 = vadd.f32 %v5861, 1e-05
        %v5866 = vrsqrt.pop %v5862
        %v5867 = vrsqrt.pop %v5863
        %v5868 = vrsqrt.pop %v5864
        %v5869 = vrsqrt.pop %v5865
        %v5870 = vmul.f32 %v5842, %v5866
        %v5871 = vmul.f32 %v5843, %v5867
        %v5872 = vmul.f32 %v5844, %v5868
        %v5873 = vmul.f32 %v5845, %v5869
        %v5874 = vmax.f32 %v5870, 0.0
        %v5875 = vmax.f32 %v5871, 0.0
        %v5876 = vmax.f32 %v5872, 0.0
        %v5877 = vmax.f32 %v5873, 0.0
        %5879 = vset.pattern.permute.xlu0 0
        %5880 = vperm.xlu0 %5879, %v1561
        %v5881 = vpop.permute.xlu0 %5880
        %5884 = vset.pattern.permute.xlu0 0
        %5885 = vperm.xlu0 %5884, %v1562
        %v5886 = vpop.permute.xlu0 %5885
        %5889 = vset.pattern.permute.xlu0 0
        %5890 = vperm.xlu0 %5889, %v1563
        %v5891 = vpop.permute.xlu0 %5890
        %5894 = vset.pattern.permute.xlu0 0
        %5895 = vperm.xlu0 %5894, %v1564
        %v5896 = vpop.permute.xlu0 %5895
        %v5899 = vsel %vm1946, %v1557, 0
        %v5902 = vsel %vm1946, %v1558, 0
        %v5905 = vsel %vm1946, %v1559, 0
        %v5908 = vsel %vm1946, %v1560, 0
        %5910 = vmatprep.subr.mxu0 0.0
        %5911 = vmatpush1.msra.mxu0 %v5874
        %5912 = vmatprep.subr.mxu0 0.0
        %5913 = vmatpush1.msra.mxu0 %v5875
        %5914 = vmatprep.subr.mxu0 0.0
        %5915 = vmatpush1.msra.mxu0 %v5876
        %5916 = vmatprep.subr.mxu0 0.0
        %5917 = vmatpush1.msra.mxu0 %v5877
        %5918 = vmatprep.subr.mxu0 0.0
        %5919 = vmatpush1.msra.mxu0 0.0
        %5920 = vmatprep.subr.mxu0 0.0
        %5921 = vmatpush1.msra.mxu0 0.0
        %5922 = vmatprep.subr.mxu0 0.0
        %5923 = vmatpush1.msra.mxu0 0.0
        %5924 = vmatprep.subr.mxu0 0.0
        %5925 = vmatpush1.msra.mxu0 0.0
        %5926 = vmatprep.subr.mxu0 0.0
        %5927 = vmatpush1.msra.mxu0 0.0
        %5928 = vmatprep.subr.mxu0 0.0
        %5929 = vmatpush1.msra.mxu0 0.0
        %5930 = vmatprep.subr.mxu0 0.0
        %5931 = vmatpush1.msra.mxu0 0.0
        %5932 = vmatprep.subr.mxu0 0.0
        %5933 = vmatpush1.msra.mxu0 0.0
        %5934 = vmatprep.subr.mxu0 0.0
        %5935 = vmatpush1.msra.mxu0 0.0
        %5936 = vmatprep.subr.mxu0 0.0
        %5937 = vmatpush1.msra.mxu0 0.0
        %5938 = vmatprep.subr.mxu0 0.0
        %5939 = vmatpush1.msra.mxu0 0.0
        %5940 = vmatprep.subr.mxu0 0.0
        %5941 = vmatpush1.msra.mxu0 0.0
        %5942 = vmatprep.subr.mxu0 0.0
        %5943 = vmatpush1.msra.mxu0 0.0
        %5944 = vmatprep.subr.mxu0 0.0
        %5945 = vmatpush1.msra.mxu0 0.0
        %5946 = vmatprep.subr.mxu0 0.0
        %5947 = vmatpush1.msra.mxu0 0.0
        %5948 = vmatprep.subr.mxu0 0.0
        %5949 = vmatpush1.msra.mxu0 0.0
        %5950 = vmatprep.subr.mxu0 0.0
        %5951 = vmatpush1.msra.mxu0 0.0
        %5952 = vmatprep.subr.mxu0 0.0
        %5953 = vmatpush1.msra.mxu0 0.0
        %5954 = vmatprep.subr.mxu0 0.0
        %5955 = vmatpush1.msra.mxu0 0.0
        %5956 = vmatprep.subr.mxu0 0.0
        %5957 = vmatpush1.msra.mxu0 0.0
        %5958 = vmatprep.subr.mxu0 0.0
        %5959 = vmatpush1.msra.mxu0 0.0
        %5960 = vmatprep.subr.mxu0 0.0
        %5961 = vmatpush1.msra.mxu0 0.0
        %5962 = vmatprep.subr.mxu0 0.0
        %5963 = vmatpush1.msra.mxu0 0.0
        %5964 = vmatprep.subr.mxu0 0.0
        %5965 = vmatpush1.msra.mxu0 0.0
        %5966 = vmatprep.subr.mxu0 0.0
        %5967 = vmatpush1.msra.mxu0 0.0
        %5968 = vmatprep.subr.mxu0 0.0
        %5969 = vmatpush1.msra.mxu0 0.0
        %5970 = vmatprep.subr.mxu0 0.0
        %5971 = vmatpush1.msra.mxu0 0.0
        %5972 = vmatprep.subr.mxu0 0.0
        %5973 = vmatpush1.msra.mxu0 0.0
        %5974 = vmatprep.mubr.f32.mxu0 0.0
        %5975 = vmatmul.mubr.f32.gmra.mrb[0].mxu0 %v5899
        %v5976 = vpop.f32.mrb[0].mxu0
        %v5977 = vadd.f32 %v5881, %v5976
        %v5978 = vpop.f32.mrb[0].mxu0
        %5979 = vmatprep.mubr.f32.mxu0 0.0
        %5980 = vmatmul.mubr.f32.gmra.mrb[0].mxu0 %v5902
        %v5981 = vpop.f32.mrb[0].mxu0
        %v5982 = vadd.f32 %v5886, %v5981
        %v5983 = vpop.f32.mrb[0].mxu0
        %5984 = vmatprep.mubr.f32.mxu0 0.0
        %5985 = vmatmul.mubr.f32.gmra.mrb[0].mxu0 %v5905
        %v5986 = vpop.f32.mrb[0].mxu0
        %v5987 = vadd.f32 %v5891, %v5986
        %v5988 = vpop.f32.mrb[0].mxu0
        %5989 = vmatprep.mubr.f32.mxu0 0.0
        %5990 = vmatmul.mubr.f32.gmra.mrb[0].mxu0 %v5908
        %v5991 = vpop.f32.mrb[0].mxu0
        %v5992 = vadd.f32 %v5896, %v5991
        %v5993 = vpop.f32.mrb[0].mxu0
        %5994 = vdwg.mxu0
        %5995 = vadd.xlane.f32.xlu0 %v5977
        %v5996 = vpop.xlane.xlu0 %5995
        %5997 = vadd.xlane.f32.xlu0 %v5982
        %v5998 = vpop.xlane.xlu0 %5997
        %5999 = vadd.xlane.f32.xlu0 %v5987
        %v6000 = vpop.xlane.xlu0 %5999
        %6001 = vadd.xlane.f32.xlu0 %v5992
        %v6002 = vpop.xlane.xlu0 %6001
        %v6003 = vmul.f32 %v5996, %v2763
        %v6004 = vmul.f32 %v5998, %v2763
        %v6005 = vmul.f32 %v6000, %v2763
        %v6006 = vmul.f32 %v6002, %v2763
        %v6007 = vsub.f32 %v5977, %v6003
        %v6008 = vsub.f32 %v5982, %v6004
        %v6009 = vsub.f32 %v5987, %v6005
        %v6010 = vsub.f32 %v5992, %v6006
        %v6011 = vmul.f32 %v6007, %v6007
        %v6012 = vmul.f32 %v6008, %v6008
        %v6013 = vmul.f32 %v6009, %v6009
        %v6014 = vmul.f32 %v6010, %v6010
        %6015 = vadd.xlane.f32.xlu0 %v6011
        %v6016 = vpop.xlane.xlu0 %6015
        %6017 = vadd.xlane.f32.xlu0 %v6012
        %v6018 = vpop.xlane.xlu0 %6017
        %6019 = vadd.xlane.f32.xlu0 %v6013
        %v6020 = vpop.xlane.xlu0 %6019
        %6021 = vadd.xlane.f32.xlu0 %v6014
        %v6022 = vpop.xlane.xlu0 %6021
        %v6023 = vmul.f32 %v6016, %v2763
        %v6024 = vmul.f32 %v6018, %v2763
        %v6025 = vmul.f32 %v6020, %v2763
        %v6026 = vmul.f32 %v6022, %v2763
        %v6027 = vadd.f32 %v6023, 1e-05
        %v6028 = vadd.f32 %v6024, 1e-05
        %v6029 = vadd.f32 %v6025, 1e-05
        %v6030 = vadd.f32 %v6026, 1e-05
        %v6031 = vrsqrt.pop %v6027
        %v6032 = vrsqrt.pop %v6028
        %v6033 = vrsqrt.pop %v6029
        %v6034 = vrsqrt.pop %v6030
        %v6035 = vmul.f32 %v6007, %v6031
        %v6036 = vmul.f32 %v6008, %v6032
        %v6037 = vmul.f32 %v6009, %v6033
        %v6038 = vmul.f32 %v6010, %v6034
        %v6039 = vmax.f32 %v6035, 0.0
        %v6040 = vmax.f32 %v6036, 0.0
        %v6041 = vmax.f32 %v6037, 0.0
        %v6042 = vmax.f32 %v6038, 0.0
        %6044 = vset.pattern.permute.xlu0 0
        %6045 = vperm.xlu0 %6044, %v1569
        %v6046 = vpop.permute.xlu0 %6045
        %6049 = vset.pattern.permute.xlu0 0
        %6050 = vperm.xlu0 %6049, %v1570
        %v6051 = vpop.permute.xlu0 %6050
        %6054 = vset.pattern.permute.xlu0 0
        %6055 = vperm.xlu0 %6054, %v1571
        %v6056 = vpop.permute.xlu0 %6055
        %6059 = vset.pattern.permute.xlu0 0
        %6060 = vperm.xlu0 %6059, %v1572
        %v6061 = vpop.permute.xlu0 %6060
        %v6064 = vsel %vm1946, %v1565, 0
        %v6067 = vsel %vm1946, %v1566, 0
        %v6070 = vsel %vm1946, %v1567, 0
        %v6073 = vsel %vm1946, %v1568, 0
        %6075 = vmatprep.subr.mxu0 0.0
        %6076 = vmatpush1.msra.mxu0 %v6039
        %6077 = vmatprep.subr.mxu0 0.0
        %6078 = vmatpush1.msra.mxu0 %v6040
        %6079 = vmatprep.subr.mxu0 0.0
        %6080 = vmatpush1.msra.mxu0 %v6041
        %6081 = vmatprep.subr.mxu0 0.0
        %6082 = vmatpush1.msra.mxu0 %v6042
        %6083 = vmatprep.subr.mxu0 0.0
        %6084 = vmatpush1.msra.mxu0 0.0
        %6085 = vmatprep.subr.mxu0 0.0
        %6086 = vmatpush1.msra.mxu0 0.0
        %6087 = vmatprep.subr.mxu0 0.0
        %6088 = vmatpush1.msra.mxu0 0.0
        %6089 = vmatprep.subr.mxu0 0.0
        %6090 = vmatpush1.msra.mxu0 0.0
        %6091 = vmatprep.subr.mxu0 0.0
        %6092 = vmatpush1.msra.mxu0 0.0
        %6093 = vmatprep.subr.mxu0 0.0
        %6094 = vmatpush1.msra.mxu0 0.0
        %6095 = vmatprep.subr.mxu0 0.0
        %6096 = vmatpush1.msra.mxu0 0.0
        %6097 = vmatprep.subr.mxu0 0.0
        %6098 = vmatpush1.msra.mxu0 0.0
        %6099 = vmatprep.subr.mxu0 0.0
        %6100 = vmatpush1.msra.mxu0 0.0
        %6101 = vmatprep.subr.mxu0 0.0
        %6102 = vmatpush1.msra.mxu0 0.0
        %6103 = vmatprep.subr.mxu0 0.0
        %6104 = vmatpush1.msra.mxu0 0.0
        %6105 = vmatprep.subr.mxu0 0.0
        %6106 = vmatpush1.msra.mxu0 0.0
        %6107 = vmatprep.subr.mxu0 0.0
        %6108 = vmatpush1.msra.mxu0 0.0
        %6109 = vmatprep.subr.mxu0 0.0
        %6110 = vmatpush1.msra.mxu0 0.0
        %6111 = vmatprep.subr.mxu0 0.0
        %6112 = vmatpush1.msra.mxu0 0.0
        %6113 = vmatprep.subr.mxu0 0.0
        %6114 = vmatpush1.msra.mxu0 0.0
        %6115 = vmatprep.subr.mxu0 0.0
        %6116 = vmatpush1.msra.mxu0 0.0
        %6117 = vmatprep.subr.mxu0 0.0
        %6118 = vmatpush1.msra.mxu0 0.0
        %6119 = vmatprep.subr.mxu0 0.0
        %6120 = vmatpush1.msra.mxu0 0.0
        %6121 = vmatprep.subr.mxu0 0.0
        %6122 = vmatpush1.msra.mxu0 0.0
        %6123 = vmatprep.subr.mxu0 0.0
        %6124 = vmatpush1.msra.mxu0 0.0
        %6125 = vmatprep.subr.mxu0 0.0
        %6126 = vmatpush1.msra.mxu0 0.0
        %6127 = vmatprep.subr.mxu0 0.0
        %6128 = vmatpush1.msra.mxu0 0.0
        %6129 = vmatprep.subr.mxu0 0.0
        %6130 = vmatpush1.msra.mxu0 0.0
        %6131 = vmatprep.subr.mxu0 0.0
        %6132 = vmatpush1.msra.mxu0 0.0
        %6133 = vmatprep.subr.mxu0 0.0
        %6134 = vmatpush1.msra.mxu0 0.0
        %6135 = vmatprep.subr.mxu0 0.0
        %6136 = vmatpush1.msra.mxu0 0.0
        %6137 = vmatprep.subr.mxu0 0.0
        %6138 = vmatpush1.msra.mxu0 0.0
        %6139 = vmatprep.mubr.f32.mxu0 0.0
        %6140 = vmatmul.mubr.f32.gmra.mrb[0].mxu0 %v6064
        %v6141 = vpop.f32.mrb[0].mxu0
        %v6142 = vadd.f32 %v6046, %v6141
        %v6143 = vpop.f32.mrb[0].mxu0
        %6144 = vmatprep.mubr.f32.mxu0 0.0
        %6145 = vmatmul.mubr.f32.gmra.mrb[0].mxu0 %v6067
        %v6146 = vpop.f32.mrb[0].mxu0
        %v6147 = vadd.f32 %v6051, %v6146
        %v6148 = vpop.f32.mrb[0].mxu0
        %6149 = vmatprep.mubr.f32.mxu0 0.0
        %6150 = vmatmul.mubr.f32.gmra.mrb[0].mxu0 %v6070
        %v6151 = vpop.f32.mrb[0].mxu0
        %v6152 = vadd.f32 %v6056, %v6151
        %v6153 = vpop.f32.mrb[0].mxu0
        %6154 = vmatprep.mubr.f32.mxu0 0.0
        %6155 = vmatmul.mubr.f32.gmra.mrb[0].mxu0 %v6073
        %v6156 = vpop.f32.mrb[0].mxu0
        %v6157 = vadd.f32 %v6061, %v6156
        %v6158 = vpop.f32.mrb[0].mxu0
        %6159 = vdwg.mxu0
        %v6160 = vadd.f32 %v5640, %v6142
        %v6161 = vadd.f32 %v5641, %v6147
        %v6162 = vadd.f32 %v5642, %v6152
        %v6163 = vadd.f32 %v5643, %v6157
        %6164 = vst [vmem:[%s1427] sm:$0xff] %v6160
        %6165 = vst [vmem:[%s1427 + $0x8] sm:$0xff] %v6161
        %6166 = vst [vmem:[%s1427 + $0x10] sm:$0xff] %v6162
        %6167 = vst [vmem:[%s1427 + $0x18] sm:$0xff] %v6163
        %s6168 = sand.u32 %s1102, 1
        %s6169 = scalar_lea.sflag [#allocation4], %s6168
        %s6170 = sand.u32 %s1102, 1
        %s6171 = smul.addr %s6170, 32
        %s6172 = scalar_lea.vmem [#allocation5], %s6171
        // Predicated region
        $region209: #{tpu_custom_call.1} parent=203 // pred_check
          %p6173 = pneg %p1112
        $region210: #{tpu_custom_call.1} parent=203 // pred_check_branch
          %6175 = sbr.rel (%p6173) target = $region212
        $region211: #{tpu_custom_call.1} parent=203 // pred_region
          %s6177 = ssub.s32 512, 512
          %6178 = vsyncadd %s6169, %s6177
          %s6179 = smul.addr %s108, 4
          %s6180 = smul.addr %s6179, 128
          %s6181 = scalar_lea.hbm %s93, %s6180
          %s6182 = sshll.u32 %s6172, 4
          %s6183 = int_to_ptr.vmem [resolvable:$true] %s6182
          %6188 = dma.vmem_to_hbm [thread:$0]  %s6183, 512, %s6181, %s6169, 128, 128, 8
        $region212: #{tpu_custom_call.1} parent=203 // pred_fallthru
          _
      $region204: #{tpu_custom_call.1} parent=5 // pred_fallthru
        _
      %p6189 = scmp.le.s32.totalorder 2, %s103
      // Predicated region
      $region213: #{tpu_custom_call.1} parent=5 // pred_check
        %p6190 = pneg %p6189
      $region214: #{tpu_custom_call.1} parent=5 // pred_check_branch
        %6192 = sbr.rel (%p6190) target = $region216
      $region215: #{tpu_custom_call.1} parent=5 // pred_region
        %s6193 = ssub.s32 %s103, 2
        // Predicated region
        $region217: #{tpu_custom_call.1} parent=215 // pred_check
          %p6194 = pneg %p1118
        $region218: #{tpu_custom_call.1} parent=215 // pred_check_branch
          %6196 = sbr.rel (%p6194) target = $region220
        $region219: #{tpu_custom_call.1} parent=215 // pred_region
          %s6197 = sand.u32 %s1103, 1
          %s6198 = scalar_lea.sflag [#allocation4], %s6197
          %s6199 = sand.u32 %s1103, 1
          %s6200 = smul.addr %s6199, 32
          %s6201 = scalar_lea.vmem [#allocation5], %s6200
          %6202 = dma.done %s6198, 512
        $region220: #{tpu_custom_call.1} parent=215 // pred_fallthru
          _
      $region216: #{tpu_custom_call.1} parent=5 // pred_fallthru
        _
    $region6: #{tpu_custom_call.1} parent=1 // loop_footer
      %s107 = sadd.s32 1, %s103
    $region7: #{tpu_custom_call.1} parent=1 // loop_footer_branch
      %102 = sbr.rel target = $region3
    $region8: #{tpu_custom_call.1} parent=1 // loop_exit
      _
    %6203 = vsyncpa [#allocation3], 1
    %s6204 = scalar_lea.sflag [#allocation3], 1
    %6205 = vsyncpa %s6204, 1
    %6206 = vsyncpa [#allocation4], 1
    %s6207 = scalar_lea.sflag [#allocation4], 1
    %6208 = vsyncpa %s6207, 1

</llo_original>
